<compile_context>
chip_gen: v7x
topology: tpu7x:2x2x1
jax: 0.10.0
libtpu: 0.0.40
codegen_flags: <defaults>
</compile_context>

<pallas_src>
import functools
import math

import jax
import jax.numpy as jnp
from jax.experimental import pallas as pl
from jax.experimental.pallas import tpu as pltpu

BALL_EPS = 4e-3   # hyptorch float32 Poincare-ball boundary eps
MIN_NORM = 1e-5   # hyptorch clamp_min on norms
BN_EPS = 1e-5


# ----------------------------------------------------------------------------
# Hyperbolic helpers (run INSIDE the kernels).  Each returns (value, new_norm)
# so the norm can be carried across the op chain instead of being recomputed.
# Exact divisions (not approx reciprocals) per the review's numerics feedback.
# ----------------------------------------------------------------------------
def _artanh(z):
    z = jnp.clip(z, -1.0 + 1e-5, 1.0 - 1e-5)
    return 0.5 * jnp.log((1.0 + z) / (1.0 - z))


def _row_norm(x, axes):
    """sqrt(sum(x^2)) over `axes`, keepdims, reduced one axis at a time."""
    s = x * x
    for a in axes:
        s = jnp.sum(s, axis=a, keepdims=True)
    return jnp.sqrt(s)


def _project(x, n, sqrt_c):
    maxnorm = (1.0 - BALL_EPS) / sqrt_c
    n = jnp.maximum(n, MIN_NORM)
    scale = jnp.where(n > maxnorm, maxnorm / n, 1.0)
    return x * scale, jnp.minimum(n, maxnorm)


def _expmap0(u, n, sqrt_c):
    n = jnp.maximum(n, MIN_NORM)
    t = jnp.tanh(sqrt_c * n)
    x = u * (t / (sqrt_c * n))
    return x, t * (1.0 / sqrt_c)


def _logmap0(y, n, sqrt_c):
    n = jnp.maximum(n, MIN_NORM)
    a = _artanh(sqrt_c * n)
    u = y * (a / (sqrt_c * n))
    return u, a * (1.0 / sqrt_c)


# ----------------------------------------------------------------------------
# Kernel 1 ("head"): project + logmap0 + 3x3 conv (pad=1) + bias + per-sample
# per-channel BN partial sums, for a block of Bt samples per grid step,
# everything resident in VMEM.  Output activation is stored in bf16.
# ----------------------------------------------------------------------------
def _head_kernel(x_ref, w_ref, b_ref, o_ref, s1_ref, s2_ref, *, sqrt_c):
    xh = x_ref[...]                                 # (Bt, Hp, Wp, Cin), padded
    Bt, Hp, Wp, Cin = xh.shape
    k = w_ref.shape[0]
    H, W = Hp - (k - 1), Wp - (k - 1)
    Cout = w_ref.shape[3]

    # project ; logmap0 on per-(sample, input-channel) rows over all spatial
    # positions.  The zero padding is norm-neutral and stays exactly zero, so
    # it doubles as the conv's zero padding.
    n = _row_norm(xh, axes=(1, 2))                  # (Bt, 1, 1, Cin)
    xh, n = _project(xh, n, sqrt_c)
    xh, _ = _logmap0(xh, n, sqrt_c)

    # Conv2d(3x3, padding=1) + bias as shifted broadcast-MACs (VPU), now over a
    # full batch block so the per-step overhead and vreg fill are amortized.
    # TODO(synk): next step per review: in-VMEM im2col (Bt*H*W, 27) @ (27,Cout)
    # on the MXU, and/or register-tiled accumulation to avoid streaming the
    # accumulator 27 times.
    wv = w_ref[...]                                 # (k, k, Cin, Cout)
    acc = jnp.zeros((Bt, H, W, Cout), jnp.float32)
    for ky in range(k):
        for kx in range(k):
            for ci in range(Cin):
                xs = xh[:, ky:ky + H, kx:kx + W, ci:ci + 1]   # (Bt, H, W, 1)
                wk = wv[ky, kx, ci:ci + 1, :]                 # (1, Cout)
                acc = acc + xs * wk
    acc = acc + b_ref[...]                          # (1, Cout) broadcast

    # bf16 activation writeback (halves inter-kernel HBM traffic).
    # TODO(synk): lane-dense (W*Cout multiple of 128) store layout left undone
    # to avoid an in-kernel relayout reshape.
    o_ref[...] = acc.astype(o_ref.dtype)

    # per-sample, per-channel sums for the 'perchannel' (train-mode BN) stats,
    # computed in f32 before the bf16 cast.
    s1 = jnp.sum(jnp.sum(acc, axis=1, keepdims=True), axis=2, keepdims=True)
    s2 = jnp.sum(jnp.sum(acc * acc, axis=1, keepdims=True), axis=2,
                 keepdims=True)
    s1_ref[...] = s1                                # (Bt, 1, 1, Cout)
    s2_ref[...] = s2


# ----------------------------------------------------------------------------
# Kernel 2 ("tail"): BN apply + the whole hyperbolic / pooling chain, fused,
# for a block of Bt samples.  Input layout per sample: (4, Ho, Wo, C) where the
# leading 4 is the 2x2 pool window, so MaxPool2d(2) is a max over that axis and
# MaxPool2d(5) is a global max over the remaining (Ho, Wo) = (5, 5) grid.
# ----------------------------------------------------------------------------
def _tail_kernel(y_ref, scale_ref, shift_ref, o_ref, *, sqrt_c):
    y = y_ref[...].astype(jnp.float32)              # (Bt, 4, Ho, Wo, C)

    # 'perchannel' normalization (affine with batch stats folded in by wrapper).
    t = y * scale_ref[...] + shift_ref[...]

    # HypConv3 tail: expmap0 -> project, then the forward's logmap0 (reinstated
    # per review: project between the pair makes it a non-identity clamp).
    # TODO(synk): exact HypConv3 behaviour unknown; this follows the usual
    # hyptorch expmap0 -> project pattern.
    n = _row_norm(t, axes=(1, 2, 3))                # (Bt, 1, 1, 1, C)
    x, n = _expmap0(t, n, sqrt_c)
    x, n = _project(x, n, sqrt_c)
    t, _ = _logmap0(x, n, sqrt_c)

    t = jnp.maximum(t, 0.0)                         # ReLU in tangent space

    # expmap0 -> project -> logmap0 per (sample, channel) over all spatial pos.
    n = _row_norm(t, axes=(1, 2, 3))
    x, n = _expmap0(t, n, sqrt_c)
    x, n = _project(x, n, sqrt_c)
    u, _ = _logmap0(x, n, sqrt_c)

    # MaxPool2d(2): the 2x2 window is axis 1.
    u = jnp.max(u, axis=1)                          # (Bt, Ho, Wo, C)

    # expmap0 -> project -> logmap0 per (sample, channel) over (Ho, Wo).
    n = _row_norm(u, axes=(1, 2))                   # (Bt, 1, 1, C)
    x, n = _expmap0(u, n, sqrt_c)
    x, n = _project(x, n, sqrt_c)
    u, _ = _logmap0(x, n, sqrt_c)

    # MaxPool2d(5) == global max over the remaining Ho x Wo (= 5 x 5) grid.
    v = jnp.max(u, axis=2, keepdims=True)
    v = jnp.max(v, axis=1, keepdims=True)           # (Bt, 1, 1, C)

    # expmap0 -> project per (sample, channel) (rows now have one element).
    n = _row_norm(v, axes=(1, 2))
    x, n = _expmap0(v, n, sqrt_c)
    x, _ = _project(x, n, sqrt_c)

    # flatten (Hf = Wf = 1) -> per-sample expmap0 -> project over channels.
    n = _row_norm(x, axes=(3,))                     # (Bt, 1, 1, 1)
    z, n = _expmap0(x, n, sqrt_c)
    z, _ = _project(z, n, sqrt_c)

    o_ref[...] = z                                  # (Bt, 1, 1, C)


# ----------------------------------------------------------------------------
# Wrapper: two batch-blocked pallas_calls plus small XLA layout plumbing
# (NCHW -> padded NHWC, BN stat reduce, pool-window refold of the activation).
# ----------------------------------------------------------------------------
def hyp_convnet_encoder(x, params, c, *, block_b=32):
    """x: (B, Cin, H, W) float32 NCHW (PyTorch convention). Returns (B, Cout)."""
    B, Cin, H, W = x.shape
    w, b, gamma, beta = params["w"], params["b"], params["gamma"], params["beta"]
    Cout, _, kh, kw = w.shape
    assert kh == 3 and kw == 3
    assert H % 2 == 0 and W % 2 == 0, "MaxPool2d(2) needs even spatial dims"
    Ho, Wo = H // 2, W // 2
    # TODO(synk): the fused tail assumes MaxPool2d(5) consumes the whole
    # post-pool2 grid (Ho == Wo == 5, i.e. 10x10 inputs); other sizes would
    # need one more window factorization in the layout plumbing below.
    assert Ho == 5 and Wo == 5

    sqrt_c = math.sqrt(float(c))
    pad = 1
    Hp, Wp = H + 2 * pad, W + 2 * pad

    # Batch block size: review-recommended 32 (safe for v7x's 64 MiB VMEM and
    # keeps multiple "parallel" grid steps at realistic B for megacore / 2 TCs).
    Bt = max(1, min(int(block_b), B))
    nb = -(-B // Bt)                  # ceil(B / Bt)
    Bpad = nb * Bt

    # --- layout plumbing (XLA): NCHW -> zero-padded NHWC (batch padded too) --
    x_nhwc = jnp.transpose(x.astype(jnp.float32), (0, 2, 3, 1))
    x_pad = jnp.pad(x_nhwc, ((0, Bpad - B), (pad, pad), (pad, pad), (0, 0)))
    w_hwio = jnp.transpose(w.astype(jnp.float32), (2, 3, 1, 0))   # (3,3,Cin,Cout)
    b2 = b.astype(jnp.float32).reshape(1, Cout)

    conv_out, s1, s2 = pl.pallas_call(
        functools.partial(_head_kernel, sqrt_c=sqrt_c),
        out_shape=(jax.ShapeDtypeStruct((Bpad, H, W, Cout), jnp.bfloat16),
                   jax.ShapeDtypeStruct((Bpad, 1, 1, Cout), jnp.float32),
                   jax.ShapeDtypeStruct((Bpad, 1, 1, Cout), jnp.float32)),
        grid=(nb,),
        in_specs=[
            pl.BlockSpec((Bt, Hp, Wp, Cin), lambda i: (i, 0, 0, 0)),
            pl.BlockSpec((3, 3, Cin, Cout), lambda i: (0, 0, 0, 0)),
            pl.BlockSpec((1, Cout), lambda i: (0, 0)),
        ],
        out_specs=(
            pl.BlockSpec((Bt, H, W, Cout), lambda i: (i, 0, 0, 0)),
            pl.BlockSpec((Bt, 1, 1, Cout), lambda i: (i, 0, 0, 0)),
            pl.BlockSpec((Bt, 1, 1, Cout), lambda i: (i, 0, 0, 0)),
        ),
        compiler_params=pltpu.CompilerParams(
            dimension_semantics=("parallel",),
            vmem_limit_bytes=32 * 1024 * 1024),   # few-MB footprint; v7x-safe
    )(x_pad, w_hwio, b2)

    # --- 'perchannel' (train-mode BatchNorm) stats over the REAL B samples ----
    # TODO(synk): matches train-mode BN (biased variance, no running stats).
    n_rows = float(B * H * W)
    mean = jnp.sum(s1[:B, 0, 0, :], axis=0) / n_rows
    ex2 = jnp.sum(s2[:B, 0, 0, :], axis=0) / n_rows
    var = jnp.maximum(ex2 - mean * mean, 0.0)
    inv = jax.lax.rsqrt(var + BN_EPS)
    gamma = gamma.astype(jnp.float32)
    beta = beta.astype(jnp.float32)
    scale = (gamma * inv).reshape(1, Cout)
    shift = (beta - mean * gamma * inv).reshape(1, Cout)

    # --- refold activation so the 2x2 pool window is a dedicated axis ---------
    # TODO(synk): could be fused into the tail kernel to save one (now bf16)
    # HBM round trip; kept in XLA to avoid in-kernel relayout reshapes.
    yf = conv_out.reshape(Bpad, Ho, 2, Wo, 2, Cout)
    yf = jnp.transpose(yf, (0, 2, 4, 1, 3, 5)).reshape(Bpad, 4, Ho, Wo, Cout)

    out = pl.pallas_call(
        functools.partial(_tail_kernel, sqrt_c=sqrt_c),
        out_shape=jax.ShapeDtypeStruct((Bpad, 1, 1, Cout), jnp.float32),
        grid=(nb,),
        in_specs=[
            pl.BlockSpec((Bt, 4, Ho, Wo, Cout), lambda i: (i, 0, 0, 0, 0)),
            pl.BlockSpec((1, Cout), lambda i: (0, 0)),
            pl.BlockSpec((1, Cout), lambda i: (0, 0)),
        ],
        out_specs=pl.BlockSpec((Bt, 1, 1, Cout), lambda i: (i, 0, 0, 0)),
        compiler_params=pltpu.CompilerParams(
            dimension_semantics=("parallel",),
            vmem_limit_bytes=32 * 1024 * 1024),
    )(yf, scale, shift)

    return out[:B, 0, 0, :]


# ----------------------------------------------------------------------------
# Deterministic parameter init + demo run.
# ----------------------------------------------------------------------------
def init_params(key, x_dim=3, hid_dim=64, ksize=3):
    kw_, _ = jax.random.split(key)
    fan_in = x_dim * ksize * ksize
    w = jax.random.normal(kw_, (hid_dim, x_dim, ksize, ksize), jnp.float32)
    w = w / jnp.sqrt(jnp.float32(fan_in))
    b = jnp.zeros((hid_dim,), jnp.float32)
    gamma = jnp.ones((hid_dim,), jnp.float32)
    beta = jnp.zeros((hid_dim,), jnp.float32)
    return {"w": w, "b": b, "gamma": gamma, "beta": beta}


if __name__ == "__main__":
    B, x_dim, H, W = 2, 3, 10, 10   # 10 -> pool2 -> 5 -> pool5 -> 1
    hid_dim = 64
    curvature = 0.05

    key = jax.random.PRNGKey(0)
    kp, kx = jax.random.split(key)
    params = init_params(kp, x_dim=x_dim, hid_dim=hid_dim)
    x = jax.random.normal(kx, (B, x_dim, H, W), jnp.float32)

    fwd = jax.jit(functools.partial(hyp_convnet_encoder, c=curvature))
    out = fwd(x, params)
    out = jax.block_until_ready(out)
    assert out.shape == (B, hid_dim), out.shape
    assert bool(jnp.all(jnp.isfinite(out)))
    print("KERNEL_OK")
</pallas_src>

<mosaic_0001>
module attributes {stable_mosaic.version = 11 : i64} {
  func.func @_head_kernel(%arg0: i32, %arg1: memref<2x12x12x3xf32, #tpu.memory_space<vmem>>, %arg2: memref<3x3x3x64xf32, #tpu.memory_space<vmem>>, %arg3: memref<1x64xf32, #tpu.memory_space<vmem>>, %arg4: memref<2x10x10x64xbf16, #tpu.memory_space<vmem>>, %arg5: memref<2x1x1x64xf32, #tpu.memory_space<vmem>>, %arg6: memref<2x1x1x64xf32, #tpu.memory_space<vmem>>) attributes {dimension_semantics = [#tpu.dimension_semantics<parallel>], iteration_bounds = array<i64: 1>, scalar_prefetch = 0 : i64, scratch_operands = 0 : i64, tpu.core_type = #tpu.core_type<tc>, window_params = [{transform_indices = @transform_0, window_bounds = array<i64: 2, 12, 12, 3>}, {pipeline_mode = #tpu.pipeline_mode<synchronous>, transform_indices = @transform_1, window_bounds = array<i64: 3, 3, 3, 64>}, {pipeline_mode = #tpu.pipeline_mode<synchronous>, transform_indices = @transform_2, window_bounds = array<i64: 1, 64>}, {transform_indices = @transform_3, window_bounds = array<i64: 2, 10, 10, 64>}, {transform_indices = @transform_4, window_bounds = array<i64: 2, 1, 1, 64>}, {transform_indices = @transform_5, window_bounds = array<i64: 2, 1, 1, 64>}]} {
    %c0 = arith.constant 0 : index
    %c0_0 = arith.constant 0 : index
    %c0_1 = arith.constant 0 : index
    %c0_2 = arith.constant 0 : index
    %0 = vector.load %arg1[%c0, %c0_0, %c0_1, %c0_2] : memref<2x12x12x3xf32, #tpu.memory_space<vmem>>, vector<2x12x12x3xf32>
    %1 = arith.mulf %0, %0 : vector<2x12x12x3xf32>
    %cst = arith.constant dense<0.000000e+00> : vector<2x12x3xf32>
    %2 = vector.multi_reduction <add>, %1, %cst [1] : vector<2x12x12x3xf32> to vector<2x12x3xf32>
    %3 = vector.shape_cast %2 : vector<2x12x3xf32> to vector<2x1x12x3xf32>
    %cst_3 = arith.constant dense<0.000000e+00> : vector<2x1x3xf32>
    %4 = vector.multi_reduction <add>, %3, %cst_3 [2] : vector<2x1x12x3xf32> to vector<2x1x3xf32>
    %5 = vector.shape_cast %4 : vector<2x1x3xf32> to vector<2x1x1x3xf32>
    %6 = math.sqrt %5 : vector<2x1x1x3xf32>
    %cst_4 = arith.constant 9.99999974E-6 : f32
    %7 = vector.broadcast %cst_4 : f32 to vector<2x1x1x3xf32>
    %8 = arith.maximumf %6, %7 : vector<2x1x1x3xf32>
    %cst_5 = arith.constant 4.45424747 : f32
    %9 = vector.broadcast %cst_5 : f32 to vector<2x1x1x3xf32>
    %10 = arith.cmpf ogt, %8, %9 : vector<2x1x1x3xf32>
    %cst_6 = arith.constant 4.45424747 : f32
    %11 = vector.broadcast %cst_6 : f32 to vector<2x1x1x3xf32>
    %12 = arith.divf %11, %8 : vector<2x1x1x3xf32>
    %cst_7 = arith.constant 1.000000e+00 : f32
    %13 = vector.broadcast %cst_7 : f32 to vector<2x1x1x3xf32>
    %14 = arith.select %10, %12, %13 : vector<2x1x1x3xi1>, vector<2x1x1x3xf32>
    %15 = vector.broadcast %14 : vector<2x1x1x3xf32> to vector<2x12x12x3xf32>
    %16 = arith.mulf %0, %15 : vector<2x12x12x3xf32>
    %cst_8 = arith.constant 4.45424747 : f32
    %17 = vector.broadcast %cst_8 : f32 to vector<2x1x1x3xf32>
    %18 = arith.minimumf %8, %17 : vector<2x1x1x3xf32>
    %cst_9 = arith.constant 9.99999974E-6 : f32
    %19 = vector.broadcast %cst_9 : f32 to vector<2x1x1x3xf32>
    %20 = arith.maximumf %18, %19 : vector<2x1x1x3xf32>
    %cst_10 = arith.constant 0.223606795 : f32
    %21 = vector.broadcast %cst_10 : f32 to vector<2x1x1x3xf32>
    %22 = arith.mulf %21, %20 : vector<2x1x1x3xf32>
    %cst_11 = arith.constant -0.999989986 : f32
    %cst_12 = arith.constant 0.999989986 : f32
    %23 = vector.broadcast %cst_11 : f32 to vector<2x1x1x3xf32>
    %24 = arith.maximumf %23, %22 : vector<2x1x1x3xf32>
    %25 = vector.broadcast %cst_12 : f32 to vector<2x1x1x3xf32>
    %26 = arith.minimumf %25, %24 : vector<2x1x1x3xf32>
    %cst_13 = arith.constant 1.000000e+00 : f32
    %27 = vector.broadcast %cst_13 : f32 to vector<2x1x1x3xf32>
    %28 = arith.addf %27, %26 : vector<2x1x1x3xf32>
    %cst_14 = arith.constant 1.000000e+00 : f32
    %29 = vector.broadcast %cst_14 : f32 to vector<2x1x1x3xf32>
    %30 = arith.subf %29, %26 : vector<2x1x1x3xf32>
    %31 = arith.divf %28, %30 : vector<2x1x1x3xf32>
    %32 = math.log %31 : vector<2x1x1x3xf32>
    %cst_15 = arith.constant 5.000000e-01 : f32
    %33 = vector.broadcast %cst_15 : f32 to vector<2x1x1x3xf32>
    %34 = arith.mulf %33, %32 : vector<2x1x1x3xf32>
    %cst_16 = arith.constant 0.223606795 : f32
    %35 = vector.broadcast %cst_16 : f32 to vector<2x1x1x3xf32>
    %36 = arith.mulf %35, %20 : vector<2x1x1x3xf32>
    %37 = arith.divf %34, %36 : vector<2x1x1x3xf32>
    %38 = vector.broadcast %37 : vector<2x1x1x3xf32> to vector<2x12x12x3xf32>
    %39 = arith.mulf %16, %38 : vector<2x12x12x3xf32>
    %c0_17 = arith.constant 0 : index
    %c0_18 = arith.constant 0 : index
    %c0_19 = arith.constant 0 : index
    %c0_20 = arith.constant 0 : index
    %40 = vector.load %arg2[%c0_17, %c0_18, %c0_19, %c0_20] : memref<3x3x3x64xf32, #tpu.memory_space<vmem>>, vector<3x3x3x64xf32>
    %cst_21 = arith.constant 0.000000e+00 : f32
    %41 = vector.broadcast %cst_21 : f32 to vector<2x10x10x64xf32>
    %42 = vector.extract_strided_slice %39 {offsets = [0, 0, 0, 0], sizes = [2, 10, 10, 1], strides = [1, 1, 1, 1]} : vector<2x12x12x3xf32> to vector<2x10x10x1xf32>
    %43 = vector.extract_strided_slice %40 {offsets = [0, 0, 0, 0], sizes = [1, 1, 1, 64], strides = [1, 1, 1, 1]} : vector<3x3x3x64xf32> to vector<1x1x1x64xf32>
    %44 = vector.shape_cast %43 : vector<1x1x1x64xf32> to vector<1x64xf32>
    %45 = vector.shape_cast %44 : vector<1x64xf32> to vector<1x1x1x64xf32>
    %46 = vector.broadcast %42 : vector<2x10x10x1xf32> to vector<2x10x10x64xf32>
    %47 = vector.broadcast %45 : vector<1x1x1x64xf32> to vector<2x10x10x64xf32>
    %48 = arith.mulf %46, %47 : vector<2x10x10x64xf32>
    %49 = arith.addf %41, %48 : vector<2x10x10x64xf32>
    %50 = vector.extract_strided_slice %39 {offsets = [0, 0, 0, 1], sizes = [2, 10, 10, 1], strides = [1, 1, 1, 1]} : vector<2x12x12x3xf32> to vector<2x10x10x1xf32>
    %51 = vector.extract_strided_slice %40 {offsets = [0, 0, 1, 0], sizes = [1, 1, 1, 64], strides = [1, 1, 1, 1]} : vector<3x3x3x64xf32> to vector<1x1x1x64xf32>
    %52 = vector.shape_cast %51 : vector<1x1x1x64xf32> to vector<1x64xf32>
    %53 = vector.shape_cast %52 : vector<1x64xf32> to vector<1x1x1x64xf32>
    %54 = vector.broadcast %50 : vector<2x10x10x1xf32> to vector<2x10x10x64xf32>
    %55 = vector.broadcast %53 : vector<1x1x1x64xf32> to vector<2x10x10x64xf32>
    %56 = arith.mulf %54, %55 : vector<2x10x10x64xf32>
    %57 = arith.addf %49, %56 : vector<2x10x10x64xf32>
    %58 = vector.extract_strided_slice %39 {offsets = [0, 0, 0, 2], sizes = [2, 10, 10, 1], strides = [1, 1, 1, 1]} : vector<2x12x12x3xf32> to vector<2x10x10x1xf32>
    %59 = vector.extract_strided_slice %40 {offsets = [0, 0, 2, 0], sizes = [1, 1, 1, 64], strides = [1, 1, 1, 1]} : vector<3x3x3x64xf32> to vector<1x1x1x64xf32>
    %60 = vector.shape_cast %59 : vector<1x1x1x64xf32> to vector<1x64xf32>
    %61 = vector.shape_cast %60 : vector<1x64xf32> to vector<1x1x1x64xf32>
    %62 = vector.broadcast %58 : vector<2x10x10x1xf32> to vector<2x10x10x64xf32>
    %63 = vector.broadcast %61 : vector<1x1x1x64xf32> to vector<2x10x10x64xf32>
    %64 = arith.mulf %62, %63 : vector<2x10x10x64xf32>
    %65 = arith.addf %57, %64 : vector<2x10x10x64xf32>
    %66 = vector.extract_strided_slice %39 {offsets = [0, 0, 1, 0], sizes = [2, 10, 10, 1], strides = [1, 1, 1, 1]} : vector<2x12x12x3xf32> to vector<2x10x10x1xf32>
    %67 = vector.extract_strided_slice %40 {offsets = [0, 1, 0, 0], sizes = [1, 1, 1, 64], strides = [1, 1, 1, 1]} : vector<3x3x3x64xf32> to vector<1x1x1x64xf32>
    %68 = vector.shape_cast %67 : vector<1x1x1x64xf32> to vector<1x64xf32>
    %69 = vector.shape_cast %68 : vector<1x64xf32> to vector<1x1x1x64xf32>
    %70 = vector.broadcast %66 : vector<2x10x10x1xf32> to vector<2x10x10x64xf32>
    %71 = vector.broadcast %69 : vector<1x1x1x64xf32> to vector<2x10x10x64xf32>
    %72 = arith.mulf %70, %71 : vector<2x10x10x64xf32>
    %73 = arith.addf %65, %72 : vector<2x10x10x64xf32>
    %74 = vector.extract_strided_slice %39 {offsets = [0, 0, 1, 1], sizes = [2, 10, 10, 1], strides = [1, 1, 1, 1]} : vector<2x12x12x3xf32> to vector<2x10x10x1xf32>
    %75 = vector.extract_strided_slice %40 {offsets = [0, 1, 1, 0], sizes = [1, 1, 1, 64], strides = [1, 1, 1, 1]} : vector<3x3x3x64xf32> to vector<1x1x1x64xf32>
    %76 = vector.shape_cast %75 : vector<1x1x1x64xf32> to vector<1x64xf32>
    %77 = vector.shape_cast %76 : vector<1x64xf32> to vector<1x1x1x64xf32>
    %78 = vector.broadcast %74 : vector<2x10x10x1xf32> to vector<2x10x10x64xf32>
    %79 = vector.broadcast %77 : vector<1x1x1x64xf32> to vector<2x10x10x64xf32>
    %80 = arith.mulf %78, %79 : vector<2x10x10x64xf32>
    %81 = arith.addf %73, %80 : vector<2x10x10x64xf32>
    %82 = vector.extract_strided_slice %39 {offsets = [0, 0, 1, 2], sizes = [2, 10, 10, 1], strides = [1, 1, 1, 1]} : vector<2x12x12x3xf32> to vector<2x10x10x1xf32>
    %83 = vector.extract_strided_slice %40 {offsets = [0, 1, 2, 0], sizes = [1, 1, 1, 64], strides = [1, 1, 1, 1]} : vector<3x3x3x64xf32> to vector<1x1x1x64xf32>
    %84 = vector.shape_cast %83 : vector<1x1x1x64xf32> to vector<1x64xf32>
    %85 = vector.shape_cast %84 : vector<1x64xf32> to vector<1x1x1x64xf32>
    %86 = vector.broadcast %82 : vector<2x10x10x1xf32> to vector<2x10x10x64xf32>
    %87 = vector.broadcast %85 : vector<1x1x1x64xf32> to vector<2x10x10x64xf32>
    %88 = arith.mulf %86, %87 : vector<2x10x10x64xf32>
    %89 = arith.addf %81, %88 : vector<2x10x10x64xf32>
    %90 = vector.extract_strided_slice %39 {offsets = [0, 0, 2, 0], sizes = [2, 10, 10, 1], strides = [1, 1, 1, 1]} : vector<2x12x12x3xf32> to vector<2x10x10x1xf32>
    %91 = vector.extract_strided_slice %40 {offsets = [0, 2, 0, 0], sizes = [1, 1, 1, 64], strides = [1, 1, 1, 1]} : vector<3x3x3x64xf32> to vector<1x1x1x64xf32>
    %92 = vector.shape_cast %91 : vector<1x1x1x64xf32> to vector<1x64xf32>
    %93 = vector.shape_cast %92 : vector<1x64xf32> to vector<1x1x1x64xf32>
    %94 = vector.broadcast %90 : vector<2x10x10x1xf32> to vector<2x10x10x64xf32>
    %95 = vector.broadcast %93 : vector<1x1x1x64xf32> to vector<2x10x10x64xf32>
    %96 = arith.mulf %94, %95 : vector<2x10x10x64xf32>
    %97 = arith.addf %89, %96 : vector<2x10x10x64xf32>
    %98 = vector.extract_strided_slice %39 {offsets = [0, 0, 2, 1], sizes = [2, 10, 10, 1], strides = [1, 1, 1, 1]} : vector<2x12x12x3xf32> to vector<2x10x10x1xf32>
    %99 = vector.extract_strided_slice %40 {offsets = [0, 2, 1, 0], sizes = [1, 1, 1, 64], strides = [1, 1, 1, 1]} : vector<3x3x3x64xf32> to vector<1x1x1x64xf32>
    %100 = vector.shape_cast %99 : vector<1x1x1x64xf32> to vector<1x64xf32>
    %101 = vector.shape_cast %100 : vector<1x64xf32> to vector<1x1x1x64xf32>
    %102 = vector.broadcast %98 : vector<2x10x10x1xf32> to vector<2x10x10x64xf32>
    %103 = vector.broadcast %101 : vector<1x1x1x64xf32> to vector<2x10x10x64xf32>
    %104 = arith.mulf %102, %103 : vector<2x10x10x64xf32>
    %105 = arith.addf %97, %104 : vector<2x10x10x64xf32>
    %106 = vector.extract_strided_slice %39 {offsets = [0, 0, 2, 2], sizes = [2, 10, 10, 1], strides = [1, 1, 1, 1]} : vector<2x12x12x3xf32> to vector<2x10x10x1xf32>
    %107 = vector.extract_strided_slice %40 {offsets = [0, 2, 2, 0], sizes = [1, 1, 1, 64], strides = [1, 1, 1, 1]} : vector<3x3x3x64xf32> to vector<1x1x1x64xf32>
    %108 = vector.shape_cast %107 : vector<1x1x1x64xf32> to vector<1x64xf32>
    %109 = vector.shape_cast %108 : vector<1x64xf32> to vector<1x1x1x64xf32>
    %110 = vector.broadcast %106 : vector<2x10x10x1xf32> to vector<2x10x10x64xf32>
    %111 = vector.broadcast %109 : vector<1x1x1x64xf32> to vector<2x10x10x64xf32>
    %112 = arith.mulf %110, %111 : vector<2x10x10x64xf32>
    %113 = arith.addf %105, %112 : vector<2x10x10x64xf32>
    %114 = vector.extract_strided_slice %39 {offsets = [0, 1, 0, 0], sizes = [2, 10, 10, 1], strides = [1, 1, 1, 1]} : vector<2x12x12x3xf32> to vector<2x10x10x1xf32>
    %115 = vector.extract_strided_slice %40 {offsets = [1, 0, 0, 0], sizes = [1, 1, 1, 64], strides = [1, 1, 1, 1]} : vector<3x3x3x64xf32> to vector<1x1x1x64xf32>
    %116 = vector.shape_cast %115 : vector<1x1x1x64xf32> to vector<1x64xf32>
    %117 = vector.shape_cast %116 : vector<1x64xf32> to vector<1x1x1x64xf32>
    %118 = vector.broadcast %114 : vector<2x10x10x1xf32> to vector<2x10x10x64xf32>
    %119 = vector.broadcast %117 : vector<1x1x1x64xf32> to vector<2x10x10x64xf32>
    %120 = arith.mulf %118, %119 : vector<2x10x10x64xf32>
    %121 = arith.addf %113, %120 : vector<2x10x10x64xf32>
    %122 = vector.extract_strided_slice %39 {offsets = [0, 1, 0, 1], sizes = [2, 10, 10, 1], strides = [1, 1, 1, 1]} : vector<2x12x12x3xf32> to vector<2x10x10x1xf32>
    %123 = vector.extract_strided_slice %40 {offsets = [1, 0, 1, 0], sizes = [1, 1, 1, 64], strides = [1, 1, 1, 1]} : vector<3x3x3x64xf32> to vector<1x1x1x64xf32>
    %124 = vector.shape_cast %123 : vector<1x1x1x64xf32> to vector<1x64xf32>
    %125 = vector.shape_cast %124 : vector<1x64xf32> to vector<1x1x1x64xf32>
    %126 = vector.broadcast %122 : vector<2x10x10x1xf32> to vector<2x10x10x64xf32>
    %127 = vector.broadcast %125 : vector<1x1x1x64xf32> to vector<2x10x10x64xf32>
    %128 = arith.mulf %126, %127 : vector<2x10x10x64xf32>
    %129 = arith.addf %121, %128 : vector<2x10x10x64xf32>
    %130 = vector.extract_strided_slice %39 {offsets = [0, 1, 0, 2], sizes = [2, 10, 10, 1], strides = [1, 1, 1, 1]} : vector<2x12x12x3xf32> to vector<2x10x10x1xf32>
    %131 = vector.extract_strided_slice %40 {offsets = [1, 0, 2, 0], sizes = [1, 1, 1, 64], strides = [1, 1, 1, 1]} : vector<3x3x3x64xf32> to vector<1x1x1x64xf32>
    %132 = vector.shape_cast %131 : vector<1x1x1x64xf32> to vector<1x64xf32>
    %133 = vector.shape_cast %132 : vector<1x64xf32> to vector<1x1x1x64xf32>
    %134 = vector.broadcast %130 : vector<2x10x10x1xf32> to vector<2x10x10x64xf32>
    %135 = vector.broadcast %133 : vector<1x1x1x64xf32> to vector<2x10x10x64xf32>
    %136 = arith.mulf %134, %135 : vector<2x10x10x64xf32>
    %137 = arith.addf %129, %136 : vector<2x10x10x64xf32>
    %138 = vector.extract_strided_slice %39 {offsets = [0, 1, 1, 0], sizes = [2, 10, 10, 1], strides = [1, 1, 1, 1]} : vector<2x12x12x3xf32> to vector<2x10x10x1xf32>
    %139 = vector.extract_strided_slice %40 {offsets = [1, 1, 0, 0], sizes = [1, 1, 1, 64], strides = [1, 1, 1, 1]} : vector<3x3x3x64xf32> to vector<1x1x1x64xf32>
    %140 = vector.shape_cast %139 : vector<1x1x1x64xf32> to vector<1x64xf32>
    %141 = vector.shape_cast %140 : vector<1x64xf32> to vector<1x1x1x64xf32>
    %142 = vector.broadcast %138 : vector<2x10x10x1xf32> to vector<2x10x10x64xf32>
    %143 = vector.broadcast %141 : vector<1x1x1x64xf32> to vector<2x10x10x64xf32>
    %144 = arith.mulf %142, %143 : vector<2x10x10x64xf32>
    %145 = arith.addf %137, %144 : vector<2x10x10x64xf32>
    %146 = vector.extract_strided_slice %39 {offsets = [0, 1, 1, 1], sizes = [2, 10, 10, 1], strides = [1, 1, 1, 1]} : vector<2x12x12x3xf32> to vector<2x10x10x1xf32>
    %147 = vector.extract_strided_slice %40 {offsets = [1, 1, 1, 0], sizes = [1, 1, 1, 64], strides = [1, 1, 1, 1]} : vector<3x3x3x64xf32> to vector<1x1x1x64xf32>
    %148 = vector.shape_cast %147 : vector<1x1x1x64xf32> to vector<1x64xf32>
    %149 = vector.shape_cast %148 : vector<1x64xf32> to vector<1x1x1x64xf32>
    %150 = vector.broadcast %146 : vector<2x10x10x1xf32> to vector<2x10x10x64xf32>
    %151 = vector.broadcast %149 : vector<1x1x1x64xf32> to vector<2x10x10x64xf32>
    %152 = arith.mulf %150, %151 : vector<2x10x10x64xf32>
    %153 = arith.addf %145, %152 : vector<2x10x10x64xf32>
    %154 = vector.extract_strided_slice %39 {offsets = [0, 1, 1, 2], sizes = [2, 10, 10, 1], strides = [1, 1, 1, 1]} : vector<2x12x12x3xf32> to vector<2x10x10x1xf32>
    %155 = vector.extract_strided_slice %40 {offsets = [1, 1, 2, 0], sizes = [1, 1, 1, 64], strides = [1, 1, 1, 1]} : vector<3x3x3x64xf32> to vector<1x1x1x64xf32>
    %156 = vector.shape_cast %155 : vector<1x1x1x64xf32> to vector<1x64xf32>
    %157 = vector.shape_cast %156 : vector<1x64xf32> to vector<1x1x1x64xf32>
    %158 = vector.broadcast %154 : vector<2x10x10x1xf32> to vector<2x10x10x64xf32>
    %159 = vector.broadcast %157 : vector<1x1x1x64xf32> to vector<2x10x10x64xf32>
    %160 = arith.mulf %158, %159 : vector<2x10x10x64xf32>
    %161 = arith.addf %153, %160 : vector<2x10x10x64xf32>
    %162 = vector.extract_strided_slice %39 {offsets = [0, 1, 2, 0], sizes = [2, 10, 10, 1], strides = [1, 1, 1, 1]} : vector<2x12x12x3xf32> to vector<2x10x10x1xf32>
    %163 = vector.extract_strided_slice %40 {offsets = [1, 2, 0, 0], sizes = [1, 1, 1, 64], strides = [1, 1, 1, 1]} : vector<3x3x3x64xf32> to vector<1x1x1x64xf32>
    %164 = vector.shape_cast %163 : vector<1x1x1x64xf32> to vector<1x64xf32>
    %165 = vector.shape_cast %164 : vector<1x64xf32> to vector<1x1x1x64xf32>
    %166 = vector.broadcast %162 : vector<2x10x10x1xf32> to vector<2x10x10x64xf32>
    %167 = vector.broadcast %165 : vector<1x1x1x64xf32> to vector<2x10x10x64xf32>
    %168 = arith.mulf %166, %167 : vector<2x10x10x64xf32>
    %169 = arith.addf %161, %168 : vector<2x10x10x64xf32>
    %170 = vector.extract_strided_slice %39 {offsets = [0, 1, 2, 1], sizes = [2, 10, 10, 1], strides = [1, 1, 1, 1]} : vector<2x12x12x3xf32> to vector<2x10x10x1xf32>
    %171 = vector.extract_strided_slice %40 {offsets = [1, 2, 1, 0], sizes = [1, 1, 1, 64], strides = [1, 1, 1, 1]} : vector<3x3x3x64xf32> to vector<1x1x1x64xf32>
    %172 = vector.shape_cast %171 : vector<1x1x1x64xf32> to vector<1x64xf32>
    %173 = vector.shape_cast %172 : vector<1x64xf32> to vector<1x1x1x64xf32>
    %174 = vector.broadcast %170 : vector<2x10x10x1xf32> to vector<2x10x10x64xf32>
    %175 = vector.broadcast %173 : vector<1x1x1x64xf32> to vector<2x10x10x64xf32>
    %176 = arith.mulf %174, %175 : vector<2x10x10x64xf32>
    %177 = arith.addf %169, %176 : vector<2x10x10x64xf32>
    %178 = vector.extract_strided_slice %39 {offsets = [0, 1, 2, 2], sizes = [2, 10, 10, 1], strides = [1, 1, 1, 1]} : vector<2x12x12x3xf32> to vector<2x10x10x1xf32>
    %179 = vector.extract_strided_slice %40 {offsets = [1, 2, 2, 0], sizes = [1, 1, 1, 64], strides = [1, 1, 1, 1]} : vector<3x3x3x64xf32> to vector<1x1x1x64xf32>
    %180 = vector.shape_cast %179 : vector<1x1x1x64xf32> to vector<1x64xf32>
    %181 = vector.shape_cast %180 : vector<1x64xf32> to vector<1x1x1x64xf32>
    %182 = vector.broadcast %178 : vector<2x10x10x1xf32> to vector<2x10x10x64xf32>
    %183 = vector.broadcast %181 : vector<1x1x1x64xf32> to vector<2x10x10x64xf32>
    %184 = arith.mulf %182, %183 : vector<2x10x10x64xf32>
    %185 = arith.addf %177, %184 : vector<2x10x10x64xf32>
    %186 = vector.extract_strided_slice %39 {offsets = [0, 2, 0, 0], sizes = [2, 10, 10, 1], strides = [1, 1, 1, 1]} : vector<2x12x12x3xf32> to vector<2x10x10x1xf32>
    %187 = vector.extract_strided_slice %40 {offsets = [2, 0, 0, 0], sizes = [1, 1, 1, 64], strides = [1, 1, 1, 1]} : vector<3x3x3x64xf32> to vector<1x1x1x64xf32>
    %188 = vector.shape_cast %187 : vector<1x1x1x64xf32> to vector<1x64xf32>
    %189 = vector.shape_cast %188 : vector<1x64xf32> to vector<1x1x1x64xf32>
    %190 = vector.broadcast %186 : vector<2x10x10x1xf32> to vector<2x10x10x64xf32>
    %191 = vector.broadcast %189 : vector<1x1x1x64xf32> to vector<2x10x10x64xf32>
    %192 = arith.mulf %190, %191 : vector<2x10x10x64xf32>
    %193 = arith.addf %185, %192 : vector<2x10x10x64xf32>
    %194 = vector.extract_strided_slice %39 {offsets = [0, 2, 0, 1], sizes = [2, 10, 10, 1], strides = [1, 1, 1, 1]} : vector<2x12x12x3xf32> to vector<2x10x10x1xf32>
    %195 = vector.extract_strided_slice %40 {offsets = [2, 0, 1, 0], sizes = [1, 1, 1, 64], strides = [1, 1, 1, 1]} : vector<3x3x3x64xf32> to vector<1x1x1x64xf32>
    %196 = vector.shape_cast %195 : vector<1x1x1x64xf32> to vector<1x64xf32>
    %197 = vector.shape_cast %196 : vector<1x64xf32> to vector<1x1x1x64xf32>
    %198 = vector.broadcast %194 : vector<2x10x10x1xf32> to vector<2x10x10x64xf32>
    %199 = vector.broadcast %197 : vector<1x1x1x64xf32> to vector<2x10x10x64xf32>
    %200 = arith.mulf %198, %199 : vector<2x10x10x64xf32>
    %201 = arith.addf %193, %200 : vector<2x10x10x64xf32>
    %202 = vector.extract_strided_slice %39 {offsets = [0, 2, 0, 2], sizes = [2, 10, 10, 1], strides = [1, 1, 1, 1]} : vector<2x12x12x3xf32> to vector<2x10x10x1xf32>
    %203 = vector.extract_strided_slice %40 {offsets = [2, 0, 2, 0], sizes = [1, 1, 1, 64], strides = [1, 1, 1, 1]} : vector<3x3x3x64xf32> to vector<1x1x1x64xf32>
    %204 = vector.shape_cast %203 : vector<1x1x1x64xf32> to vector<1x64xf32>
    %205 = vector.shape_cast %204 : vector<1x64xf32> to vector<1x1x1x64xf32>
    %206 = vector.broadcast %202 : vector<2x10x10x1xf32> to vector<2x10x10x64xf32>
    %207 = vector.broadcast %205 : vector<1x1x1x64xf32> to vector<2x10x10x64xf32>
    %208 = arith.mulf %206, %207 : vector<2x10x10x64xf32>
    %209 = arith.addf %201, %208 : vector<2x10x10x64xf32>
    %210 = vector.extract_strided_slice %39 {offsets = [0, 2, 1, 0], sizes = [2, 10, 10, 1], strides = [1, 1, 1, 1]} : vector<2x12x12x3xf32> to vector<2x10x10x1xf32>
    %211 = vector.extract_strided_slice %40 {offsets = [2, 1, 0, 0], sizes = [1, 1, 1, 64], strides = [1, 1, 1, 1]} : vector<3x3x3x64xf32> to vector<1x1x1x64xf32>
    %212 = vector.shape_cast %211 : vector<1x1x1x64xf32> to vector<1x64xf32>
    %213 = vector.shape_cast %212 : vector<1x64xf32> to vector<1x1x1x64xf32>
    %214 = vector.broadcast %210 : vector<2x10x10x1xf32> to vector<2x10x10x64xf32>
    %215 = vector.broadcast %213 : vector<1x1x1x64xf32> to vector<2x10x10x64xf32>
    %216 = arith.mulf %214, %215 : vector<2x10x10x64xf32>
    %217 = arith.addf %209, %216 : vector<2x10x10x64xf32>
    %218 = vector.extract_strided_slice %39 {offsets = [0, 2, 1, 1], sizes = [2, 10, 10, 1], strides = [1, 1, 1, 1]} : vector<2x12x12x3xf32> to vector<2x10x10x1xf32>
    %219 = vector.extract_strided_slice %40 {offsets = [2, 1, 1, 0], sizes = [1, 1, 1, 64], strides = [1, 1, 1, 1]} : vector<3x3x3x64xf32> to vector<1x1x1x64xf32>
    %220 = vector.shape_cast %219 : vector<1x1x1x64xf32> to vector<1x64xf32>
    %221 = vector.shape_cast %220 : vector<1x64xf32> to vector<1x1x1x64xf32>
    %222 = vector.broadcast %218 : vector<2x10x10x1xf32> to vector<2x10x10x64xf32>
    %223 = vector.broadcast %221 : vector<1x1x1x64xf32> to vector<2x10x10x64xf32>
    %224 = arith.mulf %222, %223 : vector<2x10x10x64xf32>
    %225 = arith.addf %217, %224 : vector<2x10x10x64xf32>
    %226 = vector.extract_strided_slice %39 {offsets = [0, 2, 1, 2], sizes = [2, 10, 10, 1], strides = [1, 1, 1, 1]} : vector<2x12x12x3xf32> to vector<2x10x10x1xf32>
    %227 = vector.extract_strided_slice %40 {offsets = [2, 1, 2, 0], sizes = [1, 1, 1, 64], strides = [1, 1, 1, 1]} : vector<3x3x3x64xf32> to vector<1x1x1x64xf32>
    %228 = vector.shape_cast %227 : vector<1x1x1x64xf32> to vector<1x64xf32>
    %229 = vector.shape_cast %228 : vector<1x64xf32> to vector<1x1x1x64xf32>
    %230 = vector.broadcast %226 : vector<2x10x10x1xf32> to vector<2x10x10x64xf32>
    %231 = vector.broadcast %229 : vector<1x1x1x64xf32> to vector<2x10x10x64xf32>
    %232 = arith.mulf %230, %231 : vector<2x10x10x64xf32>
    %233 = arith.addf %225, %232 : vector<2x10x10x64xf32>
    %234 = vector.extract_strided_slice %39 {offsets = [0, 2, 2, 0], sizes = [2, 10, 10, 1], strides = [1, 1, 1, 1]} : vector<2x12x12x3xf32> to vector<2x10x10x1xf32>
    %235 = vector.extract_strided_slice %40 {offsets = [2, 2, 0, 0], sizes = [1, 1, 1, 64], strides = [1, 1, 1, 1]} : vector<3x3x3x64xf32> to vector<1x1x1x64xf32>
    %236 = vector.shape_cast %235 : vector<1x1x1x64xf32> to vector<1x64xf32>
    %237 = vector.shape_cast %236 : vector<1x64xf32> to vector<1x1x1x64xf32>
    %238 = vector.broadcast %234 : vector<2x10x10x1xf32> to vector<2x10x10x64xf32>
    %239 = vector.broadcast %237 : vector<1x1x1x64xf32> to vector<2x10x10x64xf32>
    %240 = arith.mulf %238, %239 : vector<2x10x10x64xf32>
    %241 = arith.addf %233, %240 : vector<2x10x10x64xf32>
    %242 = vector.extract_strided_slice %39 {offsets = [0, 2, 2, 1], sizes = [2, 10, 10, 1], strides = [1, 1, 1, 1]} : vector<2x12x12x3xf32> to vector<2x10x10x1xf32>
    %243 = vector.extract_strided_slice %40 {offsets = [2, 2, 1, 0], sizes = [1, 1, 1, 64], strides = [1, 1, 1, 1]} : vector<3x3x3x64xf32> to vector<1x1x1x64xf32>
    %244 = vector.shape_cast %243 : vector<1x1x1x64xf32> to vector<1x64xf32>
    %245 = vector.shape_cast %244 : vector<1x64xf32> to vector<1x1x1x64xf32>
    %246 = vector.broadcast %242 : vector<2x10x10x1xf32> to vector<2x10x10x64xf32>
    %247 = vector.broadcast %245 : vector<1x1x1x64xf32> to vector<2x10x10x64xf32>
    %248 = arith.mulf %246, %247 : vector<2x10x10x64xf32>
    %249 = arith.addf %241, %248 : vector<2x10x10x64xf32>
    %250 = vector.extract_strided_slice %39 {offsets = [0, 2, 2, 2], sizes = [2, 10, 10, 1], strides = [1, 1, 1, 1]} : vector<2x12x12x3xf32> to vector<2x10x10x1xf32>
    %251 = vector.extract_strided_slice %40 {offsets = [2, 2, 2, 0], sizes = [1, 1, 1, 64], strides = [1, 1, 1, 1]} : vector<3x3x3x64xf32> to vector<1x1x1x64xf32>
    %252 = vector.shape_cast %251 : vector<1x1x1x64xf32> to vector<1x64xf32>
    %253 = vector.shape_cast %252 : vector<1x64xf32> to vector<1x1x1x64xf32>
    %254 = vector.broadcast %250 : vector<2x10x10x1xf32> to vector<2x10x10x64xf32>
    %255 = vector.broadcast %253 : vector<1x1x1x64xf32> to vector<2x10x10x64xf32>
    %256 = arith.mulf %254, %255 : vector<2x10x10x64xf32>
    %257 = arith.addf %249, %256 : vector<2x10x10x64xf32>
    %c0_22 = arith.constant 0 : index
    %c0_23 = arith.constant 0 : index
    %258 = vector.load %arg3[%c0_22, %c0_23] : memref<1x64xf32, #tpu.memory_space<vmem>>, vector<1x64xf32>
    %259 = vector.shape_cast %258 : vector<1x64xf32> to vector<1x1x1x64xf32>
    %260 = vector.broadcast %259 : vector<1x1x1x64xf32> to vector<2x10x10x64xf32>
    %261 = arith.addf %257, %260 : vector<2x10x10x64xf32>
    %262 = arith.truncf %261 : vector<2x10x10x64xf32> to vector<2x10x10x64xbf16>
    %c0_24 = arith.constant 0 : index
    %c0_25 = arith.constant 0 : index
    %c0_26 = arith.constant 0 : index
    %c0_27 = arith.constant 0 : index
    %263 = vector.load %arg4[%c0_24, %c0_25, %c0_26, %c0_27] : memref<2x10x10x64xbf16, #tpu.memory_space<vmem>>, vector<2x10x10x64xbf16>
    tpu.vector_store %arg4[%c0_24, %c0_25, %c0_26, %c0_27], %262 {strides = array<i32>} : memref<2x10x10x64xbf16, #tpu.memory_space<vmem>>, vector<2x10x10x64xbf16>,
    %cst_28 = arith.constant dense<0.000000e+00> : vector<2x10x64xf32>
    %264 = vector.multi_reduction <add>, %261, %cst_28 [1] : vector<2x10x10x64xf32> to vector<2x10x64xf32>
    %265 = vector.shape_cast %264 : vector<2x10x64xf32> to vector<2x1x10x64xf32>
    %cst_29 = arith.constant dense<0.000000e+00> : vector<2x1x64xf32>
    %266 = vector.multi_reduction <add>, %265, %cst_29 [2] : vector<2x1x10x64xf32> to vector<2x1x64xf32>
    %267 = vector.shape_cast %266 : vector<2x1x64xf32> to vector<2x1x1x64xf32>
    %268 = arith.mulf %261, %261 : vector<2x10x10x64xf32>
    %cst_30 = arith.constant dense<0.000000e+00> : vector<2x10x64xf32>
    %269 = vector.multi_reduction <add>, %268, %cst_30 [1] : vector<2x10x10x64xf32> to vector<2x10x64xf32>
    %270 = vector.shape_cast %269 : vector<2x10x64xf32> to vector<2x1x10x64xf32>
    %cst_31 = arith.constant dense<0.000000e+00> : vector<2x1x64xf32>
    %271 = vector.multi_reduction <add>, %270, %cst_31 [2] : vector<2x1x10x64xf32> to vector<2x1x64xf32>
    %272 = vector.shape_cast %271 : vector<2x1x64xf32> to vector<2x1x1x64xf32>
    %c0_32 = arith.constant 0 : index
    %c0_33 = arith.constant 0 : index
    %c0_34 = arith.constant 0 : index
    %c0_35 = arith.constant 0 : index
    %273 = vector.load %arg5[%c0_32, %c0_33, %c0_34, %c0_35] : memref<2x1x1x64xf32, #tpu.memory_space<vmem>>, vector<2x1x1x64xf32>
    tpu.vector_store %arg5[%c0_32, %c0_33, %c0_34, %c0_35], %267 {strides = array<i32>} : memref<2x1x1x64xf32, #tpu.memory_space<vmem>>, vector<2x1x1x64xf32>,
    %c0_36 = arith.constant 0 : index
    %c0_37 = arith.constant 0 : index
    %c0_38 = arith.constant 0 : index
    %c0_39 = arith.constant 0 : index
    %274 = vector.load %arg6[%c0_36, %c0_37, %c0_38, %c0_39] : memref<2x1x1x64xf32, #tpu.memory_space<vmem>>, vector<2x1x1x64xf32>
    tpu.vector_store %arg6[%c0_36, %c0_37, %c0_38, %c0_39], %272 {strides = array<i32>} : memref<2x1x1x64xf32, #tpu.memory_space<vmem>>, vector<2x1x1x64xf32>,
    return
  }
  func.func @transform_0(%arg0: i32) -> (i32, i32, i32, i32) {
    %c0_i32 = arith.constant 0 : i32
    %c0_i32_0 = arith.constant 0 : i32
    %c0_i32_1 = arith.constant 0 : i32
    %c0_i32_2 = arith.constant 0 : i32
    return %arg0, %c0_i32, %c0_i32_0, %c0_i32_1 : i32, i32, i32, i32
  }
  func.func @transform_1(%arg0: i32) -> (i32, i32, i32, i32) {
    %c0_i32 = arith.constant 0 : i32
    %c0_i32_0 = arith.constant 0 : i32
    %c0_i32_1 = arith.constant 0 : i32
    %c0_i32_2 = arith.constant 0 : i32
    %c0_i32_3 = arith.constant 0 : i32
    return %c0_i32, %c0_i32_0, %c0_i32_1, %c0_i32_2 : i32, i32, i32, i32
  }
  func.func @transform_2(%arg0: i32) -> (i32, i32) {
    %c0_i32 = arith.constant 0 : i32
    %c0_i32_0 = arith.constant 0 : i32
    %c0_i32_1 = arith.constant 0 : i32
    return %c0_i32, %c0_i32_0 : i32, i32
  }
  func.func @transform_3(%arg0: i32) -> (i32, i32, i32, i32) {
    %c0_i32 = arith.constant 0 : i32
    %c0_i32_0 = arith.constant 0 : i32
    %c0_i32_1 = arith.constant 0 : i32
    %c0_i32_2 = arith.constant 0 : i32
    return %arg0, %c0_i32, %c0_i32_0, %c0_i32_1 : i32, i32, i32, i32
  }
  func.func @transform_4(%arg0: i32) -> (i32, i32, i32, i32) {
    %c0_i32 = arith.constant 0 : i32
    %c0_i32_0 = arith.constant 0 : i32
    %c0_i32_1 = arith.constant 0 : i32
    %c0_i32_2 = arith.constant 0 : i32
    return %arg0, %c0_i32, %c0_i32_0, %c0_i32_1 : i32, i32, i32, i32
  }
  func.func @transform_5(%arg0: i32) -> (i32, i32, i32, i32) {
    %c0_i32 = arith.constant 0 : i32
    %c0_i32_0 = arith.constant 0 : i32
    %c0_i32_1 = arith.constant 0 : i32
    %c0_i32_2 = arith.constant 0 : i32
    return %arg0, %c0_i32, %c0_i32_0, %c0_i32_1 : i32, i32, i32, i32
  }
}

module attributes {stable_mosaic.version = 11 : i64} {
  func.func @_tail_kernel(%arg0: i32, %arg1: memref<2x4x5x5x64xbf16, #tpu.memory_space<vmem>>, %arg2: memref<1x64xf32, #tpu.memory_space<vmem>>, %arg3: memref<1x64xf32, #tpu.memory_space<vmem>>, %arg4: memref<2x1x1x64xf32, #tpu.memory_space<vmem>>) attributes {dimension_semantics = [#tpu.dimension_semantics<parallel>], iteration_bounds = array<i64: 1>, scalar_prefetch = 0 : i64, scratch_operands = 0 : i64, tpu.core_type = #tpu.core_type<tc>, window_params = [{transform_indices = @transform_0, window_bounds = array<i64: 2, 4, 5, 5, 64>}, {pipeline_mode = #tpu.pipeline_mode<synchronous>, transform_indices = @transform_1, window_bounds = array<i64: 1, 64>}, {pipeline_mode = #tpu.pipeline_mode<synchronous>, transform_indices = @transform_2, window_bounds = array<i64: 1, 64>}, {transform_indices = @transform_3, window_bounds = array<i64: 2, 1, 1, 64>}]} {
    %c0 = arith.constant 0 : index
    %c0_0 = arith.constant 0 : index
    %c0_1 = arith.constant 0 : index
    %c0_2 = arith.constant 0 : index
    %c0_3 = arith.constant 0 : index
    %0 = vector.load %arg1[%c0, %c0_0, %c0_1, %c0_2, %c0_3] : memref<2x4x5x5x64xbf16, #tpu.memory_space<vmem>>, vector<2x4x5x5x64xbf16>
    %1 = arith.extf %0 : vector<2x4x5x5x64xbf16> to vector<2x4x5x5x64xf32>
    %c0_4 = arith.constant 0 : index
    %c0_5 = arith.constant 0 : index
    %2 = vector.load %arg2[%c0_4, %c0_5] : memref<1x64xf32, #tpu.memory_space<vmem>>, vector<1x64xf32>
    %3 = vector.shape_cast %2 : vector<1x64xf32> to vector<1x1x1x1x64xf32>
    %4 = vector.broadcast %3 : vector<1x1x1x1x64xf32> to vector<2x4x5x5x64xf32>
    %5 = arith.mulf %1, %4 : vector<2x4x5x5x64xf32>
    %c0_6 = arith.constant 0 : index
    %c0_7 = arith.constant 0 : index
    %6 = vector.load %arg3[%c0_6, %c0_7] : memref<1x64xf32, #tpu.memory_space<vmem>>, vector<1x64xf32>
    %7 = vector.shape_cast %6 : vector<1x64xf32> to vector<1x1x1x1x64xf32>
    %8 = vector.broadcast %7 : vector<1x1x1x1x64xf32> to vector<2x4x5x5x64xf32>
    %9 = arith.addf %5, %8 : vector<2x4x5x5x64xf32>
    %10 = arith.mulf %9, %9 : vector<2x4x5x5x64xf32>
    %cst = arith.constant dense<0.000000e+00> : vector<2x5x5x64xf32>
    %11 = vector.multi_reduction <add>, %10, %cst [1] : vector<2x4x5x5x64xf32> to vector<2x5x5x64xf32>
    %12 = vector.shape_cast %11 : vector<2x5x5x64xf32> to vector<2x1x5x5x64xf32>
    %cst_8 = arith.constant dense<0.000000e+00> : vector<2x1x5x64xf32>
    %13 = vector.multi_reduction <add>, %12, %cst_8 [2] : vector<2x1x5x5x64xf32> to vector<2x1x5x64xf32>
    %14 = vector.shape_cast %13 : vector<2x1x5x64xf32> to vector<2x1x1x5x64xf32>
    %cst_9 = arith.constant dense<0.000000e+00> : vector<2x1x1x64xf32>
    %15 = vector.multi_reduction <add>, %14, %cst_9 [3] : vector<2x1x1x5x64xf32> to vector<2x1x1x64xf32>
    %16 = vector.shape_cast %15 : vector<2x1x1x64xf32> to vector<2x1x1x1x64xf32>
    %17 = math.sqrt %16 : vector<2x1x1x1x64xf32>
    %cst_10 = arith.constant 9.99999974E-6 : f32
    %18 = vector.broadcast %cst_10 : f32 to vector<2x1x1x1x64xf32>
    %19 = arith.maximumf %17, %18 : vector<2x1x1x1x64xf32>
    %cst_11 = arith.constant 0.223606795 : f32
    %20 = vector.broadcast %cst_11 : f32 to vector<2x1x1x1x64xf32>
    %21 = arith.mulf %20, %19 : vector<2x1x1x1x64xf32>
    %22 = math.tanh %21 : vector<2x1x1x1x64xf32>
    %cst_12 = arith.constant 0.223606795 : f32
    %23 = vector.broadcast %cst_12 : f32 to vector<2x1x1x1x64xf32>
    %24 = arith.mulf %23, %19 : vector<2x1x1x1x64xf32>
    %25 = arith.divf %22, %24 : vector<2x1x1x1x64xf32>
    %26 = vector.broadcast %25 : vector<2x1x1x1x64xf32> to vector<2x4x5x5x64xf32>
    %27 = arith.mulf %9, %26 : vector<2x4x5x5x64xf32>
    %cst_13 = arith.constant 4.47213602 : f32
    %28 = vector.broadcast %cst_13 : f32 to vector<2x1x1x1x64xf32>
    %29 = arith.mulf %22, %28 : vector<2x1x1x1x64xf32>
    %cst_14 = arith.constant 9.99999974E-6 : f32
    %30 = vector.broadcast %cst_14 : f32 to vector<2x1x1x1x64xf32>
    %31 = arith.maximumf %29, %30 : vector<2x1x1x1x64xf32>
    %cst_15 = arith.constant 4.45424747 : f32
    %32 = vector.broadcast %cst_15 : f32 to vector<2x1x1x1x64xf32>
    %33 = arith.cmpf ogt, %31, %32 : vector<2x1x1x1x64xf32>
    %cst_16 = arith.constant 4.45424747 : f32
    %34 = vector.broadcast %cst_16 : f32 to vector<2x1x1x1x64xf32>
    %35 = arith.divf %34, %31 : vector<2x1x1x1x64xf32>
    %cst_17 = arith.constant 1.000000e+00 : f32
    %36 = vector.broadcast %cst_17 : f32 to vector<2x1x1x1x64xf32>
    %37 = arith.select %33, %35, %36 : vector<2x1x1x1x64xi1>, vector<2x1x1x1x64xf32>
    %38 = vector.broadcast %37 : vector<2x1x1x1x64xf32> to vector<2x4x5x5x64xf32>
    %39 = arith.mulf %27, %38 : vector<2x4x5x5x64xf32>
    %cst_18 = arith.constant 4.45424747 : f32
    %40 = vector.broadcast %cst_18 : f32 to vector<2x1x1x1x64xf32>
    %41 = arith.minimumf %31, %40 : vector<2x1x1x1x64xf32>
    %cst_19 = arith.constant 9.99999974E-6 : f32
    %42 = vector.broadcast %cst_19 : f32 to vector<2x1x1x1x64xf32>
    %43 = arith.maximumf %41, %42 : vector<2x1x1x1x64xf32>
    %cst_20 = arith.constant 0.223606795 : f32
    %44 = vector.broadcast %cst_20 : f32 to vector<2x1x1x1x64xf32>
    %45 = arith.mulf %44, %43 : vector<2x1x1x1x64xf32>
    %cst_21 = arith.constant -0.999989986 : f32
    %cst_22 = arith.constant 0.999989986 : f32
    %46 = vector.broadcast %cst_21 : f32 to vector<2x1x1x1x64xf32>
    %47 = arith.maximumf %46, %45 : vector<2x1x1x1x64xf32>
    %48 = vector.broadcast %cst_22 : f32 to vector<2x1x1x1x64xf32>
    %49 = arith.minimumf %48, %47 : vector<2x1x1x1x64xf32>
    %cst_23 = arith.constant 1.000000e+00 : f32
    %50 = vector.broadcast %cst_23 : f32 to vector<2x1x1x1x64xf32>
    %51 = arith.addf %50, %49 : vector<2x1x1x1x64xf32>
    %cst_24 = arith.constant 1.000000e+00 : f32
    %52 = vector.broadcast %cst_24 : f32 to vector<2x1x1x1x64xf32>
    %53 = arith.subf %52, %49 : vector<2x1x1x1x64xf32>
    %54 = arith.divf %51, %53 : vector<2x1x1x1x64xf32>
    %55 = math.log %54 : vector<2x1x1x1x64xf32>
    %cst_25 = arith.constant 5.000000e-01 : f32
    %56 = vector.broadcast %cst_25 : f32 to vector<2x1x1x1x64xf32>
    %57 = arith.mulf %56, %55 : vector<2x1x1x1x64xf32>
    %cst_26 = arith.constant 0.223606795 : f32
    %58 = vector.broadcast %cst_26 : f32 to vector<2x1x1x1x64xf32>
    %59 = arith.mulf %58, %43 : vector<2x1x1x1x64xf32>
    %60 = arith.divf %57, %59 : vector<2x1x1x1x64xf32>
    %61 = vector.broadcast %60 : vector<2x1x1x1x64xf32> to vector<2x4x5x5x64xf32>
    %62 = arith.mulf %39, %61 : vector<2x4x5x5x64xf32>
    %cst_27 = arith.constant 0.000000e+00 : f32
    %63 = vector.broadcast %cst_27 : f32 to vector<2x4x5x5x64xf32>
    %64 = arith.maximumf %62, %63 : vector<2x4x5x5x64xf32>
    %65 = arith.mulf %64, %64 : vector<2x4x5x5x64xf32>
    %cst_28 = arith.constant dense<0.000000e+00> : vector<2x5x5x64xf32>
    %66 = vector.multi_reduction <add>, %65, %cst_28 [1] : vector<2x4x5x5x64xf32> to vector<2x5x5x64xf32>
    %67 = vector.shape_cast %66 : vector<2x5x5x64xf32> to vector<2x1x5x5x64xf32>
    %cst_29 = arith.constant dense<0.000000e+00> : vector<2x1x5x64xf32>
    %68 = vector.multi_reduction <add>, %67, %cst_29 [2] : vector<2x1x5x5x64xf32> to vector<2x1x5x64xf32>
    %69 = vector.shape_cast %68 : vector<2x1x5x64xf32> to vector<2x1x1x5x64xf32>
    %cst_30 = arith.constant dense<0.000000e+00> : vector<2x1x1x64xf32>
    %70 = vector.multi_reduction <add>, %69, %cst_30 [3] : vector<2x1x1x5x64xf32> to vector<2x1x1x64xf32>
    %71 = vector.shape_cast %70 : vector<2x1x1x64xf32> to vector<2x1x1x1x64xf32>
    %72 = math.sqrt %71 : vector<2x1x1x1x64xf32>
    %cst_31 = arith.constant 9.99999974E-6 : f32
    %73 = vector.broadcast %cst_31 : f32 to vector<2x1x1x1x64xf32>
    %74 = arith.maximumf %72, %73 : vector<2x1x1x1x64xf32>
    %cst_32 = arith.constant 0.223606795 : f32
    %75 = vector.broadcast %cst_32 : f32 to vector<2x1x1x1x64xf32>
    %76 = arith.mulf %75, %74 : vector<2x1x1x1x64xf32>
    %77 = math.tanh %76 : vector<2x1x1x1x64xf32>
    %cst_33 = arith.constant 0.223606795 : f32
    %78 = vector.broadcast %cst_33 : f32 to vector<2x1x1x1x64xf32>
    %79 = arith.mulf %78, %74 : vector<2x1x1x1x64xf32>
    %80 = arith.divf %77, %79 : vector<2x1x1x1x64xf32>
    %81 = vector.broadcast %80 : vector<2x1x1x1x64xf32> to vector<2x4x5x5x64xf32>
    %82 = arith.mulf %64, %81 : vector<2x4x5x5x64xf32>
    %cst_34 = arith.constant 4.47213602 : f32
    %83 = vector.broadcast %cst_34 : f32 to vector<2x1x1x1x64xf32>
    %84 = arith.mulf %77, %83 : vector<2x1x1x1x64xf32>
    %cst_35 = arith.constant 9.99999974E-6 : f32
    %85 = vector.broadcast %cst_35 : f32 to vector<2x1x1x1x64xf32>
    %86 = arith.maximumf %84, %85 : vector<2x1x1x1x64xf32>
    %cst_36 = arith.constant 4.45424747 : f32
    %87 = vector.broadcast %cst_36 : f32 to vector<2x1x1x1x64xf32>
    %88 = arith.cmpf ogt, %86, %87 : vector<2x1x1x1x64xf32>
    %cst_37 = arith.constant 4.45424747 : f32
    %89 = vector.broadcast %cst_37 : f32 to vector<2x1x1x1x64xf32>
    %90 = arith.divf %89, %86 : vector<2x1x1x1x64xf32>
    %cst_38 = arith.constant 1.000000e+00 : f32
    %91 = vector.broadcast %cst_38 : f32 to vector<2x1x1x1x64xf32>
    %92 = arith.select %88, %90, %91 : vector<2x1x1x1x64xi1>, vector<2x1x1x1x64xf32>
    %93 = vector.broadcast %92 : vector<2x1x1x1x64xf32> to vector<2x4x5x5x64xf32>
    %94 = arith.mulf %82, %93 : vector<2x4x5x5x64xf32>
    %cst_39 = arith.constant 4.45424747 : f32
    %95 = vector.broadcast %cst_39 : f32 to vector<2x1x1x1x64xf32>
    %96 = arith.minimumf %86, %95 : vector<2x1x1x1x64xf32>
    %cst_40 = arith.constant 9.99999974E-6 : f32
    %97 = vector.broadcast %cst_40 : f32 to vector<2x1x1x1x64xf32>
    %98 = arith.maximumf %96, %97 : vector<2x1x1x1x64xf32>
    %cst_41 = arith.constant 0.223606795 : f32
    %99 = vector.broadcast %cst_41 : f32 to vector<2x1x1x1x64xf32>
    %100 = arith.mulf %99, %98 : vector<2x1x1x1x64xf32>
    %cst_42 = arith.constant -0.999989986 : f32
    %cst_43 = arith.constant 0.999989986 : f32
    %101 = vector.broadcast %cst_42 : f32 to vector<2x1x1x1x64xf32>
    %102 = arith.maximumf %101, %100 : vector<2x1x1x1x64xf32>
    %103 = vector.broadcast %cst_43 : f32 to vector<2x1x1x1x64xf32>
    %104 = arith.minimumf %103, %102 : vector<2x1x1x1x64xf32>
    %cst_44 = arith.constant 1.000000e+00 : f32
    %105 = vector.broadcast %cst_44 : f32 to vector<2x1x1x1x64xf32>
    %106 = arith.addf %105, %104 : vector<2x1x1x1x64xf32>
    %cst_45 = arith.constant 1.000000e+00 : f32
    %107 = vector.broadcast %cst_45 : f32 to vector<2x1x1x1x64xf32>
    %108 = arith.subf %107, %104 : vector<2x1x1x1x64xf32>
    %109 = arith.divf %106, %108 : vector<2x1x1x1x64xf32>
    %110 = math.log %109 : vector<2x1x1x1x64xf32>
    %cst_46 = arith.constant 5.000000e-01 : f32
    %111 = vector.broadcast %cst_46 : f32 to vector<2x1x1x1x64xf32>
    %112 = arith.mulf %111, %110 : vector<2x1x1x1x64xf32>
    %cst_47 = arith.constant 0.223606795 : f32
    %113 = vector.broadcast %cst_47 : f32 to vector<2x1x1x1x64xf32>
    %114 = arith.mulf %113, %98 : vector<2x1x1x1x64xf32>
    %115 = arith.divf %112, %114 : vector<2x1x1x1x64xf32>
    %116 = vector.broadcast %115 : vector<2x1x1x1x64xf32> to vector<2x4x5x5x64xf32>
    %117 = arith.mulf %94, %116 : vector<2x4x5x5x64xf32>
    %cst_48 = arith.constant dense<0xFF800000> : vector<2x5x5x64xf32>
    %118 = vector.multi_reduction <maximumf>, %117, %cst_48 [1] : vector<2x4x5x5x64xf32> to vector<2x5x5x64xf32>
    %119 = arith.mulf %118, %118 : vector<2x5x5x64xf32>
    %cst_49 = arith.constant dense<0.000000e+00> : vector<2x5x64xf32>
    %120 = vector.multi_reduction <add>, %119, %cst_49 [1] : vector<2x5x5x64xf32> to vector<2x5x64xf32>
    %121 = vector.shape_cast %120 : vector<2x5x64xf32> to vector<2x1x5x64xf32>
    %cst_50 = arith.constant dense<0.000000e+00> : vector<2x1x64xf32>
    %122 = vector.multi_reduction <add>, %121, %cst_50 [2] : vector<2x1x5x64xf32> to vector<2x1x64xf32>
    %123 = vector.shape_cast %122 : vector<2x1x64xf32> to vector<2x1x1x64xf32>
    %124 = math.sqrt %123 : vector<2x1x1x64xf32>
    %cst_51 = arith.constant 9.99999974E-6 : f32
    %125 = vector.broadcast %cst_51 : f32 to vector<2x1x1x64xf32>
    %126 = arith.maximumf %124, %125 : vector<2x1x1x64xf32>
    %cst_52 = arith.constant 0.223606795 : f32
    %127 = vector.broadcast %cst_52 : f32 to vector<2x1x1x64xf32>
    %128 = arith.mulf %127, %126 : vector<2x1x1x64xf32>
    %129 = math.tanh %128 : vector<2x1x1x64xf32>
    %cst_53 = arith.constant 0.223606795 : f32
    %130 = vector.broadcast %cst_53 : f32 to vector<2x1x1x64xf32>
    %131 = arith.mulf %130, %126 : vector<2x1x1x64xf32>
    %132 = arith.divf %129, %131 : vector<2x1x1x64xf32>
    %133 = vector.broadcast %132 : vector<2x1x1x64xf32> to vector<2x5x5x64xf32>
    %134 = arith.mulf %118, %133 : vector<2x5x5x64xf32>
    %cst_54 = arith.constant 4.47213602 : f32
    %135 = vector.broadcast %cst_54 : f32 to vector<2x1x1x64xf32>
    %136 = arith.mulf %129, %135 : vector<2x1x1x64xf32>
    %cst_55 = arith.constant 9.99999974E-6 : f32
    %137 = vector.broadcast %cst_55 : f32 to vector<2x1x1x64xf32>
    %138 = arith.maximumf %136, %137 : vector<2x1x1x64xf32>
    %cst_56 = arith.constant 4.45424747 : f32
    %139 = vector.broadcast %cst_56 : f32 to vector<2x1x1x64xf32>
    %140 = arith.cmpf ogt, %138, %139 : vector<2x1x1x64xf32>
    %cst_57 = arith.constant 4.45424747 : f32
    %141 = vector.broadcast %cst_57 : f32 to vector<2x1x1x64xf32>
    %142 = arith.divf %141, %138 : vector<2x1x1x64xf32>
    %cst_58 = arith.constant 1.000000e+00 : f32
    %143 = vector.broadcast %cst_58 : f32 to vector<2x1x1x64xf32>
    %144 = arith.select %140, %142, %143 : vector<2x1x1x64xi1>, vector<2x1x1x64xf32>
    %145 = vector.broadcast %144 : vector<2x1x1x64xf32> to vector<2x5x5x64xf32>
    %146 = arith.mulf %134, %145 : vector<2x5x5x64xf32>
    %cst_59 = arith.constant 4.45424747 : f32
    %147 = vector.broadcast %cst_59 : f32 to vector<2x1x1x64xf32>
    %148 = arith.minimumf %138, %147 : vector<2x1x1x64xf32>
    %cst_60 = arith.constant 9.99999974E-6 : f32
    %149 = vector.broadcast %cst_60 : f32 to vector<2x1x1x64xf32>
    %150 = arith.maximumf %148, %149 : vector<2x1x1x64xf32>
    %cst_61 = arith.constant 0.223606795 : f32
    %151 = vector.broadcast %cst_61 : f32 to vector<2x1x1x64xf32>
    %152 = arith.mulf %151, %150 : vector<2x1x1x64xf32>
    %cst_62 = arith.constant -0.999989986 : f32
    %cst_63 = arith.constant 0.999989986 : f32
    %153 = vector.broadcast %cst_62 : f32 to vector<2x1x1x64xf32>
    %154 = arith.maximumf %153, %152 : vector<2x1x1x64xf32>
    %155 = vector.broadcast %cst_63 : f32 to vector<2x1x1x64xf32>
    %156 = arith.minimumf %155, %154 : vector<2x1x1x64xf32>
    %cst_64 = arith.constant 1.000000e+00 : f32
    %157 = vector.broadcast %cst_64 : f32 to vector<2x1x1x64xf32>
    %158 = arith.addf %157, %156 : vector<2x1x1x64xf32>
    %cst_65 = arith.constant 1.000000e+00 : f32
    %159 = vector.broadcast %cst_65 : f32 to vector<2x1x1x64xf32>
    %160 = arith.subf %159, %156 : vector<2x1x1x64xf32>
    %161 = arith.divf %158, %160 : vector<2x1x1x64xf32>
    %162 = math.log %161 : vector<2x1x1x64xf32>
    %cst_66 = arith.constant 5.000000e-01 : f32
    %163 = vector.broadcast %cst_66 : f32 to vector<2x1x1x64xf32>
    %164 = arith.mulf %163, %162 : vector<2x1x1x64xf32>
    %cst_67 = arith.constant 0.223606795 : f32
    %165 = vector.broadcast %cst_67 : f32 to vector<2x1x1x64xf32>
    %166 = arith.mulf %165, %150 : vector<2x1x1x64xf32>
    %167 = arith.divf %164, %166 : vector<2x1x1x64xf32>
    %168 = vector.broadcast %167 : vector<2x1x1x64xf32> to vector<2x5x5x64xf32>
    %169 = arith.mulf %146, %168 : vector<2x5x5x64xf32>
    %cst_68 = arith.constant dense<0xFF800000> : vector<2x5x64xf32>
    %170 = vector.multi_reduction <maximumf>, %169, %cst_68 [2] : vector<2x5x5x64xf32> to vector<2x5x64xf32>
    %171 = vector.shape_cast %170 : vector<2x5x64xf32> to vector<2x5x1x64xf32>
    %cst_69 = arith.constant dense<0xFF800000> : vector<2x1x64xf32>
    %172 = vector.multi_reduction <maximumf>, %171, %cst_69 [1] : vector<2x5x1x64xf32> to vector<2x1x64xf32>
    %173 = vector.shape_cast %172 : vector<2x1x64xf32> to vector<2x1x1x64xf32>
    %174 = arith.mulf %173, %173 : vector<2x1x1x64xf32>
    %cst_70 = arith.constant dense<0.000000e+00> : vector<2x1x64xf32>
    %175 = vector.multi_reduction <add>, %174, %cst_70 [1] : vector<2x1x1x64xf32> to vector<2x1x64xf32>
    %176 = vector.shape_cast %175 : vector<2x1x64xf32> to vector<2x1x1x64xf32>
    %cst_71 = arith.constant dense<0.000000e+00> : vector<2x1x64xf32>
    %177 = vector.multi_reduction <add>, %176, %cst_71 [2] : vector<2x1x1x64xf32> to vector<2x1x64xf32>
    %178 = vector.shape_cast %177 : vector<2x1x64xf32> to vector<2x1x1x64xf32>
    %179 = math.sqrt %178 : vector<2x1x1x64xf32>
    %cst_72 = arith.constant 9.99999974E-6 : f32
    %180 = vector.broadcast %cst_72 : f32 to vector<2x1x1x64xf32>
    %181 = arith.maximumf %179, %180 : vector<2x1x1x64xf32>
    %cst_73 = arith.constant 0.223606795 : f32
    %182 = vector.broadcast %cst_73 : f32 to vector<2x1x1x64xf32>
    %183 = arith.mulf %182, %181 : vector<2x1x1x64xf32>
    %184 = math.tanh %183 : vector<2x1x1x64xf32>
    %cst_74 = arith.constant 0.223606795 : f32
    %185 = vector.broadcast %cst_74 : f32 to vector<2x1x1x64xf32>
    %186 = arith.mulf %185, %181 : vector<2x1x1x64xf32>
    %187 = arith.divf %184, %186 : vector<2x1x1x64xf32>
    %188 = arith.mulf %173, %187 : vector<2x1x1x64xf32>
    %cst_75 = arith.constant 4.47213602 : f32
    %189 = vector.broadcast %cst_75 : f32 to vector<2x1x1x64xf32>
    %190 = arith.mulf %184, %189 : vector<2x1x1x64xf32>
    %cst_76 = arith.constant 9.99999974E-6 : f32
    %191 = vector.broadcast %cst_76 : f32 to vector<2x1x1x64xf32>
    %192 = arith.maximumf %190, %191 : vector<2x1x1x64xf32>
    %cst_77 = arith.constant 4.45424747 : f32
    %193 = vector.broadcast %cst_77 : f32 to vector<2x1x1x64xf32>
    %194 = arith.cmpf ogt, %192, %193 : vector<2x1x1x64xf32>
    %cst_78 = arith.constant 4.45424747 : f32
    %195 = vector.broadcast %cst_78 : f32 to vector<2x1x1x64xf32>
    %196 = arith.divf %195, %192 : vector<2x1x1x64xf32>
    %cst_79 = arith.constant 1.000000e+00 : f32
    %197 = vector.broadcast %cst_79 : f32 to vector<2x1x1x64xf32>
    %198 = arith.select %194, %196, %197 : vector<2x1x1x64xi1>, vector<2x1x1x64xf32>
    %199 = arith.mulf %188, %198 : vector<2x1x1x64xf32>
    %200 = arith.mulf %199, %199 : vector<2x1x1x64xf32>
    %cst_80 = arith.constant dense<0.000000e+00> : vector<2x1x1xf32>
    %201 = vector.multi_reduction <add>, %200, %cst_80 [3] : vector<2x1x1x64xf32> to vector<2x1x1xf32>
    %202 = vector.shape_cast %201 : vector<2x1x1xf32> to vector<2x1x1x1xf32>
    %203 = math.sqrt %202 : vector<2x1x1x1xf32>
    %cst_81 = arith.constant 9.99999974E-6 : f32
    %204 = vector.broadcast %cst_81 : f32 to vector<2x1x1x1xf32>
    %205 = arith.maximumf %203, %204 : vector<2x1x1x1xf32>
    %cst_82 = arith.constant 0.223606795 : f32
    %206 = vector.broadcast %cst_82 : f32 to vector<2x1x1x1xf32>
    %207 = arith.mulf %206, %205 : vector<2x1x1x1xf32>
    %208 = math.tanh %207 : vector<2x1x1x1xf32>
    %cst_83 = arith.constant 0.223606795 : f32
    %209 = vector.broadcast %cst_83 : f32 to vector<2x1x1x1xf32>
    %210 = arith.mulf %209, %205 : vector<2x1x1x1xf32>
    %211 = arith.divf %208, %210 : vector<2x1x1x1xf32>
    %212 = vector.broadcast %211 : vector<2x1x1x1xf32> to vector<2x1x1x64xf32>
    %213 = arith.mulf %199, %212 : vector<2x1x1x64xf32>
    %cst_84 = arith.constant 4.47213602 : f32
    %214 = vector.broadcast %cst_84 : f32 to vector<2x1x1x1xf32>
    %215 = arith.mulf %208, %214 : vector<2x1x1x1xf32>
    %cst_85 = arith.constant 9.99999974E-6 : f32
    %216 = vector.broadcast %cst_85 : f32 to vector<2x1x1x1xf32>
    %217 = arith.maximumf %215, %216 : vector<2x1x1x1xf32>
    %cst_86 = arith.constant 4.45424747 : f32
    %218 = vector.broadcast %cst_86 : f32 to vector<2x1x1x1xf32>
    %219 = arith.cmpf ogt, %217, %218 : vector<2x1x1x1xf32>
    %cst_87 = arith.constant 4.45424747 : f32
    %220 = vector.broadcast %cst_87 : f32 to vector<2x1x1x1xf32>
    %221 = arith.divf %220, %217 : vector<2x1x1x1xf32>
    %cst_88 = arith.constant 1.000000e+00 : f32
    %222 = vector.broadcast %cst_88 : f32 to vector<2x1x1x1xf32>
    %223 = arith.select %219, %221, %222 : vector<2x1x1x1xi1>, vector<2x1x1x1xf32>
    %224 = vector.broadcast %223 : vector<2x1x1x1xf32> to vector<2x1x1x64xf32>
    %225 = arith.mulf %213, %224 : vector<2x1x1x64xf32>
    %c0_89 = arith.constant 0 : index
    %c0_90 = arith.constant 0 : index
    %c0_91 = arith.constant 0 : index
    %c0_92 = arith.constant 0 : index
    %226 = vector.load %arg4[%c0_89, %c0_90, %c0_91, %c0_92] : memref<2x1x1x64xf32, #tpu.memory_space<vmem>>, vector<2x1x1x64xf32>
    tpu.vector_store %arg4[%c0_89, %c0_90, %c0_91, %c0_92], %225 {strides = array<i32>} : memref<2x1x1x64xf32, #tpu.memory_space<vmem>>, vector<2x1x1x64xf32>,
    return
  }
  func.func @transform_0(%arg0: i32) -> (i32, i32, i32, i32, i32) {
    %c0_i32 = arith.constant 0 : i32
    %c0_i32_0 = arith.constant 0 : i32
    %c0_i32_1 = arith.constant 0 : i32
    %c0_i32_2 = arith.constant 0 : i32
    %c0_i32_3 = arith.constant 0 : i32
    return %arg0, %c0_i32, %c0_i32_0, %c0_i32_1, %c0_i32_2 : i32, i32, i32, i32, i32
  }
  func.func @transform_1(%arg0: i32) -> (i32, i32) {
    %c0_i32 = arith.constant 0 : i32
    %c0_i32_0 = arith.constant 0 : i32
    %c0_i32_1 = arith.constant 0 : i32
    return %c0_i32, %c0_i32_0 : i32, i32
  }
  func.func @transform_2(%arg0: i32) -> (i32, i32) {
    %c0_i32 = arith.constant 0 : i32
    %c0_i32_0 = arith.constant 0 : i32
    %c0_i32_1 = arith.constant 0 : i32
    return %c0_i32, %c0_i32_0 : i32, i32
  }
  func.func @transform_3(%arg0: i32) -> (i32, i32, i32, i32) {
    %c0_i32 = arith.constant 0 : i32
    %c0_i32_0 = arith.constant 0 : i32
    %c0_i32_1 = arith.constant 0 : i32
    %c0_i32_2 = arith.constant 0 : i32
    return %arg0, %c0_i32, %c0_i32_0, %c0_i32_1 : i32, i32, i32, i32
  }
}

</mosaic_0001>

<llo_original>
// kernel: hyp_convnet_encoder.3
$region0: #{hyp_convnet_encoder.3}
  #allocation0 [shape = 'u32[]', space=smem, size = 0x4, offset = 0x4, fixed_abs, tag = 'smem constant byte address 0x4 - core index']
  #allocation1 [shape = 'u32[144,128]{1,0:T(1,128)}', space=vmem, size = 0x12000, scoped, tag = 'internal scratch']
  %s0 = inlined_call_operand.vmem [shape: bf16[2,4,5,5,64], index: 0, kind: input, shape index: {}]
  %s1 = inlined_call_operand.vmem [shape: f32[1,64], index: 1, kind: input, shape index: {}]
  %s2 = inlined_call_operand.vmem [shape: f32[1,64], index: 2, kind: input, shape index: {}]
  %s3 = inlined_call_operand.hbm [shape: f32[2,1,1,64], index: 3, kind: output, shape index: {}]
  %s4 = sld [smem:[#allocation0]]
  $region22: #{hyp_convnet_encoder.3} parent=0
    _
  %s6 = ssub.s32 1, %s4
  %s7 = scalar_select 0, %s6, %s4
  $region1: #{hyp_convnet_encoder.3} parent=0
    #allocation2 [shape = 'u8[1024]{0}', space=vmem, size = 0x400, scoped, tag = 'output window, operand 0, single buffered']
    #allocation3 [shape = 's32[1]{0}', space=sflag, size = 0x4, scoped, tag = 'scoped memory for hyp_convnet_encoder.3']
    %8 = vsyncpa [#allocation3], 0
    // Predicated region
    $region2: #{hyp_convnet_encoder.3} parent=1 // pred_check
      _
    $region3: #{hyp_convnet_encoder.3} parent=1 // pred_check_branch
      %10 = sbr.rel (0) target = $region5
    $region4: #{hyp_convnet_encoder.3} parent=1 // pred_region
      _
    $region5: #{hyp_convnet_encoder.3} parent=1 // pred_fallthru
      _
    // Predicated region
    $region6: #{hyp_convnet_encoder.3} parent=1 // pred_check
      _
    $region7: #{hyp_convnet_encoder.3} parent=1 // pred_check_branch
      %12 = sbr.rel (0) target = $region9
    $region8: #{hyp_convnet_encoder.3} parent=1 // pred_region
      _
    $region9: #{hyp_convnet_encoder.3} parent=1 // pred_fallthru
      _
    // Predicated region
    $region10: #{hyp_convnet_encoder.3} parent=1 // pred_check
      _
    $region11: #{hyp_convnet_encoder.3} parent=1 // pred_check_branch
      %14 = sbr.rel (0) target = $region13
    $region12: #{hyp_convnet_encoder.3} parent=1 // pred_region
      _
    $region13: #{hyp_convnet_encoder.3} parent=1 // pred_fallthru
      _
    %v15 = vld [vmem:[%s0] sm:$0x7]
    %v16 = vld [vmem:[%s0 + $0x4] sm:$0x7]
    %v17 = vld [vmem:[%s0 + $0x8] sm:$0x7]
    %v18 = vld [vmem:[%s0 + $0xc] sm:$0x7]
    %v19 = vld [vmem:[%s0 + $0x10] sm:$0x7]
    %v20 = vld [vmem:[%s0 + $0x14] sm:$0x7]
    %v21 = vld [vmem:[%s0 + $0x18] sm:$0x7]
    %v22 = vld [vmem:[%s0 + $0x1c] sm:$0x7]
    %v23 = vld [vmem:[%s0 + $0x20] sm:$0x7]
    %v24 = vld [vmem:[%s0 + $0x24] sm:$0x7]
    %v25 = vld [vmem:[%s0 + $0x28] sm:$0x7]
    %v26 = vld [vmem:[%s0 + $0x2c] sm:$0x7]
    %v27 = vld [vmem:[%s0 + $0x30] sm:$0x7]
    %v28 = vld [vmem:[%s0 + $0x34] sm:$0x7]
    %v29 = vld [vmem:[%s0 + $0x38] sm:$0x7]
    %v30 = vld [vmem:[%s0 + $0x3c] sm:$0x7]
    %v31 = vld [vmem:[%s0 + $0x40] sm:$0x7]
    %v32 = vld [vmem:[%s0 + $0x44] sm:$0x7]
    %v33 = vld [vmem:[%s0 + $0x48] sm:$0x7]
    %v34 = vld [vmem:[%s0 + $0x4c] sm:$0x7]
    %v35 = vld [vmem:[%s0 + $0x50] sm:$0x7]
    %v36 = vld [vmem:[%s0 + $0x54] sm:$0x7]
    %v37 = vld [vmem:[%s0 + $0x58] sm:$0x7]
    %v38 = vld [vmem:[%s0 + $0x5c] sm:$0x7]
    %v39 = vld [vmem:[%s0 + $0x60] sm:$0x7]
    %v40 = vld [vmem:[%s0 + $0x64] sm:$0x7]
    %v41 = vld [vmem:[%s0 + $0x68] sm:$0x7]
    %v42 = vld [vmem:[%s0 + $0x6c] sm:$0x7]
    %v43 = vld [vmem:[%s0 + $0x70] sm:$0x7]
    %v44 = vld [vmem:[%s0 + $0x74] sm:$0x7]
    %v45 = vld [vmem:[%s0 + $0x78] sm:$0x7]
    %v46 = vld [vmem:[%s0 + $0x7c] sm:$0x7]
    %v47 = vld [vmem:[%s0 + $0x80] sm:$0x7]
    %v48 = vld [vmem:[%s0 + $0x84] sm:$0x7]
    %v49 = vld [vmem:[%s0 + $0x88] sm:$0x7]
    %v50 = vld [vmem:[%s0 + $0x8c] sm:$0x7]
    %v51 = vld [vmem:[%s0 + $0x90] sm:$0x7]
    %v52 = vld [vmem:[%s0 + $0x94] sm:$0x7]
    %v53 = vld [vmem:[%s0 + $0x98] sm:$0x7]
    %v54 = vld [vmem:[%s0 + $0x9c] sm:$0x7]
    %v55 = vunpack.c.l.bf16 %v15
    %v56 = vunpack.c.l.bf16 %v16
    %v57 = vunpack.c.l.bf16 %v17
    %v58 = vunpack.c.l.bf16 %v18
    %v59 = vunpack.c.l.bf16 %v19
    %v60 = vunpack.c.l.bf16 %v20
    %v61 = vunpack.c.l.bf16 %v21
    %v62 = vunpack.c.l.bf16 %v22
    %v63 = vunpack.c.l.bf16 %v23
    %v64 = vunpack.c.l.bf16 %v24
    %v65 = vunpack.c.l.bf16 %v25
    %v66 = vunpack.c.l.bf16 %v26
    %v67 = vunpack.c.l.bf16 %v27
    %v68 = vunpack.c.l.bf16 %v28
    %v69 = vunpack.c.l.bf16 %v29
    %v70 = vunpack.c.l.bf16 %v30
    %v71 = vunpack.c.l.bf16 %v31
    %v72 = vunpack.c.l.bf16 %v32
    %v73 = vunpack.c.l.bf16 %v33
    %v74 = vunpack.c.l.bf16 %v34
    %v75 = vunpack.c.l.bf16 %v35
    %v76 = vunpack.c.l.bf16 %v36
    %v77 = vunpack.c.l.bf16 %v37
    %v78 = vunpack.c.l.bf16 %v38
    %v79 = vunpack.c.l.bf16 %v39
    %v80 = vunpack.c.l.bf16 %v40
    %v81 = vunpack.c.l.bf16 %v41
    %v82 = vunpack.c.l.bf16 %v42
    %v83 = vunpack.c.l.bf16 %v43
    %v84 = vunpack.c.l.bf16 %v44
    %v85 = vunpack.c.l.bf16 %v45
    %v86 = vunpack.c.l.bf16 %v46
    %v87 = vunpack.c.l.bf16 %v47
    %v88 = vunpack.c.l.bf16 %v48
    %v89 = vunpack.c.l.bf16 %v49
    %v90 = vunpack.c.l.bf16 %v50
    %v91 = vunpack.c.l.bf16 %v51
    %v92 = vunpack.c.l.bf16 %v52
    %v93 = vunpack.c.l.bf16 %v53
    %v94 = vunpack.c.l.bf16 %v54
    %v95 = vld [vmem:[%s1] sm:$0x1]
    %v97 = vlaneseq
    %v98 = vshrl.u32 %v97, 7
    %v99 = vsub.s32 0, %v98
    %v100 = vrot.slane %v95, %v99
    %v102 = vmul.f32 %v55, %v100
    %v103 = vmul.f32 %v56, %v100
    %v104 = vmul.f32 %v57, %v100
    %v105 = vmul.f32 %v58, %v100
    %v106 = vmul.f32 %v59, %v100
    %v107 = vmul.f32 %v60, %v100
    %v108 = vmul.f32 %v61, %v100
    %v109 = vmul.f32 %v62, %v100
    %v110 = vmul.f32 %v63, %v100
    %v111 = vmul.f32 %v64, %v100
    %v112 = vmul.f32 %v65, %v100
    %v113 = vmul.f32 %v66, %v100
    %v114 = vmul.f32 %v67, %v100
    %v115 = vmul.f32 %v68, %v100
    %v116 = vmul.f32 %v69, %v100
    %v117 = vmul.f32 %v70, %v100
    %v118 = vmul.f32 %v71, %v100
    %v119 = vmul.f32 %v72, %v100
    %v120 = vmul.f32 %v73, %v100
    %v121 = vmul.f32 %v74, %v100
    %v122 = vmul.f32 %v75, %v100
    %v123 = vmul.f32 %v76, %v100
    %v124 = vmul.f32 %v77, %v100
    %v125 = vmul.f32 %v78, %v100
    %v126 = vmul.f32 %v79, %v100
    %v127 = vmul.f32 %v80, %v100
    %v128 = vmul.f32 %v81, %v100
    %v129 = vmul.f32 %v82, %v100
    %v130 = vmul.f32 %v83, %v100
    %v131 = vmul.f32 %v84, %v100
    %v132 = vmul.f32 %v85, %v100
    %v133 = vmul.f32 %v86, %v100
    %v134 = vmul.f32 %v87, %v100
    %v135 = vmul.f32 %v88, %v100
    %v136 = vmul.f32 %v89, %v100
    %v137 = vmul.f32 %v90, %v100
    %v138 = vmul.f32 %v91, %v100
    %v139 = vmul.f32 %v92, %v100
    %v140 = vmul.f32 %v93, %v100
    %v141 = vmul.f32 %v94, %v100
    %v142 = vld [vmem:[%s2] sm:$0x1]
    %v144 = vlaneseq
    %v145 = vshrl.u32 %v144, 7
    %v146 = vsub.s32 0, %v145
    %v147 = vrot.slane %v142, %v146
    %v149 = vadd.f32 %v102, %v147
    %v150 = vadd.f32 %v103, %v147
    %v151 = vadd.f32 %v104, %v147
    %v152 = vadd.f32 %v105, %v147
    %v153 = vadd.f32 %v106, %v147
    %v154 = vadd.f32 %v107, %v147
    %v155 = vadd.f32 %v108, %v147
    %v156 = vadd.f32 %v109, %v147
    %v157 = vadd.f32 %v110, %v147
    %v158 = vadd.f32 %v111, %v147
    %v159 = vadd.f32 %v112, %v147
    %v160 = vadd.f32 %v113, %v147
    %v161 = vadd.f32 %v114, %v147
    %v162 = vadd.f32 %v115, %v147
    %v163 = vadd.f32 %v116, %v147
    %v164 = vadd.f32 %v117, %v147
    %v165 = vadd.f32 %v118, %v147
    %v166 = vadd.f32 %v119, %v147
    %v167 = vadd.f32 %v120, %v147
    %v168 = vadd.f32 %v121, %v147
    %v169 = vadd.f32 %v122, %v147
    %v170 = vadd.f32 %v123, %v147
    %v171 = vadd.f32 %v124, %v147
    %v172 = vadd.f32 %v125, %v147
    %v173 = vadd.f32 %v126, %v147
    %v174 = vadd.f32 %v127, %v147
    %v175 = vadd.f32 %v128, %v147
    %v176 = vadd.f32 %v129, %v147
    %v177 = vadd.f32 %v130, %v147
    %v178 = vadd.f32 %v131, %v147
    %v179 = vadd.f32 %v132, %v147
    %v180 = vadd.f32 %v133, %v147
    %v181 = vadd.f32 %v134, %v147
    %v182 = vadd.f32 %v135, %v147
    %v183 = vadd.f32 %v136, %v147
    %v184 = vadd.f32 %v137, %v147
    %v185 = vadd.f32 %v138, %v147
    %v186 = vadd.f32 %v139, %v147
    %v187 = vadd.f32 %v140, %v147
    %v188 = vadd.f32 %v141, %v147
    %v189 = vmul.f32 %v149, %v149
    %v190 = vmul.f32 %v150, %v150
    %v191 = vmul.f32 %v151, %v151
    %v192 = vmul.f32 %v152, %v152
    %v193 = vmul.f32 %v153, %v153
    %v194 = vmul.f32 %v154, %v154
    %v195 = vmul.f32 %v155, %v155
    %v196 = vmul.f32 %v156, %v156
    %v197 = vmul.f32 %v157, %v157
    %v198 = vmul.f32 %v158, %v158
    %v199 = vmul.f32 %v159, %v159
    %v200 = vmul.f32 %v160, %v160
    %v201 = vmul.f32 %v161, %v161
    %v202 = vmul.f32 %v162, %v162
    %v203 = vmul.f32 %v163, %v163
    %v204 = vmul.f32 %v164, %v164
    %v205 = vmul.f32 %v165, %v165
    %v206 = vmul.f32 %v166, %v166
    %v207 = vmul.f32 %v167, %v167
    %v208 = vmul.f32 %v168, %v168
    %v209 = vmul.f32 %v169, %v169
    %v210 = vmul.f32 %v170, %v170
    %v211 = vmul.f32 %v171, %v171
    %v212 = vmul.f32 %v172, %v172
    %v213 = vmul.f32 %v173, %v173
    %v214 = vmul.f32 %v174, %v174
    %v215 = vmul.f32 %v175, %v175
    %v216 = vmul.f32 %v176, %v176
    %v217 = vmul.f32 %v177, %v177
    %v218 = vmul.f32 %v178, %v178
    %v219 = vmul.f32 %v179, %v179
    %v220 = vmul.f32 %v180, %v180
    %v221 = vmul.f32 %v181, %v181
    %v222 = vmul.f32 %v182, %v182
    %v223 = vmul.f32 %v183, %v183
    %v224 = vmul.f32 %v184, %v184
    %v225 = vmul.f32 %v185, %v185
    %v226 = vmul.f32 %v186, %v186
    %v227 = vmul.f32 %v187, %v187
    %v228 = vmul.f32 %v188, %v188
    %vm229 = vcmask 520192
    %v230 = vsel %vm229, %v189, 0.0
    %v231 = vsel %vm229, %v194, 0.0
    %v232 = vadd.f32 %v230, %v231
    %v233 = vsel %vm229, %v199, 0.0
    %v234 = vadd.f32 %v232, %v233
    %v235 = vsel %vm229, %v204, 0.0
    %v236 = vadd.f32 %v234, %v235
    %v237 = vsel %vm229, %v190, 0.0
    %v238 = vsel %vm229, %v195, 0.0
    %v239 = vadd.f32 %v237, %v238
    %v240 = vsel %vm229, %v200, 0.0
    %v241 = vadd.f32 %v239, %v240
    %v242 = vsel %vm229, %v205, 0.0
    %v243 = vadd.f32 %v241, %v242
    %v244 = vsel %vm229, %v191, 0.0
    %v245 = vsel %vm229, %v196, 0.0
    %v246 = vadd.f32 %v244, %v245
    %v247 = vsel %vm229, %v201, 0.0
    %v248 = vadd.f32 %v246, %v247
    %v249 = vsel %vm229, %v206, 0.0
    %v250 = vadd.f32 %v248, %v249
    %v251 = vsel %vm229, %v192, 0.0
    %v252 = vsel %vm229, %v197, 0.0
    %v253 = vadd.f32 %v251, %v252
    %v254 = vsel %vm229, %v202, 0.0
    %v255 = vadd.f32 %v253, %v254
    %v256 = vsel %vm229, %v207, 0.0
    %v257 = vadd.f32 %v255, %v256
    %v258 = vsel %vm229, %v193, 0.0
    %v259 = vsel %vm229, %v198, 0.0
    %v260 = vadd.f32 %v258, %v259
    %v261 = vsel %vm229, %v203, 0.0
    %v262 = vadd.f32 %v260, %v261
    %v263 = vsel %vm229, %v208, 0.0
    %v264 = vadd.f32 %v262, %v263
    %v265 = vsel %vm229, %v209, 0.0
    %v266 = vsel %vm229, %v214, 0.0
    %v267 = vadd.f32 %v265, %v266
    %v268 = vsel %vm229, %v219, 0.0
    %v269 = vadd.f32 %v267, %v268
    %v270 = vsel %vm229, %v224, 0.0
    %v271 = vadd.f32 %v269, %v270
    %v272 = vsel %vm229, %v210, 0.0
    %v273 = vsel %vm229, %v215, 0.0
    %v274 = vadd.f32 %v272, %v273
    %v275 = vsel %vm229, %v220, 0.0
    %v276 = vadd.f32 %v274, %v275
    %v277 = vsel %vm229, %v225, 0.0
    %v278 = vadd.f32 %v276, %v277
    %v279 = vsel %vm229, %v211, 0.0
    %v280 = vsel %vm229, %v216, 0.0
    %v281 = vadd.f32 %v279, %v280
    %v282 = vsel %vm229, %v221, 0.0
    %v283 = vadd.f32 %v281, %v282
    %v284 = vsel %vm229, %v226, 0.0
    %v285 = vadd.f32 %v283, %v284
    %v286 = vsel %vm229, %v212, 0.0
    %v287 = vsel %vm229, %v217, 0.0
    %v288 = vadd.f32 %v286, %v287
    %v289 = vsel %vm229, %v222, 0.0
    %v290 = vadd.f32 %v288, %v289
    %v291 = vsel %vm229, %v227, 0.0
    %v292 = vadd.f32 %v290, %v291
    %v293 = vsel %vm229, %v213, 0.0
    %v294 = vsel %vm229, %v218, 0.0
    %v295 = vadd.f32 %v293, %v294
    %v296 = vsel %vm229, %v223, 0.0
    %v297 = vadd.f32 %v295, %v296
    %v298 = vsel %vm229, %v228, 0.0
    %v299 = vadd.f32 %v297, %v298
    %v300 = vsel %vm229, %v236, 0.0
    %v301 = vsel %vm229, %v243, 0.0
    %v302 = vadd.f32 %v300, %v301
    %v303 = vsel %vm229, %v250, 0.0
    %v304 = vadd.f32 %v302, %v303
    %v305 = vsel %vm229, %v257, 0.0
    %v306 = vadd.f32 %v304, %v305
    %v307 = vsel %vm229, %v264, 0.0
    %v308 = vadd.f32 %v306, %v307
    %v309 = vsel %vm229, %v271, 0.0
    %v310 = vsel %vm229, %v278, 0.0
    %v311 = vadd.f32 %v309, %v310
    %v312 = vsel %vm229, %v285, 0.0
    %v313 = vadd.f32 %v311, %v312
    %v314 = vsel %vm229, %v292, 0.0
    %v315 = vadd.f32 %v313, %v314
    %v316 = vsel %vm229, %v299, 0.0
    %v317 = vadd.f32 %v315, %v316
    %v318 = vsel %vm229, %v308, 0.0
    %v319 = vrot.slane %v318, 4
    %v320 = vadd.f32 %v318, %v319
    %v321 = vrot.slane %v320, 2
    %v322 = vadd.f32 %v320, %v321
    %v323 = vrot.slane %v322, 1
    %v324 = vadd.f32 %v322, %v323
    %v325 = vsel %vm229, %v317, 0.0
    %v326 = vrot.slane %v325, 4
    %v327 = vadd.f32 %v325, %v326
    %v328 = vrot.slane %v327, 2
    %v329 = vadd.f32 %v327, %v328
    %v330 = vrot.slane %v329, 1
    %v331 = vadd.f32 %v329, %v330
    %v332 = vrsqrt.pop %v324
    %v333 = vmul.f32 %v324, %v332
    %vm334 = vcmp.eq.f32.partialorder %v324, inf
    %v335 = vsel %vm334, %v324, %v333
    %vm336 = vcmp.eq.f32.partialorder %v324, 0.0
    %v337 = vand.u32 %v324, 2147483648
    %v338 = vsel %vm336, %v337, %v335
    %v339 = vrsqrt.pop %v331
    %v340 = vmul.f32 %v331, %v339
    %vm341 = vcmp.eq.f32.partialorder %v331, inf
    %v342 = vsel %vm341, %v331, %v340
    %vm343 = vcmp.eq.f32.partialorder %v331, 0.0
    %v344 = vand.u32 %v331, 2147483648
    %v345 = vsel %vm343, %v344, %v342
    %v346 = vmax.f32 %v338, 1e-05
    %v347 = vmax.f32 %v345, 1e-05
    %v348 = vmul.f32 %v346, 0.2236068
    %v349 = vmul.f32 %v347, 0.2236068
    %v350 = vtanh.pop %v348
    %v351 = vtanh.pop %v349
    %v352 = vrcp.pop %v348
    %v353 = vmul.f32 %v350, %v352
    %v354 = vrcp.pop %v349
    %v355 = vmul.f32 %v351, %v354
    %v356 = vmul.f32 %v149, %v353
    %v357 = vmul.f32 %v150, %v353
    %v358 = vmul.f32 %v151, %v353
    %v359 = vmul.f32 %v152, %v353
    %v360 = vmul.f32 %v153, %v353
    %v361 = vmul.f32 %v154, %v353
    %v362 = vmul.f32 %v155, %v353
    %v363 = vmul.f32 %v156, %v353
    %v364 = vmul.f32 %v157, %v353
    %v365 = vmul.f32 %v158, %v353
    %v366 = vmul.f32 %v159, %v353
    %v367 = vmul.f32 %v160, %v353
    %v368 = vmul.f32 %v161, %v353
    %v369 = vmul.f32 %v162, %v353
    %v370 = vmul.f32 %v163, %v353
    %v371 = vmul.f32 %v164, %v353
    %v372 = vmul.f32 %v165, %v353
    %v373 = vmul.f32 %v166, %v353
    %v374 = vmul.f32 %v167, %v353
    %v375 = vmul.f32 %v168, %v353
    %v376 = vmul.f32 %v169, %v355
    %v377 = vmul.f32 %v170, %v355
    %v378 = vmul.f32 %v171, %v355
    %v379 = vmul.f32 %v172, %v355
    %v380 = vmul.f32 %v173, %v355
    %v381 = vmul.f32 %v174, %v355
    %v382 = vmul.f32 %v175, %v355
    %v383 = vmul.f32 %v176, %v355
    %v384 = vmul.f32 %v177, %v355
    %v385 = vmul.f32 %v178, %v355
    %v386 = vmul.f32 %v179, %v355
    %v387 = vmul.f32 %v180, %v355
    %v388 = vmul.f32 %v181, %v355
    %v389 = vmul.f32 %v182, %v355
    %v390 = vmul.f32 %v183, %v355
    %v391 = vmul.f32 %v184, %v355
    %v392 = vmul.f32 %v185, %v355
    %v393 = vmul.f32 %v186, %v355
    %v394 = vmul.f32 %v187, %v355
    %v395 = vmul.f32 %v188, %v355
    %v396 = vmul.f32 %v350, 4.472136
    %v397 = vmul.f32 %v351, 4.472136
    %v398 = vmax.f32 %v396, 1e-05
    %v399 = vmax.f32 %v397, 1e-05
    %vm400 = vcmp.gt.f32.partialorder %v398, 4.4542475
    %vm401 = vcmp.gt.f32.partialorder %v399, 4.4542475
    %v402 = vrcp.pop %v398
    %v403 = vmul.f32 4.4542475, %v402
    %v404 = vrcp.pop %v399
    %v405 = vmul.f32 4.4542475, %v404
    %v406 = vsel %vm400, %v403, 1.0
    %v407 = vsel %vm401, %v405, 1.0
    %v408 = vmul.f32 %v356, %v406
    %v409 = vmul.f32 %v357, %v406
    %v410 = vmul.f32 %v358, %v406
    %v411 = vmul.f32 %v359, %v406
    %v412 = vmul.f32 %v360, %v406
    %v413 = vmul.f32 %v361, %v406
    %v414 = vmul.f32 %v362, %v406
    %v415 = vmul.f32 %v363, %v406
    %v416 = vmul.f32 %v364, %v406
    %v417 = vmul.f32 %v365, %v406
    %v418 = vmul.f32 %v366, %v406
    %v419 = vmul.f32 %v367, %v406
    %v420 = vmul.f32 %v368, %v406
    %v421 = vmul.f32 %v369, %v406
    %v422 = vmul.f32 %v370, %v406
    %v423 = vmul.f32 %v371, %v406
    %v424 = vmul.f32 %v372, %v406
    %v425 = vmul.f32 %v373, %v406
    %v426 = vmul.f32 %v374, %v406
    %v427 = vmul.f32 %v375, %v406
    %v428 = vmul.f32 %v376, %v407
    %v429 = vmul.f32 %v377, %v407
    %v430 = vmul.f32 %v378, %v407
    %v431 = vmul.f32 %v379, %v407
    %v432 = vmul.f32 %v380, %v407
    %v433 = vmul.f32 %v381, %v407
    %v434 = vmul.f32 %v382, %v407
    %v435 = vmul.f32 %v383, %v407
    %v436 = vmul.f32 %v384, %v407
    %v437 = vmul.f32 %v385, %v407
    %v438 = vmul.f32 %v386, %v407
    %v439 = vmul.f32 %v387, %v407
    %v440 = vmul.f32 %v388, %v407
    %v441 = vmul.f32 %v389, %v407
    %v442 = vmul.f32 %v390, %v407
    %v443 = vmul.f32 %v391, %v407
    %v444 = vmul.f32 %v392, %v407
    %v445 = vmul.f32 %v393, %v407
    %v446 = vmul.f32 %v394, %v407
    %v447 = vmul.f32 %v395, %v407
    %v448 = vmin.f32 %v398, 4.4542475
    %v449 = vmin.f32 %v399, 4.4542475
    %v450 = vmax.f32 %v448, 1e-05
    %v451 = vmax.f32 %v449, 1e-05
    %v452 = vmul.f32 %v450, 0.2236068
    %v453 = vmul.f32 %v451, 0.2236068
    %v454 = vmax.f32 %v452, -0.99999
    %v455 = vmax.f32 %v453, -0.99999
    %v456 = vmin.f32 %v454, 0.99999
    %v457 = vmin.f32 %v455, 0.99999
    %v458 = vadd.f32 %v456, 1.0
    %v459 = vadd.f32 %v457, 1.0
    %v460 = vsub.f32 1.0, %v456
    %v461 = vsub.f32 1.0, %v457
    %v462 = vrcp.pop %v460
    %v463 = vmul.f32 %v458, %v462
    %v464 = vrcp.pop %v461
    %v465 = vmul.f32 %v459, %v464
    %v466 = vlog2.pop %v463
    %v467 = vmul.f32 %v466, 0.6931472
    %v468 = vlog2.pop %v465
    %v469 = vmul.f32 %v468, 0.6931472
    %v470 = vmul.f32 %v467, 0.5
    %v471 = vmul.f32 %v469, 0.5
    %v472 = vrcp.pop %v452
    %v473 = vmul.f32 %v470, %v472
    %v474 = vrcp.pop %v453
    %v475 = vmul.f32 %v471, %v474
    %v476 = vmul.f32 %v408, %v473
    %v477 = vmul.f32 %v409, %v473
    %v478 = vmul.f32 %v410, %v473
    %v479 = vmul.f32 %v411, %v473
    %v480 = vmul.f32 %v412, %v473
    %v481 = vmul.f32 %v413, %v473
    %v482 = vmul.f32 %v414, %v473
    %v483 = vmul.f32 %v415, %v473
    %v484 = vmul.f32 %v416, %v473
    %v485 = vmul.f32 %v417, %v473
    %v486 = vmul.f32 %v418, %v473
    %v487 = vmul.f32 %v419, %v473
    %v488 = vmul.f32 %v420, %v473
    %v489 = vmul.f32 %v421, %v473
    %v490 = vmul.f32 %v422, %v473
    %v491 = vmul.f32 %v423, %v473
    %v492 = vmul.f32 %v424, %v473
    %v493 = vmul.f32 %v425, %v473
    %v494 = vmul.f32 %v426, %v473
    %v495 = vmul.f32 %v427, %v473
    %v496 = vmul.f32 %v428, %v475
    %v497 = vmul.f32 %v429, %v475
    %v498 = vmul.f32 %v430, %v475
    %v499 = vmul.f32 %v431, %v475
    %v500 = vmul.f32 %v432, %v475
    %v501 = vmul.f32 %v433, %v475
    %v502 = vmul.f32 %v434, %v475
    %v503 = vmul.f32 %v435, %v475
    %v504 = vmul.f32 %v436, %v475
    %v505 = vmul.f32 %v437, %v475
    %v506 = vmul.f32 %v438, %v475
    %v507 = vmul.f32 %v439, %v475
    %v508 = vmul.f32 %v440, %v475
    %v509 = vmul.f32 %v441, %v475
    %v510 = vmul.f32 %v442, %v475
    %v511 = vmul.f32 %v443, %v475
    %v512 = vmul.f32 %v444, %v475
    %v513 = vmul.f32 %v445, %v475
    %v514 = vmul.f32 %v446, %v475
    %v515 = vmul.f32 %v447, %v475
    %v516 = vmax.f32 %v476, 0.0
    %v517 = vmax.f32 %v477, 0.0
    %v518 = vmax.f32 %v478, 0.0
    %v519 = vmax.f32 %v479, 0.0
    %v520 = vmax.f32 %v480, 0.0
    %v521 = vmax.f32 %v481, 0.0
    %v522 = vmax.f32 %v482, 0.0
    %v523 = vmax.f32 %v483, 0.0
    %v524 = vmax.f32 %v484, 0.0
    %v525 = vmax.f32 %v485, 0.0
    %v526 = vmax.f32 %v486, 0.0
    %v527 = vmax.f32 %v487, 0.0
    %v528 = vmax.f32 %v488, 0.0
    %v529 = vmax.f32 %v489, 0.0
    %v530 = vmax.f32 %v490, 0.0
    %v531 = vmax.f32 %v491, 0.0
    %v532 = vmax.f32 %v492, 0.0
    %v533 = vmax.f32 %v493, 0.0
    %v534 = vmax.f32 %v494, 0.0
    %v535 = vmax.f32 %v495, 0.0
    %v536 = vmax.f32 %v496, 0.0
    %v537 = vmax.f32 %v497, 0.0
    %v538 = vmax.f32 %v498, 0.0
    %v539 = vmax.f32 %v499, 0.0
    %v540 = vmax.f32 %v500, 0.0
    %v541 = vmax.f32 %v501, 0.0
    %v542 = vmax.f32 %v502, 0.0
    %v543 = vmax.f32 %v503, 0.0
    %v544 = vmax.f32 %v504, 0.0
    %v545 = vmax.f32 %v505, 0.0
    %v546 = vmax.f32 %v506, 0.0
    %v547 = vmax.f32 %v507, 0.0
    %v548 = vmax.f32 %v508, 0.0
    %v549 = vmax.f32 %v509, 0.0
    %v550 = vmax.f32 %v510, 0.0
    %v551 = vmax.f32 %v511, 0.0
    %v552 = vmax.f32 %v512, 0.0
    %v553 = vmax.f32 %v513, 0.0
    %v554 = vmax.f32 %v514, 0.0
    %v555 = vmax.f32 %v515, 0.0
    %v556 = vmul.f32 %v516, %v516
    %v557 = vmul.f32 %v517, %v517
    %v558 = vmul.f32 %v518, %v518
    %v559 = vmul.f32 %v519, %v519
    %v560 = vmul.f32 %v520, %v520
    %v561 = vmul.f32 %v521, %v521
    %v562 = vmul.f32 %v522, %v522
    %v563 = vmul.f32 %v523, %v523
    %v564 = vmul.f32 %v524, %v524
    %v565 = vmul.f32 %v525, %v525
    %v566 = vmul.f32 %v526, %v526
    %v567 = vmul.f32 %v527, %v527
    %v568 = vmul.f32 %v528, %v528
    %v569 = vmul.f32 %v529, %v529
    %v570 = vmul.f32 %v530, %v530
    %v571 = vmul.f32 %v531, %v531
    %v572 = vmul.f32 %v532, %v532
    %v573 = vmul.f32 %v533, %v533
    %v574 = vmul.f32 %v534, %v534
    %v575 = vmul.f32 %v535, %v535
    %v576 = vmul.f32 %v536, %v536
    %v577 = vmul.f32 %v537, %v537
    %v578 = vmul.f32 %v538, %v538
    %v579 = vmul.f32 %v539, %v539
    %v580 = vmul.f32 %v540, %v540
    %v581 = vmul.f32 %v541, %v541
    %v582 = vmul.f32 %v542, %v542
    %v583 = vmul.f32 %v543, %v543
    %v584 = vmul.f32 %v544, %v544
    %v585 = vmul.f32 %v545, %v545
    %v586 = vmul.f32 %v546, %v546
    %v587 = vmul.f32 %v547, %v547
    %v588 = vmul.f32 %v548, %v548
    %v589 = vmul.f32 %v549, %v549
    %v590 = vmul.f32 %v550, %v550
    %v591 = vmul.f32 %v551, %v551
    %v592 = vmul.f32 %v552, %v552
    %v593 = vmul.f32 %v553, %v553
    %v594 = vmul.f32 %v554, %v554
    %v595 = vmul.f32 %v555, %v555
    %v596 = vsel %vm229, %v556, 0.0
    %v597 = vsel %vm229, %v561, 0.0
    %v598 = vadd.f32 %v596, %v597
    %v599 = vsel %vm229, %v566, 0.0
    %v600 = vadd.f32 %v598, %v599
    %v601 = vsel %vm229, %v571, 0.0
    %v602 = vadd.f32 %v600, %v601
    %v603 = vsel %vm229, %v557, 0.0
    %v604 = vsel %vm229, %v562, 0.0
    %v605 = vadd.f32 %v603, %v604
    %v606 = vsel %vm229, %v567, 0.0
    %v607 = vadd.f32 %v605, %v606
    %v608 = vsel %vm229, %v572, 0.0
    %v609 = vadd.f32 %v607, %v608
    %v610 = vsel %vm229, %v558, 0.0
    %v611 = vsel %vm229, %v563, 0.0
    %v612 = vadd.f32 %v610, %v611
    %v613 = vsel %vm229, %v568, 0.0
    %v614 = vadd.f32 %v612, %v613
    %v615 = vsel %vm229, %v573, 0.0
    %v616 = vadd.f32 %v614, %v615
    %v617 = vsel %vm229, %v559, 0.0
    %v618 = vsel %vm229, %v564, 0.0
    %v619 = vadd.f32 %v617, %v618
    %v620 = vsel %vm229, %v569, 0.0
    %v621 = vadd.f32 %v619, %v620
    %v622 = vsel %vm229, %v574, 0.0
    %v623 = vadd.f32 %v621, %v622
    %v624 = vsel %vm229, %v560, 0.0
    %v625 = vsel %vm229, %v565, 0.0
    %v626 = vadd.f32 %v624, %v625
    %v627 = vsel %vm229, %v570, 0.0
    %v628 = vadd.f32 %v626, %v627
    %v629 = vsel %vm229, %v575, 0.0
    %v630 = vadd.f32 %v628, %v629
    %v631 = vsel %vm229, %v576, 0.0
    %v632 = vsel %vm229, %v581, 0.0
    %v633 = vadd.f32 %v631, %v632
    %v634 = vsel %vm229, %v586, 0.0
    %v635 = vadd.f32 %v633, %v634
    %v636 = vsel %vm229, %v591, 0.0
    %v637 = vadd.f32 %v635, %v636
    %v638 = vsel %vm229, %v577, 0.0
    %v639 = vsel %vm229, %v582, 0.0
    %v640 = vadd.f32 %v638, %v639
    %v641 = vsel %vm229, %v587, 0.0
    %v642 = vadd.f32 %v640, %v641
    %v643 = vsel %vm229, %v592, 0.0
    %v644 = vadd.f32 %v642, %v643
    %v645 = vsel %vm229, %v578, 0.0
    %v646 = vsel %vm229, %v583, 0.0
    %v647 = vadd.f32 %v645, %v646
    %v648 = vsel %vm229, %v588, 0.0
    %v649 = vadd.f32 %v647, %v648
    %v650 = vsel %vm229, %v593, 0.0
    %v651 = vadd.f32 %v649, %v650
    %v652 = vsel %vm229, %v579, 0.0
    %v653 = vsel %vm229, %v584, 0.0
    %v654 = vadd.f32 %v652, %v653
    %v655 = vsel %vm229, %v589, 0.0
    %v656 = vadd.f32 %v654, %v655
    %v657 = vsel %vm229, %v594, 0.0
    %v658 = vadd.f32 %v656, %v657
    %v659 = vsel %vm229, %v580, 0.0
    %v660 = vsel %vm229, %v585, 0.0
    %v661 = vadd.f32 %v659, %v660
    %v662 = vsel %vm229, %v590, 0.0
    %v663 = vadd.f32 %v661, %v662
    %v664 = vsel %vm229, %v595, 0.0
    %v665 = vadd.f32 %v663, %v664
    %v666 = vsel %vm229, %v602, 0.0
    %v667 = vsel %vm229, %v609, 0.0
    %v668 = vadd.f32 %v666, %v667
    %v669 = vsel %vm229, %v616, 0.0
    %v670 = vadd.f32 %v668, %v669
    %v671 = vsel %vm229, %v623, 0.0
    %v672 = vadd.f32 %v670, %v671
    %v673 = vsel %vm229, %v630, 0.0
    %v674 = vadd.f32 %v672, %v673
    %v675 = vsel %vm229, %v637, 0.0
    %v676 = vsel %vm229, %v644, 0.0
    %v677 = vadd.f32 %v675, %v676
    %v678 = vsel %vm229, %v651, 0.0
    %v679 = vadd.f32 %v677, %v678
    %v680 = vsel %vm229, %v658, 0.0
    %v681 = vadd.f32 %v679, %v680
    %v682 = vsel %vm229, %v665, 0.0
    %v683 = vadd.f32 %v681, %v682
    %v684 = vsel %vm229, %v674, 0.0
    %v685 = vrot.slane %v684, 4
    %v686 = vadd.f32 %v684, %v685
    %v687 = vrot.slane %v686, 2
    %v688 = vadd.f32 %v686, %v687
    %v689 = vrot.slane %v688, 1
    %v690 = vadd.f32 %v688, %v689
    %v691 = vsel %vm229, %v683, 0.0
    %v692 = vrot.slane %v691, 4
    %v693 = vadd.f32 %v691, %v692
    %v694 = vrot.slane %v693, 2
    %v695 = vadd.f32 %v693, %v694
    %v696 = vrot.slane %v695, 1
    %v697 = vadd.f32 %v695, %v696
    %v698 = vrsqrt.pop %v690
    %v699 = vmul.f32 %v690, %v698
    %vm700 = vcmp.eq.f32.partialorder %v690, inf
    %v701 = vsel %vm700, %v690, %v699
    %vm702 = vcmp.eq.f32.partialorder %v690, 0.0
    %v703 = vand.u32 %v690, 2147483648
    %v704 = vsel %vm702, %v703, %v701
    %v705 = vrsqrt.pop %v697
    %v706 = vmul.f32 %v697, %v705
    %vm707 = vcmp.eq.f32.partialorder %v697, inf
    %v708 = vsel %vm707, %v697, %v706
    %vm709 = vcmp.eq.f32.partialorder %v697, 0.0
    %v710 = vand.u32 %v697, 2147483648
    %v711 = vsel %vm709, %v710, %v708
    %v712 = vmax.f32 %v704, 1e-05
    %v713 = vmax.f32 %v711, 1e-05
    %v714 = vmul.f32 %v712, 0.2236068
    %v715 = vmul.f32 %v713, 0.2236068
    %v716 = vtanh.pop %v714
    %v717 = vtanh.pop %v715
    %v718 = vrcp.pop %v714
    %v719 = vmul.f32 %v716, %v718
    %v720 = vrcp.pop %v715
    %v721 = vmul.f32 %v717, %v720
    %v722 = vmul.f32 %v516, %v719
    %v723 = vmul.f32 %v517, %v719
    %v724 = vmul.f32 %v518, %v719
    %v725 = vmul.f32 %v519, %v719
    %v726 = vmul.f32 %v520, %v719
    %v727 = vmul.f32 %v521, %v719
    %v728 = vmul.f32 %v522, %v719
    %v729 = vmul.f32 %v523, %v719
    %v730 = vmul.f32 %v524, %v719
    %v731 = vmul.f32 %v525, %v719
    %v732 = vmul.f32 %v526, %v719
    %v733 = vmul.f32 %v527, %v719
    %v734 = vmul.f32 %v528, %v719
    %v735 = vmul.f32 %v529, %v719
    %v736 = vmul.f32 %v530, %v719
    %v737 = vmul.f32 %v531, %v719
    %v738 = vmul.f32 %v532, %v719
    %v739 = vmul.f32 %v533, %v719
    %v740 = vmul.f32 %v534, %v719
    %v741 = vmul.f32 %v535, %v719
    %v742 = vmul.f32 %v536, %v721
    %v743 = vmul.f32 %v537, %v721
    %v744 = vmul.f32 %v538, %v721
    %v745 = vmul.f32 %v539, %v721
    %v746 = vmul.f32 %v540, %v721
    %v747 = vmul.f32 %v541, %v721
    %v748 = vmul.f32 %v542, %v721
    %v749 = vmul.f32 %v543, %v721
    %v750 = vmul.f32 %v544, %v721
    %v751 = vmul.f32 %v545, %v721
    %v752 = vmul.f32 %v546, %v721
    %v753 = vmul.f32 %v547, %v721
    %v754 = vmul.f32 %v548, %v721
    %v755 = vmul.f32 %v549, %v721
    %v756 = vmul.f32 %v550, %v721
    %v757 = vmul.f32 %v551, %v721
    %v758 = vmul.f32 %v552, %v721
    %v759 = vmul.f32 %v553, %v721
    %v760 = vmul.f32 %v554, %v721
    %v761 = vmul.f32 %v555, %v721
    %v762 = vmul.f32 %v716, 4.472136
    %v763 = vmul.f32 %v717, 4.472136
    %v764 = vmax.f32 %v762, 1e-05
    %v765 = vmax.f32 %v763, 1e-05
    %vm766 = vcmp.gt.f32.partialorder %v764, 4.4542475
    %vm767 = vcmp.gt.f32.partialorder %v765, 4.4542475
    %v768 = vrcp.pop %v764
    %v769 = vmul.f32 4.4542475, %v768
    %v770 = vrcp.pop %v765
    %v771 = vmul.f32 4.4542475, %v770
    %v772 = vsel %vm766, %v769, 1.0
    %v773 = vsel %vm767, %v771, 1.0
    %v774 = vmul.f32 %v722, %v772
    %v775 = vmul.f32 %v723, %v772
    %v776 = vmul.f32 %v724, %v772
    %v777 = vmul.f32 %v725, %v772
    %v778 = vmul.f32 %v726, %v772
    %v779 = vmul.f32 %v727, %v772
    %v780 = vmul.f32 %v728, %v772
    %v781 = vmul.f32 %v729, %v772
    %v782 = vmul.f32 %v730, %v772
    %v783 = vmul.f32 %v731, %v772
    %v784 = vmul.f32 %v732, %v772
    %v785 = vmul.f32 %v733, %v772
    %v786 = vmul.f32 %v734, %v772
    %v787 = vmul.f32 %v735, %v772
    %v788 = vmul.f32 %v736, %v772
    %v789 = vmul.f32 %v737, %v772
    %v790 = vmul.f32 %v738, %v772
    %v791 = vmul.f32 %v739, %v772
    %v792 = vmul.f32 %v740, %v772
    %v793 = vmul.f32 %v741, %v772
    %v794 = vmul.f32 %v742, %v773
    %v795 = vmul.f32 %v743, %v773
    %v796 = vmul.f32 %v744, %v773
    %v797 = vmul.f32 %v745, %v773
    %v798 = vmul.f32 %v746, %v773
    %v799 = vmul.f32 %v747, %v773
    %v800 = vmul.f32 %v748, %v773
    %v801 = vmul.f32 %v749, %v773
    %v802 = vmul.f32 %v750, %v773
    %v803 = vmul.f32 %v751, %v773
    %v804 = vmul.f32 %v752, %v773
    %v805 = vmul.f32 %v753, %v773
    %v806 = vmul.f32 %v754, %v773
    %v807 = vmul.f32 %v755, %v773
    %v808 = vmul.f32 %v756, %v773
    %v809 = vmul.f32 %v757, %v773
    %v810 = vmul.f32 %v758, %v773
    %v811 = vmul.f32 %v759, %v773
    %v812 = vmul.f32 %v760, %v773
    %v813 = vmul.f32 %v761, %v773
    %v814 = vmin.f32 %v764, 4.4542475
    %v815 = vmin.f32 %v765, 4.4542475
    %v816 = vmax.f32 %v814, 1e-05
    %v817 = vmax.f32 %v815, 1e-05
    %v818 = vmul.f32 %v816, 0.2236068
    %v819 = vmul.f32 %v817, 0.2236068
    %v820 = vmax.f32 %v818, -0.99999
    %v821 = vmax.f32 %v819, -0.99999
    %v822 = vmin.f32 %v820, 0.99999
    %v823 = vmin.f32 %v821, 0.99999
    %v824 = vadd.f32 %v822, 1.0
    %v825 = vadd.f32 %v823, 1.0
    %v826 = vsub.f32 1.0, %v822
    %v827 = vsub.f32 1.0, %v823
    %v828 = vrcp.pop %v826
    %v829 = vmul.f32 %v824, %v828
    %v830 = vrcp.pop %v827
    %v831 = vmul.f32 %v825, %v830
    %v832 = vlog2.pop %v829
    %v833 = vmul.f32 %v832, 0.6931472
    %v834 = vlog2.pop %v831
    %v835 = vmul.f32 %v834, 0.6931472
    %v836 = vmul.f32 %v833, 0.5
    %v837 = vmul.f32 %v835, 0.5
    %v838 = vrcp.pop %v818
    %v839 = vmul.f32 %v836, %v838
    %v840 = vrcp.pop %v819
    %v841 = vmul.f32 %v837, %v840
    %v842 = vmul.f32 %v774, %v839
    %v843 = vmul.f32 %v775, %v839
    %v844 = vmul.f32 %v776, %v839
    %v845 = vmul.f32 %v777, %v839
    %v846 = vmul.f32 %v778, %v839
    %v847 = vmul.f32 %v779, %v839
    %v848 = vmul.f32 %v780, %v839
    %v849 = vmul.f32 %v781, %v839
    %v850 = vmul.f32 %v782, %v839
    %v851 = vmul.f32 %v783, %v839
    %v852 = vmul.f32 %v784, %v839
    %v853 = vmul.f32 %v785, %v839
    %v854 = vmul.f32 %v786, %v839
    %v855 = vmul.f32 %v787, %v839
    %v856 = vmul.f32 %v788, %v839
    %v857 = vmul.f32 %v789, %v839
    %v858 = vmul.f32 %v790, %v839
    %v859 = vmul.f32 %v791, %v839
    %v860 = vmul.f32 %v792, %v839
    %v861 = vmul.f32 %v793, %v839
    %v862 = vmul.f32 %v794, %v841
    %v863 = vmul.f32 %v795, %v841
    %v864 = vmul.f32 %v796, %v841
    %v865 = vmul.f32 %v797, %v841
    %v866 = vmul.f32 %v798, %v841
    %v867 = vmul.f32 %v799, %v841
    %v868 = vmul.f32 %v800, %v841
    %v869 = vmul.f32 %v801, %v841
    %v870 = vmul.f32 %v802, %v841
    %v871 = vmul.f32 %v803, %v841
    %v872 = vmul.f32 %v804, %v841
    %v873 = vmul.f32 %v805, %v841
    %v874 = vmul.f32 %v806, %v841
    %v875 = vmul.f32 %v807, %v841
    %v876 = vmul.f32 %v808, %v841
    %v877 = vmul.f32 %v809, %v841
    %v878 = vmul.f32 %v810, %v841
    %v879 = vmul.f32 %v811, %v841
    %v880 = vmul.f32 %v812, %v841
    %v881 = vmul.f32 %v813, %v841
    %v882 = vsel %vm229, %v842, -inf
    %v883 = vsel %vm229, %v847, -inf
    %v884 = vmax.f32 %v882, %v883
    %v885 = vsel %vm229, %v852, -inf
    %v886 = vmax.f32 %v884, %v885
    %v887 = vsel %vm229, %v857, -inf
    %v888 = vmax.f32 %v886, %v887
    %v889 = vsel %vm229, %v843, -inf
    %v890 = vsel %vm229, %v848, -inf
    %v891 = vmax.f32 %v889, %v890
    %v892 = vsel %vm229, %v853, -inf
    %v893 = vmax.f32 %v891, %v892
    %v894 = vsel %vm229, %v858, -inf
    %v895 = vmax.f32 %v893, %v894
    %v896 = vsel %vm229, %v844, -inf
    %v897 = vsel %vm229, %v849, -inf
    %v898 = vmax.f32 %v896, %v897
    %v899 = vsel %vm229, %v854, -inf
    %v900 = vmax.f32 %v898, %v899
    %v901 = vsel %vm229, %v859, -inf
    %v902 = vmax.f32 %v900, %v901
    %v903 = vsel %vm229, %v845, -inf
    %v904 = vsel %vm229, %v850, -inf
    %v905 = vmax.f32 %v903, %v904
    %v906 = vsel %vm229, %v855, -inf
    %v907 = vmax.f32 %v905, %v906
    %v908 = vsel %vm229, %v860, -inf
    %v909 = vmax.f32 %v907, %v908
    %v910 = vsel %vm229, %v846, -inf
    %v911 = vsel %vm229, %v851, -inf
    %v912 = vmax.f32 %v910, %v911
    %v913 = vsel %vm229, %v856, -inf
    %v914 = vmax.f32 %v912, %v913
    %v915 = vsel %vm229, %v861, -inf
    %v916 = vmax.f32 %v914, %v915
    %v917 = vsel %vm229, %v862, -inf
    %v918 = vsel %vm229, %v867, -inf
    %v919 = vmax.f32 %v917, %v918
    %v920 = vsel %vm229, %v872, -inf
    %v921 = vmax.f32 %v919, %v920
    %v922 = vsel %vm229, %v877, -inf
    %v923 = vmax.f32 %v921, %v922
    %v924 = vsel %vm229, %v863, -inf
    %v925 = vsel %vm229, %v868, -inf
    %v926 = vmax.f32 %v924, %v925
    %v927 = vsel %vm229, %v873, -inf
    %v928 = vmax.f32 %v926, %v927
    %v929 = vsel %vm229, %v878, -inf
    %v930 = vmax.f32 %v928, %v929
    %v931 = vsel %vm229, %v864, -inf
    %v932 = vsel %vm229, %v869, -inf
    %v933 = vmax.f32 %v931, %v932
    %v934 = vsel %vm229, %v874, -inf
    %v935 = vmax.f32 %v933, %v934
    %v936 = vsel %vm229, %v879, -inf
    %v937 = vmax.f32 %v935, %v936
    %v938 = vsel %vm229, %v865, -inf
    %v939 = vsel %vm229, %v870, -inf
    %v940 = vmax.f32 %v938, %v939
    %v941 = vsel %vm229, %v875, -inf
    %v942 = vmax.f32 %v940, %v941
    %v943 = vsel %vm229, %v880, -inf
    %v944 = vmax.f32 %v942, %v943
    %v945 = vsel %vm229, %v866, -inf
    %v946 = vsel %vm229, %v871, -inf
    %v947 = vmax.f32 %v945, %v946
    %v948 = vsel %vm229, %v876, -inf
    %v949 = vmax.f32 %v947, %v948
    %v950 = vsel %vm229, %v881, -inf
    %v951 = vmax.f32 %v949, %v950
    %v952 = vmul.f32 %v888, %v888
    %v953 = vmul.f32 %v895, %v895
    %v954 = vmul.f32 %v902, %v902
    %v955 = vmul.f32 %v909, %v909
    %v956 = vmul.f32 %v916, %v916
    %v957 = vmul.f32 %v923, %v923
    %v958 = vmul.f32 %v930, %v930
    %v959 = vmul.f32 %v937, %v937
    %v960 = vmul.f32 %v944, %v944
    %v961 = vmul.f32 %v951, %v951
    %v962 = vsel %vm229, %v952, 0.0
    %v963 = vsel %vm229, %v953, 0.0
    %v964 = vadd.f32 %v962, %v963
    %v965 = vsel %vm229, %v954, 0.0
    %v966 = vadd.f32 %v964, %v965
    %v967 = vsel %vm229, %v955, 0.0
    %v968 = vadd.f32 %v966, %v967
    %v969 = vsel %vm229, %v956, 0.0
    %v970 = vadd.f32 %v968, %v969
    %v971 = vsel %vm229, %v957, 0.0
    %v972 = vsel %vm229, %v958, 0.0
    %v973 = vadd.f32 %v971, %v972
    %v974 = vsel %vm229, %v959, 0.0
    %v975 = vadd.f32 %v973, %v974
    %v976 = vsel %vm229, %v960, 0.0
    %v977 = vadd.f32 %v975, %v976
    %v978 = vsel %vm229, %v961, 0.0
    %v979 = vadd.f32 %v977, %v978
    %v980 = vsel %vm229, %v970, 0.0
    %v981 = vrot.slane %v980, 4
    %v982 = vadd.f32 %v980, %v981
    %v983 = vrot.slane %v982, 2
    %v984 = vadd.f32 %v982, %v983
    %v985 = vrot.slane %v984, 1
    %v986 = vadd.f32 %v984, %v985
    %v987 = vsel %vm229, %v979, 0.0
    %v988 = vrot.slane %v987, 4
    %v989 = vadd.f32 %v987, %v988
    %v990 = vrot.slane %v989, 2
    %v991 = vadd.f32 %v989, %v990
    %v992 = vrot.slane %v991, 1
    %v993 = vadd.f32 %v991, %v992
    %v994 = vrsqrt.pop %v986
    %v995 = vmul.f32 %v986, %v994
    %vm996 = vcmp.eq.f32.partialorder %v986, inf
    %v997 = vsel %vm996, %v986, %v995
    %vm998 = vcmp.eq.f32.partialorder %v986, 0.0
    %v999 = vand.u32 %v986, 2147483648
    %v1000 = vsel %vm998, %v999, %v997
    %v1001 = vrsqrt.pop %v993
    %v1002 = vmul.f32 %v993, %v1001
    %vm1003 = vcmp.eq.f32.partialorder %v993, inf
    %v1004 = vsel %vm1003, %v993, %v1002
    %vm1005 = vcmp.eq.f32.partialorder %v993, 0.0
    %v1006 = vand.u32 %v993, 2147483648
    %v1007 = vsel %vm1005, %v1006, %v1004
    %v1008 = vmax.f32 %v1000, 1e-05
    %v1009 = vmax.f32 %v1007, 1e-05
    %v1010 = vmul.f32 %v1008, 0.2236068
    %v1011 = vmul.f32 %v1009, 0.2236068
    %v1012 = vtanh.pop %v1010
    %v1013 = vtanh.pop %v1011
    %v1014 = vrcp.pop %v1010
    %v1015 = vmul.f32 %v1012, %v1014
    %v1016 = vrcp.pop %v1011
    %v1017 = vmul.f32 %v1013, %v1016
    %v1018 = vmul.f32 %v888, %v1015
    %v1019 = vmul.f32 %v895, %v1015
    %v1020 = vmul.f32 %v902, %v1015
    %v1021 = vmul.f32 %v909, %v1015
    %v1022 = vmul.f32 %v916, %v1015
    %v1023 = vmul.f32 %v923, %v1017
    %v1024 = vmul.f32 %v930, %v1017
    %v1025 = vmul.f32 %v937, %v1017
    %v1026 = vmul.f32 %v944, %v1017
    %v1027 = vmul.f32 %v951, %v1017
    %v1028 = vmul.f32 %v1012, 4.472136
    %v1029 = vmul.f32 %v1013, 4.472136
    %v1030 = vmax.f32 %v1028, 1e-05
    %v1031 = vmax.f32 %v1029, 1e-05
    %vm1032 = vcmp.gt.f32.partialorder %v1030, 4.4542475
    %vm1033 = vcmp.gt.f32.partialorder %v1031, 4.4542475
    %v1034 = vrcp.pop %v1030
    %v1035 = vmul.f32 4.4542475, %v1034
    %v1036 = vrcp.pop %v1031
    %v1037 = vmul.f32 4.4542475, %v1036
    %v1038 = vsel %vm1032, %v1035, 1.0
    %v1039 = vsel %vm1033, %v1037, 1.0
    %v1040 = vmul.f32 %v1018, %v1038
    %v1041 = vmul.f32 %v1019, %v1038
    %v1042 = vmul.f32 %v1020, %v1038
    %v1043 = vmul.f32 %v1021, %v1038
    %v1044 = vmul.f32 %v1022, %v1038
    %v1045 = vmul.f32 %v1023, %v1039
    %v1046 = vmul.f32 %v1024, %v1039
    %v1047 = vmul.f32 %v1025, %v1039
    %v1048 = vmul.f32 %v1026, %v1039
    %v1049 = vmul.f32 %v1027, %v1039
    %v1050 = vmin.f32 %v1030, 4.4542475
    %v1051 = vmin.f32 %v1031, 4.4542475
    %v1052 = vmax.f32 %v1050, 1e-05
    %v1053 = vmax.f32 %v1051, 1e-05
    %v1054 = vmul.f32 %v1052, 0.2236068
    %v1055 = vmul.f32 %v1053, 0.2236068
    %v1056 = vmax.f32 %v1054, -0.99999
    %v1057 = vmax.f32 %v1055, -0.99999
    %v1058 = vmin.f32 %v1056, 0.99999
    %v1059 = vmin.f32 %v1057, 0.99999
    %v1060 = vadd.f32 %v1058, 1.0
    %v1061 = vadd.f32 %v1059, 1.0
    %v1062 = vsub.f32 1.0, %v1058
    %v1063 = vsub.f32 1.0, %v1059
    %v1064 = vrcp.pop %v1062
    %v1065 = vmul.f32 %v1060, %v1064
    %v1066 = vrcp.pop %v1063
    %v1067 = vmul.f32 %v1061, %v1066
    %v1068 = vlog2.pop %v1065
    %v1069 = vmul.f32 %v1068, 0.6931472
    %v1070 = vlog2.pop %v1067
    %v1071 = vmul.f32 %v1070, 0.6931472
    %v1072 = vmul.f32 %v1069, 0.5
    %v1073 = vmul.f32 %v1071, 0.5
    %v1074 = vrcp.pop %v1054
    %v1075 = vmul.f32 %v1072, %v1074
    %v1076 = vrcp.pop %v1055
    %v1077 = vmul.f32 %v1073, %v1076
    %v1078 = vmul.f32 %v1040, %v1075
    %v1079 = vmul.f32 %v1041, %v1075
    %v1080 = vmul.f32 %v1042, %v1075
    %v1081 = vmul.f32 %v1043, %v1075
    %v1082 = vmul.f32 %v1044, %v1075
    %v1083 = vmul.f32 %v1045, %v1077
    %v1084 = vmul.f32 %v1046, %v1077
    %v1085 = vmul.f32 %v1047, %v1077
    %v1086 = vmul.f32 %v1048, %v1077
    %v1087 = vmul.f32 %v1049, %v1077
    %v1088 = vsel %vm229, %v1078, -inf
    %v1089 = vrot.slane %v1088, 4
    %v1090 = vmax.f32 %v1088, %v1089
    %v1091 = vrot.slane %v1090, 2
    %v1092 = vmax.f32 %v1090, %v1091
    %v1093 = vrot.slane %v1092, 1
    %v1094 = vmax.f32 %v1092, %v1093
    %v1095 = vsel %vm229, %v1079, -inf
    %v1096 = vrot.slane %v1095, 4
    %v1097 = vmax.f32 %v1095, %v1096
    %v1098 = vrot.slane %v1097, 2
    %v1099 = vmax.f32 %v1097, %v1098
    %v1100 = vrot.slane %v1099, 1
    %v1101 = vmax.f32 %v1099, %v1100
    %v1102 = vsel %vm229, %v1080, -inf
    %v1103 = vrot.slane %v1102, 4
    %v1104 = vmax.f32 %v1102, %v1103
    %v1105 = vrot.slane %v1104, 2
    %v1106 = vmax.f32 %v1104, %v1105
    %v1107 = vrot.slane %v1106, 1
    %v1108 = vmax.f32 %v1106, %v1107
    %v1109 = vsel %vm229, %v1081, -inf
    %v1110 = vrot.slane %v1109, 4
    %v1111 = vmax.f32 %v1109, %v1110
    %v1112 = vrot.slane %v1111, 2
    %v1113 = vmax.f32 %v1111, %v1112
    %v1114 = vrot.slane %v1113, 1
    %v1115 = vmax.f32 %v1113, %v1114
    %v1116 = vsel %vm229, %v1082, -inf
    %v1117 = vrot.slane %v1116, 4
    %v1118 = vmax.f32 %v1116, %v1117
    %v1119 = vrot.slane %v1118, 2
    %v1120 = vmax.f32 %v1118, %v1119
    %v1121 = vrot.slane %v1120, 1
    %v1122 = vmax.f32 %v1120, %v1121
    %v1123 = vsel %vm229, %v1083, -inf
    %v1124 = vrot.slane %v1123, 4
    %v1125 = vmax.f32 %v1123, %v1124
    %v1126 = vrot.slane %v1125, 2
    %v1127 = vmax.f32 %v1125, %v1126
    %v1128 = vrot.slane %v1127, 1
    %v1129 = vmax.f32 %v1127, %v1128
    %v1130 = vsel %vm229, %v1084, -inf
    %v1131 = vrot.slane %v1130, 4
    %v1132 = vmax.f32 %v1130, %v1131
    %v1133 = vrot.slane %v1132, 2
    %v1134 = vmax.f32 %v1132, %v1133
    %v1135 = vrot.slane %v1134, 1
    %v1136 = vmax.f32 %v1134, %v1135
    %v1137 = vsel %vm229, %v1085, -inf
    %v1138 = vrot.slane %v1137, 4
    %v1139 = vmax.f32 %v1137, %v1138
    %v1140 = vrot.slane %v1139, 2
    %v1141 = vmax.f32 %v1139, %v1140
    %v1142 = vrot.slane %v1141, 1
    %v1143 = vmax.f32 %v1141, %v1142
    %v1144 = vsel %vm229, %v1086, -inf
    %v1145 = vrot.slane %v1144, 4
    %v1146 = vmax.f32 %v1144, %v1145
    %v1147 = vrot.slane %v1146, 2
    %v1148 = vmax.f32 %v1146, %v1147
    %v1149 = vrot.slane %v1148, 1
    %v1150 = vmax.f32 %v1148, %v1149
    %v1151 = vsel %vm229, %v1087, -inf
    %v1152 = vrot.slane %v1151, 4
    %v1153 = vmax.f32 %v1151, %v1152
    %v1154 = vrot.slane %v1153, 2
    %v1155 = vmax.f32 %v1153, %v1154
    %v1156 = vrot.slane %v1155, 1
    %v1157 = vmax.f32 %v1155, %v1156
    %vm1158 = vcmask 523264
    %v1159 = vsel %vm1158, %v1094, -inf
    %v1160 = vsel %vm1158, %v1101, -inf
    %v1161 = vsel %vm1158, %v1108, -inf
    %v1162 = vmax.f32 %v1159, %v1161
    %v1163 = vsel %vm1158, %v1115, -inf
    %v1164 = vmax.f32 %v1160, %v1163
    %v1165 = vsel %vm1158, %v1122, -inf
    %v1166 = vmax.f32 %v1162, %v1165
    %v1167 = vmax.f32 %v1166, %v1164
    %v1168 = vsel %vm1158, %v1129, -inf
    %v1169 = vsel %vm1158, %v1136, -inf
    %v1170 = vsel %vm1158, %v1143, -inf
    %v1171 = vmax.f32 %v1168, %v1170
    %v1172 = vsel %vm1158, %v1150, -inf
    %v1173 = vmax.f32 %v1169, %v1172
    %v1174 = vsel %vm1158, %v1157, -inf
    %v1175 = vmax.f32 %v1171, %v1174
    %v1176 = vmax.f32 %v1175, %v1173
    %v1177 = vmul.f32 %v1167, %v1167
    %v1178 = vmul.f32 %v1176, %v1176
    %v1179 = vadd.f32 %v1177, 0.0
    %v1180 = vadd.f32 %v1178, 0.0
    %v1181 = vadd.f32 %v1179, 0.0
    %v1182 = vadd.f32 %v1180, 0.0
    %v1183 = vrsqrt.pop %v1181
    %v1184 = vmul.f32 %v1181, %v1183
    %vm1185 = vcmp.eq.f32.partialorder %v1181, inf
    %v1186 = vsel %vm1185, %v1181, %v1184
    %vm1187 = vcmp.eq.f32.partialorder %v1181, 0.0
    %v1188 = vand.u32 %v1181, 2147483648
    %v1189 = vsel %vm1187, %v1188, %v1186
    %v1190 = vrsqrt.pop %v1182
    %v1191 = vmul.f32 %v1182, %v1190
    %vm1192 = vcmp.eq.f32.partialorder %v1182, inf
    %v1193 = vsel %vm1192, %v1182, %v1191
    %vm1194 = vcmp.eq.f32.partialorder %v1182, 0.0
    %v1195 = vand.u32 %v1182, 2147483648
    %v1196 = vsel %vm1194, %v1195, %v1193
    %v1197 = vmax.f32 %v1189, 1e-05
    %v1198 = vmax.f32 %v1196, 1e-05
    %v1199 = vmul.f32 %v1197, 0.2236068
    %v1200 = vmul.f32 %v1198, 0.2236068
    %v1201 = vtanh.pop %v1199
    %v1202 = vtanh.pop %v1200
    %v1203 = vrcp.pop %v1199
    %v1204 = vmul.f32 %v1201, %v1203
    %v1205 = vrcp.pop %v1200
    %v1206 = vmul.f32 %v1202, %v1205
    %v1207 = vmul.f32 %v1167, %v1204
    %v1208 = vmul.f32 %v1176, %v1206
    %v1209 = vmul.f32 %v1201, 4.472136
    %v1210 = vmul.f32 %v1202, 4.472136
    %v1211 = vmax.f32 %v1209, 1e-05
    %v1212 = vmax.f32 %v1210, 1e-05
    %vm1213 = vcmp.gt.f32.partialorder %v1211, 4.4542475
    %vm1214 = vcmp.gt.f32.partialorder %v1212, 4.4542475
    %v1215 = vrcp.pop %v1211
    %v1216 = vmul.f32 4.4542475, %v1215
    %v1217 = vrcp.pop %v1212
    %v1218 = vmul.f32 4.4542475, %v1217
    %v1219 = vsel %vm1213, %v1216, 1.0
    %v1220 = vsel %vm1214, %v1218, 1.0
    %v1221 = vmul.f32 %v1207, %v1219
    %v1222 = vmul.f32 %v1208, %v1220
    %v1223 = vmul.f32 %v1221, %v1221
    %v1224 = vmul.f32 %v1222, %v1222
    %v1225 = vsel %vm1158, %v1223, 0.0
    %1226 = vadd.xlane.f32.xlu0 %v1225
    %v1227 = vpop.xlane.xlu0 %1226
    %v1228 = vsel %vm1158, %v1224, 0.0
    %1229 = vadd.xlane.f32.xlu0 %v1228
    %v1230 = vpop.xlane.xlu0 %1229
    %v1231 = vrsqrt.pop %v1227
    %v1232 = vmul.f32 %v1227, %v1231
    %vm1233 = vcmp.eq.f32.partialorder %v1227, inf
    %v1234 = vsel %vm1233, %v1227, %v1232
    %vm1235 = vcmp.eq.f32.partialorder %v1227, 0.0
    %v1236 = vand.u32 %v1227, 2147483648
    %v1237 = vsel %vm1235, %v1236, %v1234
    %v1238 = vrsqrt.pop %v1230
    %v1239 = vmul.f32 %v1230, %v1238
    %vm1240 = vcmp.eq.f32.partialorder %v1230, inf
    %v1241 = vsel %vm1240, %v1230, %v1239
    %vm1242 = vcmp.eq.f32.partialorder %v1230, 0.0
    %v1243 = vand.u32 %v1230, 2147483648
    %v1244 = vsel %vm1242, %v1243, %v1241
    %v1245 = vmax.f32 %v1237, 1e-05
    %v1246 = vmax.f32 %v1244, 1e-05
    %v1247 = vmul.f32 %v1245, 0.2236068
    %v1248 = vmul.f32 %v1246, 0.2236068
    %v1249 = vtanh.pop %v1247
    %v1250 = vtanh.pop %v1248
    %v1251 = vrcp.pop %v1247
    %v1252 = vmul.f32 %v1249, %v1251
    %v1253 = vrcp.pop %v1248
    %v1254 = vmul.f32 %v1250, %v1253
    %v1255 = vmul.f32 %v1221, %v1252
    %v1256 = vmul.f32 %v1222, %v1254
    %v1257 = vmul.f32 %v1249, 4.472136
    %v1258 = vmul.f32 %v1250, 4.472136
    %v1259 = vmax.f32 %v1257, 1e-05
    %v1260 = vmax.f32 %v1258, 1e-05
    %vm1261 = vcmp.gt.f32.partialorder %v1259, 4.4542475
    %vm1262 = vcmp.gt.f32.partialorder %v1260, 4.4542475
    %v1263 = vrcp.pop %v1259
    %v1264 = vmul.f32 4.4542475, %v1263
    %v1265 = vrcp.pop %v1260
    %v1266 = vmul.f32 4.4542475, %v1265
    %v1267 = vsel %vm1261, %v1264, 1.0
    %v1268 = vsel %vm1262, %v1266, 1.0
    %v1269 = vmul.f32 %v1255, %v1267
    %v1270 = vmul.f32 %v1256, %v1268
    %vm1271 = vcmask 516096
    %1272 = vst.msk [vmem:[#allocation2] sm:$0x1] %vm1271, %v1269
    %1273 = vst.msk [vmem:[#allocation2 + $0x1] sm:$0x1] %vm1271, %v1270
    // Predicated region
    $region14: #{hyp_convnet_encoder.3} parent=1 // pred_check
      _
    $region15: #{hyp_convnet_encoder.3} parent=1 // pred_check_branch
      %1275 = sbr.rel (0) target = $region17
    $region16: #{hyp_convnet_encoder.3} parent=1 // pred_region
      %s1277 = ssub.s32 32, 32
      %1278 = vsyncadd [#allocation3], %s1277
      %s1279 = sshll.u32 [#allocation2], 4
      %s1280 = int_to_ptr.vmem [resolvable:$true] %s1279
      %1285 = dma.vmem_to_hbm [thread:$0]  %s1280, 32, %s3, [#allocation3], 16, 16, 1
    $region17: #{hyp_convnet_encoder.3} parent=1 // pred_fallthru
      _
    // Predicated region
    $region18: #{hyp_convnet_encoder.3} parent=1 // pred_check
      _
    $region19: #{hyp_convnet_encoder.3} parent=1 // pred_check_branch
      %1287 = sbr.rel (0) target = $region21
    $region20: #{hyp_convnet_encoder.3} parent=1 // pred_region
      %1288 = dma.done [#allocation3], 32
    $region21: #{hyp_convnet_encoder.3} parent=1 // pred_fallthru
      _
    %1289 = vsyncpa [#allocation3], 1

// kernel: hyp_convnet_encoder.2
$region0: #{hyp_convnet_encoder.2}
  #allocation0 [shape = 'u32[]', space=smem, size = 0x4, offset = 0x4, fixed_abs, tag = 'smem constant byte address 0x4 - core index']
  #allocation1 [shape = 'u32[144,128]{1,0:T(1,128)}', space=vmem, size = 0x12000, scoped, tag = 'internal scratch']
  %s0 = inlined_call_operand.vmem [shape: f32[2,12,12,3], index: 0, kind: input, shape index: {}]
  %s1 = inlined_call_operand.vmem [shape: f32[3,3,3,64], index: 1, kind: input, shape index: {}]
  %s2 = inlined_call_operand.vmem [shape: f32[1,64], index: 2, kind: input, shape index: {}]
  %s3 = inlined_call_operand.vmem [shape: bf16[2,10,10,64], index: 3, kind: output, shape index: {0}]
  %s4 = inlined_call_operand.vmem [shape: f32[2,1,1,64], index: 4, kind: output, shape index: {1}]
  %s5 = inlined_call_operand.vmem [shape: f32[2,1,1,64], index: 5, kind: output, shape index: {2}]
  %6 = xla_tuple %s3, %s4, %s5
  %s7 = sld [smem:[#allocation0]]
  $region38: #{hyp_convnet_encoder.2} parent=0
    _
  %s9 = ssub.s32 1, %s7
  %s10 = scalar_select 0, %s9, %s7
  // Predicated region
  $region2: #{hyp_convnet_encoder.2} parent=0 // pred_check
    _
  $region3: #{hyp_convnet_encoder.2} parent=0 // pred_check_branch
    %12 = sbr.rel (0) target = $region5
  $region4: #{hyp_convnet_encoder.2} parent=0 // pred_region
    _
  $region5: #{hyp_convnet_encoder.2} parent=0 // pred_fallthru
    _
  // Predicated region
  $region6: #{hyp_convnet_encoder.2} parent=0 // pred_check
    _
  $region7: #{hyp_convnet_encoder.2} parent=0 // pred_check_branch
    %14 = sbr.rel (0) target = $region9
  $region8: #{hyp_convnet_encoder.2} parent=0 // pred_region
    _
  $region9: #{hyp_convnet_encoder.2} parent=0 // pred_fallthru
    _
  // Predicated region
  $region10: #{hyp_convnet_encoder.2} parent=0 // pred_check
    _
  $region11: #{hyp_convnet_encoder.2} parent=0 // pred_check_branch
    %16 = sbr.rel (0) target = $region13
  $region12: #{hyp_convnet_encoder.2} parent=0 // pred_region
    _
  $region13: #{hyp_convnet_encoder.2} parent=0 // pred_fallthru
    _
  %v17 = vld [vmem:[%s0] sm:$0xff]
  %v18 = vld [vmem:[%s0 + $0x8] sm:$0xf]
  %v19 = vld [vmem:[%s0 + $0x10] sm:$0xff]
  %v20 = vld [vmem:[%s0 + $0x18] sm:$0xf]
  %v21 = vld [vmem:[%s0 + $0x20] sm:$0xff]
  %v22 = vld [vmem:[%s0 + $0x28] sm:$0xf]
  %v23 = vld [vmem:[%s0 + $0x30] sm:$0xff]
  %v24 = vld [vmem:[%s0 + $0x38] sm:$0xf]
  %v25 = vld [vmem:[%s0 + $0x40] sm:$0xff]
  %v26 = vld [vmem:[%s0 + $0x48] sm:$0xf]
  %v27 = vld [vmem:[%s0 + $0x50] sm:$0xff]
  %v28 = vld [vmem:[%s0 + $0x58] sm:$0xf]
  %v29 = vld [vmem:[%s0 + $0x60] sm:$0xff]
  %v30 = vld [vmem:[%s0 + $0x68] sm:$0xf]
  %v31 = vld [vmem:[%s0 + $0x70] sm:$0xff]
  %v32 = vld [vmem:[%s0 + $0x78] sm:$0xf]
  %v33 = vld [vmem:[%s0 + $0x80] sm:$0xff]
  %v34 = vld [vmem:[%s0 + $0x88] sm:$0xf]
  %v35 = vld [vmem:[%s0 + $0x90] sm:$0xff]
  %v36 = vld [vmem:[%s0 + $0x98] sm:$0xf]
  %v37 = vld [vmem:[%s0 + $0xa0] sm:$0xff]
  %v38 = vld [vmem:[%s0 + $0xa8] sm:$0xf]
  %v39 = vld [vmem:[%s0 + $0xb0] sm:$0xff]
  %v40 = vld [vmem:[%s0 + $0xb8] sm:$0xf]
  %v41 = vld [vmem:[%s0 + $0xc0] sm:$0xff]
  %v42 = vld [vmem:[%s0 + $0xc8] sm:$0xf]
  %v43 = vld [vmem:[%s0 + $0xd0] sm:$0xff]
  %v44 = vld [vmem:[%s0 + $0xd8] sm:$0xf]
  %v45 = vld [vmem:[%s0 + $0xe0] sm:$0xff]
  %v46 = vld [vmem:[%s0 + $0xe8] sm:$0xf]
  %v47 = vld [vmem:[%s0 + $0xf0] sm:$0xff]
  %v48 = vld [vmem:[%s0 + $0xf8] sm:$0xf]
  %v49 = vld [vmem:[%s0 + $0x100] sm:$0xff]
  %v50 = vld [vmem:[%s0 + $0x108] sm:$0xf]
  %v51 = vld [vmem:[%s0 + $0x110] sm:$0xff]
  %v52 = vld [vmem:[%s0 + $0x118] sm:$0xf]
  %v53 = vld [vmem:[%s0 + $0x120] sm:$0xff]
  %v54 = vld [vmem:[%s0 + $0x128] sm:$0xf]
  %v55 = vld [vmem:[%s0 + $0x130] sm:$0xff]
  %v56 = vld [vmem:[%s0 + $0x138] sm:$0xf]
  %v57 = vld [vmem:[%s0 + $0x140] sm:$0xff]
  %v58 = vld [vmem:[%s0 + $0x148] sm:$0xf]
  %v59 = vld [vmem:[%s0 + $0x150] sm:$0xff]
  %v60 = vld [vmem:[%s0 + $0x158] sm:$0xf]
  %v61 = vld [vmem:[%s0 + $0x160] sm:$0xff]
  %v62 = vld [vmem:[%s0 + $0x168] sm:$0xf]
  %v63 = vld [vmem:[%s0 + $0x170] sm:$0xff]
  %v64 = vld [vmem:[%s0 + $0x178] sm:$0xf]
  %v65 = vmul.f32 %v17, %v17
  %v66 = vmul.f32 %v18, %v18
  %v67 = vmul.f32 %v19, %v19
  %v68 = vmul.f32 %v20, %v20
  %v69 = vmul.f32 %v21, %v21
  %v70 = vmul.f32 %v22, %v22
  %v71 = vmul.f32 %v23, %v23
  %v72 = vmul.f32 %v24, %v24
  %v73 = vmul.f32 %v25, %v25
  %v74 = vmul.f32 %v26, %v26
  %v75 = vmul.f32 %v27, %v27
  %v76 = vmul.f32 %v28, %v28
  %v77 = vmul.f32 %v29, %v29
  %v78 = vmul.f32 %v30, %v30
  %v79 = vmul.f32 %v31, %v31
  %v80 = vmul.f32 %v32, %v32
  %v81 = vmul.f32 %v33, %v33
  %v82 = vmul.f32 %v34, %v34
  %v83 = vmul.f32 %v35, %v35
  %v84 = vmul.f32 %v36, %v36
  %v85 = vmul.f32 %v37, %v37
  %v86 = vmul.f32 %v38, %v38
  %v87 = vmul.f32 %v39, %v39
  %v88 = vmul.f32 %v40, %v40
  %v89 = vmul.f32 %v41, %v41
  %v90 = vmul.f32 %v42, %v42
  %v91 = vmul.f32 %v43, %v43
  %v92 = vmul.f32 %v44, %v44
  %v93 = vmul.f32 %v45, %v45
  %v94 = vmul.f32 %v46, %v46
  %v95 = vmul.f32 %v47, %v47
  %v96 = vmul.f32 %v48, %v48
  %v97 = vmul.f32 %v49, %v49
  %v98 = vmul.f32 %v50, %v50
  %v99 = vmul.f32 %v51, %v51
  %v100 = vmul.f32 %v52, %v52
  %v101 = vmul.f32 %v53, %v53
  %v102 = vmul.f32 %v54, %v54
  %v103 = vmul.f32 %v55, %v55
  %v104 = vmul.f32 %v56, %v56
  %v105 = vmul.f32 %v57, %v57
  %v106 = vmul.f32 %v58, %v58
  %v107 = vmul.f32 %v59, %v59
  %v108 = vmul.f32 %v60, %v60
  %v109 = vmul.f32 %v61, %v61
  %v110 = vmul.f32 %v62, %v62
  %v111 = vmul.f32 %v63, %v63
  %v112 = vmul.f32 %v64, %v64
  %vm113 = vcmask 23552
  %v114 = vsel %vm113, %v65, 0.0
  %v115 = vsel %vm113, %v67, 0.0
  %v116 = vadd.f32 %v114, %v115
  %v117 = vsel %vm113, %v69, 0.0
  %v118 = vadd.f32 %v116, %v117
  %v119 = vsel %vm113, %v71, 0.0
  %v120 = vadd.f32 %v118, %v119
  %v121 = vsel %vm113, %v73, 0.0
  %v122 = vadd.f32 %v120, %v121
  %v123 = vsel %vm113, %v75, 0.0
  %v124 = vadd.f32 %v122, %v123
  %v125 = vsel %vm113, %v77, 0.0
  %v126 = vadd.f32 %v124, %v125
  %v127 = vsel %vm113, %v79, 0.0
  %v128 = vadd.f32 %v126, %v127
  %v129 = vsel %vm113, %v81, 0.0
  %v130 = vadd.f32 %v128, %v129
  %v131 = vsel %vm113, %v83, 0.0
  %v132 = vadd.f32 %v130, %v131
  %v133 = vsel %vm113, %v85, 0.0
  %v134 = vadd.f32 %v132, %v133
  %v135 = vsel %vm113, %v87, 0.0
  %v136 = vadd.f32 %v134, %v135
  %vm137 = vcmask 19456
  %v138 = vsel %vm137, %v66, 0.0
  %v139 = vsel %vm137, %v68, 0.0
  %v140 = vadd.f32 %v138, %v139
  %v141 = vsel %vm137, %v70, 0.0
  %v142 = vadd.f32 %v140, %v141
  %v143 = vsel %vm137, %v72, 0.0
  %v144 = vadd.f32 %v142, %v143
  %v145 = vsel %vm137, %v74, 0.0
  %v146 = vadd.f32 %v144, %v145
  %v147 = vsel %vm137, %v76, 0.0
  %v148 = vadd.f32 %v146, %v147
  %v149 = vsel %vm137, %v78, 0.0
  %v150 = vadd.f32 %v148, %v149
  %v151 = vsel %vm137, %v80, 0.0
  %v152 = vadd.f32 %v150, %v151
  %v153 = vsel %vm137, %v82, 0.0
  %v154 = vadd.f32 %v152, %v153
  %v155 = vsel %vm137, %v84, 0.0
  %v156 = vadd.f32 %v154, %v155
  %v157 = vsel %vm137, %v86, 0.0
  %v158 = vadd.f32 %v156, %v157
  %v159 = vsel %vm137, %v88, 0.0
  %v160 = vadd.f32 %v158, %v159
  %v161 = vsel %vm113, %v89, 0.0
  %v162 = vsel %vm113, %v91, 0.0
  %v163 = vadd.f32 %v161, %v162
  %v164 = vsel %vm113, %v93, 0.0
  %v165 = vadd.f32 %v163, %v164
  %v166 = vsel %vm113, %v95, 0.0
  %v167 = vadd.f32 %v165, %v166
  %v168 = vsel %vm113, %v97, 0.0
  %v169 = vadd.f32 %v167, %v168
  %v170 = vsel %vm113, %v99, 0.0
  %v171 = vadd.f32 %v169, %v170
  %v172 = vsel %vm113, %v101, 0.0
  %v173 = vadd.f32 %v171, %v172
  %v174 = vsel %vm113, %v103, 0.0
  %v175 = vadd.f32 %v173, %v174
  %v176 = vsel %vm113, %v105, 0.0
  %v177 = vadd.f32 %v175, %v176
  %v178 = vsel %vm113, %v107, 0.0
  %v179 = vadd.f32 %v177, %v178
  %v180 = vsel %vm113, %v109, 0.0
  %v181 = vadd.f32 %v179, %v180
  %v182 = vsel %vm113, %v111, 0.0
  %v183 = vadd.f32 %v181, %v182
  %v184 = vsel %vm137, %v90, 0.0
  %v185 = vsel %vm137, %v92, 0.0
  %v186 = vadd.f32 %v184, %v185
  %v187 = vsel %vm137, %v94, 0.0
  %v188 = vadd.f32 %v186, %v187
  %v189 = vsel %vm137, %v96, 0.0
  %v190 = vadd.f32 %v188, %v189
  %v191 = vsel %vm137, %v98, 0.0
  %v192 = vadd.f32 %v190, %v191
  %v193 = vsel %vm137, %v100, 0.0
  %v194 = vadd.f32 %v192, %v193
  %v195 = vsel %vm137, %v102, 0.0
  %v196 = vadd.f32 %v194, %v195
  %v197 = vsel %vm137, %v104, 0.0
  %v198 = vadd.f32 %v196, %v197
  %v199 = vsel %vm137, %v106, 0.0
  %v200 = vadd.f32 %v198, %v199
  %v201 = vsel %vm137, %v108, 0.0
  %v202 = vadd.f32 %v200, %v201
  %v203 = vsel %vm137, %v110, 0.0
  %v204 = vadd.f32 %v202, %v203
  %v205 = vsel %vm137, %v112, 0.0
  %v206 = vadd.f32 %v204, %v205
  %v207 = vsel %vm113, %v136, 0.0
  %v208 = vsel %vm137, %v160, 0.0
  %v209 = vadd.f32 %v207, %v208
  %v210 = vrot.slane %v209, 4
  %v211 = vadd.f32 %v209, %v210
  %v212 = vrot.slane %v211, 2
  %v213 = vadd.f32 %v211, %v212
  %v214 = vrot.slane %v213, 1
  %v215 = vadd.f32 %v213, %v214
  %v216 = vsel %vm113, %v183, 0.0
  %v217 = vsel %vm137, %v206, 0.0
  %v218 = vadd.f32 %v216, %v217
  %v219 = vrot.slane %v218, 4
  %v220 = vadd.f32 %v218, %v219
  %v221 = vrot.slane %v220, 2
  %v222 = vadd.f32 %v220, %v221
  %v223 = vrot.slane %v222, 1
  %v224 = vadd.f32 %v222, %v223
  %v225 = vrsqrt.pop %v215
  %v226 = vmul.f32 %v215, %v225
  %vm227 = vcmp.eq.f32.partialorder %v215, inf
  %v228 = vsel %vm227, %v215, %v226
  %vm229 = vcmp.eq.f32.partialorder %v215, 0.0
  %v230 = vand.u32 %v215, 2147483648
  %v231 = vsel %vm229, %v230, %v228
  %v232 = vrsqrt.pop %v224
  %v233 = vmul.f32 %v224, %v232
  %vm234 = vcmp.eq.f32.partialorder %v224, inf
  %v235 = vsel %vm234, %v224, %v233
  %vm236 = vcmp.eq.f32.partialorder %v224, 0.0
  %v237 = vand.u32 %v224, 2147483648
  %v238 = vsel %vm236, %v237, %v235
  %v239 = vmax.f32 %v231, 1e-05
  %v240 = vmax.f32 %v238, 1e-05
  %vm241 = vcmp.gt.f32.partialorder %v239, 4.4542475
  %vm242 = vcmp.gt.f32.partialorder %v240, 4.4542475
  %v243 = vrcp.pop %v239
  %v244 = vmul.f32 4.4542475, %v243
  %v245 = vrcp.pop %v240
  %v246 = vmul.f32 4.4542475, %v245
  %v247 = vsel %vm241, %v244, 1.0
  %v248 = vsel %vm242, %v246, 1.0
  %v249 = vmul.f32 %v17, %v247
  %v250 = vmul.f32 %v18, %v247
  %v251 = vmul.f32 %v19, %v247
  %v252 = vmul.f32 %v20, %v247
  %v253 = vmul.f32 %v21, %v247
  %v254 = vmul.f32 %v22, %v247
  %v255 = vmul.f32 %v23, %v247
  %v256 = vmul.f32 %v24, %v247
  %v257 = vmul.f32 %v25, %v247
  %v258 = vmul.f32 %v26, %v247
  %v259 = vmul.f32 %v27, %v247
  %v260 = vmul.f32 %v28, %v247
  %v261 = vmul.f32 %v29, %v247
  %v262 = vmul.f32 %v30, %v247
  %v263 = vmul.f32 %v31, %v247
  %v264 = vmul.f32 %v32, %v247
  %v265 = vmul.f32 %v33, %v247
  %v266 = vmul.f32 %v34, %v247
  %v267 = vmul.f32 %v35, %v247
  %v268 = vmul.f32 %v36, %v247
  %v269 = vmul.f32 %v37, %v247
  %v270 = vmul.f32 %v38, %v247
  %v271 = vmul.f32 %v39, %v247
  %v272 = vmul.f32 %v40, %v247
  %v273 = vmul.f32 %v41, %v248
  %v274 = vmul.f32 %v42, %v248
  %v275 = vmul.f32 %v43, %v248
  %v276 = vmul.f32 %v44, %v248
  %v277 = vmul.f32 %v45, %v248
  %v278 = vmul.f32 %v46, %v248
  %v279 = vmul.f32 %v47, %v248
  %v280 = vmul.f32 %v48, %v248
  %v281 = vmul.f32 %v49, %v248
  %v282 = vmul.f32 %v50, %v248
  %v283 = vmul.f32 %v51, %v248
  %v284 = vmul.f32 %v52, %v248
  %v285 = vmul.f32 %v53, %v248
  %v286 = vmul.f32 %v54, %v248
  %v287 = vmul.f32 %v55, %v248
  %v288 = vmul.f32 %v56, %v248
  %v289 = vmul.f32 %v57, %v248
  %v290 = vmul.f32 %v58, %v248
  %v291 = vmul.f32 %v59, %v248
  %v292 = vmul.f32 %v60, %v248
  %v293 = vmul.f32 %v61, %v248
  %v294 = vmul.f32 %v62, %v248
  %v295 = vmul.f32 %v63, %v248
  %v296 = vmul.f32 %v64, %v248
  %v297 = vmin.f32 %v239, 4.4542475
  %v298 = vmin.f32 %v240, 4.4542475
  %v299 = vmax.f32 %v297, 1e-05
  %v300 = vmax.f32 %v298, 1e-05
  %v301 = vmul.f32 %v299, 0.2236068
  %v302 = vmul.f32 %v300, 0.2236068
  %v303 = vmax.f32 %v301, -0.99999
  %v304 = vmax.f32 %v302, -0.99999
  %v305 = vmin.f32 %v303, 0.99999
  %v306 = vmin.f32 %v304, 0.99999
  %v307 = vadd.f32 %v305, 1.0
  %v308 = vadd.f32 %v306, 1.0
  %v309 = vsub.f32 1.0, %v305
  %v310 = vsub.f32 1.0, %v306
  %v311 = vrcp.pop %v309
  %v312 = vmul.f32 %v307, %v311
  %v313 = vrcp.pop %v310
  %v314 = vmul.f32 %v308, %v313
  %v315 = vlog2.pop %v312
  %v316 = vmul.f32 %v315, 0.6931472
  %v317 = vlog2.pop %v314
  %v318 = vmul.f32 %v317, 0.6931472
  %v319 = vmul.f32 %v316, 0.5
  %v320 = vmul.f32 %v318, 0.5
  %v321 = vrcp.pop %v301
  %v322 = vmul.f32 %v319, %v321
  %v323 = vrcp.pop %v302
  %v324 = vmul.f32 %v320, %v323
  %v325 = vmul.f32 %v249, %v322
  %v326 = vmul.f32 %v250, %v322
  %v327 = vmul.f32 %v251, %v322
  %v328 = vmul.f32 %v252, %v322
  %v329 = vmul.f32 %v253, %v322
  %v330 = vmul.f32 %v254, %v322
  %v331 = vmul.f32 %v255, %v322
  %v332 = vmul.f32 %v256, %v322
  %v333 = vmul.f32 %v257, %v322
  %v334 = vmul.f32 %v258, %v322
  %v335 = vmul.f32 %v259, %v322
  %v336 = vmul.f32 %v260, %v322
  %v337 = vmul.f32 %v261, %v322
  %v338 = vmul.f32 %v262, %v322
  %v339 = vmul.f32 %v263, %v322
  %v340 = vmul.f32 %v264, %v322
  %v341 = vmul.f32 %v265, %v322
  %v342 = vmul.f32 %v266, %v322
  %v343 = vmul.f32 %v267, %v322
  %v344 = vmul.f32 %v268, %v322
  %v345 = vmul.f32 %v269, %v322
  %v346 = vmul.f32 %v270, %v322
  %v347 = vmul.f32 %v271, %v322
  %v348 = vmul.f32 %v272, %v322
  %v349 = vmul.f32 %v273, %v324
  %v350 = vmul.f32 %v274, %v324
  %v351 = vmul.f32 %v275, %v324
  %v352 = vmul.f32 %v276, %v324
  %v353 = vmul.f32 %v277, %v324
  %v354 = vmul.f32 %v278, %v324
  %v355 = vmul.f32 %v279, %v324
  %v356 = vmul.f32 %v280, %v324
  %v357 = vmul.f32 %v281, %v324
  %v358 = vmul.f32 %v282, %v324
  %v359 = vmul.f32 %v283, %v324
  %v360 = vmul.f32 %v284, %v324
  %v361 = vmul.f32 %v285, %v324
  %v362 = vmul.f32 %v286, %v324
  %v363 = vmul.f32 %v287, %v324
  %v364 = vmul.f32 %v288, %v324
  %v365 = vmul.f32 %v289, %v324
  %v366 = vmul.f32 %v290, %v324
  %v367 = vmul.f32 %v291, %v324
  %v368 = vmul.f32 %v292, %v324
  %v369 = vmul.f32 %v293, %v324
  %v370 = vmul.f32 %v294, %v324
  %v371 = vmul.f32 %v295, %v324
  %v372 = vmul.f32 %v296, %v324
  %v373 = vld [vmem:[%s1] sm:$0x7]
  %v374 = vld [vmem:[%s1 + $0x4] sm:$0x7]
  %v375 = vld [vmem:[%s1 + $0x8] sm:$0x7]
  %v376 = vld [vmem:[%s1 + $0xc] sm:$0x7]
  %v377 = vld [vmem:[%s1 + $0x10] sm:$0x7]
  %v378 = vld [vmem:[%s1 + $0x14] sm:$0x7]
  %v379 = vld [vmem:[%s1 + $0x18] sm:$0x7]
  %v380 = vld [vmem:[%s1 + $0x1c] sm:$0x7]
  %v381 = vld [vmem:[%s1 + $0x20] sm:$0x7]
  %383 = vset.pattern.permute.xlu0 0
  %384 = vperm.xlu0 %383, %v325
  %v385 = vpop.permute.xlu0 %384
  %388 = vset.pattern.permute.xlu0 0
  %389 = vperm.xlu0 %388, %v326
  %v390 = vpop.permute.xlu0 %389
  %393 = vset.pattern.permute.xlu0 0
  %394 = vperm.xlu0 %393, %v327
  %v395 = vpop.permute.xlu0 %394
  %398 = vset.pattern.permute.xlu0 0
  %399 = vperm.xlu0 %398, %v328
  %v400 = vpop.permute.xlu0 %399
  %403 = vset.pattern.permute.xlu0 0
  %404 = vperm.xlu0 %403, %v329
  %v405 = vpop.permute.xlu0 %404
  %408 = vset.pattern.permute.xlu0 0
  %409 = vperm.xlu0 %408, %v330
  %v410 = vpop.permute.xlu0 %409
  %413 = vset.pattern.permute.xlu0 0
  %414 = vperm.xlu0 %413, %v331
  %v415 = vpop.permute.xlu0 %414
  %418 = vset.pattern.permute.xlu0 0
  %419 = vperm.xlu0 %418, %v332
  %v420 = vpop.permute.xlu0 %419
  %423 = vset.pattern.permute.xlu0 0
  %424 = vperm.xlu0 %423, %v333
  %v425 = vpop.permute.xlu0 %424
  %428 = vset.pattern.permute.xlu0 0
  %429 = vperm.xlu0 %428, %v334
  %v430 = vpop.permute.xlu0 %429
  %433 = vset.pattern.permute.xlu0 0
  %434 = vperm.xlu0 %433, %v335
  %v435 = vpop.permute.xlu0 %434
  %438 = vset.pattern.permute.xlu0 0
  %439 = vperm.xlu0 %438, %v336
  %v440 = vpop.permute.xlu0 %439
  %443 = vset.pattern.permute.xlu0 0
  %444 = vperm.xlu0 %443, %v337
  %v445 = vpop.permute.xlu0 %444
  %448 = vset.pattern.permute.xlu0 0
  %449 = vperm.xlu0 %448, %v338
  %v450 = vpop.permute.xlu0 %449
  %453 = vset.pattern.permute.xlu0 0
  %454 = vperm.xlu0 %453, %v339
  %v455 = vpop.permute.xlu0 %454
  %458 = vset.pattern.permute.xlu0 0
  %459 = vperm.xlu0 %458, %v340
  %v460 = vpop.permute.xlu0 %459
  %463 = vset.pattern.permute.xlu0 0
  %464 = vperm.xlu0 %463, %v341
  %v465 = vpop.permute.xlu0 %464
  %468 = vset.pattern.permute.xlu0 0
  %469 = vperm.xlu0 %468, %v342
  %v470 = vpop.permute.xlu0 %469
  %473 = vset.pattern.permute.xlu0 0
  %474 = vperm.xlu0 %473, %v343
  %v475 = vpop.permute.xlu0 %474
  %478 = vset.pattern.permute.xlu0 0
  %479 = vperm.xlu0 %478, %v344
  %v480 = vpop.permute.xlu0 %479
  %483 = vset.pattern.permute.xlu0 0
  %484 = vperm.xlu0 %483, %v349
  %v485 = vpop.permute.xlu0 %484
  %488 = vset.pattern.permute.xlu0 0
  %489 = vperm.xlu0 %488, %v350
  %v490 = vpop.permute.xlu0 %489
  %493 = vset.pattern.permute.xlu0 0
  %494 = vperm.xlu0 %493, %v351
  %v495 = vpop.permute.xlu0 %494
  %498 = vset.pattern.permute.xlu0 0
  %499 = vperm.xlu0 %498, %v352
  %v500 = vpop.permute.xlu0 %499
  %503 = vset.pattern.permute.xlu0 0
  %504 = vperm.xlu0 %503, %v353
  %v505 = vpop.permute.xlu0 %504
  %508 = vset.pattern.permute.xlu0 0
  %509 = vperm.xlu0 %508, %v354
  %v510 = vpop.permute.xlu0 %509
  %513 = vset.pattern.permute.xlu0 0
  %514 = vperm.xlu0 %513, %v355
  %v515 = vpop.permute.xlu0 %514
  %518 = vset.pattern.permute.xlu0 0
  %519 = vperm.xlu0 %518, %v356
  %v520 = vpop.permute.xlu0 %519
  %523 = vset.pattern.permute.xlu0 0
  %524 = vperm.xlu0 %523, %v357
  %v525 = vpop.permute.xlu0 %524
  %528 = vset.pattern.permute.xlu0 0
  %529 = vperm.xlu0 %528, %v358
  %v530 = vpop.permute.xlu0 %529
  %533 = vset.pattern.permute.xlu0 0
  %534 = vperm.xlu0 %533, %v359
  %v535 = vpop.permute.xlu0 %534
  %538 = vset.pattern.permute.xlu0 0
  %539 = vperm.xlu0 %538, %v360
  %v540 = vpop.permute.xlu0 %539
  %543 = vset.pattern.permute.xlu0 0
  %544 = vperm.xlu0 %543, %v361
  %v545 = vpop.permute.xlu0 %544
  %548 = vset.pattern.permute.xlu0 0
  %549 = vperm.xlu0 %548, %v362
  %v550 = vpop.permute.xlu0 %549
  %553 = vset.pattern.permute.xlu0 0
  %554 = vperm.xlu0 %553, %v363
  %v555 = vpop.permute.xlu0 %554
  %558 = vset.pattern.permute.xlu0 0
  %559 = vperm.xlu0 %558, %v364
  %v560 = vpop.permute.xlu0 %559
  %563 = vset.pattern.permute.xlu0 0
  %564 = vperm.xlu0 %563, %v365
  %v565 = vpop.permute.xlu0 %564
  %568 = vset.pattern.permute.xlu0 0
  %569 = vperm.xlu0 %568, %v366
  %v570 = vpop.permute.xlu0 %569
  %573 = vset.pattern.permute.xlu0 0
  %574 = vperm.xlu0 %573, %v367
  %v575 = vpop.permute.xlu0 %574
  %578 = vset.pattern.permute.xlu0 0
  %579 = vperm.xlu0 %578, %v368
  %v580 = vpop.permute.xlu0 %579
  %v582 = vlaneseq
  %v583 = vshrl.u32 %v582, 7
  %v584 = vsub.s32 0, %v583
  %v585 = vrot.slane %v373, %v584
  %v586 = vmul.f32 %v385, %v585
  %v587 = vmul.f32 %v390, %v585
  %v588 = vmul.f32 %v395, %v585
  %v589 = vmul.f32 %v400, %v585
  %v590 = vmul.f32 %v405, %v585
  %v591 = vmul.f32 %v410, %v585
  %v592 = vmul.f32 %v415, %v585
  %v593 = vmul.f32 %v420, %v585
  %v594 = vmul.f32 %v425, %v585
  %v595 = vmul.f32 %v430, %v585
  %v596 = vmul.f32 %v435, %v585
  %v597 = vmul.f32 %v440, %v585
  %v598 = vmul.f32 %v445, %v585
  %v599 = vmul.f32 %v450, %v585
  %v600 = vmul.f32 %v455, %v585
  %v601 = vmul.f32 %v460, %v585
  %v602 = vmul.f32 %v465, %v585
  %v603 = vmul.f32 %v470, %v585
  %v604 = vmul.f32 %v475, %v585
  %v605 = vmul.f32 %v480, %v585
  %v606 = vmul.f32 %v485, %v585
  %v607 = vmul.f32 %v490, %v585
  %v608 = vmul.f32 %v495, %v585
  %v609 = vmul.f32 %v500, %v585
  %v610 = vmul.f32 %v505, %v585
  %v611 = vmul.f32 %v510, %v585
  %v612 = vmul.f32 %v515, %v585
  %v613 = vmul.f32 %v520, %v585
  %v614 = vmul.f32 %v525, %v585
  %v615 = vmul.f32 %v530, %v585
  %v616 = vmul.f32 %v535, %v585
  %v617 = vmul.f32 %v540, %v585
  %v618 = vmul.f32 %v545, %v585
  %v619 = vmul.f32 %v550, %v585
  %v620 = vmul.f32 %v555, %v585
  %v621 = vmul.f32 %v560, %v585
  %v622 = vmul.f32 %v565, %v585
  %v623 = vmul.f32 %v570, %v585
  %v624 = vmul.f32 %v575, %v585
  %v625 = vmul.f32 %v580, %v585
  %v626 = vadd.f32 %v586, 0.0
  %v627 = vadd.f32 %v587, 0.0
  %v628 = vadd.f32 %v588, 0.0
  %v629 = vadd.f32 %v589, 0.0
  %v630 = vadd.f32 %v590, 0.0
  %v631 = vadd.f32 %v591, 0.0
  %v632 = vadd.f32 %v592, 0.0
  %v633 = vadd.f32 %v593, 0.0
  %v634 = vadd.f32 %v594, 0.0
  %v635 = vadd.f32 %v595, 0.0
  %v636 = vadd.f32 %v596, 0.0
  %v637 = vadd.f32 %v597, 0.0
  %v638 = vadd.f32 %v598, 0.0
  %v639 = vadd.f32 %v599, 0.0
  %v640 = vadd.f32 %v600, 0.0
  %v641 = vadd.f32 %v601, 0.0
  %v642 = vadd.f32 %v602, 0.0
  %v643 = vadd.f32 %v603, 0.0
  %v644 = vadd.f32 %v604, 0.0
  %v645 = vadd.f32 %v605, 0.0
  %v646 = vadd.f32 %v606, 0.0
  %v647 = vadd.f32 %v607, 0.0
  %v648 = vadd.f32 %v608, 0.0
  %v649 = vadd.f32 %v609, 0.0
  %v650 = vadd.f32 %v610, 0.0
  %v651 = vadd.f32 %v611, 0.0
  %v652 = vadd.f32 %v612, 0.0
  %v653 = vadd.f32 %v613, 0.0
  %v654 = vadd.f32 %v614, 0.0
  %v655 = vadd.f32 %v615, 0.0
  %v656 = vadd.f32 %v616, 0.0
  %v657 = vadd.f32 %v617, 0.0
  %v658 = vadd.f32 %v618, 0.0
  %v659 = vadd.f32 %v619, 0.0
  %v660 = vadd.f32 %v620, 0.0
  %v661 = vadd.f32 %v621, 0.0
  %v662 = vadd.f32 %v622, 0.0
  %v663 = vadd.f32 %v623, 0.0
  %v664 = vadd.f32 %v624, 0.0
  %v665 = vadd.f32 %v625, 0.0
  %666 = vset.pattern.permute.xlu0 1
  %667 = vperm.xlu0 %666, %v325
  %v668 = vpop.permute.xlu0 %667
  %670 = vset.pattern.permute.xlu0 1
  %671 = vperm.xlu0 %670, %v326
  %v672 = vpop.permute.xlu0 %671
  %674 = vset.pattern.permute.xlu0 1
  %675 = vperm.xlu0 %674, %v327
  %v676 = vpop.permute.xlu0 %675
  %678 = vset.pattern.permute.xlu0 1
  %679 = vperm.xlu0 %678, %v328
  %v680 = vpop.permute.xlu0 %679
  %682 = vset.pattern.permute.xlu0 1
  %683 = vperm.xlu0 %682, %v329
  %v684 = vpop.permute.xlu0 %683
  %686 = vset.pattern.permute.xlu0 1
  %687 = vperm.xlu0 %686, %v330
  %v688 = vpop.permute.xlu0 %687
  %690 = vset.pattern.permute.xlu0 1
  %691 = vperm.xlu0 %690, %v331
  %v692 = vpop.permute.xlu0 %691
  %694 = vset.pattern.permute.xlu0 1
  %695 = vperm.xlu0 %694, %v332
  %v696 = vpop.permute.xlu0 %695
  %698 = vset.pattern.permute.xlu0 1
  %699 = vperm.xlu0 %698, %v333
  %v700 = vpop.permute.xlu0 %699
  %702 = vset.pattern.permute.xlu0 1
  %703 = vperm.xlu0 %702, %v334
  %v704 = vpop.permute.xlu0 %703
  %706 = vset.pattern.permute.xlu0 1
  %707 = vperm.xlu0 %706, %v335
  %v708 = vpop.permute.xlu0 %707
  %710 = vset.pattern.permute.xlu0 1
  %711 = vperm.xlu0 %710, %v336
  %v712 = vpop.permute.xlu0 %711
  %714 = vset.pattern.permute.xlu0 1
  %715 = vperm.xlu0 %714, %v337
  %v716 = vpop.permute.xlu0 %715
  %718 = vset.pattern.permute.xlu0 1
  %719 = vperm.xlu0 %718, %v338
  %v720 = vpop.permute.xlu0 %719
  %722 = vset.pattern.permute.xlu0 1
  %723 = vperm.xlu0 %722, %v339
  %v724 = vpop.permute.xlu0 %723
  %726 = vset.pattern.permute.xlu0 1
  %727 = vperm.xlu0 %726, %v340
  %v728 = vpop.permute.xlu0 %727
  %730 = vset.pattern.permute.xlu0 1
  %731 = vperm.xlu0 %730, %v341
  %v732 = vpop.permute.xlu0 %731
  %734 = vset.pattern.permute.xlu0 1
  %735 = vperm.xlu0 %734, %v342
  %v736 = vpop.permute.xlu0 %735
  %738 = vset.pattern.permute.xlu0 1
  %739 = vperm.xlu0 %738, %v343
  %v740 = vpop.permute.xlu0 %739
  %742 = vset.pattern.permute.xlu0 1
  %743 = vperm.xlu0 %742, %v344
  %v744 = vpop.permute.xlu0 %743
  %746 = vset.pattern.permute.xlu0 1
  %747 = vperm.xlu0 %746, %v349
  %v748 = vpop.permute.xlu0 %747
  %750 = vset.pattern.permute.xlu0 1
  %751 = vperm.xlu0 %750, %v350
  %v752 = vpop.permute.xlu0 %751
  %754 = vset.pattern.permute.xlu0 1
  %755 = vperm.xlu0 %754, %v351
  %v756 = vpop.permute.xlu0 %755
  %758 = vset.pattern.permute.xlu0 1
  %759 = vperm.xlu0 %758, %v352
  %v760 = vpop.permute.xlu0 %759
  %762 = vset.pattern.permute.xlu0 1
  %763 = vperm.xlu0 %762, %v353
  %v764 = vpop.permute.xlu0 %763
  %766 = vset.pattern.permute.xlu0 1
  %767 = vperm.xlu0 %766, %v354
  %v768 = vpop.permute.xlu0 %767
  %770 = vset.pattern.permute.xlu0 1
  %771 = vperm.xlu0 %770, %v355
  %v772 = vpop.permute.xlu0 %771
  %774 = vset.pattern.permute.xlu0 1
  %775 = vperm.xlu0 %774, %v356
  %v776 = vpop.permute.xlu0 %775
  %778 = vset.pattern.permute.xlu0 1
  %779 = vperm.xlu0 %778, %v357
  %v780 = vpop.permute.xlu0 %779
  %782 = vset.pattern.permute.xlu0 1
  %783 = vperm.xlu0 %782, %v358
  %v784 = vpop.permute.xlu0 %783
  %786 = vset.pattern.permute.xlu0 1
  %787 = vperm.xlu0 %786, %v359
  %v788 = vpop.permute.xlu0 %787
  %790 = vset.pattern.permute.xlu0 1
  %791 = vperm.xlu0 %790, %v360
  %v792 = vpop.permute.xlu0 %791
  %794 = vset.pattern.permute.xlu0 1
  %795 = vperm.xlu0 %794, %v361
  %v796 = vpop.permute.xlu0 %795
  %798 = vset.pattern.permute.xlu0 1
  %799 = vperm.xlu0 %798, %v362
  %v800 = vpop.permute.xlu0 %799
  %802 = vset.pattern.permute.xlu0 1
  %803 = vperm.xlu0 %802, %v363
  %v804 = vpop.permute.xlu0 %803
  %806 = vset.pattern.permute.xlu0 1
  %807 = vperm.xlu0 %806, %v364
  %v808 = vpop.permute.xlu0 %807
  %810 = vset.pattern.permute.xlu0 1
  %811 = vperm.xlu0 %810, %v365
  %v812 = vpop.permute.xlu0 %811
  %814 = vset.pattern.permute.xlu0 1
  %815 = vperm.xlu0 %814, %v366
  %v816 = vpop.permute.xlu0 %815
  %818 = vset.pattern.permute.xlu0 1
  %819 = vperm.xlu0 %818, %v367
  %v820 = vpop.permute.xlu0 %819
  %822 = vset.pattern.permute.xlu0 1
  %823 = vperm.xlu0 %822, %v368
  %v824 = vpop.permute.xlu0 %823
  %v826 = vlaneseq
  %v827 = vshrl.u32 %v826, 7
  %v828 = vsub.s32 1, %v827
  %v829 = vrot.slane %v373, %v828
  %v830 = vmul.f32 %v668, %v829
  %v831 = vmul.f32 %v672, %v829
  %v832 = vmul.f32 %v676, %v829
  %v833 = vmul.f32 %v680, %v829
  %v834 = vmul.f32 %v684, %v829
  %v835 = vmul.f32 %v688, %v829
  %v836 = vmul.f32 %v692, %v829
  %v837 = vmul.f32 %v696, %v829
  %v838 = vmul.f32 %v700, %v829
  %v839 = vmul.f32 %v704, %v829
  %v840 = vmul.f32 %v708, %v829
  %v841 = vmul.f32 %v712, %v829
  %v842 = vmul.f32 %v716, %v829
  %v843 = vmul.f32 %v720, %v829
  %v844 = vmul.f32 %v724, %v829
  %v845 = vmul.f32 %v728, %v829
  %v846 = vmul.f32 %v732, %v829
  %v847 = vmul.f32 %v736, %v829
  %v848 = vmul.f32 %v740, %v829
  %v849 = vmul.f32 %v744, %v829
  %v850 = vmul.f32 %v748, %v829
  %v851 = vmul.f32 %v752, %v829
  %v852 = vmul.f32 %v756, %v829
  %v853 = vmul.f32 %v760, %v829
  %v854 = vmul.f32 %v764, %v829
  %v855 = vmul.f32 %v768, %v829
  %v856 = vmul.f32 %v772, %v829
  %v857 = vmul.f32 %v776, %v829
  %v858 = vmul.f32 %v780, %v829
  %v859 = vmul.f32 %v784, %v829
  %v860 = vmul.f32 %v788, %v829
  %v861 = vmul.f32 %v792, %v829
  %v862 = vmul.f32 %v796, %v829
  %v863 = vmul.f32 %v800, %v829
  %v864 = vmul.f32 %v804, %v829
  %v865 = vmul.f32 %v808, %v829
  %v866 = vmul.f32 %v812, %v829
  %v867 = vmul.f32 %v816, %v829
  %v868 = vmul.f32 %v820, %v829
  %v869 = vmul.f32 %v824, %v829
  %v870 = vadd.f32 %v626, %v830
  %v871 = vadd.f32 %v627, %v831
  %v872 = vadd.f32 %v628, %v832
  %v873 = vadd.f32 %v629, %v833
  %v874 = vadd.f32 %v630, %v834
  %v875 = vadd.f32 %v631, %v835
  %v876 = vadd.f32 %v632, %v836
  %v877 = vadd.f32 %v633, %v837
  %v878 = vadd.f32 %v634, %v838
  %v879 = vadd.f32 %v635, %v839
  %v880 = vadd.f32 %v636, %v840
  %v881 = vadd.f32 %v637, %v841
  %v882 = vadd.f32 %v638, %v842
  %v883 = vadd.f32 %v639, %v843
  %v884 = vadd.f32 %v640, %v844
  %v885 = vadd.f32 %v641, %v845
  %v886 = vadd.f32 %v642, %v846
  %v887 = vadd.f32 %v643, %v847
  %v888 = vadd.f32 %v644, %v848
  %v889 = vadd.f32 %v645, %v849
  %v890 = vadd.f32 %v646, %v850
  %v891 = vadd.f32 %v647, %v851
  %v892 = vadd.f32 %v648, %v852
  %v893 = vadd.f32 %v649, %v853
  %v894 = vadd.f32 %v650, %v854
  %v895 = vadd.f32 %v651, %v855
  %v896 = vadd.f32 %v652, %v856
  %v897 = vadd.f32 %v653, %v857
  %v898 = vadd.f32 %v654, %v858
  %v899 = vadd.f32 %v655, %v859
  %v900 = vadd.f32 %v656, %v860
  %v901 = vadd.f32 %v657, %v861
  %v902 = vadd.f32 %v658, %v862
  %v903 = vadd.f32 %v659, %v863
  %v904 = vadd.f32 %v660, %v864
  %v905 = vadd.f32 %v661, %v865
  %v906 = vadd.f32 %v662, %v866
  %v907 = vadd.f32 %v663, %v867
  %v908 = vadd.f32 %v664, %v868
  %v909 = vadd.f32 %v665, %v869
  %910 = vset.pattern.permute.xlu0 2
  %911 = vperm.xlu0 %910, %v325
  %v912 = vpop.permute.xlu0 %911
  %914 = vset.pattern.permute.xlu0 2
  %915 = vperm.xlu0 %914, %v326
  %v916 = vpop.permute.xlu0 %915
  %918 = vset.pattern.permute.xlu0 2
  %919 = vperm.xlu0 %918, %v327
  %v920 = vpop.permute.xlu0 %919
  %922 = vset.pattern.permute.xlu0 2
  %923 = vperm.xlu0 %922, %v328
  %v924 = vpop.permute.xlu0 %923
  %926 = vset.pattern.permute.xlu0 2
  %927 = vperm.xlu0 %926, %v329
  %v928 = vpop.permute.xlu0 %927
  %930 = vset.pattern.permute.xlu0 2
  %931 = vperm.xlu0 %930, %v330
  %v932 = vpop.permute.xlu0 %931
  %934 = vset.pattern.permute.xlu0 2
  %935 = vperm.xlu0 %934, %v331
  %v936 = vpop.permute.xlu0 %935
  %938 = vset.pattern.permute.xlu0 2
  %939 = vperm.xlu0 %938, %v332
  %v940 = vpop.permute.xlu0 %939
  %942 = vset.pattern.permute.xlu0 2
  %943 = vperm.xlu0 %942, %v333
  %v944 = vpop.permute.xlu0 %943
  %946 = vset.pattern.permute.xlu0 2
  %947 = vperm.xlu0 %946, %v334
  %v948 = vpop.permute.xlu0 %947
  %950 = vset.pattern.permute.xlu0 2
  %951 = vperm.xlu0 %950, %v335
  %v952 = vpop.permute.xlu0 %951
  %954 = vset.pattern.permute.xlu0 2
  %955 = vperm.xlu0 %954, %v336
  %v956 = vpop.permute.xlu0 %955
  %958 = vset.pattern.permute.xlu0 2
  %959 = vperm.xlu0 %958, %v337
  %v960 = vpop.permute.xlu0 %959
  %962 = vset.pattern.permute.xlu0 2
  %963 = vperm.xlu0 %962, %v338
  %v964 = vpop.permute.xlu0 %963
  %966 = vset.pattern.permute.xlu0 2
  %967 = vperm.xlu0 %966, %v339
  %v968 = vpop.permute.xlu0 %967
  %970 = vset.pattern.permute.xlu0 2
  %971 = vperm.xlu0 %970, %v340
  %v972 = vpop.permute.xlu0 %971
  %974 = vset.pattern.permute.xlu0 2
  %975 = vperm.xlu0 %974, %v341
  %v976 = vpop.permute.xlu0 %975
  %978 = vset.pattern.permute.xlu0 2
  %979 = vperm.xlu0 %978, %v342
  %v980 = vpop.permute.xlu0 %979
  %982 = vset.pattern.permute.xlu0 2
  %983 = vperm.xlu0 %982, %v343
  %v984 = vpop.permute.xlu0 %983
  %986 = vset.pattern.permute.xlu0 2
  %987 = vperm.xlu0 %986, %v344
  %v988 = vpop.permute.xlu0 %987
  %990 = vset.pattern.permute.xlu0 2
  %991 = vperm.xlu0 %990, %v349
  %v992 = vpop.permute.xlu0 %991
  %994 = vset.pattern.permute.xlu0 2
  %995 = vperm.xlu0 %994, %v350
  %v996 = vpop.permute.xlu0 %995
  %998 = vset.pattern.permute.xlu0 2
  %999 = vperm.xlu0 %998, %v351
  %v1000 = vpop.permute.xlu0 %999
  %1002 = vset.pattern.permute.xlu0 2
  %1003 = vperm.xlu0 %1002, %v352
  %v1004 = vpop.permute.xlu0 %1003
  %1006 = vset.pattern.permute.xlu0 2
  %1007 = vperm.xlu0 %1006, %v353
  %v1008 = vpop.permute.xlu0 %1007
  %1010 = vset.pattern.permute.xlu0 2
  %1011 = vperm.xlu0 %1010, %v354
  %v1012 = vpop.permute.xlu0 %1011
  %1014 = vset.pattern.permute.xlu0 2
  %1015 = vperm.xlu0 %1014, %v355
  %v1016 = vpop.permute.xlu0 %1015
  %1018 = vset.pattern.permute.xlu0 2
  %1019 = vperm.xlu0 %1018, %v356
  %v1020 = vpop.permute.xlu0 %1019
  %1022 = vset.pattern.permute.xlu0 2
  %1023 = vperm.xlu0 %1022, %v357
  %v1024 = vpop.permute.xlu0 %1023
  %1026 = vset.pattern.permute.xlu0 2
  %1027 = vperm.xlu0 %1026, %v358
  %v1028 = vpop.permute.xlu0 %1027
  %1030 = vset.pattern.permute.xlu0 2
  %1031 = vperm.xlu0 %1030, %v359
  %v1032 = vpop.permute.xlu0 %1031
  %1034 = vset.pattern.permute.xlu0 2
  %1035 = vperm.xlu0 %1034, %v360
  %v1036 = vpop.permute.xlu0 %1035
  %1038 = vset.pattern.permute.xlu0 2
  %1039 = vperm.xlu0 %1038, %v361
  %v1040 = vpop.permute.xlu0 %1039
  %1042 = vset.pattern.permute.xlu0 2
  %1043 = vperm.xlu0 %1042, %v362
  %v1044 = vpop.permute.xlu0 %1043
  %1046 = vset.pattern.permute.xlu0 2
  %1047 = vperm.xlu0 %1046, %v363
  %v1048 = vpop.permute.xlu0 %1047
  %1050 = vset.pattern.permute.xlu0 2
  %1051 = vperm.xlu0 %1050, %v364
  %v1052 = vpop.permute.xlu0 %1051
  %1054 = vset.pattern.permute.xlu0 2
  %1055 = vperm.xlu0 %1054, %v365
  %v1056 = vpop.permute.xlu0 %1055
  %1058 = vset.pattern.permute.xlu0 2
  %1059 = vperm.xlu0 %1058, %v366
  %v1060 = vpop.permute.xlu0 %1059
  %1062 = vset.pattern.permute.xlu0 2
  %1063 = vperm.xlu0 %1062, %v367
  %v1064 = vpop.permute.xlu0 %1063
  %1066 = vset.pattern.permute.xlu0 2
  %1067 = vperm.xlu0 %1066, %v368
  %v1068 = vpop.permute.xlu0 %1067
  %v1070 = vlaneseq
  %v1071 = vshrl.u32 %v1070, 7
  %v1072 = vsub.s32 2, %v1071
  %v1073 = vrot.slane %v373, %v1072
  %v1074 = vmul.f32 %v912, %v1073
  %v1075 = vmul.f32 %v916, %v1073
  %v1076 = vmul.f32 %v920, %v1073
  %v1077 = vmul.f32 %v924, %v1073
  %v1078 = vmul.f32 %v928, %v1073
  %v1079 = vmul.f32 %v932, %v1073
  %v1080 = vmul.f32 %v936, %v1073
  %v1081 = vmul.f32 %v940, %v1073
  %v1082 = vmul.f32 %v944, %v1073
  %v1083 = vmul.f32 %v948, %v1073
  %v1084 = vmul.f32 %v952, %v1073
  %v1085 = vmul.f32 %v956, %v1073
  %v1086 = vmul.f32 %v960, %v1073
  %v1087 = vmul.f32 %v964, %v1073
  %v1088 = vmul.f32 %v968, %v1073
  %v1089 = vmul.f32 %v972, %v1073
  %v1090 = vmul.f32 %v976, %v1073
  %v1091 = vmul.f32 %v980, %v1073
  %v1092 = vmul.f32 %v984, %v1073
  %v1093 = vmul.f32 %v988, %v1073
  %v1094 = vmul.f32 %v992, %v1073
  %v1095 = vmul.f32 %v996, %v1073
  %v1096 = vmul.f32 %v1000, %v1073
  %v1097 = vmul.f32 %v1004, %v1073
  %v1098 = vmul.f32 %v1008, %v1073
  %v1099 = vmul.f32 %v1012, %v1073
  %v1100 = vmul.f32 %v1016, %v1073
  %v1101 = vmul.f32 %v1020, %v1073
  %v1102 = vmul.f32 %v1024, %v1073
  %v1103 = vmul.f32 %v1028, %v1073
  %v1104 = vmul.f32 %v1032, %v1073
  %v1105 = vmul.f32 %v1036, %v1073
  %v1106 = vmul.f32 %v1040, %v1073
  %v1107 = vmul.f32 %v1044, %v1073
  %v1108 = vmul.f32 %v1048, %v1073
  %v1109 = vmul.f32 %v1052, %v1073
  %v1110 = vmul.f32 %v1056, %v1073
  %v1111 = vmul.f32 %v1060, %v1073
  %v1112 = vmul.f32 %v1064, %v1073
  %v1113 = vmul.f32 %v1068, %v1073
  %v1114 = vadd.f32 %v870, %v1074
  %v1115 = vadd.f32 %v871, %v1075
  %v1116 = vadd.f32 %v872, %v1076
  %v1117 = vadd.f32 %v873, %v1077
  %v1118 = vadd.f32 %v874, %v1078
  %v1119 = vadd.f32 %v875, %v1079
  %v1120 = vadd.f32 %v876, %v1080
  %v1121 = vadd.f32 %v877, %v1081
  %v1122 = vadd.f32 %v878, %v1082
  %v1123 = vadd.f32 %v879, %v1083
  %v1124 = vadd.f32 %v880, %v1084
  %v1125 = vadd.f32 %v881, %v1085
  %v1126 = vadd.f32 %v882, %v1086
  %v1127 = vadd.f32 %v883, %v1087
  %v1128 = vadd.f32 %v884, %v1088
  %v1129 = vadd.f32 %v885, %v1089
  %v1130 = vadd.f32 %v886, %v1090
  %v1131 = vadd.f32 %v887, %v1091
  %v1132 = vadd.f32 %v888, %v1092
  %v1133 = vadd.f32 %v889, %v1093
  %v1134 = vadd.f32 %v890, %v1094
  %v1135 = vadd.f32 %v891, %v1095
  %v1136 = vadd.f32 %v892, %v1096
  %v1137 = vadd.f32 %v893, %v1097
  %v1138 = vadd.f32 %v894, %v1098
  %v1139 = vadd.f32 %v895, %v1099
  %v1140 = vadd.f32 %v896, %v1100
  %v1141 = vadd.f32 %v897, %v1101
  %v1142 = vadd.f32 %v898, %v1102
  %v1143 = vadd.f32 %v899, %v1103
  %v1144 = vadd.f32 %v900, %v1104
  %v1145 = vadd.f32 %v901, %v1105
  %v1146 = vadd.f32 %v902, %v1106
  %v1147 = vadd.f32 %v903, %v1107
  %v1148 = vadd.f32 %v904, %v1108
  %v1149 = vadd.f32 %v905, %v1109
  %v1150 = vadd.f32 %v906, %v1110
  %v1151 = vadd.f32 %v907, %v1111
  %v1152 = vadd.f32 %v908, %v1112
  %v1153 = vadd.f32 %v909, %v1113
  %v1154 = vlaneseq
  %v1155 = vshrl.u32 %v1154, 7
  %v1156 = vsub.s32 0, %v1155
  %v1157 = vrot.slane %v374, %v1156
  %v1158 = vmul.f32 %v385, %v1157
  %v1159 = vmul.f32 %v390, %v1157
  %v1160 = vmul.f32 %v395, %v1157
  %v1161 = vmul.f32 %v400, %v1157
  %v1162 = vmul.f32 %v405, %v1157
  %v1163 = vmul.f32 %v410, %v1157
  %v1164 = vmul.f32 %v415, %v1157
  %v1165 = vmul.f32 %v420, %v1157
  %v1166 = vmul.f32 %v425, %v1157
  %v1167 = vmul.f32 %v430, %v1157
  %v1168 = vmul.f32 %v435, %v1157
  %v1169 = vmul.f32 %v440, %v1157
  %v1170 = vmul.f32 %v445, %v1157
  %v1171 = vmul.f32 %v450, %v1157
  %v1172 = vmul.f32 %v455, %v1157
  %v1173 = vmul.f32 %v460, %v1157
  %v1174 = vmul.f32 %v465, %v1157
  %v1175 = vmul.f32 %v470, %v1157
  %v1176 = vmul.f32 %v475, %v1157
  %v1177 = vmul.f32 %v480, %v1157
  %v1178 = vmul.f32 %v485, %v1157
  %v1179 = vmul.f32 %v490, %v1157
  %v1180 = vmul.f32 %v495, %v1157
  %v1181 = vmul.f32 %v500, %v1157
  %v1182 = vmul.f32 %v505, %v1157
  %v1183 = vmul.f32 %v510, %v1157
  %v1184 = vmul.f32 %v515, %v1157
  %v1185 = vmul.f32 %v520, %v1157
  %v1186 = vmul.f32 %v525, %v1157
  %v1187 = vmul.f32 %v530, %v1157
  %v1188 = vmul.f32 %v535, %v1157
  %v1189 = vmul.f32 %v540, %v1157
  %v1190 = vmul.f32 %v545, %v1157
  %v1191 = vmul.f32 %v550, %v1157
  %v1192 = vmul.f32 %v555, %v1157
  %v1193 = vmul.f32 %v560, %v1157
  %v1194 = vmul.f32 %v565, %v1157
  %v1195 = vmul.f32 %v570, %v1157
  %v1196 = vmul.f32 %v575, %v1157
  %v1197 = vmul.f32 %v580, %v1157
  %vm1238 = vcmask 1046528
  %v1239 = vrot.slane %v1158, 1
  %v1240 = vrot.slane %v1159, 1
  %v1241 = vsel %vm1238, %v1239, %v1240
  %v1242 = vrot.slane %v1160, 1
  %v1243 = vrot.slane %v1161, 1
  %v1244 = vsel %vm1238, %v1242, %v1243
  %v1245 = vrot.slane %v1162, 1
  %v1246 = vrot.slane %v1163, 1
  %v1247 = vsel %vm1238, %v1245, %v1246
  %v1248 = vrot.slane %v1164, 1
  %v1249 = vrot.slane %v1165, 1
  %v1250 = vsel %vm1238, %v1248, %v1249
  %v1251 = vrot.slane %v1166, 1
  %v1252 = vrot.slane %v1167, 1
  %v1253 = vsel %vm1238, %v1251, %v1252
  %v1254 = vrot.slane %v1168, 1
  %v1255 = vrot.slane %v1169, 1
  %v1256 = vsel %vm1238, %v1254, %v1255
  %v1257 = vrot.slane %v1170, 1
  %v1258 = vrot.slane %v1171, 1
  %v1259 = vsel %vm1238, %v1257, %v1258
  %v1260 = vrot.slane %v1172, 1
  %v1261 = vrot.slane %v1173, 1
  %v1262 = vsel %vm1238, %v1260, %v1261
  %v1263 = vrot.slane %v1174, 1
  %v1264 = vrot.slane %v1175, 1
  %v1265 = vsel %vm1238, %v1263, %v1264
  %v1266 = vrot.slane %v1176, 1
  %v1267 = vrot.slane %v1177, 1
  %v1268 = vsel %vm1238, %v1266, %v1267
  %v1269 = vrot.slane %v1178, 1
  %v1270 = vrot.slane %v1179, 1
  %v1271 = vsel %vm1238, %v1269, %v1270
  %v1272 = vrot.slane %v1180, 1
  %v1273 = vrot.slane %v1181, 1
  %v1274 = vsel %vm1238, %v1272, %v1273
  %v1275 = vrot.slane %v1182, 1
  %v1276 = vrot.slane %v1183, 1
  %v1277 = vsel %vm1238, %v1275, %v1276
  %v1278 = vrot.slane %v1184, 1
  %v1279 = vrot.slane %v1185, 1
  %v1280 = vsel %vm1238, %v1278, %v1279
  %v1281 = vrot.slane %v1186, 1
  %v1282 = vrot.slane %v1187, 1
  %v1283 = vsel %vm1238, %v1281, %v1282
  %v1284 = vrot.slane %v1188, 1
  %v1285 = vrot.slane %v1189, 1
  %v1286 = vsel %vm1238, %v1284, %v1285
  %v1287 = vrot.slane %v1190, 1
  %v1288 = vrot.slane %v1191, 1
  %v1289 = vsel %vm1238, %v1287, %v1288
  %v1290 = vrot.slane %v1192, 1
  %v1291 = vrot.slane %v1193, 1
  %v1292 = vsel %vm1238, %v1290, %v1291
  %v1293 = vrot.slane %v1194, 1
  %v1294 = vrot.slane %v1195, 1
  %v1295 = vsel %vm1238, %v1293, %v1294
  %v1296 = vrot.slane %v1196, 1
  %v1297 = vrot.slane %v1197, 1
  %v1298 = vsel %vm1238, %v1296, %v1297
  %v1339 = vadd.f32 %v1114, %v1241
  %v1340 = vadd.f32 %v1115, %v1240
  %v1341 = vadd.f32 %v1116, %v1244
  %v1342 = vadd.f32 %v1117, %v1243
  %v1343 = vadd.f32 %v1118, %v1247
  %v1344 = vadd.f32 %v1119, %v1246
  %v1345 = vadd.f32 %v1120, %v1250
  %v1346 = vadd.f32 %v1121, %v1249
  %v1347 = vadd.f32 %v1122, %v1253
  %v1348 = vadd.f32 %v1123, %v1252
  %v1349 = vadd.f32 %v1124, %v1256
  %v1350 = vadd.f32 %v1125, %v1255
  %v1351 = vadd.f32 %v1126, %v1259
  %v1352 = vadd.f32 %v1127, %v1258
  %v1353 = vadd.f32 %v1128, %v1262
  %v1354 = vadd.f32 %v1129, %v1261
  %v1355 = vadd.f32 %v1130, %v1265
  %v1356 = vadd.f32 %v1131, %v1264
  %v1357 = vadd.f32 %v1132, %v1268
  %v1358 = vadd.f32 %v1133, %v1267
  %v1359 = vadd.f32 %v1134, %v1271
  %v1360 = vadd.f32 %v1135, %v1270
  %v1361 = vadd.f32 %v1136, %v1274
  %v1362 = vadd.f32 %v1137, %v1273
  %v1363 = vadd.f32 %v1138, %v1277
  %v1364 = vadd.f32 %v1139, %v1276
  %v1365 = vadd.f32 %v1140, %v1280
  %v1366 = vadd.f32 %v1141, %v1279
  %v1367 = vadd.f32 %v1142, %v1283
  %v1368 = vadd.f32 %v1143, %v1282
  %v1369 = vadd.f32 %v1144, %v1286
  %v1370 = vadd.f32 %v1145, %v1285
  %v1371 = vadd.f32 %v1146, %v1289
  %v1372 = vadd.f32 %v1147, %v1288
  %v1373 = vadd.f32 %v1148, %v1292
  %v1374 = vadd.f32 %v1149, %v1291
  %v1375 = vadd.f32 %v1150, %v1295
  %v1376 = vadd.f32 %v1151, %v1294
  %v1377 = vadd.f32 %v1152, %v1298
  %v1378 = vadd.f32 %v1153, %v1297
  %v1379 = vlaneseq
  %v1380 = vshrl.u32 %v1379, 7
  %v1381 = vsub.s32 1, %v1380
  %v1382 = vrot.slane %v374, %v1381
  %v1383 = vmul.f32 %v668, %v1382
  %v1384 = vmul.f32 %v672, %v1382
  %v1385 = vmul.f32 %v676, %v1382
  %v1386 = vmul.f32 %v680, %v1382
  %v1387 = vmul.f32 %v684, %v1382
  %v1388 = vmul.f32 %v688, %v1382
  %v1389 = vmul.f32 %v692, %v1382
  %v1390 = vmul.f32 %v696, %v1382
  %v1391 = vmul.f32 %v700, %v1382
  %v1392 = vmul.f32 %v704, %v1382
  %v1393 = vmul.f32 %v708, %v1382
  %v1394 = vmul.f32 %v712, %v1382
  %v1395 = vmul.f32 %v716, %v1382
  %v1396 = vmul.f32 %v720, %v1382
  %v1397 = vmul.f32 %v724, %v1382
  %v1398 = vmul.f32 %v728, %v1382
  %v1399 = vmul.f32 %v732, %v1382
  %v1400 = vmul.f32 %v736, %v1382
  %v1401 = vmul.f32 %v740, %v1382
  %v1402 = vmul.f32 %v744, %v1382
  %v1403 = vmul.f32 %v748, %v1382
  %v1404 = vmul.f32 %v752, %v1382
  %v1405 = vmul.f32 %v756, %v1382
  %v1406 = vmul.f32 %v760, %v1382
  %v1407 = vmul.f32 %v764, %v1382
  %v1408 = vmul.f32 %v768, %v1382
  %v1409 = vmul.f32 %v772, %v1382
  %v1410 = vmul.f32 %v776, %v1382
  %v1411 = vmul.f32 %v780, %v1382
  %v1412 = vmul.f32 %v784, %v1382
  %v1413 = vmul.f32 %v788, %v1382
  %v1414 = vmul.f32 %v792, %v1382
  %v1415 = vmul.f32 %v796, %v1382
  %v1416 = vmul.f32 %v800, %v1382
  %v1417 = vmul.f32 %v804, %v1382
  %v1418 = vmul.f32 %v808, %v1382
  %v1419 = vmul.f32 %v812, %v1382
  %v1420 = vmul.f32 %v816, %v1382
  %v1421 = vmul.f32 %v820, %v1382
  %v1422 = vmul.f32 %v824, %v1382
  %v1463 = vrot.slane %v1383, 1
  %v1464 = vrot.slane %v1384, 1
  %v1465 = vsel %vm1238, %v1463, %v1464
  %v1466 = vrot.slane %v1385, 1
  %v1467 = vrot.slane %v1386, 1
  %v1468 = vsel %vm1238, %v1466, %v1467
  %v1469 = vrot.slane %v1387, 1
  %v1470 = vrot.slane %v1388, 1
  %v1471 = vsel %vm1238, %v1469, %v1470
  %v1472 = vrot.slane %v1389, 1
  %v1473 = vrot.slane %v1390, 1
  %v1474 = vsel %vm1238, %v1472, %v1473
  %v1475 = vrot.slane %v1391, 1
  %v1476 = vrot.slane %v1392, 1
  %v1477 = vsel %vm1238, %v1475, %v1476
  %v1478 = vrot.slane %v1393, 1
  %v1479 = vrot.slane %v1394, 1
  %v1480 = vsel %vm1238, %v1478, %v1479
  %v1481 = vrot.slane %v1395, 1
  %v1482 = vrot.slane %v1396, 1
  %v1483 = vsel %vm1238, %v1481, %v1482
  %v1484 = vrot.slane %v1397, 1
  %v1485 = vrot.slane %v1398, 1
  %v1486 = vsel %vm1238, %v1484, %v1485
  %v1487 = vrot.slane %v1399, 1
  %v1488 = vrot.slane %v1400, 1
  %v1489 = vsel %vm1238, %v1487, %v1488
  %v1490 = vrot.slane %v1401, 1
  %v1491 = vrot.slane %v1402, 1
  %v1492 = vsel %vm1238, %v1490, %v1491
  %v1493 = vrot.slane %v1403, 1
  %v1494 = vrot.slane %v1404, 1
  %v1495 = vsel %vm1238, %v1493, %v1494
  %v1496 = vrot.slane %v1405, 1
  %v1497 = vrot.slane %v1406, 1
  %v1498 = vsel %vm1238, %v1496, %v1497
  %v1499 = vrot.slane %v1407, 1
  %v1500 = vrot.slane %v1408, 1
  %v1501 = vsel %vm1238, %v1499, %v1500
  %v1502 = vrot.slane %v1409, 1
  %v1503 = vrot.slane %v1410, 1
  %v1504 = vsel %vm1238, %v1502, %v1503
  %v1505 = vrot.slane %v1411, 1
  %v1506 = vrot.slane %v1412, 1
  %v1507 = vsel %vm1238, %v1505, %v1506
  %v1508 = vrot.slane %v1413, 1
  %v1509 = vrot.slane %v1414, 1
  %v1510 = vsel %vm1238, %v1508, %v1509
  %v1511 = vrot.slane %v1415, 1
  %v1512 = vrot.slane %v1416, 1
  %v1513 = vsel %vm1238, %v1511, %v1512
  %v1514 = vrot.slane %v1417, 1
  %v1515 = vrot.slane %v1418, 1
  %v1516 = vsel %vm1238, %v1514, %v1515
  %v1517 = vrot.slane %v1419, 1
  %v1518 = vrot.slane %v1420, 1
  %v1519 = vsel %vm1238, %v1517, %v1518
  %v1520 = vrot.slane %v1421, 1
  %v1521 = vrot.slane %v1422, 1
  %v1522 = vsel %vm1238, %v1520, %v1521
  %v1563 = vadd.f32 %v1339, %v1465
  %v1564 = vadd.f32 %v1340, %v1464
  %v1565 = vadd.f32 %v1341, %v1468
  %v1566 = vadd.f32 %v1342, %v1467
  %v1567 = vadd.f32 %v1343, %v1471
  %v1568 = vadd.f32 %v1344, %v1470
  %v1569 = vadd.f32 %v1345, %v1474
  %v1570 = vadd.f32 %v1346, %v1473
  %v1571 = vadd.f32 %v1347, %v1477
  %v1572 = vadd.f32 %v1348, %v1476
  %v1573 = vadd.f32 %v1349, %v1480
  %v1574 = vadd.f32 %v1350, %v1479
  %v1575 = vadd.f32 %v1351, %v1483
  %v1576 = vadd.f32 %v1352, %v1482
  %v1577 = vadd.f32 %v1353, %v1486
  %v1578 = vadd.f32 %v1354, %v1485
  %v1579 = vadd.f32 %v1355, %v1489
  %v1580 = vadd.f32 %v1356, %v1488
  %v1581 = vadd.f32 %v1357, %v1492
  %v1582 = vadd.f32 %v1358, %v1491
  %v1583 = vadd.f32 %v1359, %v1495
  %v1584 = vadd.f32 %v1360, %v1494
  %v1585 = vadd.f32 %v1361, %v1498
  %v1586 = vadd.f32 %v1362, %v1497
  %v1587 = vadd.f32 %v1363, %v1501
  %v1588 = vadd.f32 %v1364, %v1500
  %v1589 = vadd.f32 %v1365, %v1504
  %v1590 = vadd.f32 %v1366, %v1503
  %v1591 = vadd.f32 %v1367, %v1507
  %v1592 = vadd.f32 %v1368, %v1506
  %v1593 = vadd.f32 %v1369, %v1510
  %v1594 = vadd.f32 %v1370, %v1509
  %v1595 = vadd.f32 %v1371, %v1513
  %v1596 = vadd.f32 %v1372, %v1512
  %v1597 = vadd.f32 %v1373, %v1516
  %v1598 = vadd.f32 %v1374, %v1515
  %v1599 = vadd.f32 %v1375, %v1519
  %v1600 = vadd.f32 %v1376, %v1518
  %v1601 = vadd.f32 %v1377, %v1522
  %v1602 = vadd.f32 %v1378, %v1521
  %v1603 = vlaneseq
  %v1604 = vshrl.u32 %v1603, 7
  %v1605 = vsub.s32 2, %v1604
  %v1606 = vrot.slane %v374, %v1605
  %v1607 = vmul.f32 %v912, %v1606
  %v1608 = vmul.f32 %v916, %v1606
  %v1609 = vmul.f32 %v920, %v1606
  %v1610 = vmul.f32 %v924, %v1606
  %v1611 = vmul.f32 %v928, %v1606
  %v1612 = vmul.f32 %v932, %v1606
  %v1613 = vmul.f32 %v936, %v1606
  %v1614 = vmul.f32 %v940, %v1606
  %v1615 = vmul.f32 %v944, %v1606
  %v1616 = vmul.f32 %v948, %v1606
  %v1617 = vmul.f32 %v952, %v1606
  %v1618 = vmul.f32 %v956, %v1606
  %v1619 = vmul.f32 %v960, %v1606
  %v1620 = vmul.f32 %v964, %v1606
  %v1621 = vmul.f32 %v968, %v1606
  %v1622 = vmul.f32 %v972, %v1606
  %v1623 = vmul.f32 %v976, %v1606
  %v1624 = vmul.f32 %v980, %v1606
  %v1625 = vmul.f32 %v984, %v1606
  %v1626 = vmul.f32 %v988, %v1606
  %v1627 = vmul.f32 %v992, %v1606
  %v1628 = vmul.f32 %v996, %v1606
  %v1629 = vmul.f32 %v1000, %v1606
  %v1630 = vmul.f32 %v1004, %v1606
  %v1631 = vmul.f32 %v1008, %v1606
  %v1632 = vmul.f32 %v1012, %v1606
  %v1633 = vmul.f32 %v1016, %v1606
  %v1634 = vmul.f32 %v1020, %v1606
  %v1635 = vmul.f32 %v1024, %v1606
  %v1636 = vmul.f32 %v1028, %v1606
  %v1637 = vmul.f32 %v1032, %v1606
  %v1638 = vmul.f32 %v1036, %v1606
  %v1639 = vmul.f32 %v1040, %v1606
  %v1640 = vmul.f32 %v1044, %v1606
  %v1641 = vmul.f32 %v1048, %v1606
  %v1642 = vmul.f32 %v1052, %v1606
  %v1643 = vmul.f32 %v1056, %v1606
  %v1644 = vmul.f32 %v1060, %v1606
  %v1645 = vmul.f32 %v1064, %v1606
  %v1646 = vmul.f32 %v1068, %v1606
  %v1687 = vrot.slane %v1607, 1
  %v1688 = vrot.slane %v1608, 1
  %v1689 = vsel %vm1238, %v1687, %v1688
  %v1690 = vrot.slane %v1609, 1
  %v1691 = vrot.slane %v1610, 1
  %v1692 = vsel %vm1238, %v1690, %v1691
  %v1693 = vrot.slane %v1611, 1
  %v1694 = vrot.slane %v1612, 1
  %v1695 = vsel %vm1238, %v1693, %v1694
  %v1696 = vrot.slane %v1613, 1
  %v1697 = vrot.slane %v1614, 1
  %v1698 = vsel %vm1238, %v1696, %v1697
  %v1699 = vrot.slane %v1615, 1
  %v1700 = vrot.slane %v1616, 1
  %v1701 = vsel %vm1238, %v1699, %v1700
  %v1702 = vrot.slane %v1617, 1
  %v1703 = vrot.slane %v1618, 1
  %v1704 = vsel %vm1238, %v1702, %v1703
  %v1705 = vrot.slane %v1619, 1
  %v1706 = vrot.slane %v1620, 1
  %v1707 = vsel %vm1238, %v1705, %v1706
  %v1708 = vrot.slane %v1621, 1
  %v1709 = vrot.slane %v1622, 1
  %v1710 = vsel %vm1238, %v1708, %v1709
  %v1711 = vrot.slane %v1623, 1
  %v1712 = vrot.slane %v1624, 1
  %v1713 = vsel %vm1238, %v1711, %v1712
  %v1714 = vrot.slane %v1625, 1
  %v1715 = vrot.slane %v1626, 1
  %v1716 = vsel %vm1238, %v1714, %v1715
  %v1717 = vrot.slane %v1627, 1
  %v1718 = vrot.slane %v1628, 1
  %v1719 = vsel %vm1238, %v1717, %v1718
  %v1720 = vrot.slane %v1629, 1
  %v1721 = vrot.slane %v1630, 1
  %v1722 = vsel %vm1238, %v1720, %v1721
  %v1723 = vrot.slane %v1631, 1
  %v1724 = vrot.slane %v1632, 1
  %v1725 = vsel %vm1238, %v1723, %v1724
  %v1726 = vrot.slane %v1633, 1
  %v1727 = vrot.slane %v1634, 1
  %v1728 = vsel %vm1238, %v1726, %v1727
  %v1729 = vrot.slane %v1635, 1
  %v1730 = vrot.slane %v1636, 1
  %v1731 = vsel %vm1238, %v1729, %v1730
  %v1732 = vrot.slane %v1637, 1
  %v1733 = vrot.slane %v1638, 1
  %v1734 = vsel %vm1238, %v1732, %v1733
  %v1735 = vrot.slane %v1639, 1
  %v1736 = vrot.slane %v1640, 1
  %v1737 = vsel %vm1238, %v1735, %v1736
  %v1738 = vrot.slane %v1641, 1
  %v1739 = vrot.slane %v1642, 1
  %v1740 = vsel %vm1238, %v1738, %v1739
  %v1741 = vrot.slane %v1643, 1
  %v1742 = vrot.slane %v1644, 1
  %v1743 = vsel %vm1238, %v1741, %v1742
  %v1744 = vrot.slane %v1645, 1
  %v1745 = vrot.slane %v1646, 1
  %v1746 = vsel %vm1238, %v1744, %v1745
  %v1787 = vadd.f32 %v1563, %v1689
  %v1788 = vadd.f32 %v1564, %v1688
  %v1789 = vadd.f32 %v1565, %v1692
  %v1790 = vadd.f32 %v1566, %v1691
  %v1791 = vadd.f32 %v1567, %v1695
  %v1792 = vadd.f32 %v1568, %v1694
  %v1793 = vadd.f32 %v1569, %v1698
  %v1794 = vadd.f32 %v1570, %v1697
  %v1795 = vadd.f32 %v1571, %v1701
  %v1796 = vadd.f32 %v1572, %v1700
  %v1797 = vadd.f32 %v1573, %v1704
  %v1798 = vadd.f32 %v1574, %v1703
  %v1799 = vadd.f32 %v1575, %v1707
  %v1800 = vadd.f32 %v1576, %v1706
  %v1801 = vadd.f32 %v1577, %v1710
  %v1802 = vadd.f32 %v1578, %v1709
  %v1803 = vadd.f32 %v1579, %v1713
  %v1804 = vadd.f32 %v1580, %v1712
  %v1805 = vadd.f32 %v1581, %v1716
  %v1806 = vadd.f32 %v1582, %v1715
  %v1807 = vadd.f32 %v1583, %v1719
  %v1808 = vadd.f32 %v1584, %v1718
  %v1809 = vadd.f32 %v1585, %v1722
  %v1810 = vadd.f32 %v1586, %v1721
  %v1811 = vadd.f32 %v1587, %v1725
  %v1812 = vadd.f32 %v1588, %v1724
  %v1813 = vadd.f32 %v1589, %v1728
  %v1814 = vadd.f32 %v1590, %v1727
  %v1815 = vadd.f32 %v1591, %v1731
  %v1816 = vadd.f32 %v1592, %v1730
  %v1817 = vadd.f32 %v1593, %v1734
  %v1818 = vadd.f32 %v1594, %v1733
  %v1819 = vadd.f32 %v1595, %v1737
  %v1820 = vadd.f32 %v1596, %v1736
  %v1821 = vadd.f32 %v1597, %v1740
  %v1822 = vadd.f32 %v1598, %v1739
  %v1823 = vadd.f32 %v1599, %v1743
  %v1824 = vadd.f32 %v1600, %v1742
  %v1825 = vadd.f32 %v1601, %v1746
  %v1826 = vadd.f32 %v1602, %v1745
  %v1827 = vlaneseq
  %v1828 = vshrl.u32 %v1827, 7
  %v1829 = vsub.s32 0, %v1828
  %v1830 = vrot.slane %v375, %v1829
  %v1831 = vmul.f32 %v385, %v1830
  %v1832 = vmul.f32 %v390, %v1830
  %v1833 = vmul.f32 %v395, %v1830
  %v1834 = vmul.f32 %v400, %v1830
  %v1835 = vmul.f32 %v405, %v1830
  %v1836 = vmul.f32 %v410, %v1830
  %v1837 = vmul.f32 %v415, %v1830
  %v1838 = vmul.f32 %v420, %v1830
  %v1839 = vmul.f32 %v425, %v1830
  %v1840 = vmul.f32 %v430, %v1830
  %v1841 = vmul.f32 %v435, %v1830
  %v1842 = vmul.f32 %v440, %v1830
  %v1843 = vmul.f32 %v445, %v1830
  %v1844 = vmul.f32 %v450, %v1830
  %v1845 = vmul.f32 %v455, %v1830
  %v1846 = vmul.f32 %v460, %v1830
  %v1847 = vmul.f32 %v465, %v1830
  %v1848 = vmul.f32 %v470, %v1830
  %v1849 = vmul.f32 %v475, %v1830
  %v1850 = vmul.f32 %v480, %v1830
  %v1851 = vmul.f32 %v485, %v1830
  %v1852 = vmul.f32 %v490, %v1830
  %v1853 = vmul.f32 %v495, %v1830
  %v1854 = vmul.f32 %v500, %v1830
  %v1855 = vmul.f32 %v505, %v1830
  %v1856 = vmul.f32 %v510, %v1830
  %v1857 = vmul.f32 %v515, %v1830
  %v1858 = vmul.f32 %v520, %v1830
  %v1859 = vmul.f32 %v525, %v1830
  %v1860 = vmul.f32 %v530, %v1830
  %v1861 = vmul.f32 %v535, %v1830
  %v1862 = vmul.f32 %v540, %v1830
  %v1863 = vmul.f32 %v545, %v1830
  %v1864 = vmul.f32 %v550, %v1830
  %v1865 = vmul.f32 %v555, %v1830
  %v1866 = vmul.f32 %v560, %v1830
  %v1867 = vmul.f32 %v565, %v1830
  %v1868 = vmul.f32 %v570, %v1830
  %v1869 = vmul.f32 %v575, %v1830
  %v1870 = vmul.f32 %v580, %v1830
  %vm1911 = vcmask 1045504
  %v1912 = vrot.slane %v1831, 2
  %v1913 = vrot.slane %v1832, 2
  %v1914 = vsel %vm1911, %v1912, %v1913
  %v1915 = vrot.slane %v1833, 2
  %v1916 = vrot.slane %v1834, 2
  %v1917 = vsel %vm1911, %v1915, %v1916
  %v1918 = vrot.slane %v1835, 2
  %v1919 = vrot.slane %v1836, 2
  %v1920 = vsel %vm1911, %v1918, %v1919
  %v1921 = vrot.slane %v1837, 2
  %v1922 = vrot.slane %v1838, 2
  %v1923 = vsel %vm1911, %v1921, %v1922
  %v1924 = vrot.slane %v1839, 2
  %v1925 = vrot.slane %v1840, 2
  %v1926 = vsel %vm1911, %v1924, %v1925
  %v1927 = vrot.slane %v1841, 2
  %v1928 = vrot.slane %v1842, 2
  %v1929 = vsel %vm1911, %v1927, %v1928
  %v1930 = vrot.slane %v1843, 2
  %v1931 = vrot.slane %v1844, 2
  %v1932 = vsel %vm1911, %v1930, %v1931
  %v1933 = vrot.slane %v1845, 2
  %v1934 = vrot.slane %v1846, 2
  %v1935 = vsel %vm1911, %v1933, %v1934
  %v1936 = vrot.slane %v1847, 2
  %v1937 = vrot.slane %v1848, 2
  %v1938 = vsel %vm1911, %v1936, %v1937
  %v1939 = vrot.slane %v1849, 2
  %v1940 = vrot.slane %v1850, 2
  %v1941 = vsel %vm1911, %v1939, %v1940
  %v1942 = vrot.slane %v1851, 2
  %v1943 = vrot.slane %v1852, 2
  %v1944 = vsel %vm1911, %v1942, %v1943
  %v1945 = vrot.slane %v1853, 2
  %v1946 = vrot.slane %v1854, 2
  %v1947 = vsel %vm1911, %v1945, %v1946
  %v1948 = vrot.slane %v1855, 2
  %v1949 = vrot.slane %v1856, 2
  %v1950 = vsel %vm1911, %v1948, %v1949
  %v1951 = vrot.slane %v1857, 2
  %v1952 = vrot.slane %v1858, 2
  %v1953 = vsel %vm1911, %v1951, %v1952
  %v1954 = vrot.slane %v1859, 2
  %v1955 = vrot.slane %v1860, 2
  %v1956 = vsel %vm1911, %v1954, %v1955
  %v1957 = vrot.slane %v1861, 2
  %v1958 = vrot.slane %v1862, 2
  %v1959 = vsel %vm1911, %v1957, %v1958
  %v1960 = vrot.slane %v1863, 2
  %v1961 = vrot.slane %v1864, 2
  %v1962 = vsel %vm1911, %v1960, %v1961
  %v1963 = vrot.slane %v1865, 2
  %v1964 = vrot.slane %v1866, 2
  %v1965 = vsel %vm1911, %v1963, %v1964
  %v1966 = vrot.slane %v1867, 2
  %v1967 = vrot.slane %v1868, 2
  %v1968 = vsel %vm1911, %v1966, %v1967
  %v1969 = vrot.slane %v1869, 2
  %v1970 = vrot.slane %v1870, 2
  %v1971 = vsel %vm1911, %v1969, %v1970
  %v2012 = vadd.f32 %v1787, %v1914
  %v2013 = vadd.f32 %v1788, %v1913
  %v2014 = vadd.f32 %v1789, %v1917
  %v2015 = vadd.f32 %v1790, %v1916
  %v2016 = vadd.f32 %v1791, %v1920
  %v2017 = vadd.f32 %v1792, %v1919
  %v2018 = vadd.f32 %v1793, %v1923
  %v2019 = vadd.f32 %v1794, %v1922
  %v2020 = vadd.f32 %v1795, %v1926
  %v2021 = vadd.f32 %v1796, %v1925
  %v2022 = vadd.f32 %v1797, %v1929
  %v2023 = vadd.f32 %v1798, %v1928
  %v2024 = vadd.f32 %v1799, %v1932
  %v2025 = vadd.f32 %v1800, %v1931
  %v2026 = vadd.f32 %v1801, %v1935
  %v2027 = vadd.f32 %v1802, %v1934
  %v2028 = vadd.f32 %v1803, %v1938
  %v2029 = vadd.f32 %v1804, %v1937
  %v2030 = vadd.f32 %v1805, %v1941
  %v2031 = vadd.f32 %v1806, %v1940
  %v2032 = vadd.f32 %v1807, %v1944
  %v2033 = vadd.f32 %v1808, %v1943
  %v2034 = vadd.f32 %v1809, %v1947
  %v2035 = vadd.f32 %v1810, %v1946
  %v2036 = vadd.f32 %v1811, %v1950
  %v2037 = vadd.f32 %v1812, %v1949
  %v2038 = vadd.f32 %v1813, %v1953
  %v2039 = vadd.f32 %v1814, %v1952
  %v2040 = vadd.f32 %v1815, %v1956
  %v2041 = vadd.f32 %v1816, %v1955
  %v2042 = vadd.f32 %v1817, %v1959
  %v2043 = vadd.f32 %v1818, %v1958
  %v2044 = vadd.f32 %v1819, %v1962
  %v2045 = vadd.f32 %v1820, %v1961
  %v2046 = vadd.f32 %v1821, %v1965
  %v2047 = vadd.f32 %v1822, %v1964
  %v2048 = vadd.f32 %v1823, %v1968
  %v2049 = vadd.f32 %v1824, %v1967
  %v2050 = vadd.f32 %v1825, %v1971
  %v2051 = vadd.f32 %v1826, %v1970
  %v2052 = vlaneseq
  %v2053 = vshrl.u32 %v2052, 7
  %v2054 = vsub.s32 1, %v2053
  %v2055 = vrot.slane %v375, %v2054
  %v2056 = vmul.f32 %v668, %v2055
  %v2057 = vmul.f32 %v672, %v2055
  %v2058 = vmul.f32 %v676, %v2055
  %v2059 = vmul.f32 %v680, %v2055
  %v2060 = vmul.f32 %v684, %v2055
  %v2061 = vmul.f32 %v688, %v2055
  %v2062 = vmul.f32 %v692, %v2055
  %v2063 = vmul.f32 %v696, %v2055
  %v2064 = vmul.f32 %v700, %v2055
  %v2065 = vmul.f32 %v704, %v2055
  %v2066 = vmul.f32 %v708, %v2055
  %v2067 = vmul.f32 %v712, %v2055
  %v2068 = vmul.f32 %v716, %v2055
  %v2069 = vmul.f32 %v720, %v2055
  %v2070 = vmul.f32 %v724, %v2055
  %v2071 = vmul.f32 %v728, %v2055
  %v2072 = vmul.f32 %v732, %v2055
  %v2073 = vmul.f32 %v736, %v2055
  %v2074 = vmul.f32 %v740, %v2055
  %v2075 = vmul.f32 %v744, %v2055
  %v2076 = vmul.f32 %v748, %v2055
  %v2077 = vmul.f32 %v752, %v2055
  %v2078 = vmul.f32 %v756, %v2055
  %v2079 = vmul.f32 %v760, %v2055
  %v2080 = vmul.f32 %v764, %v2055
  %v2081 = vmul.f32 %v768, %v2055
  %v2082 = vmul.f32 %v772, %v2055
  %v2083 = vmul.f32 %v776, %v2055
  %v2084 = vmul.f32 %v780, %v2055
  %v2085 = vmul.f32 %v784, %v2055
  %v2086 = vmul.f32 %v788, %v2055
  %v2087 = vmul.f32 %v792, %v2055
  %v2088 = vmul.f32 %v796, %v2055
  %v2089 = vmul.f32 %v800, %v2055
  %v2090 = vmul.f32 %v804, %v2055
  %v2091 = vmul.f32 %v808, %v2055
  %v2092 = vmul.f32 %v812, %v2055
  %v2093 = vmul.f32 %v816, %v2055
  %v2094 = vmul.f32 %v820, %v2055
  %v2095 = vmul.f32 %v824, %v2055
  %v2136 = vrot.slane %v2056, 2
  %v2137 = vrot.slane %v2057, 2
  %v2138 = vsel %vm1911, %v2136, %v2137
  %v2139 = vrot.slane %v2058, 2
  %v2140 = vrot.slane %v2059, 2
  %v2141 = vsel %vm1911, %v2139, %v2140
  %v2142 = vrot.slane %v2060, 2
  %v2143 = vrot.slane %v2061, 2
  %v2144 = vsel %vm1911, %v2142, %v2143
  %v2145 = vrot.slane %v2062, 2
  %v2146 = vrot.slane %v2063, 2
  %v2147 = vsel %vm1911, %v2145, %v2146
  %v2148 = vrot.slane %v2064, 2
  %v2149 = vrot.slane %v2065, 2
  %v2150 = vsel %vm1911, %v2148, %v2149
  %v2151 = vrot.slane %v2066, 2
  %v2152 = vrot.slane %v2067, 2
  %v2153 = vsel %vm1911, %v2151, %v2152
  %v2154 = vrot.slane %v2068, 2
  %v2155 = vrot.slane %v2069, 2
  %v2156 = vsel %vm1911, %v2154, %v2155
  %v2157 = vrot.slane %v2070, 2
  %v2158 = vrot.slane %v2071, 2
  %v2159 = vsel %vm1911, %v2157, %v2158
  %v2160 = vrot.slane %v2072, 2
  %v2161 = vrot.slane %v2073, 2
  %v2162 = vsel %vm1911, %v2160, %v2161
  %v2163 = vrot.slane %v2074, 2
  %v2164 = vrot.slane %v2075, 2
  %v2165 = vsel %vm1911, %v2163, %v2164
  %v2166 = vrot.slane %v2076, 2
  %v2167 = vrot.slane %v2077, 2
  %v2168 = vsel %vm1911, %v2166, %v2167
  %v2169 = vrot.slane %v2078, 2
  %v2170 = vrot.slane %v2079, 2
  %v2171 = vsel %vm1911, %v2169, %v2170
  %v2172 = vrot.slane %v2080, 2
  %v2173 = vrot.slane %v2081, 2
  %v2174 = vsel %vm1911, %v2172, %v2173
  %v2175 = vrot.slane %v2082, 2
  %v2176 = vrot.slane %v2083, 2
  %v2177 = vsel %vm1911, %v2175, %v2176
  %v2178 = vrot.slane %v2084, 2
  %v2179 = vrot.slane %v2085, 2
  %v2180 = vsel %vm1911, %v2178, %v2179
  %v2181 = vrot.slane %v2086, 2
  %v2182 = vrot.slane %v2087, 2
  %v2183 = vsel %vm1911, %v2181, %v2182
  %v2184 = vrot.slane %v2088, 2
  %v2185 = vrot.slane %v2089, 2
  %v2186 = vsel %vm1911, %v2184, %v2185
  %v2187 = vrot.slane %v2090, 2
  %v2188 = vrot.slane %v2091, 2
  %v2189 = vsel %vm1911, %v2187, %v2188
  %v2190 = vrot.slane %v2092, 2
  %v2191 = vrot.slane %v2093, 2
  %v2192 = vsel %vm1911, %v2190, %v2191
  %v2193 = vrot.slane %v2094, 2
  %v2194 = vrot.slane %v2095, 2
  %v2195 = vsel %vm1911, %v2193, %v2194
  %v2236 = vadd.f32 %v2012, %v2138
  %v2237 = vadd.f32 %v2013, %v2137
  %v2238 = vadd.f32 %v2014, %v2141
  %v2239 = vadd.f32 %v2015, %v2140
  %v2240 = vadd.f32 %v2016, %v2144
  %v2241 = vadd.f32 %v2017, %v2143
  %v2242 = vadd.f32 %v2018, %v2147
  %v2243 = vadd.f32 %v2019, %v2146
  %v2244 = vadd.f32 %v2020, %v2150
  %v2245 = vadd.f32 %v2021, %v2149
  %v2246 = vadd.f32 %v2022, %v2153
  %v2247 = vadd.f32 %v2023, %v2152
  %v2248 = vadd.f32 %v2024, %v2156
  %v2249 = vadd.f32 %v2025, %v2155
  %v2250 = vadd.f32 %v2026, %v2159
  %v2251 = vadd.f32 %v2027, %v2158
  %v2252 = vadd.f32 %v2028, %v2162
  %v2253 = vadd.f32 %v2029, %v2161
  %v2254 = vadd.f32 %v2030, %v2165
  %v2255 = vadd.f32 %v2031, %v2164
  %v2256 = vadd.f32 %v2032, %v2168
  %v2257 = vadd.f32 %v2033, %v2167
  %v2258 = vadd.f32 %v2034, %v2171
  %v2259 = vadd.f32 %v2035, %v2170
  %v2260 = vadd.f32 %v2036, %v2174
  %v2261 = vadd.f32 %v2037, %v2173
  %v2262 = vadd.f32 %v2038, %v2177
  %v2263 = vadd.f32 %v2039, %v2176
  %v2264 = vadd.f32 %v2040, %v2180
  %v2265 = vadd.f32 %v2041, %v2179
  %v2266 = vadd.f32 %v2042, %v2183
  %v2267 = vadd.f32 %v2043, %v2182
  %v2268 = vadd.f32 %v2044, %v2186
  %v2269 = vadd.f32 %v2045, %v2185
  %v2270 = vadd.f32 %v2046, %v2189
  %v2271 = vadd.f32 %v2047, %v2188
  %v2272 = vadd.f32 %v2048, %v2192
  %v2273 = vadd.f32 %v2049, %v2191
  %v2274 = vadd.f32 %v2050, %v2195
  %v2275 = vadd.f32 %v2051, %v2194
  %v2276 = vlaneseq
  %v2277 = vshrl.u32 %v2276, 7
  %v2278 = vsub.s32 2, %v2277
  %v2279 = vrot.slane %v375, %v2278
  %v2280 = vmul.f32 %v912, %v2279
  %v2281 = vmul.f32 %v916, %v2279
  %v2282 = vmul.f32 %v920, %v2279
  %v2283 = vmul.f32 %v924, %v2279
  %v2284 = vmul.f32 %v928, %v2279
  %v2285 = vmul.f32 %v932, %v2279
  %v2286 = vmul.f32 %v936, %v2279
  %v2287 = vmul.f32 %v940, %v2279
  %v2288 = vmul.f32 %v944, %v2279
  %v2289 = vmul.f32 %v948, %v2279
  %v2290 = vmul.f32 %v952, %v2279
  %v2291 = vmul.f32 %v956, %v2279
  %v2292 = vmul.f32 %v960, %v2279
  %v2293 = vmul.f32 %v964, %v2279
  %v2294 = vmul.f32 %v968, %v2279
  %v2295 = vmul.f32 %v972, %v2279
  %v2296 = vmul.f32 %v976, %v2279
  %v2297 = vmul.f32 %v980, %v2279
  %v2298 = vmul.f32 %v984, %v2279
  %v2299 = vmul.f32 %v988, %v2279
  %v2300 = vmul.f32 %v992, %v2279
  %v2301 = vmul.f32 %v996, %v2279
  %v2302 = vmul.f32 %v1000, %v2279
  %v2303 = vmul.f32 %v1004, %v2279
  %v2304 = vmul.f32 %v1008, %v2279
  %v2305 = vmul.f32 %v1012, %v2279
  %v2306 = vmul.f32 %v1016, %v2279
  %v2307 = vmul.f32 %v1020, %v2279
  %v2308 = vmul.f32 %v1024, %v2279
  %v2309 = vmul.f32 %v1028, %v2279
  %v2310 = vmul.f32 %v1032, %v2279
  %v2311 = vmul.f32 %v1036, %v2279
  %v2312 = vmul.f32 %v1040, %v2279
  %v2313 = vmul.f32 %v1044, %v2279
  %v2314 = vmul.f32 %v1048, %v2279
  %v2315 = vmul.f32 %v1052, %v2279
  %v2316 = vmul.f32 %v1056, %v2279
  %v2317 = vmul.f32 %v1060, %v2279
  %v2318 = vmul.f32 %v1064, %v2279
  %v2319 = vmul.f32 %v1068, %v2279
  %v2360 = vrot.slane %v2280, 2
  %v2361 = vrot.slane %v2281, 2
  %v2362 = vsel %vm1911, %v2360, %v2361
  %v2363 = vrot.slane %v2282, 2
  %v2364 = vrot.slane %v2283, 2
  %v2365 = vsel %vm1911, %v2363, %v2364
  %v2366 = vrot.slane %v2284, 2
  %v2367 = vrot.slane %v2285, 2
  %v2368 = vsel %vm1911, %v2366, %v2367
  %v2369 = vrot.slane %v2286, 2
  %v2370 = vrot.slane %v2287, 2
  %v2371 = vsel %vm1911, %v2369, %v2370
  %v2372 = vrot.slane %v2288, 2
  %v2373 = vrot.slane %v2289, 2
  %v2374 = vsel %vm1911, %v2372, %v2373
  %v2375 = vrot.slane %v2290, 2
  %v2376 = vrot.slane %v2291, 2
  %v2377 = vsel %vm1911, %v2375, %v2376
  %v2378 = vrot.slane %v2292, 2
  %v2379 = vrot.slane %v2293, 2
  %v2380 = vsel %vm1911, %v2378, %v2379
  %v2381 = vrot.slane %v2294, 2
  %v2382 = vrot.slane %v2295, 2
  %v2383 = vsel %vm1911, %v2381, %v2382
  %v2384 = vrot.slane %v2296, 2
  %v2385 = vrot.slane %v2297, 2
  %v2386 = vsel %vm1911, %v2384, %v2385
  %v2387 = vrot.slane %v2298, 2
  %v2388 = vrot.slane %v2299, 2
  %v2389 = vsel %vm1911, %v2387, %v2388
  %v2390 = vrot.slane %v2300, 2
  %v2391 = vrot.slane %v2301, 2
  %v2392 = vsel %vm1911, %v2390, %v2391
  %v2393 = vrot.slane %v2302, 2
  %v2394 = vrot.slane %v2303, 2
  %v2395 = vsel %vm1911, %v2393, %v2394
  %v2396 = vrot.slane %v2304, 2
  %v2397 = vrot.slane %v2305, 2
  %v2398 = vsel %vm1911, %v2396, %v2397
  %v2399 = vrot.slane %v2306, 2
  %v2400 = vrot.slane %v2307, 2
  %v2401 = vsel %vm1911, %v2399, %v2400
  %v2402 = vrot.slane %v2308, 2
  %v2403 = vrot.slane %v2309, 2
  %v2404 = vsel %vm1911, %v2402, %v2403
  %v2405 = vrot.slane %v2310, 2
  %v2406 = vrot.slane %v2311, 2
  %v2407 = vsel %vm1911, %v2405, %v2406
  %v2408 = vrot.slane %v2312, 2
  %v2409 = vrot.slane %v2313, 2
  %v2410 = vsel %vm1911, %v2408, %v2409
  %v2411 = vrot.slane %v2314, 2
  %v2412 = vrot.slane %v2315, 2
  %v2413 = vsel %vm1911, %v2411, %v2412
  %v2414 = vrot.slane %v2316, 2
  %v2415 = vrot.slane %v2317, 2
  %v2416 = vsel %vm1911, %v2414, %v2415
  %v2417 = vrot.slane %v2318, 2
  %v2418 = vrot.slane %v2319, 2
  %v2419 = vsel %vm1911, %v2417, %v2418
  %v2460 = vadd.f32 %v2236, %v2362
  %v2461 = vadd.f32 %v2237, %v2361
  %v2462 = vadd.f32 %v2238, %v2365
  %v2463 = vadd.f32 %v2239, %v2364
  %v2464 = vadd.f32 %v2240, %v2368
  %v2465 = vadd.f32 %v2241, %v2367
  %v2466 = vadd.f32 %v2242, %v2371
  %v2467 = vadd.f32 %v2243, %v2370
  %v2468 = vadd.f32 %v2244, %v2374
  %v2469 = vadd.f32 %v2245, %v2373
  %v2470 = vadd.f32 %v2246, %v2377
  %v2471 = vadd.f32 %v2247, %v2376
  %v2472 = vadd.f32 %v2248, %v2380
  %v2473 = vadd.f32 %v2249, %v2379
  %v2474 = vadd.f32 %v2250, %v2383
  %v2475 = vadd.f32 %v2251, %v2382
  %v2476 = vadd.f32 %v2252, %v2386
  %v2477 = vadd.f32 %v2253, %v2385
  %v2478 = vadd.f32 %v2254, %v2389
  %v2479 = vadd.f32 %v2255, %v2388
  %v2480 = vadd.f32 %v2256, %v2392
  %v2481 = vadd.f32 %v2257, %v2391
  %v2482 = vadd.f32 %v2258, %v2395
  %v2483 = vadd.f32 %v2259, %v2394
  %v2484 = vadd.f32 %v2260, %v2398
  %v2485 = vadd.f32 %v2261, %v2397
  %v2486 = vadd.f32 %v2262, %v2401
  %v2487 = vadd.f32 %v2263, %v2400
  %v2488 = vadd.f32 %v2264, %v2404
  %v2489 = vadd.f32 %v2265, %v2403
  %v2490 = vadd.f32 %v2266, %v2407
  %v2491 = vadd.f32 %v2267, %v2406
  %v2492 = vadd.f32 %v2268, %v2410
  %v2493 = vadd.f32 %v2269, %v2409
  %v2494 = vadd.f32 %v2270, %v2413
  %v2495 = vadd.f32 %v2271, %v2412
  %v2496 = vadd.f32 %v2272, %v2416
  %v2497 = vadd.f32 %v2273, %v2415
  %v2498 = vadd.f32 %v2274, %v2419
  %v2499 = vadd.f32 %v2275, %v2418
  %2501 = vset.pattern.permute.xlu0 0
  %2502 = vperm.xlu0 %2501, %v345
  %v2503 = vpop.permute.xlu0 %2502
  %2506 = vset.pattern.permute.xlu0 0
  %2507 = vperm.xlu0 %2506, %v346
  %v2508 = vpop.permute.xlu0 %2507
  %2511 = vset.pattern.permute.xlu0 0
  %2512 = vperm.xlu0 %2511, %v369
  %v2513 = vpop.permute.xlu0 %2512
  %2516 = vset.pattern.permute.xlu0 0
  %2517 = vperm.xlu0 %2516, %v370
  %v2518 = vpop.permute.xlu0 %2517
  %v2520 = vlaneseq
  %v2521 = vshrl.u32 %v2520, 7
  %v2522 = vsub.s32 0, %v2521
  %v2523 = vrot.slane %v376, %v2522
  %v2524 = vmul.f32 %v395, %v2523
  %v2525 = vmul.f32 %v400, %v2523
  %v2526 = vmul.f32 %v405, %v2523
  %v2527 = vmul.f32 %v410, %v2523
  %v2528 = vmul.f32 %v415, %v2523
  %v2529 = vmul.f32 %v420, %v2523
  %v2530 = vmul.f32 %v425, %v2523
  %v2531 = vmul.f32 %v430, %v2523
  %v2532 = vmul.f32 %v435, %v2523
  %v2533 = vmul.f32 %v440, %v2523
  %v2534 = vmul.f32 %v445, %v2523
  %v2535 = vmul.f32 %v450, %v2523
  %v2536 = vmul.f32 %v455, %v2523
  %v2537 = vmul.f32 %v460, %v2523
  %v2538 = vmul.f32 %v465, %v2523
  %v2539 = vmul.f32 %v470, %v2523
  %v2540 = vmul.f32 %v475, %v2523
  %v2541 = vmul.f32 %v480, %v2523
  %v2542 = vmul.f32 %v2503, %v2523
  %v2543 = vmul.f32 %v2508, %v2523
  %v2544 = vmul.f32 %v495, %v2523
  %v2545 = vmul.f32 %v500, %v2523
  %v2546 = vmul.f32 %v505, %v2523
  %v2547 = vmul.f32 %v510, %v2523
  %v2548 = vmul.f32 %v515, %v2523
  %v2549 = vmul.f32 %v520, %v2523
  %v2550 = vmul.f32 %v525, %v2523
  %v2551 = vmul.f32 %v530, %v2523
  %v2552 = vmul.f32 %v535, %v2523
  %v2553 = vmul.f32 %v540, %v2523
  %v2554 = vmul.f32 %v545, %v2523
  %v2555 = vmul.f32 %v550, %v2523
  %v2556 = vmul.f32 %v555, %v2523
  %v2557 = vmul.f32 %v560, %v2523
  %v2558 = vmul.f32 %v565, %v2523
  %v2559 = vmul.f32 %v570, %v2523
  %v2560 = vmul.f32 %v575, %v2523
  %v2561 = vmul.f32 %v580, %v2523
  %v2562 = vmul.f32 %v2513, %v2523
  %v2563 = vmul.f32 %v2518, %v2523
  %v2564 = vadd.f32 %v2460, %v2524
  %v2565 = vadd.f32 %v2461, %v2525
  %v2566 = vadd.f32 %v2462, %v2526
  %v2567 = vadd.f32 %v2463, %v2527
  %v2568 = vadd.f32 %v2464, %v2528
  %v2569 = vadd.f32 %v2465, %v2529
  %v2570 = vadd.f32 %v2466, %v2530
  %v2571 = vadd.f32 %v2467, %v2531
  %v2572 = vadd.f32 %v2468, %v2532
  %v2573 = vadd.f32 %v2469, %v2533
  %v2574 = vadd.f32 %v2470, %v2534
  %v2575 = vadd.f32 %v2471, %v2535
  %v2576 = vadd.f32 %v2472, %v2536
  %v2577 = vadd.f32 %v2473, %v2537
  %v2578 = vadd.f32 %v2474, %v2538
  %v2579 = vadd.f32 %v2475, %v2539
  %v2580 = vadd.f32 %v2476, %v2540
  %v2581 = vadd.f32 %v2477, %v2541
  %v2582 = vadd.f32 %v2478, %v2542
  %v2583 = vadd.f32 %v2479, %v2543
  %v2584 = vadd.f32 %v2480, %v2544
  %v2585 = vadd.f32 %v2481, %v2545
  %v2586 = vadd.f32 %v2482, %v2546
  %v2587 = vadd.f32 %v2483, %v2547
  %v2588 = vadd.f32 %v2484, %v2548
  %v2589 = vadd.f32 %v2485, %v2549
  %v2590 = vadd.f32 %v2486, %v2550
  %v2591 = vadd.f32 %v2487, %v2551
  %v2592 = vadd.f32 %v2488, %v2552
  %v2593 = vadd.f32 %v2489, %v2553
  %v2594 = vadd.f32 %v2490, %v2554
  %v2595 = vadd.f32 %v2491, %v2555
  %v2596 = vadd.f32 %v2492, %v2556
  %v2597 = vadd.f32 %v2493, %v2557
  %v2598 = vadd.f32 %v2494, %v2558
  %v2599 = vadd.f32 %v2495, %v2559
  %v2600 = vadd.f32 %v2496, %v2560
  %v2601 = vadd.f32 %v2497, %v2561
  %v2602 = vadd.f32 %v2498, %v2562
  %v2603 = vadd.f32 %v2499, %v2563
  %2604 = vset.pattern.permute.xlu0 1
  %2605 = vperm.xlu0 %2604, %v345
  %v2606 = vpop.permute.xlu0 %2605
  %2608 = vset.pattern.permute.xlu0 1
  %2609 = vperm.xlu0 %2608, %v346
  %v2610 = vpop.permute.xlu0 %2609
  %2612 = vset.pattern.permute.xlu0 1
  %2613 = vperm.xlu0 %2612, %v369
  %v2614 = vpop.permute.xlu0 %2613
  %2616 = vset.pattern.permute.xlu0 1
  %2617 = vperm.xlu0 %2616, %v370
  %v2618 = vpop.permute.xlu0 %2617
  %v2620 = vlaneseq
  %v2621 = vshrl.u32 %v2620, 7
  %v2622 = vsub.s32 1, %v2621
  %v2623 = vrot.slane %v376, %v2622
  %v2624 = vmul.f32 %v676, %v2623
  %v2625 = vmul.f32 %v680, %v2623
  %v2626 = vmul.f32 %v684, %v2623
  %v2627 = vmul.f32 %v688, %v2623
  %v2628 = vmul.f32 %v692, %v2623
  %v2629 = vmul.f32 %v696, %v2623
  %v2630 = vmul.f32 %v700, %v2623
  %v2631 = vmul.f32 %v704, %v2623
  %v2632 = vmul.f32 %v708, %v2623
  %v2633 = vmul.f32 %v712, %v2623
  %v2634 = vmul.f32 %v716, %v2623
  %v2635 = vmul.f32 %v720, %v2623
  %v2636 = vmul.f32 %v724, %v2623
  %v2637 = vmul.f32 %v728, %v2623
  %v2638 = vmul.f32 %v732, %v2623
  %v2639 = vmul.f32 %v736, %v2623
  %v2640 = vmul.f32 %v740, %v2623
  %v2641 = vmul.f32 %v744, %v2623
  %v2642 = vmul.f32 %v2606, %v2623
  %v2643 = vmul.f32 %v2610, %v2623
  %v2644 = vmul.f32 %v756, %v2623
  %v2645 = vmul.f32 %v760, %v2623
  %v2646 = vmul.f32 %v764, %v2623
  %v2647 = vmul.f32 %v768, %v2623
  %v2648 = vmul.f32 %v772, %v2623
  %v2649 = vmul.f32 %v776, %v2623
  %v2650 = vmul.f32 %v780, %v2623
  %v2651 = vmul.f32 %v784, %v2623
  %v2652 = vmul.f32 %v788, %v2623
  %v2653 = vmul.f32 %v792, %v2623
  %v2654 = vmul.f32 %v796, %v2623
  %v2655 = vmul.f32 %v800, %v2623
  %v2656 = vmul.f32 %v804, %v2623
  %v2657 = vmul.f32 %v808, %v2623
  %v2658 = vmul.f32 %v812, %v2623
  %v2659 = vmul.f32 %v816, %v2623
  %v2660 = vmul.f32 %v820, %v2623
  %v2661 = vmul.f32 %v824, %v2623
  %v2662 = vmul.f32 %v2614, %v2623
  %v2663 = vmul.f32 %v2618, %v2623
  %v2664 = vadd.f32 %v2564, %v2624
  %v2665 = vadd.f32 %v2565, %v2625
  %v2666 = vadd.f32 %v2566, %v2626
  %v2667 = vadd.f32 %v2567, %v2627
  %v2668 = vadd.f32 %v2568, %v2628
  %v2669 = vadd.f32 %v2569, %v2629
  %v2670 = vadd.f32 %v2570, %v2630
  %v2671 = vadd.f32 %v2571, %v2631
  %v2672 = vadd.f32 %v2572, %v2632
  %v2673 = vadd.f32 %v2573, %v2633
  %v2674 = vadd.f32 %v2574, %v2634
  %v2675 = vadd.f32 %v2575, %v2635
  %v2676 = vadd.f32 %v2576, %v2636
  %v2677 = vadd.f32 %v2577, %v2637
  %v2678 = vadd.f32 %v2578, %v2638
  %v2679 = vadd.f32 %v2579, %v2639
  %v2680 = vadd.f32 %v2580, %v2640
  %v2681 = vadd.f32 %v2581, %v2641
  %v2682 = vadd.f32 %v2582, %v2642
  %v2683 = vadd.f32 %v2583, %v2643
  %v2684 = vadd.f32 %v2584, %v2644
  %v2685 = vadd.f32 %v2585, %v2645
  %v2686 = vadd.f32 %v2586, %v2646
  %v2687 = vadd.f32 %v2587, %v2647
  %v2688 = vadd.f32 %v2588, %v2648
  %v2689 = vadd.f32 %v2589, %v2649
  %v2690 = vadd.f32 %v2590, %v2650
  %v2691 = vadd.f32 %v2591, %v2651
  %v2692 = vadd.f32 %v2592, %v2652
  %v2693 = vadd.f32 %v2593, %v2653
  %v2694 = vadd.f32 %v2594, %v2654
  %v2695 = vadd.f32 %v2595, %v2655
  %v2696 = vadd.f32 %v2596, %v2656
  %v2697 = vadd.f32 %v2597, %v2657
  %v2698 = vadd.f32 %v2598, %v2658
  %v2699 = vadd.f32 %v2599, %v2659
  %v2700 = vadd.f32 %v2600, %v2660
  %v2701 = vadd.f32 %v2601, %v2661
  %v2702 = vadd.f32 %v2602, %v2662
  %v2703 = vadd.f32 %v2603, %v2663
  %2704 = vset.pattern.permute.xlu0 2
  %2705 = vperm.xlu0 %2704, %v345
  %v2706 = vpop.permute.xlu0 %2705
  %2708 = vset.pattern.permute.xlu0 2
  %2709 = vperm.xlu0 %2708, %v346
  %v2710 = vpop.permute.xlu0 %2709
  %2712 = vset.pattern.permute.xlu0 2
  %2713 = vperm.xlu0 %2712, %v369
  %v2714 = vpop.permute.xlu0 %2713
  %2716 = vset.pattern.permute.xlu0 2
  %2717 = vperm.xlu0 %2716, %v370
  %v2718 = vpop.permute.xlu0 %2717
  %v2720 = vlaneseq
  %v2721 = vshrl.u32 %v2720, 7
  %v2722 = vsub.s32 2, %v2721
  %v2723 = vrot.slane %v376, %v2722
  %v2724 = vmul.f32 %v920, %v2723
  %v2725 = vmul.f32 %v924, %v2723
  %v2726 = vmul.f32 %v928, %v2723
  %v2727 = vmul.f32 %v932, %v2723
  %v2728 = vmul.f32 %v936, %v2723
  %v2729 = vmul.f32 %v940, %v2723
  %v2730 = vmul.f32 %v944, %v2723
  %v2731 = vmul.f32 %v948, %v2723
  %v2732 = vmul.f32 %v952, %v2723
  %v2733 = vmul.f32 %v956, %v2723
  %v2734 = vmul.f32 %v960, %v2723
  %v2735 = vmul.f32 %v964, %v2723
  %v2736 = vmul.f32 %v968, %v2723
  %v2737 = vmul.f32 %v972, %v2723
  %v2738 = vmul.f32 %v976, %v2723
  %v2739 = vmul.f32 %v980, %v2723
  %v2740 = vmul.f32 %v984, %v2723
  %v2741 = vmul.f32 %v988, %v2723
  %v2742 = vmul.f32 %v2706, %v2723
  %v2743 = vmul.f32 %v2710, %v2723
  %v2744 = vmul.f32 %v1000, %v2723
  %v2745 = vmul.f32 %v1004, %v2723
  %v2746 = vmul.f32 %v1008, %v2723
  %v2747 = vmul.f32 %v1012, %v2723
  %v2748 = vmul.f32 %v1016, %v2723
  %v2749 = vmul.f32 %v1020, %v2723
  %v2750 = vmul.f32 %v1024, %v2723
  %v2751 = vmul.f32 %v1028, %v2723
  %v2752 = vmul.f32 %v1032, %v2723
  %v2753 = vmul.f32 %v1036, %v2723
  %v2754 = vmul.f32 %v1040, %v2723
  %v2755 = vmul.f32 %v1044, %v2723
  %v2756 = vmul.f32 %v1048, %v2723
  %v2757 = vmul.f32 %v1052, %v2723
  %v2758 = vmul.f32 %v1056, %v2723
  %v2759 = vmul.f32 %v1060, %v2723
  %v2760 = vmul.f32 %v1064, %v2723
  %v2761 = vmul.f32 %v1068, %v2723
  %v2762 = vmul.f32 %v2714, %v2723
  %v2763 = vmul.f32 %v2718, %v2723
  %v2764 = vadd.f32 %v2664, %v2724
  %v2765 = vadd.f32 %v2665, %v2725
  %v2766 = vadd.f32 %v2666, %v2726
  %v2767 = vadd.f32 %v2667, %v2727
  %v2768 = vadd.f32 %v2668, %v2728
  %v2769 = vadd.f32 %v2669, %v2729
  %v2770 = vadd.f32 %v2670, %v2730
  %v2771 = vadd.f32 %v2671, %v2731
  %v2772 = vadd.f32 %v2672, %v2732
  %v2773 = vadd.f32 %v2673, %v2733
  %v2774 = vadd.f32 %v2674, %v2734
  %v2775 = vadd.f32 %v2675, %v2735
  %v2776 = vadd.f32 %v2676, %v2736
  %v2777 = vadd.f32 %v2677, %v2737
  %v2778 = vadd.f32 %v2678, %v2738
  %v2779 = vadd.f32 %v2679, %v2739
  %v2780 = vadd.f32 %v2680, %v2740
  %v2781 = vadd.f32 %v2681, %v2741
  %v2782 = vadd.f32 %v2682, %v2742
  %v2783 = vadd.f32 %v2683, %v2743
  %v2784 = vadd.f32 %v2684, %v2744
  %v2785 = vadd.f32 %v2685, %v2745
  %v2786 = vadd.f32 %v2686, %v2746
  %v2787 = vadd.f32 %v2687, %v2747
  %v2788 = vadd.f32 %v2688, %v2748
  %v2789 = vadd.f32 %v2689, %v2749
  %v2790 = vadd.f32 %v2690, %v2750
  %v2791 = vadd.f32 %v2691, %v2751
  %v2792 = vadd.f32 %v2692, %v2752
  %v2793 = vadd.f32 %v2693, %v2753
  %v2794 = vadd.f32 %v2694, %v2754
  %v2795 = vadd.f32 %v2695, %v2755
  %v2796 = vadd.f32 %v2696, %v2756
  %v2797 = vadd.f32 %v2697, %v2757
  %v2798 = vadd.f32 %v2698, %v2758
  %v2799 = vadd.f32 %v2699, %v2759
  %v2800 = vadd.f32 %v2700, %v2760
  %v2801 = vadd.f32 %v2701, %v2761
  %v2802 = vadd.f32 %v2702, %v2762
  %v2803 = vadd.f32 %v2703, %v2763
  %v2804 = vlaneseq
  %v2805 = vshrl.u32 %v2804, 7
  %v2806 = vsub.s32 0, %v2805
  %v2807 = vrot.slane %v377, %v2806
  %v2808 = vmul.f32 %v395, %v2807
  %v2809 = vmul.f32 %v400, %v2807
  %v2810 = vmul.f32 %v405, %v2807
  %v2811 = vmul.f32 %v410, %v2807
  %v2812 = vmul.f32 %v415, %v2807
  %v2813 = vmul.f32 %v420, %v2807
  %v2814 = vmul.f32 %v425, %v2807
  %v2815 = vmul.f32 %v430, %v2807
  %v2816 = vmul.f32 %v435, %v2807
  %v2817 = vmul.f32 %v440, %v2807
  %v2818 = vmul.f32 %v445, %v2807
  %v2819 = vmul.f32 %v450, %v2807
  %v2820 = vmul.f32 %v455, %v2807
  %v2821 = vmul.f32 %v460, %v2807
  %v2822 = vmul.f32 %v465, %v2807
  %v2823 = vmul.f32 %v470, %v2807
  %v2824 = vmul.f32 %v475, %v2807
  %v2825 = vmul.f32 %v480, %v2807
  %v2826 = vmul.f32 %v2503, %v2807
  %v2827 = vmul.f32 %v2508, %v2807
  %v2828 = vmul.f32 %v495, %v2807
  %v2829 = vmul.f32 %v500, %v2807
  %v2830 = vmul.f32 %v505, %v2807
  %v2831 = vmul.f32 %v510, %v2807
  %v2832 = vmul.f32 %v515, %v2807
  %v2833 = vmul.f32 %v520, %v2807
  %v2834 = vmul.f32 %v525, %v2807
  %v2835 = vmul.f32 %v530, %v2807
  %v2836 = vmul.f32 %v535, %v2807
  %v2837 = vmul.f32 %v540, %v2807
  %v2838 = vmul.f32 %v545, %v2807
  %v2839 = vmul.f32 %v550, %v2807
  %v2840 = vmul.f32 %v555, %v2807
  %v2841 = vmul.f32 %v560, %v2807
  %v2842 = vmul.f32 %v565, %v2807
  %v2843 = vmul.f32 %v570, %v2807
  %v2844 = vmul.f32 %v575, %v2807
  %v2845 = vmul.f32 %v580, %v2807
  %v2846 = vmul.f32 %v2513, %v2807
  %v2847 = vmul.f32 %v2518, %v2807
  %v2888 = vrot.slane %v2808, 1
  %v2889 = vrot.slane %v2809, 1
  %v2890 = vsel %vm1238, %v2888, %v2889
  %v2891 = vrot.slane %v2810, 1
  %v2892 = vrot.slane %v2811, 1
  %v2893 = vsel %vm1238, %v2891, %v2892
  %v2894 = vrot.slane %v2812, 1
  %v2895 = vrot.slane %v2813, 1
  %v2896 = vsel %vm1238, %v2894, %v2895
  %v2897 = vrot.slane %v2814, 1
  %v2898 = vrot.slane %v2815, 1
  %v2899 = vsel %vm1238, %v2897, %v2898
  %v2900 = vrot.slane %v2816, 1
  %v2901 = vrot.slane %v2817, 1
  %v2902 = vsel %vm1238, %v2900, %v2901
  %v2903 = vrot.slane %v2818, 1
  %v2904 = vrot.slane %v2819, 1
  %v2905 = vsel %vm1238, %v2903, %v2904
  %v2906 = vrot.slane %v2820, 1
  %v2907 = vrot.slane %v2821, 1
  %v2908 = vsel %vm1238, %v2906, %v2907
  %v2909 = vrot.slane %v2822, 1
  %v2910 = vrot.slane %v2823, 1
  %v2911 = vsel %vm1238, %v2909, %v2910
  %v2912 = vrot.slane %v2824, 1
  %v2913 = vrot.slane %v2825, 1
  %v2914 = vsel %vm1238, %v2912, %v2913
  %v2915 = vrot.slane %v2826, 1
  %v2916 = vrot.slane %v2827, 1
  %v2917 = vsel %vm1238, %v2915, %v2916
  %v2918 = vrot.slane %v2828, 1
  %v2919 = vrot.slane %v2829, 1
  %v2920 = vsel %vm1238, %v2918, %v2919
  %v2921 = vrot.slane %v2830, 1
  %v2922 = vrot.slane %v2831, 1
  %v2923 = vsel %vm1238, %v2921, %v2922
  %v2924 = vrot.slane %v2832, 1
  %v2925 = vrot.slane %v2833, 1
  %v2926 = vsel %vm1238, %v2924, %v2925
  %v2927 = vrot.slane %v2834, 1
  %v2928 = vrot.slane %v2835, 1
  %v2929 = vsel %vm1238, %v2927, %v2928
  %v2930 = vrot.slane %v2836, 1
  %v2931 = vrot.slane %v2837, 1
  %v2932 = vsel %vm1238, %v2930, %v2931
  %v2933 = vrot.slane %v2838, 1
  %v2934 = vrot.slane %v2839, 1
  %v2935 = vsel %vm1238, %v2933, %v2934
  %v2936 = vrot.slane %v2840, 1
  %v2937 = vrot.slane %v2841, 1
  %v2938 = vsel %vm1238, %v2936, %v2937
  %v2939 = vrot.slane %v2842, 1
  %v2940 = vrot.slane %v2843, 1
  %v2941 = vsel %vm1238, %v2939, %v2940
  %v2942 = vrot.slane %v2844, 1
  %v2943 = vrot.slane %v2845, 1
  %v2944 = vsel %vm1238, %v2942, %v2943
  %v2945 = vrot.slane %v2846, 1
  %v2946 = vrot.slane %v2847, 1
  %v2947 = vsel %vm1238, %v2945, %v2946
  %v2988 = vadd.f32 %v2764, %v2890
  %v2989 = vadd.f32 %v2765, %v2889
  %v2990 = vadd.f32 %v2766, %v2893
  %v2991 = vadd.f32 %v2767, %v2892
  %v2992 = vadd.f32 %v2768, %v2896
  %v2993 = vadd.f32 %v2769, %v2895
  %v2994 = vadd.f32 %v2770, %v2899
  %v2995 = vadd.f32 %v2771, %v2898
  %v2996 = vadd.f32 %v2772, %v2902
  %v2997 = vadd.f32 %v2773, %v2901
  %v2998 = vadd.f32 %v2774, %v2905
  %v2999 = vadd.f32 %v2775, %v2904
  %v3000 = vadd.f32 %v2776, %v2908
  %v3001 = vadd.f32 %v2777, %v2907
  %v3002 = vadd.f32 %v2778, %v2911
  %v3003 = vadd.f32 %v2779, %v2910
  %v3004 = vadd.f32 %v2780, %v2914
  %v3005 = vadd.f32 %v2781, %v2913
  %v3006 = vadd.f32 %v2782, %v2917
  %v3007 = vadd.f32 %v2783, %v2916
  %v3008 = vadd.f32 %v2784, %v2920
  %v3009 = vadd.f32 %v2785, %v2919
  %v3010 = vadd.f32 %v2786, %v2923
  %v3011 = vadd.f32 %v2787, %v2922
  %v3012 = vadd.f32 %v2788, %v2926
  %v3013 = vadd.f32 %v2789, %v2925
  %v3014 = vadd.f32 %v2790, %v2929
  %v3015 = vadd.f32 %v2791, %v2928
  %v3016 = vadd.f32 %v2792, %v2932
  %v3017 = vadd.f32 %v2793, %v2931
  %v3018 = vadd.f32 %v2794, %v2935
  %v3019 = vadd.f32 %v2795, %v2934
  %v3020 = vadd.f32 %v2796, %v2938
  %v3021 = vadd.f32 %v2797, %v2937
  %v3022 = vadd.f32 %v2798, %v2941
  %v3023 = vadd.f32 %v2799, %v2940
  %v3024 = vadd.f32 %v2800, %v2944
  %v3025 = vadd.f32 %v2801, %v2943
  %v3026 = vadd.f32 %v2802, %v2947
  %v3027 = vadd.f32 %v2803, %v2946
  %v3028 = vlaneseq
  %v3029 = vshrl.u32 %v3028, 7
  %v3030 = vsub.s32 1, %v3029
  %v3031 = vrot.slane %v377, %v3030
  %v3032 = vmul.f32 %v676, %v3031
  %v3033 = vmul.f32 %v680, %v3031
  %v3034 = vmul.f32 %v684, %v3031
  %v3035 = vmul.f32 %v688, %v3031
  %v3036 = vmul.f32 %v692, %v3031
  %v3037 = vmul.f32 %v696, %v3031
  %v3038 = vmul.f32 %v700, %v3031
  %v3039 = vmul.f32 %v704, %v3031
  %v3040 = vmul.f32 %v708, %v3031
  %v3041 = vmul.f32 %v712, %v3031
  %v3042 = vmul.f32 %v716, %v3031
  %v3043 = vmul.f32 %v720, %v3031
  %v3044 = vmul.f32 %v724, %v3031
  %v3045 = vmul.f32 %v728, %v3031
  %v3046 = vmul.f32 %v732, %v3031
  %v3047 = vmul.f32 %v736, %v3031
  %v3048 = vmul.f32 %v740, %v3031
  %v3049 = vmul.f32 %v744, %v3031
  %v3050 = vmul.f32 %v2606, %v3031
  %v3051 = vmul.f32 %v2610, %v3031
  %v3052 = vmul.f32 %v756, %v3031
  %v3053 = vmul.f32 %v760, %v3031
  %v3054 = vmul.f32 %v764, %v3031
  %v3055 = vmul.f32 %v768, %v3031
  %v3056 = vmul.f32 %v772, %v3031
  %v3057 = vmul.f32 %v776, %v3031
  %v3058 = vmul.f32 %v780, %v3031
  %v3059 = vmul.f32 %v784, %v3031
  %v3060 = vmul.f32 %v788, %v3031
  %v3061 = vmul.f32 %v792, %v3031
  %v3062 = vmul.f32 %v796, %v3031
  %v3063 = vmul.f32 %v800, %v3031
  %v3064 = vmul.f32 %v804, %v3031
  %v3065 = vmul.f32 %v808, %v3031
  %v3066 = vmul.f32 %v812, %v3031
  %v3067 = vmul.f32 %v816, %v3031
  %v3068 = vmul.f32 %v820, %v3031
  %v3069 = vmul.f32 %v824, %v3031
  %v3070 = vmul.f32 %v2614, %v3031
  %v3071 = vmul.f32 %v2618, %v3031
  %v3112 = vrot.slane %v3032, 1
  %v3113 = vrot.slane %v3033, 1
  %v3114 = vsel %vm1238, %v3112, %v3113
  %v3115 = vrot.slane %v3034, 1
  %v3116 = vrot.slane %v3035, 1
  %v3117 = vsel %vm1238, %v3115, %v3116
  %v3118 = vrot.slane %v3036, 1
  %v3119 = vrot.slane %v3037, 1
  %v3120 = vsel %vm1238, %v3118, %v3119
  %v3121 = vrot.slane %v3038, 1
  %v3122 = vrot.slane %v3039, 1
  %v3123 = vsel %vm1238, %v3121, %v3122
  %v3124 = vrot.slane %v3040, 1
  %v3125 = vrot.slane %v3041, 1
  %v3126 = vsel %vm1238, %v3124, %v3125
  %v3127 = vrot.slane %v3042, 1
  %v3128 = vrot.slane %v3043, 1
  %v3129 = vsel %vm1238, %v3127, %v3128
  %v3130 = vrot.slane %v3044, 1
  %v3131 = vrot.slane %v3045, 1
  %v3132 = vsel %vm1238, %v3130, %v3131
  %v3133 = vrot.slane %v3046, 1
  %v3134 = vrot.slane %v3047, 1
  %v3135 = vsel %vm1238, %v3133, %v3134
  %v3136 = vrot.slane %v3048, 1
  %v3137 = vrot.slane %v3049, 1
  %v3138 = vsel %vm1238, %v3136, %v3137
  %v3139 = vrot.slane %v3050, 1
  %v3140 = vrot.slane %v3051, 1
  %v3141 = vsel %vm1238, %v3139, %v3140
  %v3142 = vrot.slane %v3052, 1
  %v3143 = vrot.slane %v3053, 1
  %v3144 = vsel %vm1238, %v3142, %v3143
  %v3145 = vrot.slane %v3054, 1
  %v3146 = vrot.slane %v3055, 1
  %v3147 = vsel %vm1238, %v3145, %v3146
  %v3148 = vrot.slane %v3056, 1
  %v3149 = vrot.slane %v3057, 1
  %v3150 = vsel %vm1238, %v3148, %v3149
  %v3151 = vrot.slane %v3058, 1
  %v3152 = vrot.slane %v3059, 1
  %v3153 = vsel %vm1238, %v3151, %v3152
  %v3154 = vrot.slane %v3060, 1
  %v3155 = vrot.slane %v3061, 1
  %v3156 = vsel %vm1238, %v3154, %v3155
  %v3157 = vrot.slane %v3062, 1
  %v3158 = vrot.slane %v3063, 1
  %v3159 = vsel %vm1238, %v3157, %v3158
  %v3160 = vrot.slane %v3064, 1
  %v3161 = vrot.slane %v3065, 1
  %v3162 = vsel %vm1238, %v3160, %v3161
  %v3163 = vrot.slane %v3066, 1
  %v3164 = vrot.slane %v3067, 1
  %v3165 = vsel %vm1238, %v3163, %v3164
  %v3166 = vrot.slane %v3068, 1
  %v3167 = vrot.slane %v3069, 1
  %v3168 = vsel %vm1238, %v3166, %v3167
  %v3169 = vrot.slane %v3070, 1
  %v3170 = vrot.slane %v3071, 1
  %v3171 = vsel %vm1238, %v3169, %v3170
  %v3212 = vadd.f32 %v2988, %v3114
  %v3213 = vadd.f32 %v2989, %v3113
  %v3214 = vadd.f32 %v2990, %v3117
  %v3215 = vadd.f32 %v2991, %v3116
  %v3216 = vadd.f32 %v2992, %v3120
  %v3217 = vadd.f32 %v2993, %v3119
  %v3218 = vadd.f32 %v2994, %v3123
  %v3219 = vadd.f32 %v2995, %v3122
  %v3220 = vadd.f32 %v2996, %v3126
  %v3221 = vadd.f32 %v2997, %v3125
  %v3222 = vadd.f32 %v2998, %v3129
  %v3223 = vadd.f32 %v2999, %v3128
  %v3224 = vadd.f32 %v3000, %v3132
  %v3225 = vadd.f32 %v3001, %v3131
  %v3226 = vadd.f32 %v3002, %v3135
  %v3227 = vadd.f32 %v3003, %v3134
  %v3228 = vadd.f32 %v3004, %v3138
  %v3229 = vadd.f32 %v3005, %v3137
  %v3230 = vadd.f32 %v3006, %v3141
  %v3231 = vadd.f32 %v3007, %v3140
  %v3232 = vadd.f32 %v3008, %v3144
  %v3233 = vadd.f32 %v3009, %v3143
  %v3234 = vadd.f32 %v3010, %v3147
  %v3235 = vadd.f32 %v3011, %v3146
  %v3236 = vadd.f32 %v3012, %v3150
  %v3237 = vadd.f32 %v3013, %v3149
  %v3238 = vadd.f32 %v3014, %v3153
  %v3239 = vadd.f32 %v3015, %v3152
  %v3240 = vadd.f32 %v3016, %v3156
  %v3241 = vadd.f32 %v3017, %v3155
  %v3242 = vadd.f32 %v3018, %v3159
  %v3243 = vadd.f32 %v3019, %v3158
  %v3244 = vadd.f32 %v3020, %v3162
  %v3245 = vadd.f32 %v3021, %v3161
  %v3246 = vadd.f32 %v3022, %v3165
  %v3247 = vadd.f32 %v3023, %v3164
  %v3248 = vadd.f32 %v3024, %v3168
  %v3249 = vadd.f32 %v3025, %v3167
  %v3250 = vadd.f32 %v3026, %v3171
  %v3251 = vadd.f32 %v3027, %v3170
  %v3252 = vlaneseq
  %v3253 = vshrl.u32 %v3252, 7
  %v3254 = vsub.s32 2, %v3253
  %v3255 = vrot.slane %v377, %v3254
  %v3256 = vmul.f32 %v920, %v3255
  %v3257 = vmul.f32 %v924, %v3255
  %v3258 = vmul.f32 %v928, %v3255
  %v3259 = vmul.f32 %v932, %v3255
  %v3260 = vmul.f32 %v936, %v3255
  %v3261 = vmul.f32 %v940, %v3255
  %v3262 = vmul.f32 %v944, %v3255
  %v3263 = vmul.f32 %v948, %v3255
  %v3264 = vmul.f32 %v952, %v3255
  %v3265 = vmul.f32 %v956, %v3255
  %v3266 = vmul.f32 %v960, %v3255
  %v3267 = vmul.f32 %v964, %v3255
  %v3268 = vmul.f32 %v968, %v3255
  %v3269 = vmul.f32 %v972, %v3255
  %v3270 = vmul.f32 %v976, %v3255
  %v3271 = vmul.f32 %v980, %v3255
  %v3272 = vmul.f32 %v984, %v3255
  %v3273 = vmul.f32 %v988, %v3255
  %v3274 = vmul.f32 %v2706, %v3255
  %v3275 = vmul.f32 %v2710, %v3255
  %v3276 = vmul.f32 %v1000, %v3255
  %v3277 = vmul.f32 %v1004, %v3255
  %v3278 = vmul.f32 %v1008, %v3255
  %v3279 = vmul.f32 %v1012, %v3255
  %v3280 = vmul.f32 %v1016, %v3255
  %v3281 = vmul.f32 %v1020, %v3255
  %v3282 = vmul.f32 %v1024, %v3255
  %v3283 = vmul.f32 %v1028, %v3255
  %v3284 = vmul.f32 %v1032, %v3255
  %v3285 = vmul.f32 %v1036, %v3255
  %v3286 = vmul.f32 %v1040, %v3255
  %v3287 = vmul.f32 %v1044, %v3255
  %v3288 = vmul.f32 %v1048, %v3255
  %v3289 = vmul.f32 %v1052, %v3255
  %v3290 = vmul.f32 %v1056, %v3255
  %v3291 = vmul.f32 %v1060, %v3255
  %v3292 = vmul.f32 %v1064, %v3255
  %v3293 = vmul.f32 %v1068, %v3255
  %v3294 = vmul.f32 %v2714, %v3255
  %v3295 = vmul.f32 %v2718, %v3255
  %v3336 = vrot.slane %v3256, 1
  %v3337 = vrot.slane %v3257, 1
  %v3338 = vsel %vm1238, %v3336, %v3337
  %v3339 = vrot.slane %v3258, 1
  %v3340 = vrot.slane %v3259, 1
  %v3341 = vsel %vm1238, %v3339, %v3340
  %v3342 = vrot.slane %v3260, 1
  %v3343 = vrot.slane %v3261, 1
  %v3344 = vsel %vm1238, %v3342, %v3343
  %v3345 = vrot.slane %v3262, 1
  %v3346 = vrot.slane %v3263, 1
  %v3347 = vsel %vm1238, %v3345, %v3346
  %v3348 = vrot.slane %v3264, 1
  %v3349 = vrot.slane %v3265, 1
  %v3350 = vsel %vm1238, %v3348, %v3349
  %v3351 = vrot.slane %v3266, 1
  %v3352 = vrot.slane %v3267, 1
  %v3353 = vsel %vm1238, %v3351, %v3352
  %v3354 = vrot.slane %v3268, 1
  %v3355 = vrot.slane %v3269, 1
  %v3356 = vsel %vm1238, %v3354, %v3355
  %v3357 = vrot.slane %v3270, 1
  %v3358 = vrot.slane %v3271, 1
  %v3359 = vsel %vm1238, %v3357, %v3358
  %v3360 = vrot.slane %v3272, 1
  %v3361 = vrot.slane %v3273, 1
  %v3362 = vsel %vm1238, %v3360, %v3361
  %v3363 = vrot.slane %v3274, 1
  %v3364 = vrot.slane %v3275, 1
  %v3365 = vsel %vm1238, %v3363, %v3364
  %v3366 = vrot.slane %v3276, 1
  %v3367 = vrot.slane %v3277, 1
  %v3368 = vsel %vm1238, %v3366, %v3367
  %v3369 = vrot.slane %v3278, 1
  %v3370 = vrot.slane %v3279, 1
  %v3371 = vsel %vm1238, %v3369, %v3370
  %v3372 = vrot.slane %v3280, 1
  %v3373 = vrot.slane %v3281, 1
  %v3374 = vsel %vm1238, %v3372, %v3373
  %v3375 = vrot.slane %v3282, 1
  %v3376 = vrot.slane %v3283, 1
  %v3377 = vsel %vm1238, %v3375, %v3376
  %v3378 = vrot.slane %v3284, 1
  %v3379 = vrot.slane %v3285, 1
  %v3380 = vsel %vm1238, %v3378, %v3379
  %v3381 = vrot.slane %v3286, 1
  %v3382 = vrot.slane %v3287, 1
  %v3383 = vsel %vm1238, %v3381, %v3382
  %v3384 = vrot.slane %v3288, 1
  %v3385 = vrot.slane %v3289, 1
  %v3386 = vsel %vm1238, %v3384, %v3385
  %v3387 = vrot.slane %v3290, 1
  %v3388 = vrot.slane %v3291, 1
  %v3389 = vsel %vm1238, %v3387, %v3388
  %v3390 = vrot.slane %v3292, 1
  %v3391 = vrot.slane %v3293, 1
  %v3392 = vsel %vm1238, %v3390, %v3391
  %v3393 = vrot.slane %v3294, 1
  %v3394 = vrot.slane %v3295, 1
  %v3395 = vsel %vm1238, %v3393, %v3394
  %v3436 = vadd.f32 %v3212, %v3338
  %v3437 = vadd.f32 %v3213, %v3337
  %v3438 = vadd.f32 %v3214, %v3341
  %v3439 = vadd.f32 %v3215, %v3340
  %v3440 = vadd.f32 %v3216, %v3344
  %v3441 = vadd.f32 %v3217, %v3343
  %v3442 = vadd.f32 %v3218, %v3347
  %v3443 = vadd.f32 %v3219, %v3346
  %v3444 = vadd.f32 %v3220, %v3350
  %v3445 = vadd.f32 %v3221, %v3349
  %v3446 = vadd.f32 %v3222, %v3353
  %v3447 = vadd.f32 %v3223, %v3352
  %v3448 = vadd.f32 %v3224, %v3356
  %v3449 = vadd.f32 %v3225, %v3355
  %v3450 = vadd.f32 %v3226, %v3359
  %v3451 = vadd.f32 %v3227, %v3358
  %v3452 = vadd.f32 %v3228, %v3362
  %v3453 = vadd.f32 %v3229, %v3361
  %v3454 = vadd.f32 %v3230, %v3365
  %v3455 = vadd.f32 %v3231, %v3364
  %v3456 = vadd.f32 %v3232, %v3368
  %v3457 = vadd.f32 %v3233, %v3367
  %v3458 = vadd.f32 %v3234, %v3371
  %v3459 = vadd.f32 %v3235, %v3370
  %v3460 = vadd.f32 %v3236, %v3374
  %v3461 = vadd.f32 %v3237, %v3373
  %v3462 = vadd.f32 %v3238, %v3377
  %v3463 = vadd.f32 %v3239, %v3376
  %v3464 = vadd.f32 %v3240, %v3380
  %v3465 = vadd.f32 %v3241, %v3379
  %v3466 = vadd.f32 %v3242, %v3383
  %v3467 = vadd.f32 %v3243, %v3382
  %v3468 = vadd.f32 %v3244, %v3386
  %v3469 = vadd.f32 %v3245, %v3385
  %v3470 = vadd.f32 %v3246, %v3389
  %v3471 = vadd.f32 %v3247, %v3388
  %v3472 = vadd.f32 %v3248, %v3392
  %v3473 = vadd.f32 %v3249, %v3391
  %v3474 = vadd.f32 %v3250, %v3395
  %v3475 = vadd.f32 %v3251, %v3394
  %v3476 = vlaneseq
  %v3477 = vshrl.u32 %v3476, 7
  %v3478 = vsub.s32 0, %v3477
  %v3479 = vrot.slane %v378, %v3478
  %v3480 = vmul.f32 %v395, %v3479
  %v3481 = vmul.f32 %v400, %v3479
  %v3482 = vmul.f32 %v405, %v3479
  %v3483 = vmul.f32 %v410, %v3479
  %v3484 = vmul.f32 %v415, %v3479
  %v3485 = vmul.f32 %v420, %v3479
  %v3486 = vmul.f32 %v425, %v3479
  %v3487 = vmul.f32 %v430, %v3479
  %v3488 = vmul.f32 %v435, %v3479
  %v3489 = vmul.f32 %v440, %v3479
  %v3490 = vmul.f32 %v445, %v3479
  %v3491 = vmul.f32 %v450, %v3479
  %v3492 = vmul.f32 %v455, %v3479
  %v3493 = vmul.f32 %v460, %v3479
  %v3494 = vmul.f32 %v465, %v3479
  %v3495 = vmul.f32 %v470, %v3479
  %v3496 = vmul.f32 %v475, %v3479
  %v3497 = vmul.f32 %v480, %v3479
  %v3498 = vmul.f32 %v2503, %v3479
  %v3499 = vmul.f32 %v2508, %v3479
  %v3500 = vmul.f32 %v495, %v3479
  %v3501 = vmul.f32 %v500, %v3479
  %v3502 = vmul.f32 %v505, %v3479
  %v3503 = vmul.f32 %v510, %v3479
  %v3504 = vmul.f32 %v515, %v3479
  %v3505 = vmul.f32 %v520, %v3479
  %v3506 = vmul.f32 %v525, %v3479
  %v3507 = vmul.f32 %v530, %v3479
  %v3508 = vmul.f32 %v535, %v3479
  %v3509 = vmul.f32 %v540, %v3479
  %v3510 = vmul.f32 %v545, %v3479
  %v3511 = vmul.f32 %v550, %v3479
  %v3512 = vmul.f32 %v555, %v3479
  %v3513 = vmul.f32 %v560, %v3479
  %v3514 = vmul.f32 %v565, %v3479
  %v3515 = vmul.f32 %v570, %v3479
  %v3516 = vmul.f32 %v575, %v3479
  %v3517 = vmul.f32 %v580, %v3479
  %v3518 = vmul.f32 %v2513, %v3479
  %v3519 = vmul.f32 %v2518, %v3479
  %v3560 = vrot.slane %v3480, 2
  %v3561 = vrot.slane %v3481, 2
  %v3562 = vsel %vm1911, %v3560, %v3561
  %v3563 = vrot.slane %v3482, 2
  %v3564 = vrot.slane %v3483, 2
  %v3565 = vsel %vm1911, %v3563, %v3564
  %v3566 = vrot.slane %v3484, 2
  %v3567 = vrot.slane %v3485, 2
  %v3568 = vsel %vm1911, %v3566, %v3567
  %v3569 = vrot.slane %v3486, 2
  %v3570 = vrot.slane %v3487, 2
  %v3571 = vsel %vm1911, %v3569, %v3570
  %v3572 = vrot.slane %v3488, 2
  %v3573 = vrot.slane %v3489, 2
  %v3574 = vsel %vm1911, %v3572, %v3573
  %v3575 = vrot.slane %v3490, 2
  %v3576 = vrot.slane %v3491, 2
  %v3577 = vsel %vm1911, %v3575, %v3576
  %v3578 = vrot.slane %v3492, 2
  %v3579 = vrot.slane %v3493, 2
  %v3580 = vsel %vm1911, %v3578, %v3579
  %v3581 = vrot.slane %v3494, 2
  %v3582 = vrot.slane %v3495, 2
  %v3583 = vsel %vm1911, %v3581, %v3582
  %v3584 = vrot.slane %v3496, 2
  %v3585 = vrot.slane %v3497, 2
  %v3586 = vsel %vm1911, %v3584, %v3585
  %v3587 = vrot.slane %v3498, 2
  %v3588 = vrot.slane %v3499, 2
  %v3589 = vsel %vm1911, %v3587, %v3588
  %v3590 = vrot.slane %v3500, 2
  %v3591 = vrot.slane %v3501, 2
  %v3592 = vsel %vm1911, %v3590, %v3591
  %v3593 = vrot.slane %v3502, 2
  %v3594 = vrot.slane %v3503, 2
  %v3595 = vsel %vm1911, %v3593, %v3594
  %v3596 = vrot.slane %v3504, 2
  %v3597 = vrot.slane %v3505, 2
  %v3598 = vsel %vm1911, %v3596, %v3597
  %v3599 = vrot.slane %v3506, 2
  %v3600 = vrot.slane %v3507, 2
  %v3601 = vsel %vm1911, %v3599, %v3600
  %v3602 = vrot.slane %v3508, 2
  %v3603 = vrot.slane %v3509, 2
  %v3604 = vsel %vm1911, %v3602, %v3603
  %v3605 = vrot.slane %v3510, 2
  %v3606 = vrot.slane %v3511, 2
  %v3607 = vsel %vm1911, %v3605, %v3606
  %v3608 = vrot.slane %v3512, 2
  %v3609 = vrot.slane %v3513, 2
  %v3610 = vsel %vm1911, %v3608, %v3609
  %v3611 = vrot.slane %v3514, 2
  %v3612 = vrot.slane %v3515, 2
  %v3613 = vsel %vm1911, %v3611, %v3612
  %v3614 = vrot.slane %v3516, 2
  %v3615 = vrot.slane %v3517, 2
  %v3616 = vsel %vm1911, %v3614, %v3615
  %v3617 = vrot.slane %v3518, 2
  %v3618 = vrot.slane %v3519, 2
  %v3619 = vsel %vm1911, %v3617, %v3618
  %v3660 = vadd.f32 %v3436, %v3562
  %v3661 = vadd.f32 %v3437, %v3561
  %v3662 = vadd.f32 %v3438, %v3565
  %v3663 = vadd.f32 %v3439, %v3564
  %v3664 = vadd.f32 %v3440, %v3568
  %v3665 = vadd.f32 %v3441, %v3567
  %v3666 = vadd.f32 %v3442, %v3571
  %v3667 = vadd.f32 %v3443, %v3570
  %v3668 = vadd.f32 %v3444, %v3574
  %v3669 = vadd.f32 %v3445, %v3573
  %v3670 = vadd.f32 %v3446, %v3577
  %v3671 = vadd.f32 %v3447, %v3576
  %v3672 = vadd.f32 %v3448, %v3580
  %v3673 = vadd.f32 %v3449, %v3579
  %v3674 = vadd.f32 %v3450, %v3583
  %v3675 = vadd.f32 %v3451, %v3582
  %v3676 = vadd.f32 %v3452, %v3586
  %v3677 = vadd.f32 %v3453, %v3585
  %v3678 = vadd.f32 %v3454, %v3589
  %v3679 = vadd.f32 %v3455, %v3588
  %v3680 = vadd.f32 %v3456, %v3592
  %v3681 = vadd.f32 %v3457, %v3591
  %v3682 = vadd.f32 %v3458, %v3595
  %v3683 = vadd.f32 %v3459, %v3594
  %v3684 = vadd.f32 %v3460, %v3598
  %v3685 = vadd.f32 %v3461, %v3597
  %v3686 = vadd.f32 %v3462, %v3601
  %v3687 = vadd.f32 %v3463, %v3600
  %v3688 = vadd.f32 %v3464, %v3604
  %v3689 = vadd.f32 %v3465, %v3603
  %v3690 = vadd.f32 %v3466, %v3607
  %v3691 = vadd.f32 %v3467, %v3606
  %v3692 = vadd.f32 %v3468, %v3610
  %v3693 = vadd.f32 %v3469, %v3609
  %v3694 = vadd.f32 %v3470, %v3613
  %v3695 = vadd.f32 %v3471, %v3612
  %v3696 = vadd.f32 %v3472, %v3616
  %v3697 = vadd.f32 %v3473, %v3615
  %v3698 = vadd.f32 %v3474, %v3619
  %v3699 = vadd.f32 %v3475, %v3618
  %v3700 = vlaneseq
  %v3701 = vshrl.u32 %v3700, 7
  %v3702 = vsub.s32 1, %v3701
  %v3703 = vrot.slane %v378, %v3702
  %v3704 = vmul.f32 %v676, %v3703
  %v3705 = vmul.f32 %v680, %v3703
  %v3706 = vmul.f32 %v684, %v3703
  %v3707 = vmul.f32 %v688, %v3703
  %v3708 = vmul.f32 %v692, %v3703
  %v3709 = vmul.f32 %v696, %v3703
  %v3710 = vmul.f32 %v700, %v3703
  %v3711 = vmul.f32 %v704, %v3703
  %v3712 = vmul.f32 %v708, %v3703
  %v3713 = vmul.f32 %v712, %v3703
  %v3714 = vmul.f32 %v716, %v3703
  %v3715 = vmul.f32 %v720, %v3703
  %v3716 = vmul.f32 %v724, %v3703
  %v3717 = vmul.f32 %v728, %v3703
  %v3718 = vmul.f32 %v732, %v3703
  %v3719 = vmul.f32 %v736, %v3703
  %v3720 = vmul.f32 %v740, %v3703
  %v3721 = vmul.f32 %v744, %v3703
  %v3722 = vmul.f32 %v2606, %v3703
  %v3723 = vmul.f32 %v2610, %v3703
  %v3724 = vmul.f32 %v756, %v3703
  %v3725 = vmul.f32 %v760, %v3703
  %v3726 = vmul.f32 %v764, %v3703
  %v3727 = vmul.f32 %v768, %v3703
  %v3728 = vmul.f32 %v772, %v3703
  %v3729 = vmul.f32 %v776, %v3703
  %v3730 = vmul.f32 %v780, %v3703
  %v3731 = vmul.f32 %v784, %v3703
  %v3732 = vmul.f32 %v788, %v3703
  %v3733 = vmul.f32 %v792, %v3703
  %v3734 = vmul.f32 %v796, %v3703
  %v3735 = vmul.f32 %v800, %v3703
  %v3736 = vmul.f32 %v804, %v3703
  %v3737 = vmul.f32 %v808, %v3703
  %v3738 = vmul.f32 %v812, %v3703
  %v3739 = vmul.f32 %v816, %v3703
  %v3740 = vmul.f32 %v820, %v3703
  %v3741 = vmul.f32 %v824, %v3703
  %v3742 = vmul.f32 %v2614, %v3703
  %v3743 = vmul.f32 %v2618, %v3703
  %v3784 = vrot.slane %v3704, 2
  %v3785 = vrot.slane %v3705, 2
  %v3786 = vsel %vm1911, %v3784, %v3785
  %v3787 = vrot.slane %v3706, 2
  %v3788 = vrot.slane %v3707, 2
  %v3789 = vsel %vm1911, %v3787, %v3788
  %v3790 = vrot.slane %v3708, 2
  %v3791 = vrot.slane %v3709, 2
  %v3792 = vsel %vm1911, %v3790, %v3791
  %v3793 = vrot.slane %v3710, 2
  %v3794 = vrot.slane %v3711, 2
  %v3795 = vsel %vm1911, %v3793, %v3794
  %v3796 = vrot.slane %v3712, 2
  %v3797 = vrot.slane %v3713, 2
  %v3798 = vsel %vm1911, %v3796, %v3797
  %v3799 = vrot.slane %v3714, 2
  %v3800 = vrot.slane %v3715, 2
  %v3801 = vsel %vm1911, %v3799, %v3800
  %v3802 = vrot.slane %v3716, 2
  %v3803 = vrot.slane %v3717, 2
  %v3804 = vsel %vm1911, %v3802, %v3803
  %v3805 = vrot.slane %v3718, 2
  %v3806 = vrot.slane %v3719, 2
  %v3807 = vsel %vm1911, %v3805, %v3806
  %v3808 = vrot.slane %v3720, 2
  %v3809 = vrot.slane %v3721, 2
  %v3810 = vsel %vm1911, %v3808, %v3809
  %v3811 = vrot.slane %v3722, 2
  %v3812 = vrot.slane %v3723, 2
  %v3813 = vsel %vm1911, %v3811, %v3812
  %v3814 = vrot.slane %v3724, 2
  %v3815 = vrot.slane %v3725, 2
  %v3816 = vsel %vm1911, %v3814, %v3815
  %v3817 = vrot.slane %v3726, 2
  %v3818 = vrot.slane %v3727, 2
  %v3819 = vsel %vm1911, %v3817, %v3818
  %v3820 = vrot.slane %v3728, 2
  %v3821 = vrot.slane %v3729, 2
  %v3822 = vsel %vm1911, %v3820, %v3821
  %v3823 = vrot.slane %v3730, 2
  %v3824 = vrot.slane %v3731, 2
  %v3825 = vsel %vm1911, %v3823, %v3824
  %v3826 = vrot.slane %v3732, 2
  %v3827 = vrot.slane %v3733, 2
  %v3828 = vsel %vm1911, %v3826, %v3827
  %v3829 = vrot.slane %v3734, 2
  %v3830 = vrot.slane %v3735, 2
  %v3831 = vsel %vm1911, %v3829, %v3830
  %v3832 = vrot.slane %v3736, 2
  %v3833 = vrot.slane %v3737, 2
  %v3834 = vsel %vm1911, %v3832, %v3833
  %v3835 = vrot.slane %v3738, 2
  %v3836 = vrot.slane %v3739, 2
  %v3837 = vsel %vm1911, %v3835, %v3836
  %v3838 = vrot.slane %v3740, 2
  %v3839 = vrot.slane %v3741, 2
  %v3840 = vsel %vm1911, %v3838, %v3839
  %v3841 = vrot.slane %v3742, 2
  %v3842 = vrot.slane %v3743, 2
  %v3843 = vsel %vm1911, %v3841, %v3842
  %v3884 = vadd.f32 %v3660, %v3786
  %v3885 = vadd.f32 %v3661, %v3785
  %v3886 = vadd.f32 %v3662, %v3789
  %v3887 = vadd.f32 %v3663, %v3788
  %v3888 = vadd.f32 %v3664, %v3792
  %v3889 = vadd.f32 %v3665, %v3791
  %v3890 = vadd.f32 %v3666, %v3795
  %v3891 = vadd.f32 %v3667, %v3794
  %v3892 = vadd.f32 %v3668, %v3798
  %v3893 = vadd.f32 %v3669, %v3797
  %v3894 = vadd.f32 %v3670, %v3801
  %v3895 = vadd.f32 %v3671, %v3800
  %v3896 = vadd.f32 %v3672, %v3804
  %v3897 = vadd.f32 %v3673, %v3803
  %v3898 = vadd.f32 %v3674, %v3807
  %v3899 = vadd.f32 %v3675, %v3806
  %v3900 = vadd.f32 %v3676, %v3810
  %v3901 = vadd.f32 %v3677, %v3809
  %v3902 = vadd.f32 %v3678, %v3813
  %v3903 = vadd.f32 %v3679, %v3812
  %v3904 = vadd.f32 %v3680, %v3816
  %v3905 = vadd.f32 %v3681, %v3815
  %v3906 = vadd.f32 %v3682, %v3819
  %v3907 = vadd.f32 %v3683, %v3818
  %v3908 = vadd.f32 %v3684, %v3822
  %v3909 = vadd.f32 %v3685, %v3821
  %v3910 = vadd.f32 %v3686, %v3825
  %v3911 = vadd.f32 %v3687, %v3824
  %v3912 = vadd.f32 %v3688, %v3828
  %v3913 = vadd.f32 %v3689, %v3827
  %v3914 = vadd.f32 %v3690, %v3831
  %v3915 = vadd.f32 %v3691, %v3830
  %v3916 = vadd.f32 %v3692, %v3834
  %v3917 = vadd.f32 %v3693, %v3833
  %v3918 = vadd.f32 %v3694, %v3837
  %v3919 = vadd.f32 %v3695, %v3836
  %v3920 = vadd.f32 %v3696, %v3840
  %v3921 = vadd.f32 %v3697, %v3839
  %v3922 = vadd.f32 %v3698, %v3843
  %v3923 = vadd.f32 %v3699, %v3842
  %v3924 = vlaneseq
  %v3925 = vshrl.u32 %v3924, 7
  %v3926 = vsub.s32 2, %v3925
  %v3927 = vrot.slane %v378, %v3926
  %v3928 = vmul.f32 %v920, %v3927
  %v3929 = vmul.f32 %v924, %v3927
  %v3930 = vmul.f32 %v928, %v3927
  %v3931 = vmul.f32 %v932, %v3927
  %v3932 = vmul.f32 %v936, %v3927
  %v3933 = vmul.f32 %v940, %v3927
  %v3934 = vmul.f32 %v944, %v3927
  %v3935 = vmul.f32 %v948, %v3927
  %v3936 = vmul.f32 %v952, %v3927
  %v3937 = vmul.f32 %v956, %v3927
  %v3938 = vmul.f32 %v960, %v3927
  %v3939 = vmul.f32 %v964, %v3927
  %v3940 = vmul.f32 %v968, %v3927
  %v3941 = vmul.f32 %v972, %v3927
  %v3942 = vmul.f32 %v976, %v3927
  %v3943 = vmul.f32 %v980, %v3927
  %v3944 = vmul.f32 %v984, %v3927
  %v3945 = vmul.f32 %v988, %v3927
  %v3946 = vmul.f32 %v2706, %v3927
  %v3947 = vmul.f32 %v2710, %v3927
  %v3948 = vmul.f32 %v1000, %v3927
  %v3949 = vmul.f32 %v1004, %v3927
  %v3950 = vmul.f32 %v1008, %v3927
  %v3951 = vmul.f32 %v1012, %v3927
  %v3952 = vmul.f32 %v1016, %v3927
  %v3953 = vmul.f32 %v1020, %v3927
  %v3954 = vmul.f32 %v1024, %v3927
  %v3955 = vmul.f32 %v1028, %v3927
  %v3956 = vmul.f32 %v1032, %v3927
  %v3957 = vmul.f32 %v1036, %v3927
  %v3958 = vmul.f32 %v1040, %v3927
  %v3959 = vmul.f32 %v1044, %v3927
  %v3960 = vmul.f32 %v1048, %v3927
  %v3961 = vmul.f32 %v1052, %v3927
  %v3962 = vmul.f32 %v1056, %v3927
  %v3963 = vmul.f32 %v1060, %v3927
  %v3964 = vmul.f32 %v1064, %v3927
  %v3965 = vmul.f32 %v1068, %v3927
  %v3966 = vmul.f32 %v2714, %v3927
  %v3967 = vmul.f32 %v2718, %v3927
  %v4008 = vrot.slane %v3928, 2
  %v4009 = vrot.slane %v3929, 2
  %v4010 = vsel %vm1911, %v4008, %v4009
  %v4011 = vrot.slane %v3930, 2
  %v4012 = vrot.slane %v3931, 2
  %v4013 = vsel %vm1911, %v4011, %v4012
  %v4014 = vrot.slane %v3932, 2
  %v4015 = vrot.slane %v3933, 2
  %v4016 = vsel %vm1911, %v4014, %v4015
  %v4017 = vrot.slane %v3934, 2
  %v4018 = vrot.slane %v3935, 2
  %v4019 = vsel %vm1911, %v4017, %v4018
  %v4020 = vrot.slane %v3936, 2
  %v4021 = vrot.slane %v3937, 2
  %v4022 = vsel %vm1911, %v4020, %v4021
  %v4023 = vrot.slane %v3938, 2
  %v4024 = vrot.slane %v3939, 2
  %v4025 = vsel %vm1911, %v4023, %v4024
  %v4026 = vrot.slane %v3940, 2
  %v4027 = vrot.slane %v3941, 2
  %v4028 = vsel %vm1911, %v4026, %v4027
  %v4029 = vrot.slane %v3942, 2
  %v4030 = vrot.slane %v3943, 2
  %v4031 = vsel %vm1911, %v4029, %v4030
  %v4032 = vrot.slane %v3944, 2
  %v4033 = vrot.slane %v3945, 2
  %v4034 = vsel %vm1911, %v4032, %v4033
  %v4035 = vrot.slane %v3946, 2
  %v4036 = vrot.slane %v3947, 2
  %v4037 = vsel %vm1911, %v4035, %v4036
  %v4038 = vrot.slane %v3948, 2
  %v4039 = vrot.slane %v3949, 2
  %v4040 = vsel %vm1911, %v4038, %v4039
  %v4041 = vrot.slane %v3950, 2
  %v4042 = vrot.slane %v3951, 2
  %v4043 = vsel %vm1911, %v4041, %v4042
  %v4044 = vrot.slane %v3952, 2
  %v4045 = vrot.slane %v3953, 2
  %v4046 = vsel %vm1911, %v4044, %v4045
  %v4047 = vrot.slane %v3954, 2
  %v4048 = vrot.slane %v3955, 2
  %v4049 = vsel %vm1911, %v4047, %v4048
  %v4050 = vrot.slane %v3956, 2
  %v4051 = vrot.slane %v3957, 2
  %v4052 = vsel %vm1911, %v4050, %v4051
  %v4053 = vrot.slane %v3958, 2
  %v4054 = vrot.slane %v3959, 2
  %v4055 = vsel %vm1911, %v4053, %v4054
  %v4056 = vrot.slane %v3960, 2
  %v4057 = vrot.slane %v3961, 2
  %v4058 = vsel %vm1911, %v4056, %v4057
  %v4059 = vrot.slane %v3962, 2
  %v4060 = vrot.slane %v3963, 2
  %v4061 = vsel %vm1911, %v4059, %v4060
  %v4062 = vrot.slane %v3964, 2
  %v4063 = vrot.slane %v3965, 2
  %v4064 = vsel %vm1911, %v4062, %v4063
  %v4065 = vrot.slane %v3966, 2
  %v4066 = vrot.slane %v3967, 2
  %v4067 = vsel %vm1911, %v4065, %v4066
  %v4108 = vadd.f32 %v3884, %v4010
  %v4109 = vadd.f32 %v3885, %v4009
  %v4110 = vadd.f32 %v3886, %v4013
  %v4111 = vadd.f32 %v3887, %v4012
  %v4112 = vadd.f32 %v3888, %v4016
  %v4113 = vadd.f32 %v3889, %v4015
  %v4114 = vadd.f32 %v3890, %v4019
  %v4115 = vadd.f32 %v3891, %v4018
  %v4116 = vadd.f32 %v3892, %v4022
  %v4117 = vadd.f32 %v3893, %v4021
  %v4118 = vadd.f32 %v3894, %v4025
  %v4119 = vadd.f32 %v3895, %v4024
  %v4120 = vadd.f32 %v3896, %v4028
  %v4121 = vadd.f32 %v3897, %v4027
  %v4122 = vadd.f32 %v3898, %v4031
  %v4123 = vadd.f32 %v3899, %v4030
  %v4124 = vadd.f32 %v3900, %v4034
  %v4125 = vadd.f32 %v3901, %v4033
  %v4126 = vadd.f32 %v3902, %v4037
  %v4127 = vadd.f32 %v3903, %v4036
  %v4128 = vadd.f32 %v3904, %v4040
  %v4129 = vadd.f32 %v3905, %v4039
  %v4130 = vadd.f32 %v3906, %v4043
  %v4131 = vadd.f32 %v3907, %v4042
  %v4132 = vadd.f32 %v3908, %v4046
  %v4133 = vadd.f32 %v3909, %v4045
  %v4134 = vadd.f32 %v3910, %v4049
  %v4135 = vadd.f32 %v3911, %v4048
  %v4136 = vadd.f32 %v3912, %v4052
  %v4137 = vadd.f32 %v3913, %v4051
  %v4138 = vadd.f32 %v3914, %v4055
  %v4139 = vadd.f32 %v3915, %v4054
  %v4140 = vadd.f32 %v3916, %v4058
  %v4141 = vadd.f32 %v3917, %v4057
  %v4142 = vadd.f32 %v3918, %v4061
  %v4143 = vadd.f32 %v3919, %v4060
  %v4144 = vadd.f32 %v3920, %v4064
  %v4145 = vadd.f32 %v3921, %v4063
  %v4146 = vadd.f32 %v3922, %v4067
  %v4147 = vadd.f32 %v3923, %v4066
  %4149 = vset.pattern.permute.xlu0 0
  %4150 = vperm.xlu0 %4149, %v347
  %v4151 = vpop.permute.xlu0 %4150
  %4154 = vset.pattern.permute.xlu0 0
  %4155 = vperm.xlu0 %4154, %v348
  %v4156 = vpop.permute.xlu0 %4155
  %4159 = vset.pattern.permute.xlu0 0
  %4160 = vperm.xlu0 %4159, %v371
  %v4161 = vpop.permute.xlu0 %4160
  %4164 = vset.pattern.permute.xlu0 0
  %4165 = vperm.xlu0 %4164, %v372
  %v4166 = vpop.permute.xlu0 %4165
  %v4168 = vlaneseq
  %v4169 = vshrl.u32 %v4168, 7
  %v4170 = vsub.s32 0, %v4169
  %v4171 = vrot.slane %v379, %v4170
  %v4172 = vmul.f32 %v405, %v4171
  %v4173 = vmul.f32 %v410, %v4171
  %v4174 = vmul.f32 %v415, %v4171
  %v4175 = vmul.f32 %v420, %v4171
  %v4176 = vmul.f32 %v425, %v4171
  %v4177 = vmul.f32 %v430, %v4171
  %v4178 = vmul.f32 %v435, %v4171
  %v4179 = vmul.f32 %v440, %v4171
  %v4180 = vmul.f32 %v445, %v4171
  %v4181 = vmul.f32 %v450, %v4171
  %v4182 = vmul.f32 %v455, %v4171
  %v4183 = vmul.f32 %v460, %v4171
  %v4184 = vmul.f32 %v465, %v4171
  %v4185 = vmul.f32 %v470, %v4171
  %v4186 = vmul.f32 %v475, %v4171
  %v4187 = vmul.f32 %v480, %v4171
  %v4188 = vmul.f32 %v2503, %v4171
  %v4189 = vmul.f32 %v2508, %v4171
  %v4190 = vmul.f32 %v4151, %v4171
  %v4191 = vmul.f32 %v4156, %v4171
  %v4192 = vmul.f32 %v505, %v4171
  %v4193 = vmul.f32 %v510, %v4171
  %v4194 = vmul.f32 %v515, %v4171
  %v4195 = vmul.f32 %v520, %v4171
  %v4196 = vmul.f32 %v525, %v4171
  %v4197 = vmul.f32 %v530, %v4171
  %v4198 = vmul.f32 %v535, %v4171
  %v4199 = vmul.f32 %v540, %v4171
  %v4200 = vmul.f32 %v545, %v4171
  %v4201 = vmul.f32 %v550, %v4171
  %v4202 = vmul.f32 %v555, %v4171
  %v4203 = vmul.f32 %v560, %v4171
  %v4204 = vmul.f32 %v565, %v4171
  %v4205 = vmul.f32 %v570, %v4171
  %v4206 = vmul.f32 %v575, %v4171
  %v4207 = vmul.f32 %v580, %v4171
  %v4208 = vmul.f32 %v2513, %v4171
  %v4209 = vmul.f32 %v2518, %v4171
  %v4210 = vmul.f32 %v4161, %v4171
  %v4211 = vmul.f32 %v4166, %v4171
  %v4212 = vadd.f32 %v4108, %v4172
  %v4213 = vadd.f32 %v4109, %v4173
  %v4214 = vadd.f32 %v4110, %v4174
  %v4215 = vadd.f32 %v4111, %v4175
  %v4216 = vadd.f32 %v4112, %v4176
  %v4217 = vadd.f32 %v4113, %v4177
  %v4218 = vadd.f32 %v4114, %v4178
  %v4219 = vadd.f32 %v4115, %v4179
  %v4220 = vadd.f32 %v4116, %v4180
  %v4221 = vadd.f32 %v4117, %v4181
  %v4222 = vadd.f32 %v4118, %v4182
  %v4223 = vadd.f32 %v4119, %v4183
  %v4224 = vadd.f32 %v4120, %v4184
  %v4225 = vadd.f32 %v4121, %v4185
  %v4226 = vadd.f32 %v4122, %v4186
  %v4227 = vadd.f32 %v4123, %v4187
  %v4228 = vadd.f32 %v4124, %v4188
  %v4229 = vadd.f32 %v4125, %v4189
  %v4230 = vadd.f32 %v4126, %v4190
  %v4231 = vadd.f32 %v4127, %v4191
  %v4232 = vadd.f32 %v4128, %v4192
  %v4233 = vadd.f32 %v4129, %v4193
  %v4234 = vadd.f32 %v4130, %v4194
  %v4235 = vadd.f32 %v4131, %v4195
  %v4236 = vadd.f32 %v4132, %v4196
  %v4237 = vadd.f32 %v4133, %v4197
  %v4238 = vadd.f32 %v4134, %v4198
  %v4239 = vadd.f32 %v4135, %v4199
  %v4240 = vadd.f32 %v4136, %v4200
  %v4241 = vadd.f32 %v4137, %v4201
  %v4242 = vadd.f32 %v4138, %v4202
  %v4243 = vadd.f32 %v4139, %v4203
  %v4244 = vadd.f32 %v4140, %v4204
  %v4245 = vadd.f32 %v4141, %v4205
  %v4246 = vadd.f32 %v4142, %v4206
  %v4247 = vadd.f32 %v4143, %v4207
  %v4248 = vadd.f32 %v4144, %v4208
  %v4249 = vadd.f32 %v4145, %v4209
  %v4250 = vadd.f32 %v4146, %v4210
  %v4251 = vadd.f32 %v4147, %v4211
  %4252 = vset.pattern.permute.xlu0 1
  %4253 = vperm.xlu0 %4252, %v347
  %v4254 = vpop.permute.xlu0 %4253
  %4256 = vset.pattern.permute.xlu0 1
  %4257 = vperm.xlu0 %4256, %v348
  %v4258 = vpop.permute.xlu0 %4257
  %4260 = vset.pattern.permute.xlu0 1
  %4261 = vperm.xlu0 %4260, %v371
  %v4262 = vpop.permute.xlu0 %4261
  %4264 = vset.pattern.permute.xlu0 1
  %4265 = vperm.xlu0 %4264, %v372
  %v4266 = vpop.permute.xlu0 %4265
  %v4268 = vlaneseq
  %v4269 = vshrl.u32 %v4268, 7
  %v4270 = vsub.s32 1, %v4269
  %v4271 = vrot.slane %v379, %v4270
  %v4272 = vmul.f32 %v684, %v4271
  %v4273 = vmul.f32 %v688, %v4271
  %v4274 = vmul.f32 %v692, %v4271
  %v4275 = vmul.f32 %v696, %v4271
  %v4276 = vmul.f32 %v700, %v4271
  %v4277 = vmul.f32 %v704, %v4271
  %v4278 = vmul.f32 %v708, %v4271
  %v4279 = vmul.f32 %v712, %v4271
  %v4280 = vmul.f32 %v716, %v4271
  %v4281 = vmul.f32 %v720, %v4271
  %v4282 = vmul.f32 %v724, %v4271
  %v4283 = vmul.f32 %v728, %v4271
  %v4284 = vmul.f32 %v732, %v4271
  %v4285 = vmul.f32 %v736, %v4271
  %v4286 = vmul.f32 %v740, %v4271
  %v4287 = vmul.f32 %v744, %v4271
  %v4288 = vmul.f32 %v2606, %v4271
  %v4289 = vmul.f32 %v2610, %v4271
  %v4290 = vmul.f32 %v4254, %v4271
  %v4291 = vmul.f32 %v4258, %v4271
  %v4292 = vmul.f32 %v764, %v4271
  %v4293 = vmul.f32 %v768, %v4271
  %v4294 = vmul.f32 %v772, %v4271
  %v4295 = vmul.f32 %v776, %v4271
  %v4296 = vmul.f32 %v780, %v4271
  %v4297 = vmul.f32 %v784, %v4271
  %v4298 = vmul.f32 %v788, %v4271
  %v4299 = vmul.f32 %v792, %v4271
  %v4300 = vmul.f32 %v796, %v4271
  %v4301 = vmul.f32 %v800, %v4271
  %v4302 = vmul.f32 %v804, %v4271
  %v4303 = vmul.f32 %v808, %v4271
  %v4304 = vmul.f32 %v812, %v4271
  %v4305 = vmul.f32 %v816, %v4271
  %v4306 = vmul.f32 %v820, %v4271
  %v4307 = vmul.f32 %v824, %v4271
  %v4308 = vmul.f32 %v2614, %v4271
  %v4309 = vmul.f32 %v2618, %v4271
  %v4310 = vmul.f32 %v4262, %v4271
  %v4311 = vmul.f32 %v4266, %v4271
  %v4312 = vadd.f32 %v4212, %v4272
  %v4313 = vadd.f32 %v4213, %v4273
  %v4314 = vadd.f32 %v4214, %v4274
  %v4315 = vadd.f32 %v4215, %v4275
  %v4316 = vadd.f32 %v4216, %v4276
  %v4317 = vadd.f32 %v4217, %v4277
  %v4318 = vadd.f32 %v4218, %v4278
  %v4319 = vadd.f32 %v4219, %v4279
  %v4320 = vadd.f32 %v4220, %v4280
  %v4321 = vadd.f32 %v4221, %v4281
  %v4322 = vadd.f32 %v4222, %v4282
  %v4323 = vadd.f32 %v4223, %v4283
  %v4324 = vadd.f32 %v4224, %v4284
  %v4325 = vadd.f32 %v4225, %v4285
  %v4326 = vadd.f32 %v4226, %v4286
  %v4327 = vadd.f32 %v4227, %v4287
  %v4328 = vadd.f32 %v4228, %v4288
  %v4329 = vadd.f32 %v4229, %v4289
  %v4330 = vadd.f32 %v4230, %v4290
  %v4331 = vadd.f32 %v4231, %v4291
  %v4332 = vadd.f32 %v4232, %v4292
  %v4333 = vadd.f32 %v4233, %v4293
  %v4334 = vadd.f32 %v4234, %v4294
  %v4335 = vadd.f32 %v4235, %v4295
  %v4336 = vadd.f32 %v4236, %v4296
  %v4337 = vadd.f32 %v4237, %v4297
  %v4338 = vadd.f32 %v4238, %v4298
  %v4339 = vadd.f32 %v4239, %v4299
  %v4340 = vadd.f32 %v4240, %v4300
  %v4341 = vadd.f32 %v4241, %v4301
  %v4342 = vadd.f32 %v4242, %v4302
  %v4343 = vadd.f32 %v4243, %v4303
  %v4344 = vadd.f32 %v4244, %v4304
  %v4345 = vadd.f32 %v4245, %v4305
  %v4346 = vadd.f32 %v4246, %v4306
  %v4347 = vadd.f32 %v4247, %v4307
  %v4348 = vadd.f32 %v4248, %v4308
  %v4349 = vadd.f32 %v4249, %v4309
  %v4350 = vadd.f32 %v4250, %v4310
  %v4351 = vadd.f32 %v4251, %v4311
  %4352 = vset.pattern.permute.xlu0 2
  %4353 = vperm.xlu0 %4352, %v347
  %v4354 = vpop.permute.xlu0 %4353
  %4356 = vset.pattern.permute.xlu0 2
  %4357 = vperm.xlu0 %4356, %v348
  %v4358 = vpop.permute.xlu0 %4357
  %4360 = vset.pattern.permute.xlu0 2
  %4361 = vperm.xlu0 %4360, %v371
  %v4362 = vpop.permute.xlu0 %4361
  %4364 = vset.pattern.permute.xlu0 2
  %4365 = vperm.xlu0 %4364, %v372
  %v4366 = vpop.permute.xlu0 %4365
  %v4368 = vlaneseq
  %v4369 = vshrl.u32 %v4368, 7
  %v4370 = vsub.s32 2, %v4369
  %v4371 = vrot.slane %v379, %v4370
  %v4372 = vmul.f32 %v928, %v4371
  %v4373 = vmul.f32 %v932, %v4371
  %v4374 = vmul.f32 %v936, %v4371
  %v4375 = vmul.f32 %v940, %v4371
  %v4376 = vmul.f32 %v944, %v4371
  %v4377 = vmul.f32 %v948, %v4371
  %v4378 = vmul.f32 %v952, %v4371
  %v4379 = vmul.f32 %v956, %v4371
  %v4380 = vmul.f32 %v960, %v4371
  %v4381 = vmul.f32 %v964, %v4371
  %v4382 = vmul.f32 %v968, %v4371
  %v4383 = vmul.f32 %v972, %v4371
  %v4384 = vmul.f32 %v976, %v4371
  %v4385 = vmul.f32 %v980, %v4371
  %v4386 = vmul.f32 %v984, %v4371
  %v4387 = vmul.f32 %v988, %v4371
  %v4388 = vmul.f32 %v2706, %v4371
  %v4389 = vmul.f32 %v2710, %v4371
  %v4390 = vmul.f32 %v4354, %v4371
  %v4391 = vmul.f32 %v4358, %v4371
  %v4392 = vmul.f32 %v1008, %v4371
  %v4393 = vmul.f32 %v1012, %v4371
  %v4394 = vmul.f32 %v1016, %v4371
  %v4395 = vmul.f32 %v1020, %v4371
  %v4396 = vmul.f32 %v1024, %v4371
  %v4397 = vmul.f32 %v1028, %v4371
  %v4398 = vmul.f32 %v1032, %v4371
  %v4399 = vmul.f32 %v1036, %v4371
  %v4400 = vmul.f32 %v1040, %v4371
  %v4401 = vmul.f32 %v1044, %v4371
  %v4402 = vmul.f32 %v1048, %v4371
  %v4403 = vmul.f32 %v1052, %v4371
  %v4404 = vmul.f32 %v1056, %v4371
  %v4405 = vmul.f32 %v1060, %v4371
  %v4406 = vmul.f32 %v1064, %v4371
  %v4407 = vmul.f32 %v1068, %v4371
  %v4408 = vmul.f32 %v2714, %v4371
  %v4409 = vmul.f32 %v2718, %v4371
  %v4410 = vmul.f32 %v4362, %v4371
  %v4411 = vmul.f32 %v4366, %v4371
  %v4412 = vadd.f32 %v4312, %v4372
  %v4413 = vadd.f32 %v4313, %v4373
  %v4414 = vadd.f32 %v4314, %v4374
  %v4415 = vadd.f32 %v4315, %v4375
  %v4416 = vadd.f32 %v4316, %v4376
  %v4417 = vadd.f32 %v4317, %v4377
  %v4418 = vadd.f32 %v4318, %v4378
  %v4419 = vadd.f32 %v4319, %v4379
  %v4420 = vadd.f32 %v4320, %v4380
  %v4421 = vadd.f32 %v4321, %v4381
  %v4422 = vadd.f32 %v4322, %v4382
  %v4423 = vadd.f32 %v4323, %v4383
  %v4424 = vadd.f32 %v4324, %v4384
  %v4425 = vadd.f32 %v4325, %v4385
  %v4426 = vadd.f32 %v4326, %v4386
  %v4427 = vadd.f32 %v4327, %v4387
  %v4428 = vadd.f32 %v4328, %v4388
  %v4429 = vadd.f32 %v4329, %v4389
  %v4430 = vadd.f32 %v4330, %v4390
  %v4431 = vadd.f32 %v4331, %v4391
  %v4432 = vadd.f32 %v4332, %v4392
  %v4433 = vadd.f32 %v4333, %v4393
  %v4434 = vadd.f32 %v4334, %v4394
  %v4435 = vadd.f32 %v4335, %v4395
  %v4436 = vadd.f32 %v4336, %v4396
  %v4437 = vadd.f32 %v4337, %v4397
  %v4438 = vadd.f32 %v4338, %v4398
  %v4439 = vadd.f32 %v4339, %v4399
  %v4440 = vadd.f32 %v4340, %v4400
  %v4441 = vadd.f32 %v4341, %v4401
  %v4442 = vadd.f32 %v4342, %v4402
  %v4443 = vadd.f32 %v4343, %v4403
  %v4444 = vadd.f32 %v4344, %v4404
  %v4445 = vadd.f32 %v4345, %v4405
  %v4446 = vadd.f32 %v4346, %v4406
  %v4447 = vadd.f32 %v4347, %v4407
  %v4448 = vadd.f32 %v4348, %v4408
  %v4449 = vadd.f32 %v4349, %v4409
  %v4450 = vadd.f32 %v4350, %v4410
  %v4451 = vadd.f32 %v4351, %v4411
  %v4452 = vlaneseq
  %v4453 = vshrl.u32 %v4452, 7
  %v4454 = vsub.s32 0, %v4453
  %v4455 = vrot.slane %v380, %v4454
  %v4456 = vmul.f32 %v405, %v4455
  %v4457 = vmul.f32 %v410, %v4455
  %v4458 = vmul.f32 %v415, %v4455
  %v4459 = vmul.f32 %v420, %v4455
  %v4460 = vmul.f32 %v425, %v4455
  %v4461 = vmul.f32 %v430, %v4455
  %v4462 = vmul.f32 %v435, %v4455
  %v4463 = vmul.f32 %v440, %v4455
  %v4464 = vmul.f32 %v445, %v4455
  %v4465 = vmul.f32 %v450, %v4455
  %v4466 = vmul.f32 %v455, %v4455
  %v4467 = vmul.f32 %v460, %v4455
  %v4468 = vmul.f32 %v465, %v4455
  %v4469 = vmul.f32 %v470, %v4455
  %v4470 = vmul.f32 %v475, %v4455
  %v4471 = vmul.f32 %v480, %v4455
  %v4472 = vmul.f32 %v2503, %v4455
  %v4473 = vmul.f32 %v2508, %v4455
  %v4474 = vmul.f32 %v4151, %v4455
  %v4475 = vmul.f32 %v4156, %v4455
  %v4476 = vmul.f32 %v505, %v4455
  %v4477 = vmul.f32 %v510, %v4455
  %v4478 = vmul.f32 %v515, %v4455
  %v4479 = vmul.f32 %v520, %v4455
  %v4480 = vmul.f32 %v525, %v4455
  %v4481 = vmul.f32 %v530, %v4455
  %v4482 = vmul.f32 %v535, %v4455
  %v4483 = vmul.f32 %v540, %v4455
  %v4484 = vmul.f32 %v545, %v4455
  %v4485 = vmul.f32 %v550, %v4455
  %v4486 = vmul.f32 %v555, %v4455
  %v4487 = vmul.f32 %v560, %v4455
  %v4488 = vmul.f32 %v565, %v4455
  %v4489 = vmul.f32 %v570, %v4455
  %v4490 = vmul.f32 %v575, %v4455
  %v4491 = vmul.f32 %v580, %v4455
  %v4492 = vmul.f32 %v2513, %v4455
  %v4493 = vmul.f32 %v2518, %v4455
  %v4494 = vmul.f32 %v4161, %v4455
  %v4495 = vmul.f32 %v4166, %v4455
  %v4536 = vrot.slane %v4456, 1
  %v4537 = vrot.slane %v4457, 1
  %v4538 = vsel %vm1238, %v4536, %v4537
  %v4539 = vrot.slane %v4458, 1
  %v4540 = vrot.slane %v4459, 1
  %v4541 = vsel %vm1238, %v4539, %v4540
  %v4542 = vrot.slane %v4460, 1
  %v4543 = vrot.slane %v4461, 1
  %v4544 = vsel %vm1238, %v4542, %v4543
  %v4545 = vrot.slane %v4462, 1
  %v4546 = vrot.slane %v4463, 1
  %v4547 = vsel %vm1238, %v4545, %v4546
  %v4548 = vrot.slane %v4464, 1
  %v4549 = vrot.slane %v4465, 1
  %v4550 = vsel %vm1238, %v4548, %v4549
  %v4551 = vrot.slane %v4466, 1
  %v4552 = vrot.slane %v4467, 1
  %v4553 = vsel %vm1238, %v4551, %v4552
  %v4554 = vrot.slane %v4468, 1
  %v4555 = vrot.slane %v4469, 1
  %v4556 = vsel %vm1238, %v4554, %v4555
  %v4557 = vrot.slane %v4470, 1
  %v4558 = vrot.slane %v4471, 1
  %v4559 = vsel %vm1238, %v4557, %v4558
  %v4560 = vrot.slane %v4472, 1
  %v4561 = vrot.slane %v4473, 1
  %v4562 = vsel %vm1238, %v4560, %v4561
  %v4563 = vrot.slane %v4474, 1
  %v4564 = vrot.slane %v4475, 1
  %v4565 = vsel %vm1238, %v4563, %v4564
  %v4566 = vrot.slane %v4476, 1
  %v4567 = vrot.slane %v4477, 1
  %v4568 = vsel %vm1238, %v4566, %v4567
  %v4569 = vrot.slane %v4478, 1
  %v4570 = vrot.slane %v4479, 1
  %v4571 = vsel %vm1238, %v4569, %v4570
  %v4572 = vrot.slane %v4480, 1
  %v4573 = vrot.slane %v4481, 1
  %v4574 = vsel %vm1238, %v4572, %v4573
  %v4575 = vrot.slane %v4482, 1
  %v4576 = vrot.slane %v4483, 1
  %v4577 = vsel %vm1238, %v4575, %v4576
  %v4578 = vrot.slane %v4484, 1
  %v4579 = vrot.slane %v4485, 1
  %v4580 = vsel %vm1238, %v4578, %v4579
  %v4581 = vrot.slane %v4486, 1
  %v4582 = vrot.slane %v4487, 1
  %v4583 = vsel %vm1238, %v4581, %v4582
  %v4584 = vrot.slane %v4488, 1
  %v4585 = vrot.slane %v4489, 1
  %v4586 = vsel %vm1238, %v4584, %v4585
  %v4587 = vrot.slane %v4490, 1
  %v4588 = vrot.slane %v4491, 1
  %v4589 = vsel %vm1238, %v4587, %v4588
  %v4590 = vrot.slane %v4492, 1
  %v4591 = vrot.slane %v4493, 1
  %v4592 = vsel %vm1238, %v4590, %v4591
  %v4593 = vrot.slane %v4494, 1
  %v4594 = vrot.slane %v4495, 1
  %v4595 = vsel %vm1238, %v4593, %v4594
  %v4636 = vadd.f32 %v4412, %v4538
  %v4637 = vadd.f32 %v4413, %v4537
  %v4638 = vadd.f32 %v4414, %v4541
  %v4639 = vadd.f32 %v4415, %v4540
  %v4640 = vadd.f32 %v4416, %v4544
  %v4641 = vadd.f32 %v4417, %v4543
  %v4642 = vadd.f32 %v4418, %v4547
  %v4643 = vadd.f32 %v4419, %v4546
  %v4644 = vadd.f32 %v4420, %v4550
  %v4645 = vadd.f32 %v4421, %v4549
  %v4646 = vadd.f32 %v4422, %v4553
  %v4647 = vadd.f32 %v4423, %v4552
  %v4648 = vadd.f32 %v4424, %v4556
  %v4649 = vadd.f32 %v4425, %v4555
  %v4650 = vadd.f32 %v4426, %v4559
  %v4651 = vadd.f32 %v4427, %v4558
  %v4652 = vadd.f32 %v4428, %v4562
  %v4653 = vadd.f32 %v4429, %v4561
  %v4654 = vadd.f32 %v4430, %v4565
  %v4655 = vadd.f32 %v4431, %v4564
  %v4656 = vadd.f32 %v4432, %v4568
  %v4657 = vadd.f32 %v4433, %v4567
  %v4658 = vadd.f32 %v4434, %v4571
  %v4659 = vadd.f32 %v4435, %v4570
  %v4660 = vadd.f32 %v4436, %v4574
  %v4661 = vadd.f32 %v4437, %v4573
  %v4662 = vadd.f32 %v4438, %v4577
  %v4663 = vadd.f32 %v4439, %v4576
  %v4664 = vadd.f32 %v4440, %v4580
  %v4665 = vadd.f32 %v4441, %v4579
  %v4666 = vadd.f32 %v4442, %v4583
  %v4667 = vadd.f32 %v4443, %v4582
  %v4668 = vadd.f32 %v4444, %v4586
  %v4669 = vadd.f32 %v4445, %v4585
  %v4670 = vadd.f32 %v4446, %v4589
  %v4671 = vadd.f32 %v4447, %v4588
  %v4672 = vadd.f32 %v4448, %v4592
  %v4673 = vadd.f32 %v4449, %v4591
  %v4674 = vadd.f32 %v4450, %v4595
  %v4675 = vadd.f32 %v4451, %v4594
  %v4676 = vlaneseq
  %v4677 = vshrl.u32 %v4676, 7
  %v4678 = vsub.s32 1, %v4677
  %v4679 = vrot.slane %v380, %v4678
  %v4680 = vmul.f32 %v684, %v4679
  %v4681 = vmul.f32 %v688, %v4679
  %v4682 = vmul.f32 %v692, %v4679
  %v4683 = vmul.f32 %v696, %v4679
  %v4684 = vmul.f32 %v700, %v4679
  %v4685 = vmul.f32 %v704, %v4679
  %v4686 = vmul.f32 %v708, %v4679
  %v4687 = vmul.f32 %v712, %v4679
  %v4688 = vmul.f32 %v716, %v4679
  %v4689 = vmul.f32 %v720, %v4679
  %v4690 = vmul.f32 %v724, %v4679
  %v4691 = vmul.f32 %v728, %v4679
  %v4692 = vmul.f32 %v732, %v4679
  %v4693 = vmul.f32 %v736, %v4679
  %v4694 = vmul.f32 %v740, %v4679
  %v4695 = vmul.f32 %v744, %v4679
  %v4696 = vmul.f32 %v2606, %v4679
  %v4697 = vmul.f32 %v2610, %v4679
  %v4698 = vmul.f32 %v4254, %v4679
  %v4699 = vmul.f32 %v4258, %v4679
  %v4700 = vmul.f32 %v764, %v4679
  %v4701 = vmul.f32 %v768, %v4679
  %v4702 = vmul.f32 %v772, %v4679
  %v4703 = vmul.f32 %v776, %v4679
  %v4704 = vmul.f32 %v780, %v4679
  %v4705 = vmul.f32 %v784, %v4679
  %v4706 = vmul.f32 %v788, %v4679
  %v4707 = vmul.f32 %v792, %v4679
  %v4708 = vmul.f32 %v796, %v4679
  %v4709 = vmul.f32 %v800, %v4679
  %v4710 = vmul.f32 %v804, %v4679
  %v4711 = vmul.f32 %v808, %v4679
  %v4712 = vmul.f32 %v812, %v4679
  %v4713 = vmul.f32 %v816, %v4679
  %v4714 = vmul.f32 %v820, %v4679
  %v4715 = vmul.f32 %v824, %v4679
  %v4716 = vmul.f32 %v2614, %v4679
  %v4717 = vmul.f32 %v2618, %v4679
  %v4718 = vmul.f32 %v4262, %v4679
  %v4719 = vmul.f32 %v4266, %v4679
  %v4760 = vrot.slane %v4680, 1
  %v4761 = vrot.slane %v4681, 1
  %v4762 = vsel %vm1238, %v4760, %v4761
  %v4763 = vrot.slane %v4682, 1
  %v4764 = vrot.slane %v4683, 1
  %v4765 = vsel %vm1238, %v4763, %v4764
  %v4766 = vrot.slane %v4684, 1
  %v4767 = vrot.slane %v4685, 1
  %v4768 = vsel %vm1238, %v4766, %v4767
  %v4769 = vrot.slane %v4686, 1
  %v4770 = vrot.slane %v4687, 1
  %v4771 = vsel %vm1238, %v4769, %v4770
  %v4772 = vrot.slane %v4688, 1
  %v4773 = vrot.slane %v4689, 1
  %v4774 = vsel %vm1238, %v4772, %v4773
  %v4775 = vrot.slane %v4690, 1
  %v4776 = vrot.slane %v4691, 1
  %v4777 = vsel %vm1238, %v4775, %v4776
  %v4778 = vrot.slane %v4692, 1
  %v4779 = vrot.slane %v4693, 1
  %v4780 = vsel %vm1238, %v4778, %v4779
  %v4781 = vrot.slane %v4694, 1
  %v4782 = vrot.slane %v4695, 1
  %v4783 = vsel %vm1238, %v4781, %v4782
  %v4784 = vrot.slane %v4696, 1
  %v4785 = vrot.slane %v4697, 1
  %v4786 = vsel %vm1238, %v4784, %v4785
  %v4787 = vrot.slane %v4698, 1
  %v4788 = vrot.slane %v4699, 1
  %v4789 = vsel %vm1238, %v4787, %v4788
  %v4790 = vrot.slane %v4700, 1
  %v4791 = vrot.slane %v4701, 1
  %v4792 = vsel %vm1238, %v4790, %v4791
  %v4793 = vrot.slane %v4702, 1
  %v4794 = vrot.slane %v4703, 1
  %v4795 = vsel %vm1238, %v4793, %v4794
  %v4796 = vrot.slane %v4704, 1
  %v4797 = vrot.slane %v4705, 1
  %v4798 = vsel %vm1238, %v4796, %v4797
  %v4799 = vrot.slane %v4706, 1
  %v4800 = vrot.slane %v4707, 1
  %v4801 = vsel %vm1238, %v4799, %v4800
  %v4802 = vrot.slane %v4708, 1
  %v4803 = vrot.slane %v4709, 1
  %v4804 = vsel %vm1238, %v4802, %v4803
  %v4805 = vrot.slane %v4710, 1
  %v4806 = vrot.slane %v4711, 1
  %v4807 = vsel %vm1238, %v4805, %v4806
  %v4808 = vrot.slane %v4712, 1
  %v4809 = vrot.slane %v4713, 1
  %v4810 = vsel %vm1238, %v4808, %v4809
  %v4811 = vrot.slane %v4714, 1
  %v4812 = vrot.slane %v4715, 1
  %v4813 = vsel %vm1238, %v4811, %v4812
  %v4814 = vrot.slane %v4716, 1
  %v4815 = vrot.slane %v4717, 1
  %v4816 = vsel %vm1238, %v4814, %v4815
  %v4817 = vrot.slane %v4718, 1
  %v4818 = vrot.slane %v4719, 1
  %v4819 = vsel %vm1238, %v4817, %v4818
  %v4860 = vadd.f32 %v4636, %v4762
  %v4861 = vadd.f32 %v4637, %v4761
  %v4862 = vadd.f32 %v4638, %v4765
  %v4863 = vadd.f32 %v4639, %v4764
  %v4864 = vadd.f32 %v4640, %v4768
  %v4865 = vadd.f32 %v4641, %v4767
  %v4866 = vadd.f32 %v4642, %v4771
  %v4867 = vadd.f32 %v4643, %v4770
  %v4868 = vadd.f32 %v4644, %v4774
  %v4869 = vadd.f32 %v4645, %v4773
  %v4870 = vadd.f32 %v4646, %v4777
  %v4871 = vadd.f32 %v4647, %v4776
  %v4872 = vadd.f32 %v4648, %v4780
  %v4873 = vadd.f32 %v4649, %v4779
  %v4874 = vadd.f32 %v4650, %v4783
  %v4875 = vadd.f32 %v4651, %v4782
  %v4876 = vadd.f32 %v4652, %v4786
  %v4877 = vadd.f32 %v4653, %v4785
  %v4878 = vadd.f32 %v4654, %v4789
  %v4879 = vadd.f32 %v4655, %v4788
  %v4880 = vadd.f32 %v4656, %v4792
  %v4881 = vadd.f32 %v4657, %v4791
  %v4882 = vadd.f32 %v4658, %v4795
  %v4883 = vadd.f32 %v4659, %v4794
  %v4884 = vadd.f32 %v4660, %v4798
  %v4885 = vadd.f32 %v4661, %v4797
  %v4886 = vadd.f32 %v4662, %v4801
  %v4887 = vadd.f32 %v4663, %v4800
  %v4888 = vadd.f32 %v4664, %v4804
  %v4889 = vadd.f32 %v4665, %v4803
  %v4890 = vadd.f32 %v4666, %v4807
  %v4891 = vadd.f32 %v4667, %v4806
  %v4892 = vadd.f32 %v4668, %v4810
  %v4893 = vadd.f32 %v4669, %v4809
  %v4894 = vadd.f32 %v4670, %v4813
  %v4895 = vadd.f32 %v4671, %v4812
  %v4896 = vadd.f32 %v4672, %v4816
  %v4897 = vadd.f32 %v4673, %v4815
  %v4898 = vadd.f32 %v4674, %v4819
  %v4899 = vadd.f32 %v4675, %v4818
  %v4900 = vlaneseq
  %v4901 = vshrl.u32 %v4900, 7
  %v4902 = vsub.s32 2, %v4901
  %v4903 = vrot.slane %v380, %v4902
  %v4904 = vmul.f32 %v928, %v4903
  %v4905 = vmul.f32 %v932, %v4903
  %v4906 = vmul.f32 %v936, %v4903
  %v4907 = vmul.f32 %v940, %v4903
  %v4908 = vmul.f32 %v944, %v4903
  %v4909 = vmul.f32 %v948, %v4903
  %v4910 = vmul.f32 %v952, %v4903
  %v4911 = vmul.f32 %v956, %v4903
  %v4912 = vmul.f32 %v960, %v4903
  %v4913 = vmul.f32 %v964, %v4903
  %v4914 = vmul.f32 %v968, %v4903
  %v4915 = vmul.f32 %v972, %v4903
  %v4916 = vmul.f32 %v976, %v4903
  %v4917 = vmul.f32 %v980, %v4903
  %v4918 = vmul.f32 %v984, %v4903
  %v4919 = vmul.f32 %v988, %v4903
  %v4920 = vmul.f32 %v2706, %v4903
  %v4921 = vmul.f32 %v2710, %v4903
  %v4922 = vmul.f32 %v4354, %v4903
  %v4923 = vmul.f32 %v4358, %v4903
  %v4924 = vmul.f32 %v1008, %v4903
  %v4925 = vmul.f32 %v1012, %v4903
  %v4926 = vmul.f32 %v1016, %v4903
  %v4927 = vmul.f32 %v1020, %v4903
  %v4928 = vmul.f32 %v1024, %v4903
  %v4929 = vmul.f32 %v1028, %v4903
  %v4930 = vmul.f32 %v1032, %v4903
  %v4931 = vmul.f32 %v1036, %v4903
  %v4932 = vmul.f32 %v1040, %v4903
  %v4933 = vmul.f32 %v1044, %v4903
  %v4934 = vmul.f32 %v1048, %v4903
  %v4935 = vmul.f32 %v1052, %v4903
  %v4936 = vmul.f32 %v1056, %v4903
  %v4937 = vmul.f32 %v1060, %v4903
  %v4938 = vmul.f32 %v1064, %v4903
  %v4939 = vmul.f32 %v1068, %v4903
  %v4940 = vmul.f32 %v2714, %v4903
  %v4941 = vmul.f32 %v2718, %v4903
  %v4942 = vmul.f32 %v4362, %v4903
  %v4943 = vmul.f32 %v4366, %v4903
  %v4984 = vrot.slane %v4904, 1
  %v4985 = vrot.slane %v4905, 1
  %v4986 = vsel %vm1238, %v4984, %v4985
  %v4987 = vrot.slane %v4906, 1
  %v4988 = vrot.slane %v4907, 1
  %v4989 = vsel %vm1238, %v4987, %v4988
  %v4990 = vrot.slane %v4908, 1
  %v4991 = vrot.slane %v4909, 1
  %v4992 = vsel %vm1238, %v4990, %v4991
  %v4993 = vrot.slane %v4910, 1
  %v4994 = vrot.slane %v4911, 1
  %v4995 = vsel %vm1238, %v4993, %v4994
  %v4996 = vrot.slane %v4912, 1
  %v4997 = vrot.slane %v4913, 1
  %v4998 = vsel %vm1238, %v4996, %v4997
  %v4999 = vrot.slane %v4914, 1
  %v5000 = vrot.slane %v4915, 1
  %v5001 = vsel %vm1238, %v4999, %v5000
  %v5002 = vrot.slane %v4916, 1
  %v5003 = vrot.slane %v4917, 1
  %v5004 = vsel %vm1238, %v5002, %v5003
  %v5005 = vrot.slane %v4918, 1
  %v5006 = vrot.slane %v4919, 1
  %v5007 = vsel %vm1238, %v5005, %v5006
  %v5008 = vrot.slane %v4920, 1
  %v5009 = vrot.slane %v4921, 1
  %v5010 = vsel %vm1238, %v5008, %v5009
  %v5011 = vrot.slane %v4922, 1
  %v5012 = vrot.slane %v4923, 1
  %v5013 = vsel %vm1238, %v5011, %v5012
  %v5014 = vrot.slane %v4924, 1
  %v5015 = vrot.slane %v4925, 1
  %v5016 = vsel %vm1238, %v5014, %v5015
  %v5017 = vrot.slane %v4926, 1
  %v5018 = vrot.slane %v4927, 1
  %v5019 = vsel %vm1238, %v5017, %v5018
  %v5020 = vrot.slane %v4928, 1
  %v5021 = vrot.slane %v4929, 1
  %v5022 = vsel %vm1238, %v5020, %v5021
  %v5023 = vrot.slane %v4930, 1
  %v5024 = vrot.slane %v4931, 1
  %v5025 = vsel %vm1238, %v5023, %v5024
  %v5026 = vrot.slane %v4932, 1
  %v5027 = vrot.slane %v4933, 1
  %v5028 = vsel %vm1238, %v5026, %v5027
  %v5029 = vrot.slane %v4934, 1
  %v5030 = vrot.slane %v4935, 1
  %v5031 = vsel %vm1238, %v5029, %v5030
  %v5032 = vrot.slane %v4936, 1
  %v5033 = vrot.slane %v4937, 1
  %v5034 = vsel %vm1238, %v5032, %v5033
  %v5035 = vrot.slane %v4938, 1
  %v5036 = vrot.slane %v4939, 1
  %v5037 = vsel %vm1238, %v5035, %v5036
  %v5038 = vrot.slane %v4940, 1
  %v5039 = vrot.slane %v4941, 1
  %v5040 = vsel %vm1238, %v5038, %v5039
  %v5041 = vrot.slane %v4942, 1
  %v5042 = vrot.slane %v4943, 1
  %v5043 = vsel %vm1238, %v5041, %v5042
  %v5084 = vadd.f32 %v4860, %v4986
  %v5085 = vadd.f32 %v4861, %v4985
  %v5086 = vadd.f32 %v4862, %v4989
  %v5087 = vadd.f32 %v4863, %v4988
  %v5088 = vadd.f32 %v4864, %v4992
  %v5089 = vadd.f32 %v4865, %v4991
  %v5090 = vadd.f32 %v4866, %v4995
  %v5091 = vadd.f32 %v4867, %v4994
  %v5092 = vadd.f32 %v4868, %v4998
  %v5093 = vadd.f32 %v4869, %v4997
  %v5094 = vadd.f32 %v4870, %v5001
  %v5095 = vadd.f32 %v4871, %v5000
  %v5096 = vadd.f32 %v4872, %v5004
  %v5097 = vadd.f32 %v4873, %v5003
  %v5098 = vadd.f32 %v4874, %v5007
  %v5099 = vadd.f32 %v4875, %v5006
  %v5100 = vadd.f32 %v4876, %v5010
  %v5101 = vadd.f32 %v4877, %v5009
  %v5102 = vadd.f32 %v4878, %v5013
  %v5103 = vadd.f32 %v4879, %v5012
  %v5104 = vadd.f32 %v4880, %v5016
  %v5105 = vadd.f32 %v4881, %v5015
  %v5106 = vadd.f32 %v4882, %v5019
  %v5107 = vadd.f32 %v4883, %v5018
  %v5108 = vadd.f32 %v4884, %v5022
  %v5109 = vadd.f32 %v4885, %v5021
  %v5110 = vadd.f32 %v4886, %v5025
  %v5111 = vadd.f32 %v4887, %v5024
  %v5112 = vadd.f32 %v4888, %v5028
  %v5113 = vadd.f32 %v4889, %v5027
  %v5114 = vadd.f32 %v4890, %v5031
  %v5115 = vadd.f32 %v4891, %v5030
  %v5116 = vadd.f32 %v4892, %v5034
  %v5117 = vadd.f32 %v4893, %v5033
  %v5118 = vadd.f32 %v4894, %v5037
  %v5119 = vadd.f32 %v4895, %v5036
  %v5120 = vadd.f32 %v4896, %v5040
  %v5121 = vadd.f32 %v4897, %v5039
  %v5122 = vadd.f32 %v4898, %v5043
  %v5123 = vadd.f32 %v4899, %v5042
  %v5124 = vlaneseq
  %v5125 = vshrl.u32 %v5124, 7
  %v5126 = vsub.s32 0, %v5125
  %v5127 = vrot.slane %v381, %v5126
  %v5128 = vmul.f32 %v405, %v5127
  %v5129 = vmul.f32 %v410, %v5127
  %v5130 = vmul.f32 %v415, %v5127
  %v5131 = vmul.f32 %v420, %v5127
  %v5132 = vmul.f32 %v425, %v5127
  %v5133 = vmul.f32 %v430, %v5127
  %v5134 = vmul.f32 %v435, %v5127
  %v5135 = vmul.f32 %v440, %v5127
  %v5136 = vmul.f32 %v445, %v5127
  %v5137 = vmul.f32 %v450, %v5127
  %v5138 = vmul.f32 %v455, %v5127
  %v5139 = vmul.f32 %v460, %v5127
  %v5140 = vmul.f32 %v465, %v5127
  %v5141 = vmul.f32 %v470, %v5127
  %v5142 = vmul.f32 %v475, %v5127
  %v5143 = vmul.f32 %v480, %v5127
  %v5144 = vmul.f32 %v2503, %v5127
  %v5145 = vmul.f32 %v2508, %v5127
  %v5146 = vmul.f32 %v4151, %v5127
  %v5147 = vmul.f32 %v4156, %v5127
  %v5148 = vmul.f32 %v505, %v5127
  %v5149 = vmul.f32 %v510, %v5127
  %v5150 = vmul.f32 %v515, %v5127
  %v5151 = vmul.f32 %v520, %v5127
  %v5152 = vmul.f32 %v525, %v5127
  %v5153 = vmul.f32 %v530, %v5127
  %v5154 = vmul.f32 %v535, %v5127
  %v5155 = vmul.f32 %v540, %v5127
  %v5156 = vmul.f32 %v545, %v5127
  %v5157 = vmul.f32 %v550, %v5127
  %v5158 = vmul.f32 %v555, %v5127
  %v5159 = vmul.f32 %v560, %v5127
  %v5160 = vmul.f32 %v565, %v5127
  %v5161 = vmul.f32 %v570, %v5127
  %v5162 = vmul.f32 %v575, %v5127
  %v5163 = vmul.f32 %v580, %v5127
  %v5164 = vmul.f32 %v2513, %v5127
  %v5165 = vmul.f32 %v2518, %v5127
  %v5166 = vmul.f32 %v4161, %v5127
  %v5167 = vmul.f32 %v4166, %v5127
  %v5208 = vrot.slane %v5128, 2
  %v5209 = vrot.slane %v5129, 2
  %v5210 = vsel %vm1911, %v5208, %v5209
  %v5211 = vrot.slane %v5130, 2
  %v5212 = vrot.slane %v5131, 2
  %v5213 = vsel %vm1911, %v5211, %v5212
  %v5214 = vrot.slane %v5132, 2
  %v5215 = vrot.slane %v5133, 2
  %v5216 = vsel %vm1911, %v5214, %v5215
  %v5217 = vrot.slane %v5134, 2
  %v5218 = vrot.slane %v5135, 2
  %v5219 = vsel %vm1911, %v5217, %v5218
  %v5220 = vrot.slane %v5136, 2
  %v5221 = vrot.slane %v5137, 2
  %v5222 = vsel %vm1911, %v5220, %v5221
  %v5223 = vrot.slane %v5138, 2
  %v5224 = vrot.slane %v5139, 2
  %v5225 = vsel %vm1911, %v5223, %v5224
  %v5226 = vrot.slane %v5140, 2
  %v5227 = vrot.slane %v5141, 2
  %v5228 = vsel %vm1911, %v5226, %v5227
  %v5229 = vrot.slane %v5142, 2
  %v5230 = vrot.slane %v5143, 2
  %v5231 = vsel %vm1911, %v5229, %v5230
  %v5232 = vrot.slane %v5144, 2
  %v5233 = vrot.slane %v5145, 2
  %v5234 = vsel %vm1911, %v5232, %v5233
  %v5235 = vrot.slane %v5146, 2
  %v5236 = vrot.slane %v5147, 2
  %v5237 = vsel %vm1911, %v5235, %v5236
  %v5238 = vrot.slane %v5148, 2
  %v5239 = vrot.slane %v5149, 2
  %v5240 = vsel %vm1911, %v5238, %v5239
  %v5241 = vrot.slane %v5150, 2
  %v5242 = vrot.slane %v5151, 2
  %v5243 = vsel %vm1911, %v5241, %v5242
  %v5244 = vrot.slane %v5152, 2
  %v5245 = vrot.slane %v5153, 2
  %v5246 = vsel %vm1911, %v5244, %v5245
  %v5247 = vrot.slane %v5154, 2
  %v5248 = vrot.slane %v5155, 2
  %v5249 = vsel %vm1911, %v5247, %v5248
  %v5250 = vrot.slane %v5156, 2
  %v5251 = vrot.slane %v5157, 2
  %v5252 = vsel %vm1911, %v5250, %v5251
  %v5253 = vrot.slane %v5158, 2
  %v5254 = vrot.slane %v5159, 2
  %v5255 = vsel %vm1911, %v5253, %v5254
  %v5256 = vrot.slane %v5160, 2
  %v5257 = vrot.slane %v5161, 2
  %v5258 = vsel %vm1911, %v5256, %v5257
  %v5259 = vrot.slane %v5162, 2
  %v5260 = vrot.slane %v5163, 2
  %v5261 = vsel %vm1911, %v5259, %v5260
  %v5262 = vrot.slane %v5164, 2
  %v5263 = vrot.slane %v5165, 2
  %v5264 = vsel %vm1911, %v5262, %v5263
  %v5265 = vrot.slane %v5166, 2
  %v5266 = vrot.slane %v5167, 2
  %v5267 = vsel %vm1911, %v5265, %v5266
  %v5308 = vadd.f32 %v5084, %v5210
  %v5309 = vadd.f32 %v5085, %v5209
  %v5310 = vadd.f32 %v5086, %v5213
  %v5311 = vadd.f32 %v5087, %v5212
  %v5312 = vadd.f32 %v5088, %v5216
  %v5313 = vadd.f32 %v5089, %v5215
  %v5314 = vadd.f32 %v5090, %v5219
  %v5315 = vadd.f32 %v5091, %v5218
  %v5316 = vadd.f32 %v5092, %v5222
  %v5317 = vadd.f32 %v5093, %v5221
  %v5318 = vadd.f32 %v5094, %v5225
  %v5319 = vadd.f32 %v5095, %v5224
  %v5320 = vadd.f32 %v5096, %v5228
  %v5321 = vadd.f32 %v5097, %v5227
  %v5322 = vadd.f32 %v5098, %v5231
  %v5323 = vadd.f32 %v5099, %v5230
  %v5324 = vadd.f32 %v5100, %v5234
  %v5325 = vadd.f32 %v5101, %v5233
  %v5326 = vadd.f32 %v5102, %v5237
  %v5327 = vadd.f32 %v5103, %v5236
  %v5328 = vadd.f32 %v5104, %v5240
  %v5329 = vadd.f32 %v5105, %v5239
  %v5330 = vadd.f32 %v5106, %v5243
  %v5331 = vadd.f32 %v5107, %v5242
  %v5332 = vadd.f32 %v5108, %v5246
  %v5333 = vadd.f32 %v5109, %v5245
  %v5334 = vadd.f32 %v5110, %v5249
  %v5335 = vadd.f32 %v5111, %v5248
  %v5336 = vadd.f32 %v5112, %v5252
  %v5337 = vadd.f32 %v5113, %v5251
  %v5338 = vadd.f32 %v5114, %v5255
  %v5339 = vadd.f32 %v5115, %v5254
  %v5340 = vadd.f32 %v5116, %v5258
  %v5341 = vadd.f32 %v5117, %v5257
  %v5342 = vadd.f32 %v5118, %v5261
  %v5343 = vadd.f32 %v5119, %v5260
  %v5344 = vadd.f32 %v5120, %v5264
  %v5345 = vadd.f32 %v5121, %v5263
  %v5346 = vadd.f32 %v5122, %v5267
  %v5347 = vadd.f32 %v5123, %v5266
  %v5348 = vlaneseq
  %v5349 = vshrl.u32 %v5348, 7
  %v5350 = vsub.s32 1, %v5349
  %v5351 = vrot.slane %v381, %v5350
  %v5352 = vmul.f32 %v684, %v5351
  %v5353 = vmul.f32 %v688, %v5351
  %v5354 = vmul.f32 %v692, %v5351
  %v5355 = vmul.f32 %v696, %v5351
  %v5356 = vmul.f32 %v700, %v5351
  %v5357 = vmul.f32 %v704, %v5351
  %v5358 = vmul.f32 %v708, %v5351
  %v5359 = vmul.f32 %v712, %v5351
  %v5360 = vmul.f32 %v716, %v5351
  %v5361 = vmul.f32 %v720, %v5351
  %v5362 = vmul.f32 %v724, %v5351
  %v5363 = vmul.f32 %v728, %v5351
  %v5364 = vmul.f32 %v732, %v5351
  %v5365 = vmul.f32 %v736, %v5351
  %v5366 = vmul.f32 %v740, %v5351
  %v5367 = vmul.f32 %v744, %v5351
  %v5368 = vmul.f32 %v2606, %v5351
  %v5369 = vmul.f32 %v2610, %v5351
  %v5370 = vmul.f32 %v4254, %v5351
  %v5371 = vmul.f32 %v4258, %v5351
  %v5372 = vmul.f32 %v764, %v5351
  %v5373 = vmul.f32 %v768, %v5351
  %v5374 = vmul.f32 %v772, %v5351
  %v5375 = vmul.f32 %v776, %v5351
  %v5376 = vmul.f32 %v780, %v5351
  %v5377 = vmul.f32 %v784, %v5351
  %v5378 = vmul.f32 %v788, %v5351
  %v5379 = vmul.f32 %v792, %v5351
  %v5380 = vmul.f32 %v796, %v5351
  %v5381 = vmul.f32 %v800, %v5351
  %v5382 = vmul.f32 %v804, %v5351
  %v5383 = vmul.f32 %v808, %v5351
  %v5384 = vmul.f32 %v812, %v5351
  %v5385 = vmul.f32 %v816, %v5351
  %v5386 = vmul.f32 %v820, %v5351
  %v5387 = vmul.f32 %v824, %v5351
  %v5388 = vmul.f32 %v2614, %v5351
  %v5389 = vmul.f32 %v2618, %v5351
  %v5390 = vmul.f32 %v4262, %v5351
  %v5391 = vmul.f32 %v4266, %v5351
  %v5432 = vrot.slane %v5352, 2
  %v5433 = vrot.slane %v5353, 2
  %v5434 = vsel %vm1911, %v5432, %v5433
  %v5435 = vrot.slane %v5354, 2
  %v5436 = vrot.slane %v5355, 2
  %v5437 = vsel %vm1911, %v5435, %v5436
  %v5438 = vrot.slane %v5356, 2
  %v5439 = vrot.slane %v5357, 2
  %v5440 = vsel %vm1911, %v5438, %v5439
  %v5441 = vrot.slane %v5358, 2
  %v5442 = vrot.slane %v5359, 2
  %v5443 = vsel %vm1911, %v5441, %v5442
  %v5444 = vrot.slane %v5360, 2
  %v5445 = vrot.slane %v5361, 2
  %v5446 = vsel %vm1911, %v5444, %v5445
  %v5447 = vrot.slane %v5362, 2
  %v5448 = vrot.slane %v5363, 2
  %v5449 = vsel %vm1911, %v5447, %v5448
  %v5450 = vrot.slane %v5364, 2
  %v5451 = vrot.slane %v5365, 2
  %v5452 = vsel %vm1911, %v5450, %v5451
  %v5453 = vrot.slane %v5366, 2
  %v5454 = vrot.slane %v5367, 2
  %v5455 = vsel %vm1911, %v5453, %v5454
  %v5456 = vrot.slane %v5368, 2
  %v5457 = vrot.slane %v5369, 2
  %v5458 = vsel %vm1911, %v5456, %v5457
  %v5459 = vrot.slane %v5370, 2
  %v5460 = vrot.slane %v5371, 2
  %v5461 = vsel %vm1911, %v5459, %v5460
  %v5462 = vrot.slane %v5372, 2
  %v5463 = vrot.slane %v5373, 2
  %v5464 = vsel %vm1911, %v5462, %v5463
  %v5465 = vrot.slane %v5374, 2
  %v5466 = vrot.slane %v5375, 2
  %v5467 = vsel %vm1911, %v5465, %v5466
  %v5468 = vrot.slane %v5376, 2
  %v5469 = vrot.slane %v5377, 2
  %v5470 = vsel %vm1911, %v5468, %v5469
  %v5471 = vrot.slane %v5378, 2
  %v5472 = vrot.slane %v5379, 2
  %v5473 = vsel %vm1911, %v5471, %v5472
  %v5474 = vrot.slane %v5380, 2
  %v5475 = vrot.slane %v5381, 2
  %v5476 = vsel %vm1911, %v5474, %v5475
  %v5477 = vrot.slane %v5382, 2
  %v5478 = vrot.slane %v5383, 2
  %v5479 = vsel %vm1911, %v5477, %v5478
  %v5480 = vrot.slane %v5384, 2
  %v5481 = vrot.slane %v5385, 2
  %v5482 = vsel %vm1911, %v5480, %v5481
  %v5483 = vrot.slane %v5386, 2
  %v5484 = vrot.slane %v5387, 2
  %v5485 = vsel %vm1911, %v5483, %v5484
  %v5486 = vrot.slane %v5388, 2
  %v5487 = vrot.slane %v5389, 2
  %v5488 = vsel %vm1911, %v5486, %v5487
  %v5489 = vrot.slane %v5390, 2
  %v5490 = vrot.slane %v5391, 2
  %v5491 = vsel %vm1911, %v5489, %v5490
  %v5532 = vadd.f32 %v5308, %v5434
  %v5533 = vadd.f32 %v5309, %v5433
  %v5534 = vadd.f32 %v5310, %v5437
  %v5535 = vadd.f32 %v5311, %v5436
  %v5536 = vadd.f32 %v5312, %v5440
  %v5537 = vadd.f32 %v5313, %v5439
  %v5538 = vadd.f32 %v5314, %v5443
  %v5539 = vadd.f32 %v5315, %v5442
  %v5540 = vadd.f32 %v5316, %v5446
  %v5541 = vadd.f32 %v5317, %v5445
  %v5542 = vadd.f32 %v5318, %v5449
  %v5543 = vadd.f32 %v5319, %v5448
  %v5544 = vadd.f32 %v5320, %v5452
  %v5545 = vadd.f32 %v5321, %v5451
  %v5546 = vadd.f32 %v5322, %v5455
  %v5547 = vadd.f32 %v5323, %v5454
  %v5548 = vadd.f32 %v5324, %v5458
  %v5549 = vadd.f32 %v5325, %v5457
  %v5550 = vadd.f32 %v5326, %v5461
  %v5551 = vadd.f32 %v5327, %v5460
  %v5552 = vadd.f32 %v5328, %v5464
  %v5553 = vadd.f32 %v5329, %v5463
  %v5554 = vadd.f32 %v5330, %v5467
  %v5555 = vadd.f32 %v5331, %v5466
  %v5556 = vadd.f32 %v5332, %v5470
  %v5557 = vadd.f32 %v5333, %v5469
  %v5558 = vadd.f32 %v5334, %v5473
  %v5559 = vadd.f32 %v5335, %v5472
  %v5560 = vadd.f32 %v5336, %v5476
  %v5561 = vadd.f32 %v5337, %v5475
  %v5562 = vadd.f32 %v5338, %v5479
  %v5563 = vadd.f32 %v5339, %v5478
  %v5564 = vadd.f32 %v5340, %v5482
  %v5565 = vadd.f32 %v5341, %v5481
  %v5566 = vadd.f32 %v5342, %v5485
  %v5567 = vadd.f32 %v5343, %v5484
  %v5568 = vadd.f32 %v5344, %v5488
  %v5569 = vadd.f32 %v5345, %v5487
  %v5570 = vadd.f32 %v5346, %v5491
  %v5571 = vadd.f32 %v5347, %v5490
  %v5572 = vlaneseq
  %v5573 = vshrl.u32 %v5572, 7
  %v5574 = vsub.s32 2, %v5573
  %v5575 = vrot.slane %v381, %v5574
  %v5576 = vmul.f32 %v928, %v5575
  %v5577 = vmul.f32 %v932, %v5575
  %v5578 = vmul.f32 %v936, %v5575
  %v5579 = vmul.f32 %v940, %v5575
  %v5580 = vmul.f32 %v944, %v5575
  %v5581 = vmul.f32 %v948, %v5575
  %v5582 = vmul.f32 %v952, %v5575
  %v5583 = vmul.f32 %v956, %v5575
  %v5584 = vmul.f32 %v960, %v5575
  %v5585 = vmul.f32 %v964, %v5575
  %v5586 = vmul.f32 %v968, %v5575
  %v5587 = vmul.f32 %v972, %v5575
  %v5588 = vmul.f32 %v976, %v5575
  %v5589 = vmul.f32 %v980, %v5575
  %v5590 = vmul.f32 %v984, %v5575
  %v5591 = vmul.f32 %v988, %v5575
  %v5592 = vmul.f32 %v2706, %v5575
  %v5593 = vmul.f32 %v2710, %v5575
  %v5594 = vmul.f32 %v4354, %v5575
  %v5595 = vmul.f32 %v4358, %v5575
  %v5596 = vmul.f32 %v1008, %v5575
  %v5597 = vmul.f32 %v1012, %v5575
  %v5598 = vmul.f32 %v1016, %v5575
  %v5599 = vmul.f32 %v1020, %v5575
  %v5600 = vmul.f32 %v1024, %v5575
  %v5601 = vmul.f32 %v1028, %v5575
  %v5602 = vmul.f32 %v1032, %v5575
  %v5603 = vmul.f32 %v1036, %v5575
  %v5604 = vmul.f32 %v1040, %v5575
  %v5605 = vmul.f32 %v1044, %v5575
  %v5606 = vmul.f32 %v1048, %v5575
  %v5607 = vmul.f32 %v1052, %v5575
  %v5608 = vmul.f32 %v1056, %v5575
  %v5609 = vmul.f32 %v1060, %v5575
  %v5610 = vmul.f32 %v1064, %v5575
  %v5611 = vmul.f32 %v1068, %v5575
  %v5612 = vmul.f32 %v2714, %v5575
  %v5613 = vmul.f32 %v2718, %v5575
  %v5614 = vmul.f32 %v4362, %v5575
  %v5615 = vmul.f32 %v4366, %v5575
  %v5656 = vrot.slane %v5576, 2
  %v5657 = vrot.slane %v5577, 2
  %v5658 = vsel %vm1911, %v5656, %v5657
  %v5659 = vrot.slane %v5578, 2
  %v5660 = vrot.slane %v5579, 2
  %v5661 = vsel %vm1911, %v5659, %v5660
  %v5662 = vrot.slane %v5580, 2
  %v5663 = vrot.slane %v5581, 2
  %v5664 = vsel %vm1911, %v5662, %v5663
  %v5665 = vrot.slane %v5582, 2
  %v5666 = vrot.slane %v5583, 2
  %v5667 = vsel %vm1911, %v5665, %v5666
  %v5668 = vrot.slane %v5584, 2
  %v5669 = vrot.slane %v5585, 2
  %v5670 = vsel %vm1911, %v5668, %v5669
  %v5671 = vrot.slane %v5586, 2
  %v5672 = vrot.slane %v5587, 2
  %v5673 = vsel %vm1911, %v5671, %v5672
  %v5674 = vrot.slane %v5588, 2
  %v5675 = vrot.slane %v5589, 2
  %v5676 = vsel %vm1911, %v5674, %v5675
  %v5677 = vrot.slane %v5590, 2
  %v5678 = vrot.slane %v5591, 2
  %v5679 = vsel %vm1911, %v5677, %v5678
  %v5680 = vrot.slane %v5592, 2
  %v5681 = vrot.slane %v5593, 2
  %v5682 = vsel %vm1911, %v5680, %v5681
  %v5683 = vrot.slane %v5594, 2
  %v5684 = vrot.slane %v5595, 2
  %v5685 = vsel %vm1911, %v5683, %v5684
  %v5686 = vrot.slane %v5596, 2
  %v5687 = vrot.slane %v5597, 2
  %v5688 = vsel %vm1911, %v5686, %v5687
  %v5689 = vrot.slane %v5598, 2
  %v5690 = vrot.slane %v5599, 2
  %v5691 = vsel %vm1911, %v5689, %v5690
  %v5692 = vrot.slane %v5600, 2
  %v5693 = vrot.slane %v5601, 2
  %v5694 = vsel %vm1911, %v5692, %v5693
  %v5695 = vrot.slane %v5602, 2
  %v5696 = vrot.slane %v5603, 2
  %v5697 = vsel %vm1911, %v5695, %v5696
  %v5698 = vrot.slane %v5604, 2
  %v5699 = vrot.slane %v5605, 2
  %v5700 = vsel %vm1911, %v5698, %v5699
  %v5701 = vrot.slane %v5606, 2
  %v5702 = vrot.slane %v5607, 2
  %v5703 = vsel %vm1911, %v5701, %v5702
  %v5704 = vrot.slane %v5608, 2
  %v5705 = vrot.slane %v5609, 2
  %v5706 = vsel %vm1911, %v5704, %v5705
  %v5707 = vrot.slane %v5610, 2
  %v5708 = vrot.slane %v5611, 2
  %v5709 = vsel %vm1911, %v5707, %v5708
  %v5710 = vrot.slane %v5612, 2
  %v5711 = vrot.slane %v5613, 2
  %v5712 = vsel %vm1911, %v5710, %v5711
  %v5713 = vrot.slane %v5614, 2
  %v5714 = vrot.slane %v5615, 2
  %v5715 = vsel %vm1911, %v5713, %v5714
  %v5756 = vadd.f32 %v5532, %v5658
  %v5757 = vadd.f32 %v5533, %v5657
  %v5758 = vadd.f32 %v5534, %v5661
  %v5759 = vadd.f32 %v5535, %v5660
  %v5760 = vadd.f32 %v5536, %v5664
  %v5761 = vadd.f32 %v5537, %v5663
  %v5762 = vadd.f32 %v5538, %v5667
  %v5763 = vadd.f32 %v5539, %v5666
  %v5764 = vadd.f32 %v5540, %v5670
  %v5765 = vadd.f32 %v5541, %v5669
  %v5766 = vadd.f32 %v5542, %v5673
  %v5767 = vadd.f32 %v5543, %v5672
  %v5768 = vadd.f32 %v5544, %v5676
  %v5769 = vadd.f32 %v5545, %v5675
  %v5770 = vadd.f32 %v5546, %v5679
  %v5771 = vadd.f32 %v5547, %v5678
  %v5772 = vadd.f32 %v5548, %v5682
  %v5773 = vadd.f32 %v5549, %v5681
  %v5774 = vadd.f32 %v5550, %v5685
  %v5775 = vadd.f32 %v5551, %v5684
  %v5776 = vadd.f32 %v5552, %v5688
  %v5777 = vadd.f32 %v5553, %v5687
  %v5778 = vadd.f32 %v5554, %v5691
  %v5779 = vadd.f32 %v5555, %v5690
  %v5780 = vadd.f32 %v5556, %v5694
  %v5781 = vadd.f32 %v5557, %v5693
  %v5782 = vadd.f32 %v5558, %v5697
  %v5783 = vadd.f32 %v5559, %v5696
  %v5784 = vadd.f32 %v5560, %v5700
  %v5785 = vadd.f32 %v5561, %v5699
  %v5786 = vadd.f32 %v5562, %v5703
  %v5787 = vadd.f32 %v5563, %v5702
  %v5788 = vadd.f32 %v5564, %v5706
  %v5789 = vadd.f32 %v5565, %v5705
  %v5790 = vadd.f32 %v5566, %v5709
  %v5791 = vadd.f32 %v5567, %v5708
  %v5792 = vadd.f32 %v5568, %v5712
  %v5793 = vadd.f32 %v5569, %v5711
  %v5794 = vadd.f32 %v5570, %v5715
  %v5795 = vadd.f32 %v5571, %v5714
  %v5796 = vld [vmem:[%s2] sm:$0x1]
  %v5798 = vlaneseq
  %v5799 = vshrl.u32 %v5798, 7
  %v5800 = vsub.s32 0, %v5799
  %v5801 = vrot.slane %v5796, %v5800
  %v5803 = vadd.f32 %v5756, %v5801
  %v5804 = vadd.f32 %v5757, %v5801
  %v5805 = vadd.f32 %v5758, %v5801
  %v5806 = vadd.f32 %v5759, %v5801
  %v5807 = vadd.f32 %v5760, %v5801
  %v5808 = vadd.f32 %v5761, %v5801
  %v5809 = vadd.f32 %v5762, %v5801
  %v5810 = vadd.f32 %v5763, %v5801
  %v5811 = vadd.f32 %v5764, %v5801
  %v5812 = vadd.f32 %v5765, %v5801
  %v5813 = vadd.f32 %v5766, %v5801
  %v5814 = vadd.f32 %v5767, %v5801
  %v5815 = vadd.f32 %v5768, %v5801
  %v5816 = vadd.f32 %v5769, %v5801
  %v5817 = vadd.f32 %v5770, %v5801
  %v5818 = vadd.f32 %v5771, %v5801
  %v5819 = vadd.f32 %v5772, %v5801
  %v5820 = vadd.f32 %v5773, %v5801
  %v5821 = vadd.f32 %v5774, %v5801
  %v5822 = vadd.f32 %v5775, %v5801
  %v5823 = vadd.f32 %v5776, %v5801
  %v5824 = vadd.f32 %v5777, %v5801
  %v5825 = vadd.f32 %v5778, %v5801
  %v5826 = vadd.f32 %v5779, %v5801
  %v5827 = vadd.f32 %v5780, %v5801
  %v5828 = vadd.f32 %v5781, %v5801
  %v5829 = vadd.f32 %v5782, %v5801
  %v5830 = vadd.f32 %v5783, %v5801
  %v5831 = vadd.f32 %v5784, %v5801
  %v5832 = vadd.f32 %v5785, %v5801
  %v5833 = vadd.f32 %v5786, %v5801
  %v5834 = vadd.f32 %v5787, %v5801
  %v5835 = vadd.f32 %v5788, %v5801
  %v5836 = vadd.f32 %v5789, %v5801
  %v5837 = vadd.f32 %v5790, %v5801
  %v5838 = vadd.f32 %v5791, %v5801
  %v5839 = vadd.f32 %v5792, %v5801
  %v5840 = vadd.f32 %v5793, %v5801
  %v5841 = vadd.f32 %v5794, %v5801
  %v5842 = vadd.f32 %v5795, %v5801
  %v5843 = vpack.c.bf16 %v5804, %v5803
  %v5844 = vpack.c.bf16 %v5806, %v5805
  %v5845 = vpack.c.bf16 %v5808, %v5807
  %v5846 = vpack.c.bf16 %v5810, %v5809
  %v5847 = vpack.c.bf16 %v5812, %v5811
  %v5848 = vpack.c.bf16 %v5814, %v5813
  %v5849 = vpack.c.bf16 %v5816, %v5815
  %v5850 = vpack.c.bf16 %v5818, %v5817
  %v5851 = vpack.c.bf16 %v5820, %v5819
  %v5852 = vpack.c.bf16 %v5822, %v5821
  %v5853 = vpack.c.bf16 %v5824, %v5823
  %v5854 = vpack.c.bf16 %v5826, %v5825
  %v5855 = vpack.c.bf16 %v5828, %v5827
  %v5856 = vpack.c.bf16 %v5830, %v5829
  %v5857 = vpack.c.bf16 %v5832, %v5831
  %v5858 = vpack.c.bf16 %v5834, %v5833
  %v5859 = vpack.c.bf16 %v5836, %v5835
  %v5860 = vpack.c.bf16 %v5838, %v5837
  %v5861 = vpack.c.bf16 %v5840, %v5839
  %v5862 = vpack.c.bf16 %v5842, %v5841
  %v5883 = vunpack.c.l.b16 %v5843
  %v5884 = vunpack.c.h.b16 %v5843
  %v5885 = vunpack.c.l.b16 %v5844
  %v5886 = vunpack.c.h.b16 %v5844
  %v5887 = vunpack.c.l.b16 %v5845
  %v5888 = vunpack.c.h.b16 %v5845
  %v5889 = vunpack.c.l.b16 %v5846
  %v5890 = vunpack.c.h.b16 %v5846
  %v5891 = vunpack.c.l.b16 %v5847
  %v5892 = vunpack.c.h.b16 %v5847
  %v5893 = vunpack.c.l.b16 %v5848
  %v5894 = vunpack.c.h.b16 %v5848
  %v5895 = vunpack.c.l.b16 %v5849
  %v5896 = vunpack.c.h.b16 %v5849
  %v5897 = vunpack.c.l.b16 %v5850
  %v5898 = vunpack.c.h.b16 %v5850
  %v5899 = vunpack.c.l.b16 %v5851
  %v5900 = vunpack.c.h.b16 %v5851
  %v5901 = vunpack.c.l.b16 %v5852
  %v5902 = vunpack.c.h.b16 %v5852
  %v5903 = vunpack.c.l.b16 %v5853
  %v5904 = vunpack.c.h.b16 %v5853
  %v5905 = vunpack.c.l.b16 %v5854
  %v5906 = vunpack.c.h.b16 %v5854
  %v5907 = vunpack.c.l.b16 %v5855
  %v5908 = vunpack.c.h.b16 %v5855
  %v5909 = vunpack.c.l.b16 %v5856
  %v5910 = vunpack.c.h.b16 %v5856
  %v5911 = vunpack.c.l.b16 %v5857
  %v5912 = vunpack.c.h.b16 %v5857
  %v5913 = vunpack.c.l.b16 %v5858
  %v5914 = vunpack.c.h.b16 %v5858
  %v5915 = vunpack.c.l.b16 %v5859
  %v5916 = vunpack.c.h.b16 %v5859
  %v5917 = vunpack.c.l.b16 %v5860
  %v5918 = vunpack.c.h.b16 %v5860
  %v5919 = vunpack.c.l.b16 %v5861
  %v5920 = vunpack.c.h.b16 %v5861
  %v5921 = vunpack.c.l.b16 %v5862
  %v5922 = vunpack.c.h.b16 %v5862
  %v5923 = vpack.c.b16 %v5883, %v5883
  %v5924 = vpack.c.b16 %v5884, %v5884
  %v5925 = vpack.c.b16 %v5885, %v5885
  %v5926 = vpack.c.b16 %v5886, %v5886
  %v5927 = vpack.c.b16 %v5887, %v5887
  %v5928 = vpack.c.b16 %v5888, %v5888
  %v5929 = vpack.c.b16 %v5889, %v5889
  %v5930 = vpack.c.b16 %v5890, %v5890
  %v5931 = vpack.c.b16 %v5891, %v5891
  %v5932 = vpack.c.b16 %v5892, %v5892
  %v5933 = vpack.c.b16 %v5893, %v5893
  %v5934 = vpack.c.b16 %v5894, %v5894
  %v5935 = vpack.c.b16 %v5895, %v5895
  %v5936 = vpack.c.b16 %v5896, %v5896
  %v5937 = vpack.c.b16 %v5897, %v5897
  %v5938 = vpack.c.b16 %v5898, %v5898
  %v5939 = vpack.c.b16 %v5899, %v5899
  %v5940 = vpack.c.b16 %v5900, %v5900
  %v5941 = vpack.c.b16 %v5901, %v5901
  %v5942 = vpack.c.b16 %v5902, %v5902
  %v5943 = vpack.c.b16 %v5903, %v5903
  %v5944 = vpack.c.b16 %v5904, %v5904
  %v5945 = vpack.c.b16 %v5905, %v5905
  %v5946 = vpack.c.b16 %v5906, %v5906
  %v5947 = vpack.c.b16 %v5907, %v5907
  %v5948 = vpack.c.b16 %v5908, %v5908
  %v5949 = vpack.c.b16 %v5909, %v5909
  %v5950 = vpack.c.b16 %v5910, %v5910
  %v5951 = vpack.c.b16 %v5911, %v5911
  %v5952 = vpack.c.b16 %v5912, %v5912
  %v5953 = vpack.c.b16 %v5913, %v5913
  %v5954 = vpack.c.b16 %v5914, %v5914
  %v5955 = vpack.c.b16 %v5915, %v5915
  %v5956 = vpack.c.b16 %v5916, %v5916
  %v5957 = vpack.c.b16 %v5917, %v5917
  %v5958 = vpack.c.b16 %v5918, %v5918
  %v5959 = vpack.c.b16 %v5919, %v5919
  %v5960 = vpack.c.b16 %v5920, %v5920
  %v5961 = vpack.c.b16 %v5921, %v5921
  %v5962 = vpack.c.b16 %v5922, %v5922
  %vm6003 = vcmask 519168
  %6004 = vst.msk [vmem:[%s3] sm:$0xf] %vm6003, %v5923
  %vm6005 = vcmask 516096
  %6006 = vst.msk [vmem:[%s3 + $0x4] sm:$0x1] %vm6005, %v5924
  %6007 = vst.msk [vmem:[%s3 + $0x8] sm:$0xf] %vm6003, %v5925
  %6008 = vst.msk [vmem:[%s3 + $0xc] sm:$0x1] %vm6005, %v5926
  %6009 = vst.msk [vmem:[%s3 + $0x10] sm:$0xf] %vm6003, %v5927
  %6010 = vst.msk [vmem:[%s3 + $0x14] sm:$0x1] %vm6005, %v5928
  %6011 = vst.msk [vmem:[%s3 + $0x18] sm:$0xf] %vm6003, %v5929
  %6012 = vst.msk [vmem:[%s3 + $0x1c] sm:$0x1] %vm6005, %v5930
  %6013 = vst.msk [vmem:[%s3 + $0x20] sm:$0xf] %vm6003, %v5931
  %6014 = vst.msk [vmem:[%s3 + $0x24] sm:$0x1] %vm6005, %v5932
  %6015 = vst.msk [vmem:[%s3 + $0x28] sm:$0xf] %vm6003, %v5933
  %6016 = vst.msk [vmem:[%s3 + $0x2c] sm:$0x1] %vm6005, %v5934
  %6017 = vst.msk [vmem:[%s3 + $0x30] sm:$0xf] %vm6003, %v5935
  %6018 = vst.msk [vmem:[%s3 + $0x34] sm:$0x1] %vm6005, %v5936
  %6019 = vst.msk [vmem:[%s3 + $0x38] sm:$0xf] %vm6003, %v5937
  %6020 = vst.msk [vmem:[%s3 + $0x3c] sm:$0x1] %vm6005, %v5938
  %6021 = vst.msk [vmem:[%s3 + $0x40] sm:$0xf] %vm6003, %v5939
  %6022 = vst.msk [vmem:[%s3 + $0x44] sm:$0x1] %vm6005, %v5940
  %6023 = vst.msk [vmem:[%s3 + $0x48] sm:$0xf] %vm6003, %v5941
  %6024 = vst.msk [vmem:[%s3 + $0x4c] sm:$0x1] %vm6005, %v5942
  %6025 = vst.msk [vmem:[%s3 + $0x50] sm:$0xf] %vm6003, %v5943
  %6026 = vst.msk [vmem:[%s3 + $0x54] sm:$0x1] %vm6005, %v5944
  %6027 = vst.msk [vmem:[%s3 + $0x58] sm:$0xf] %vm6003, %v5945
  %6028 = vst.msk [vmem:[%s3 + $0x5c] sm:$0x1] %vm6005, %v5946
  %6029 = vst.msk [vmem:[%s3 + $0x60] sm:$0xf] %vm6003, %v5947
  %6030 = vst.msk [vmem:[%s3 + $0x64] sm:$0x1] %vm6005, %v5948
  %6031 = vst.msk [vmem:[%s3 + $0x68] sm:$0xf] %vm6003, %v5949
  %6032 = vst.msk [vmem:[%s3 + $0x6c] sm:$0x1] %vm6005, %v5950
  %6033 = vst.msk [vmem:[%s3 + $0x70] sm:$0xf] %vm6003, %v5951
  %6034 = vst.msk [vmem:[%s3 + $0x74] sm:$0x1] %vm6005, %v5952
  %6035 = vst.msk [vmem:[%s3 + $0x78] sm:$0xf] %vm6003, %v5953
  %6036 = vst.msk [vmem:[%s3 + $0x7c] sm:$0x1] %vm6005, %v5954
  %6037 = vst.msk [vmem:[%s3 + $0x80] sm:$0xf] %vm6003, %v5955
  %6038 = vst.msk [vmem:[%s3 + $0x84] sm:$0x1] %vm6005, %v5956
  %6039 = vst.msk [vmem:[%s3 + $0x88] sm:$0xf] %vm6003, %v5957
  %6040 = vst.msk [vmem:[%s3 + $0x8c] sm:$0x1] %vm6005, %v5958
  %6041 = vst.msk [vmem:[%s3 + $0x90] sm:$0xf] %vm6003, %v5959
  %6042 = vst.msk [vmem:[%s3 + $0x94] sm:$0x1] %vm6005, %v5960
  %6043 = vst.msk [vmem:[%s3 + $0x98] sm:$0xf] %vm6003, %v5961
  %6044 = vst.msk [vmem:[%s3 + $0x9c] sm:$0x1] %vm6005, %v5962
  %vm6045 = vcmask 523264
  %v6046 = vsel %vm6045, %v5803, 0.0
  %v6047 = vsel %vm6045, %v5805, 0.0
  %v6048 = vadd.f32 %v6046, %v6047
  %v6049 = vsel %vm6045, %v5807, 0.0
  %v6050 = vadd.f32 %v6048, %v6049
  %v6051 = vsel %vm6045, %v5809, 0.0
  %v6052 = vadd.f32 %v6050, %v6051
  %v6053 = vsel %vm6045, %v5811, 0.0
  %v6054 = vadd.f32 %v6052, %v6053
  %v6055 = vsel %vm6045, %v5813, 0.0
  %v6056 = vadd.f32 %v6054, %v6055
  %v6057 = vsel %vm6045, %v5815, 0.0
  %v6058 = vadd.f32 %v6056, %v6057
  %v6059 = vsel %vm6045, %v5817, 0.0
  %v6060 = vadd.f32 %v6058, %v6059
  %v6061 = vsel %vm6045, %v5819, 0.0
  %v6062 = vadd.f32 %v6060, %v6061
  %v6063 = vsel %vm6045, %v5821, 0.0
  %v6064 = vadd.f32 %v6062, %v6063
  %vm6065 = vcmask 517120
  %v6066 = vsel %vm6065, %v5804, 0.0
  %v6067 = vsel %vm6065, %v5806, 0.0
  %v6068 = vadd.f32 %v6066, %v6067
  %v6069 = vsel %vm6065, %v5808, 0.0
  %v6070 = vadd.f32 %v6068, %v6069
  %v6071 = vsel %vm6065, %v5810, 0.0
  %v6072 = vadd.f32 %v6070, %v6071
  %v6073 = vsel %vm6065, %v5812, 0.0
  %v6074 = vadd.f32 %v6072, %v6073
  %v6075 = vsel %vm6065, %v5814, 0.0
  %v6076 = vadd.f32 %v6074, %v6075
  %v6077 = vsel %vm6065, %v5816, 0.0
  %v6078 = vadd.f32 %v6076, %v6077
  %v6079 = vsel %vm6065, %v5818, 0.0
  %v6080 = vadd.f32 %v6078, %v6079
  %v6081 = vsel %vm6065, %v5820, 0.0
  %v6082 = vadd.f32 %v6080, %v6081
  %v6083 = vsel %vm6065, %v5822, 0.0
  %v6084 = vadd.f32 %v6082, %v6083
  %v6085 = vsel %vm6045, %v5823, 0.0
  %v6086 = vsel %vm6045, %v5825, 0.0
  %v6087 = vadd.f32 %v6085, %v6086
  %v6088 = vsel %vm6045, %v5827, 0.0
  %v6089 = vadd.f32 %v6087, %v6088
  %v6090 = vsel %vm6045, %v5829, 0.0
  %v6091 = vadd.f32 %v6089, %v6090
  %v6092 = vsel %vm6045, %v5831, 0.0
  %v6093 = vadd.f32 %v6091, %v6092
  %v6094 = vsel %vm6045, %v5833, 0.0
  %v6095 = vadd.f32 %v6093, %v6094
  %v6096 = vsel %vm6045, %v5835, 0.0
  %v6097 = vadd.f32 %v6095, %v6096
  %v6098 = vsel %vm6045, %v5837, 0.0
  %v6099 = vadd.f32 %v6097, %v6098
  %v6100 = vsel %vm6045, %v5839, 0.0
  %v6101 = vadd.f32 %v6099, %v6100
  %v6102 = vsel %vm6045, %v5841, 0.0
  %v6103 = vadd.f32 %v6101, %v6102
  %v6104 = vsel %vm6065, %v5824, 0.0
  %v6105 = vsel %vm6065, %v5826, 0.0
  %v6106 = vadd.f32 %v6104, %v6105
  %v6107 = vsel %vm6065, %v5828, 0.0
  %v6108 = vadd.f32 %v6106, %v6107
  %v6109 = vsel %vm6065, %v5830, 0.0
  %v6110 = vadd.f32 %v6108, %v6109
  %v6111 = vsel %vm6065, %v5832, 0.0
  %v6112 = vadd.f32 %v6110, %v6111
  %v6113 = vsel %vm6065, %v5834, 0.0
  %v6114 = vadd.f32 %v6112, %v6113
  %v6115 = vsel %vm6065, %v5836, 0.0
  %v6116 = vadd.f32 %v6114, %v6115
  %v6117 = vsel %vm6065, %v5838, 0.0
  %v6118 = vadd.f32 %v6116, %v6117
  %v6119 = vsel %vm6065, %v5840, 0.0
  %v6120 = vadd.f32 %v6118, %v6119
  %v6121 = vsel %vm6065, %v5842, 0.0
  %v6122 = vadd.f32 %v6120, %v6121
  %v6123 = vsel %vm6045, %v6064, 0.0
  %v6124 = vsel %vm6065, %v6084, 0.0
  %v6125 = vadd.f32 %v6123, %v6124
  %v6126 = vrot.slane %v6125, 4
  %v6127 = vadd.f32 %v6125, %v6126
  %v6128 = vrot.slane %v6127, 2
  %v6129 = vadd.f32 %v6127, %v6128
  %v6130 = vrot.slane %v6129, 1
  %v6131 = vadd.f32 %v6129, %v6130
  %v6132 = vsel %vm6045, %v6103, 0.0
  %v6133 = vsel %vm6065, %v6122, 0.0
  %v6134 = vadd.f32 %v6132, %v6133
  %v6135 = vrot.slane %v6134, 4
  %v6136 = vadd.f32 %v6134, %v6135
  %v6137 = vrot.slane %v6136, 2
  %v6138 = vadd.f32 %v6136, %v6137
  %v6139 = vrot.slane %v6138, 1
  %v6140 = vadd.f32 %v6138, %v6139
  %v6141 = vmul.f32 %v5803, %v5803
  %v6142 = vmul.f32 %v5804, %v5804
  %v6143 = vmul.f32 %v5805, %v5805
  %v6144 = vmul.f32 %v5806, %v5806
  %v6145 = vmul.f32 %v5807, %v5807
  %v6146 = vmul.f32 %v5808, %v5808
  %v6147 = vmul.f32 %v5809, %v5809
  %v6148 = vmul.f32 %v5810, %v5810
  %v6149 = vmul.f32 %v5811, %v5811
  %v6150 = vmul.f32 %v5812, %v5812
  %v6151 = vmul.f32 %v5813, %v5813
  %v6152 = vmul.f32 %v5814, %v5814
  %v6153 = vmul.f32 %v5815, %v5815
  %v6154 = vmul.f32 %v5816, %v5816
  %v6155 = vmul.f32 %v5817, %v5817
  %v6156 = vmul.f32 %v5818, %v5818
  %v6157 = vmul.f32 %v5819, %v5819
  %v6158 = vmul.f32 %v5820, %v5820
  %v6159 = vmul.f32 %v5821, %v5821
  %v6160 = vmul.f32 %v5822, %v5822
  %v6161 = vmul.f32 %v5823, %v5823
  %v6162 = vmul.f32 %v5824, %v5824
  %v6163 = vmul.f32 %v5825, %v5825
  %v6164 = vmul.f32 %v5826, %v5826
  %v6165 = vmul.f32 %v5827, %v5827
  %v6166 = vmul.f32 %v5828, %v5828
  %v6167 = vmul.f32 %v5829, %v5829
  %v6168 = vmul.f32 %v5830, %v5830
  %v6169 = vmul.f32 %v5831, %v5831
  %v6170 = vmul.f32 %v5832, %v5832
  %v6171 = vmul.f32 %v5833, %v5833
  %v6172 = vmul.f32 %v5834, %v5834
  %v6173 = vmul.f32 %v5835, %v5835
  %v6174 = vmul.f32 %v5836, %v5836
  %v6175 = vmul.f32 %v5837, %v5837
  %v6176 = vmul.f32 %v5838, %v5838
  %v6177 = vmul.f32 %v5839, %v5839
  %v6178 = vmul.f32 %v5840, %v5840
  %v6179 = vmul.f32 %v5841, %v5841
  %v6180 = vmul.f32 %v5842, %v5842
  %v6181 = vsel %vm6045, %v6141, 0.0
  %v6182 = vsel %vm6045, %v6143, 0.0
  %v6183 = vadd.f32 %v6181, %v6182
  %v6184 = vsel %vm6045, %v6145, 0.0
  %v6185 = vadd.f32 %v6183, %v6184
  %v6186 = vsel %vm6045, %v6147, 0.0
  %v6187 = vadd.f32 %v6185, %v6186
  %v6188 = vsel %vm6045, %v6149, 0.0
  %v6189 = vadd.f32 %v6187, %v6188
  %v6190 = vsel %vm6045, %v6151, 0.0
  %v6191 = vadd.f32 %v6189, %v6190
  %v6192 = vsel %vm6045, %v6153, 0.0
  %v6193 = vadd.f32 %v6191, %v6192
  %v6194 = vsel %vm6045, %v6155, 0.0
  %v6195 = vadd.f32 %v6193, %v6194
  %v6196 = vsel %vm6045, %v6157, 0.0
  %v6197 = vadd.f32 %v6195, %v6196
  %v6198 = vsel %vm6045, %v6159, 0.0
  %v6199 = vadd.f32 %v6197, %v6198
  %v6200 = vsel %vm6065, %v6142, 0.0
  %v6201 = vsel %vm6065, %v6144, 0.0
  %v6202 = vadd.f32 %v6200, %v6201
  %v6203 = vsel %vm6065, %v6146, 0.0
  %v6204 = vadd.f32 %v6202, %v6203
  %v6205 = vsel %vm6065, %v6148, 0.0
  %v6206 = vadd.f32 %v6204, %v6205
  %v6207 = vsel %vm6065, %v6150, 0.0
  %v6208 = vadd.f32 %v6206, %v6207
  %v6209 = vsel %vm6065, %v6152, 0.0
  %v6210 = vadd.f32 %v6208, %v6209
  %v6211 = vsel %vm6065, %v6154, 0.0
  %v6212 = vadd.f32 %v6210, %v6211
  %v6213 = vsel %vm6065, %v6156, 0.0
  %v6214 = vadd.f32 %v6212, %v6213
  %v6215 = vsel %vm6065, %v6158, 0.0
  %v6216 = vadd.f32 %v6214, %v6215
  %v6217 = vsel %vm6065, %v6160, 0.0
  %v6218 = vadd.f32 %v6216, %v6217
  %v6219 = vsel %vm6045, %v6161, 0.0
  %v6220 = vsel %vm6045, %v6163, 0.0
  %v6221 = vadd.f32 %v6219, %v6220
  %v6222 = vsel %vm6045, %v6165, 0.0
  %v6223 = vadd.f32 %v6221, %v6222
  %v6224 = vsel %vm6045, %v6167, 0.0
  %v6225 = vadd.f32 %v6223, %v6224
  %v6226 = vsel %vm6045, %v6169, 0.0
  %v6227 = vadd.f32 %v6225, %v6226
  %v6228 = vsel %vm6045, %v6171, 0.0
  %v6229 = vadd.f32 %v6227, %v6228
  %v6230 = vsel %vm6045, %v6173, 0.0
  %v6231 = vadd.f32 %v6229, %v6230
  %v6232 = vsel %vm6045, %v6175, 0.0
  %v6233 = vadd.f32 %v6231, %v6232
  %v6234 = vsel %vm6045, %v6177, 0.0
  %v6235 = vadd.f32 %v6233, %v6234
  %v6236 = vsel %vm6045, %v6179, 0.0
  %v6237 = vadd.f32 %v6235, %v6236
  %v6238 = vsel %vm6065, %v6162, 0.0
  %v6239 = vsel %vm6065, %v6164, 0.0
  %v6240 = vadd.f32 %v6238, %v6239
  %v6241 = vsel %vm6065, %v6166, 0.0
  %v6242 = vadd.f32 %v6240, %v6241
  %v6243 = vsel %vm6065, %v6168, 0.0
  %v6244 = vadd.f32 %v6242, %v6243
  %v6245 = vsel %vm6065, %v6170, 0.0
  %v6246 = vadd.f32 %v6244, %v6245
  %v6247 = vsel %vm6065, %v6172, 0.0
  %v6248 = vadd.f32 %v6246, %v6247
  %v6249 = vsel %vm6065, %v6174, 0.0
  %v6250 = vadd.f32 %v6248, %v6249
  %v6251 = vsel %vm6065, %v6176, 0.0
  %v6252 = vadd.f32 %v6250, %v6251
  %v6253 = vsel %vm6065, %v6178, 0.0
  %v6254 = vadd.f32 %v6252, %v6253
  %v6255 = vsel %vm6065, %v6180, 0.0
  %v6256 = vadd.f32 %v6254, %v6255
  %v6257 = vsel %vm6045, %v6199, 0.0
  %v6258 = vsel %vm6065, %v6218, 0.0
  %v6259 = vadd.f32 %v6257, %v6258
  %v6260 = vrot.slane %v6259, 4
  %v6261 = vadd.f32 %v6259, %v6260
  %v6262 = vrot.slane %v6261, 2
  %v6263 = vadd.f32 %v6261, %v6262
  %v6264 = vrot.slane %v6263, 1
  %v6265 = vadd.f32 %v6263, %v6264
  %v6266 = vsel %vm6045, %v6237, 0.0
  %v6267 = vsel %vm6065, %v6256, 0.0
  %v6268 = vadd.f32 %v6266, %v6267
  %v6269 = vrot.slane %v6268, 4
  %v6270 = vadd.f32 %v6268, %v6269
  %v6271 = vrot.slane %v6270, 2
  %v6272 = vadd.f32 %v6270, %v6271
  %v6273 = vrot.slane %v6272, 1
  %v6274 = vadd.f32 %v6272, %v6273
  %6275 = vst.msk [vmem:[%s4] sm:$0x1] %vm6005, %v6131
  %6276 = vst.msk [vmem:[%s4 + $0x1] sm:$0x1] %vm6005, %v6140
  %6277 = vst.msk [vmem:[%s5] sm:$0x1] %vm6005, %v6265
  %6278 = vst.msk [vmem:[%s5 + $0x1] sm:$0x1] %vm6005, %v6274
  // Predicated region
  $region14: #{hyp_convnet_encoder.2} parent=0 // pred_check
    _
  $region15: #{hyp_convnet_encoder.2} parent=0 // pred_check_branch
    %6280 = sbr.rel (0) target = $region17
  $region16: #{hyp_convnet_encoder.2} parent=0 // pred_region
    _
  $region17: #{hyp_convnet_encoder.2} parent=0 // pred_fallthru
    _
  // Predicated region
  $region18: #{hyp_convnet_encoder.2} parent=0 // pred_check
    _
  $region19: #{hyp_convnet_encoder.2} parent=0 // pred_check_branch
    %6282 = sbr.rel (0) target = $region21
  $region20: #{hyp_convnet_encoder.2} parent=0 // pred_region
    _
  $region21: #{hyp_convnet_encoder.2} parent=0 // pred_fallthru
    _
  // Predicated region
  $region22: #{hyp_convnet_encoder.2} parent=0 // pred_check
    _
  $region23: #{hyp_convnet_encoder.2} parent=0 // pred_check_branch
    %6284 = sbr.rel (0) target = $region25
  $region24: #{hyp_convnet_encoder.2} parent=0 // pred_region
    _
  $region25: #{hyp_convnet_encoder.2} parent=0 // pred_fallthru
    _
  // Predicated region
  $region26: #{hyp_convnet_encoder.2} parent=0 // pred_check
    _
  $region27: #{hyp_convnet_encoder.2} parent=0 // pred_check_branch
    %6286 = sbr.rel (0) target = $region29
  $region28: #{hyp_convnet_encoder.2} parent=0 // pred_region
    _
  $region29: #{hyp_convnet_encoder.2} parent=0 // pred_fallthru
    _
  // Predicated region
  $region30: #{hyp_convnet_encoder.2} parent=0 // pred_check
    _
  $region31: #{hyp_convnet_encoder.2} parent=0 // pred_check_branch
    %6288 = sbr.rel (0) target = $region33
  $region32: #{hyp_convnet_encoder.2} parent=0 // pred_region
    _
  $region33: #{hyp_convnet_encoder.2} parent=0 // pred_fallthru
    _
  // Predicated region
  $region34: #{hyp_convnet_encoder.2} parent=0 // pred_check
    _
  $region35: #{hyp_convnet_encoder.2} parent=0 // pred_check_branch
    %6290 = sbr.rel (0) target = $region37
  $region36: #{hyp_convnet_encoder.2} parent=0 // pred_region
    _
  $region37: #{hyp_convnet_encoder.2} parent=0 // pred_fallthru
    _

</llo_original>
